<compile_context>
chip_gen: v7x
topology: tpu7x:2x2x1
jax: 0.10.0
libtpu: 0.0.40
codegen_flags: <defaults>
</compile_context>

<pallas_src>
import functools

import jax
import jax.numpy as jnp
from jax.experimental import pallas as pl
from jax.experimental.pallas import tpu as pltpu


def _round_up(x, m):
    return (x + m - 1) // m * m


# ----------------------------------------------------------------------------
# Fused kernel: conv stack (im2col-in-VMEM dots) + 1x1 head + sigmoid + decode.
# Inputs : x_pad (1,H+2,W+2,cin0) bf16; per layer w (9*cin,mid) bf16, b (1,mid) f32;
#          head_w (mid,NPAD) bf16; head_b (1,NPAD) f32; anchors_cm (HW,4A) f32.
# Output : one lane-dense (1, HW, OUT_W) f32 slab:
#          [:, :, 0:2A]    sigmoid(cls)            (NHWC channel order)
#          [:, :, 2A:6A]   bbox deltas, coord-major (dx(A) dy(A) dw(A) dh(A))
#          [:, :, 6A:10A]  decoded boxes, coord-major (x0(A) y0(A) x1(A) y1(A))
# ----------------------------------------------------------------------------
def _fused_rpn_kernel(x_ref, *args, H, W, depth, cin0, mid, A, out_w):
    w_refs = args[0:2 * depth:2]          # (9*cin, mid) bf16 each
    b_refs = args[1:2 * depth:2]          # (1, mid)     f32 each
    head_w_ref = args[2 * depth]          # (mid, NPAD)  bf16
    head_b_ref = args[2 * depth + 1]      # (1, NPAD)    f32
    anc_ref = args[2 * depth + 2]         # (HW, 4A)     f32
    out_ref = args[2 * depth + 3]         # (1, HW, OUT_W) f32
    pad_ref = args[2 * depth + 4]         # (H+2, W+2, mid) bf16 scratch (re-pad)
    patch_ref = args[2 * depth + 5]       # (H, W, 9*cin_max) bf16 scratch (im2col)

    if depth > 1:
        # Zero only the 1-element halo border once; interior rows are fully
        # overwritten by every intermediate layer.
        zrow = jnp.zeros((1, W + 2, mid), pad_ref.dtype)
        zcol = jnp.zeros((H + 2, 1, mid), pad_ref.dtype)
        pad_ref[0:1, :, :] = zrow
        pad_ref[H + 1:H + 2, :, :] = zrow
        pad_ref[:, 0:1, :] = zcol
        pad_ref[:, W + 1:W + 2, :] = zcol

    act = None
    for d in range(depth):
        cin = cin0 if d == 0 else mid
        kdim = 9 * cin
        # Build the im2col patch matrix in VMEM: 9 shifted taps, lane-stacked.
        for dy in range(3):
            for dx in range(3):
                tap = dy * 3 + dx
                if d == 0:
                    src = x_ref[0, dy:dy + H, dx:dx + W, :]      # (H, W, cin0)
                else:
                    src = pad_ref[dy:dy + H, dx:dx + W, :]       # (H, W, mid)
                patch_ref[:, :, tap * cin:(tap + 1) * cin] = src
        patch2d = patch_ref[:, :, :kdim].reshape(H * W, kdim)
        act = jnp.dot(patch2d, w_refs[d][...],
                      preferred_element_type=jnp.float32) + b_refs[d][...]
        # NOTE: reference RPN_head has NO ReLU between the 3x3 convs.
        if d < depth - 1:
            pad_ref[1:H + 1, 1:W + 1, :] = act.reshape(H, W, mid).astype(pad_ref.dtype)

    # ---- fused 1x1 head (cls + bbox) as one lane-padded matmul ----
    hacc = jnp.dot(act.astype(jnp.bfloat16), head_w_ref[...],
                   preferred_element_type=jnp.float32) + head_b_ref[...]  # (HW, NPAD)

    # sigmoid via EUP: exp + approximate reciprocal (keeps the VALU slots free).
    cls = pl.reciprocal(1.0 + jnp.exp(-hacc[:, :2 * A]), approx=True)     # (HW, 2A)

    dcm = hacc[:, 2 * A:6 * A]                                            # (HW, 4A)
    a = anc_ref[...]                                                      # (HW, 4A)
    x0, y0 = a[:, 0 * A:1 * A], a[:, 1 * A:2 * A]
    x1, y1 = a[:, 2 * A:3 * A], a[:, 3 * A:4 * A]
    dx_, dy_ = dcm[:, 0 * A:1 * A], dcm[:, 1 * A:2 * A]
    dw_, dh_ = dcm[:, 2 * A:3 * A], dcm[:, 3 * A:4 * A]

    w_ = x1 - x0
    h_ = y1 - y0
    cx = x0 + 0.5 * w_
    cy = y0 + 0.5 * h_
    ncx = dx_ * w_ + cx
    ncy = dy_ * h_ + cy
    # NOTE: the reference bbox_adjust does not clamp dw/dh before exp; keep parity.
    nw = jnp.exp(dw_) * w_
    nh = jnp.exp(dh_) * h_
    boxes = jnp.concatenate(
        [ncx - 0.5 * nw, ncy - 0.5 * nh, ncx + 0.5 * nw, ncy + 0.5 * nh], axis=-1)

    pieces = [cls, dcm, boxes]
    pad_cols = out_w - 10 * A
    if pad_cols:
        pieces.append(jnp.zeros((H * W, pad_cols), jnp.float32))
    out_ref[0] = jnp.concatenate(pieces, axis=-1).astype(out_ref.dtype)   # dense store


def fused_rpn_conv_head(feature_map_nchw, conv_params, head_w_p, head_b_p,
                        anchors_cm, H, W, A, out_w):
    """feature_map: (N, Cin, H, W) -> (N, H*W, OUT_W) f32 fused RPN output slab."""
    N, cin0 = feature_map_nchw.shape[0], feature_map_nchw.shape[1]
    mid = conv_params[-1][0].shape[-1]
    depth = len(conv_params)
    npad = head_w_p.shape[1]
    cin_max = max(cin0, mid)

    x_nhwc = jnp.transpose(feature_map_nchw, (0, 2, 3, 1)).astype(jnp.bfloat16)
    x_pad = jnp.pad(x_nhwc, ((0, 0), (1, 1), (1, 1), (0, 0)))   # (N, H+2, W+2, cin0)

    in_specs = [pl.BlockSpec((1, H + 2, W + 2, cin0), lambda n: (n, 0, 0, 0))]
    inputs = [x_pad]
    for (w, b) in conv_params:
        cin = w.shape[2]
        # Weights resident across the batch grid (constant index_map).
        in_specs.append(pl.BlockSpec((9 * cin, mid), lambda n: (0, 0)))
        in_specs.append(pl.BlockSpec((1, mid), lambda n: (0, 0)))
        inputs.append(w.reshape(9 * cin, mid).astype(jnp.bfloat16))   # im2col layout
        inputs.append(b.reshape(1, mid).astype(jnp.float32))
    in_specs += [
        pl.BlockSpec((mid, npad), lambda n: (0, 0)),
        pl.BlockSpec((1, npad), lambda n: (0, 0)),
        pl.BlockSpec((H * W, 4 * A), lambda n: (0, 0)),   # anchors: single copy
    ]
    inputs += [head_w_p.astype(jnp.bfloat16),
               head_b_p.reshape(1, npad).astype(jnp.float32),
               anchors_cm.astype(jnp.float32)]

    # VMEM budget from actual block sizes (double-buffered IO + weights + scratch).
    footprint = (2 * (H + 2) * (W + 2) * cin0 * 2
                 + sum(9 * w.shape[2] * mid * 2 + mid * 4 for (w, _) in conv_params)
                 + mid * npad * 2 + npad * 4
                 + H * W * 4 * A * 4
                 + 2 * H * W * out_w * 4
                 + (H + 2) * (W + 2) * mid * 2
                 + H * W * 9 * cin_max * 2)
    vmem_limit = int(min(max(4 * footprint, 32 << 20), 120 << 20))

    kernel = functools.partial(_fused_rpn_kernel, H=H, W=W, depth=depth,
                               cin0=cin0, mid=mid, A=A, out_w=out_w)
    return pl.pallas_call(
        kernel,
        out_shape=jax.ShapeDtypeStruct((N, H * W, out_w), jnp.float32),
        grid=(N,),
        in_specs=in_specs,
        out_specs=pl.BlockSpec((1, H * W, out_w), lambda n: (n, 0, 0)),
        scratch_shapes=[
            pltpu.VMEM((H + 2, W + 2, mid), jnp.bfloat16),       # re-pad scratch
            pltpu.VMEM((H, W, 9 * cin_max), jnp.bfloat16),       # im2col scratch
        ],
        compiler_params=pltpu.CompilerParams(
            dimension_semantics=("parallel",),
            vmem_limit_bytes=vmem_limit),
    )(*inputs)


# ----------------------------------------------------------------------------
# Plain-JAX glue
# ----------------------------------------------------------------------------
def generate_anchors(sizes, aspect_ratios, feat_h, feat_w, stride_h, stride_w):
    """Torchvision-style anchor grid.  Returns (feat_h*feat_w*A, 4)."""
    scales = jnp.asarray(sizes, dtype=jnp.float32)
    ratios = jnp.asarray(aspect_ratios, dtype=jnp.float32)
    h_ratios = jnp.sqrt(ratios)
    w_ratios = 1.0 / h_ratios
    ws = (w_ratios[:, None] * scales[None, :]).reshape(-1)
    hs = (h_ratios[:, None] * scales[None, :]).reshape(-1)
    base = jnp.round(jnp.stack([-ws, -hs, ws, hs], axis=1) / 2.0)          # (A, 4)
    shifts_x = jnp.arange(feat_w, dtype=jnp.float32) * stride_w
    shifts_y = jnp.arange(feat_h, dtype=jnp.float32) * stride_h
    sy, sx = jnp.meshgrid(shifts_y, shifts_x, indexing="ij")
    shifts = jnp.stack(
        [sx.reshape(-1), sy.reshape(-1), sx.reshape(-1), sy.reshape(-1)], axis=1)
    anchors = (shifts[:, None, :] + base[None, :, :]).reshape(-1, 4)       # (HW*A, 4)
    return anchors


def init_params(key, input_dim, mid_dim, conv_depth, num_anchors):
    keys = jax.random.split(key, 2 * conv_depth + 4)
    params = {"conv": []}
    cin = input_dim
    for d in range(conv_depth):
        # NOTE: weights are (3,3,cin,cout); loading PyTorch (cout,cin,kH,kW)
        # checkpoints requires an explicit transpose(2,3,1,0).
        w = 0.05 * jax.random.normal(keys[2 * d], (3, 3, cin, mid_dim), jnp.float32)
        b = 0.01 * jax.random.normal(keys[2 * d + 1], (mid_dim,), jnp.float32)
        params["conv"].append((w, b))
        cin = mid_dim
    params["cls_w"] = 0.05 * jax.random.normal(keys[-4], (mid_dim, num_anchors * 2), jnp.float32)
    params["cls_b"] = 0.01 * jax.random.normal(keys[-3], (num_anchors * 2,), jnp.float32)
    # bbox columns use PyTorch's channel grouping: [anchor][dx,dy,dw,dh]
    params["bbox_w"] = 0.05 * jax.random.normal(keys[-2], (mid_dim, num_anchors * 4), jnp.float32)
    params["bbox_b"] = 0.01 * jax.random.normal(keys[-1], (num_anchors * 4,), jnp.float32)
    return params


def _cm_to_anchor_major(x_cm, N, HW, A):
    """(N, HW, 4A) coord-major -> (N, HW*A, 4) anchor-major (PyTorch NHWC reshape)."""
    return x_cm.reshape(N, HW, 4, A).transpose(0, 1, 3, 2).reshape(N, HW * A, 4)


def rpn_forward(params, image_list, feature_map, sizes, aspect_ratios):
    """Regional_Proposal_Network.forward (train_mode=True semantics)."""
    N, C, H, W = feature_map.shape
    A = len(sizes) * len(aspect_ratios)
    mid = params["conv"][-1][0].shape[-1]

    # ---- fused head weights: [cls | bbox (coord-major columns)], lane-padded ----
    bbox_w_cm = params["bbox_w"].reshape(mid, A, 4).transpose(0, 2, 1).reshape(mid, 4 * A)
    bbox_b_cm = params["bbox_b"].reshape(A, 4).T.reshape(4 * A)
    head_w = jnp.concatenate([params["cls_w"], bbox_w_cm], axis=1)   # (mid, 6A)
    head_b = jnp.concatenate([params["cls_b"], bbox_b_cm], axis=0)   # (6A,)
    npad = _round_up(max(6 * A, 128), 128)
    head_w_p = jnp.pad(head_w, ((0, 0), (0, npad - 6 * A)))
    head_b_p = jnp.pad(head_b, (0, npad - 6 * A))

    # ---- anchors (single copy, coordinate-major lanes for the kernel) ----
    img_h, img_w = image_list.shape[2], image_list.shape[3]
    anchors_1 = generate_anchors(sizes, aspect_ratios, H, W, img_h / H, img_w / W)
    anchors_cm = anchors_1.reshape(H * W, A, 4).transpose(0, 2, 1).reshape(H * W, 4 * A)

    # ---- fully fused conv stack + head + sigmoid + decode (one Pallas kernel) ----
    out_w = _round_up(max(10 * A, 128), 128)
    out = fused_rpn_conv_head(feature_map, params["conv"], head_w_p, head_b_p,
                              anchors_cm, H, W, A, out_w)
    cls = out[:, :, :2 * A]
    dlt_cm = out[:, :, 2 * A:6 * A]
    box_cm = out[:, :, 6 * A:10 * A]

    # PyTorch: sigmoid(cls NCHW).reshape(N, -1, 2)  (channel-major flatten)
    cls_nchw = jnp.transpose(cls.reshape(N, H, W, 2 * A), (0, 3, 1, 2))
    predict_cls = cls_nchw.reshape(N, -1, 2)                        # (N, A*H*W, 2)

    # PyTorch: bbox.permute(0,2,3,1).reshape(N, -1, 4)
    predict_bbox_deltas = _cm_to_anchor_major(dlt_cm, N, H * W, A)  # (N, HW*A, 4)
    decoded_anchors = _cm_to_anchor_major(box_cm, N, H * W, A)      # (N, HW*A, 4)

    anchors = jnp.broadcast_to(anchors_1[None], (N, H * W * A, 4))

    # TODO(synk): ProposalFilter (score threshold + NMS + top-k) and the roi /
    # batch-index concatenation produce dynamic shapes with no clean
    # static-shape Pallas equivalent; train_mode outputs are returned instead.
    return decoded_anchors, predict_cls, predict_bbox_deltas, anchors


# ----------------------------------------------------------------------------
# Main
# ----------------------------------------------------------------------------
if __name__ == "__main__":
    key = jax.random.PRNGKey(0)
    k_img, k_feat, k_param = jax.random.split(key, 3)

    batch, input_dim, mid_dim, conv_depth = 2, 4, 8, 2
    H = W = 16
    img_h = img_w = 64
    sizes = (32.0, 64.0)
    aspect_ratios = (0.5, 1.0)
    num_anchors = len(sizes) * len(aspect_ratios)

    image_list = jax.random.normal(k_img, (batch, 3, img_h, img_w), jnp.float32)
    feature_map = jax.random.normal(k_feat, (batch, input_dim, H, W), jnp.float32)
    params = init_params(k_param, input_dim, mid_dim, conv_depth, num_anchors)

    decoded, predict_cls, predict_deltas, anchors = rpn_forward(
        params, image_list, feature_map, sizes, aspect_ratios)

    jax.block_until_ready((decoded, predict_cls, predict_deltas, anchors))

    assert decoded.shape == (batch, num_anchors * H * W, 4)
    assert predict_cls.shape == (batch, num_anchors * H * W, 2)
    assert predict_deltas.shape == (batch, num_anchors * H * W, 4)
    assert anchors.shape == (batch, num_anchors * H * W, 4)
    assert bool(jnp.all(jnp.isfinite(decoded)))
    assert bool(jnp.all(jnp.isfinite(predict_cls)))
    assert bool(jnp.all(predict_cls >= 0.0)) and bool(jnp.all(predict_cls <= 1.0))

    print("KERNEL_OK")
</pallas_src>

<mosaic_0001>
module attributes {stable_mosaic.version = 11 : i64} {
  func.func @_fused_rpn_kernel(%arg0: i32, %arg1: memref<1x18x18x4xbf16, #tpu.memory_space<vmem>>, %arg2: memref<36x8xbf16, #tpu.memory_space<vmem>>, %arg3: memref<1x8xf32, #tpu.memory_space<vmem>>, %arg4: memref<72x8xbf16, #tpu.memory_space<vmem>>, %arg5: memref<1x8xf32, #tpu.memory_space<vmem>>, %arg6: memref<8x128xbf16, #tpu.memory_space<vmem>>, %arg7: memref<1x128xf32, #tpu.memory_space<vmem>>, %arg8: memref<256x16xf32, #tpu.memory_space<vmem>>, %arg9: memref<1x256x128xf32, #tpu.memory_space<vmem>>, %arg10: memref<18x18x8xbf16, #tpu.memory_space<vmem>>, %arg11: memref<16x16x72xbf16, #tpu.memory_space<vmem>>) attributes {dimension_semantics = [#tpu.dimension_semantics<parallel>], iteration_bounds = array<i64: 2>, scalar_prefetch = 0 : i64, scratch_operands = 2 : i64, tpu.core_type = #tpu.core_type<tc>, window_params = [{transform_indices = @transform_0, window_bounds = array<i64: 1, 18, 18, 4>}, {pipeline_mode = #tpu.pipeline_mode<synchronous>, transform_indices = @transform_1, window_bounds = array<i64: 36, 8>}, {pipeline_mode = #tpu.pipeline_mode<synchronous>, transform_indices = @transform_2, window_bounds = array<i64: 1, 8>}, {pipeline_mode = #tpu.pipeline_mode<synchronous>, transform_indices = @transform_3, window_bounds = array<i64: 72, 8>}, {pipeline_mode = #tpu.pipeline_mode<synchronous>, transform_indices = @transform_4, window_bounds = array<i64: 1, 8>}, {pipeline_mode = #tpu.pipeline_mode<synchronous>, transform_indices = @transform_5, window_bounds = array<i64: 8, 128>}, {pipeline_mode = #tpu.pipeline_mode<synchronous>, transform_indices = @transform_6, window_bounds = array<i64: 1, 128>}, {pipeline_mode = #tpu.pipeline_mode<synchronous>, transform_indices = @transform_7, window_bounds = array<i64: 256, 16>}, {transform_indices = @transform_8, window_bounds = array<i64: 1, 256, 128>}]} {
    %cst = arith.constant 0.000000e+00 : bf16
    %0 = vector.broadcast %cst : bf16 to vector<1x18x8xbf16>
    %cst_0 = arith.constant 0.000000e+00 : bf16
    %1 = vector.broadcast %cst_0 : bf16 to vector<18x1x8xbf16>
    %c0 = arith.constant 0 : index
    %c0_1 = arith.constant 0 : index
    %c0_2 = arith.constant 0 : index
    %2 = vector.load %arg10[%c0, %c0_1, %c0_2] : memref<18x18x8xbf16, #tpu.memory_space<vmem>>, vector<1x18x8xbf16>
    tpu.vector_store %arg10[%c0, %c0_1, %c0_2], %0 {strides = array<i32>} : memref<18x18x8xbf16, #tpu.memory_space<vmem>>, vector<1x18x8xbf16>,
    %c17 = arith.constant 17 : index
    %c0_3 = arith.constant 0 : index
    %c0_4 = arith.constant 0 : index
    %3 = vector.load %arg10[%c17, %c0_3, %c0_4] : memref<18x18x8xbf16, #tpu.memory_space<vmem>>, vector<1x18x8xbf16>
    tpu.vector_store %arg10[%c17, %c0_3, %c0_4], %0 {strides = array<i32>} : memref<18x18x8xbf16, #tpu.memory_space<vmem>>, vector<1x18x8xbf16>,
    %c0_5 = arith.constant 0 : index
    %c0_6 = arith.constant 0 : index
    %c0_7 = arith.constant 0 : index
    %4 = vector.load %arg10[%c0_5, %c0_6, %c0_7] : memref<18x18x8xbf16, #tpu.memory_space<vmem>>, vector<18x1x8xbf16>
    tpu.vector_store %arg10[%c0_5, %c0_6, %c0_7], %1 {strides = array<i32>} : memref<18x18x8xbf16, #tpu.memory_space<vmem>>, vector<18x1x8xbf16>,
    %c0_8 = arith.constant 0 : index
    %c17_9 = arith.constant 17 : index
    %c0_10 = arith.constant 0 : index
    %5 = vector.load %arg10[%c0_8, %c17_9, %c0_10] : memref<18x18x8xbf16, #tpu.memory_space<vmem>>, vector<18x1x8xbf16>
    tpu.vector_store %arg10[%c0_8, %c17_9, %c0_10], %1 {strides = array<i32>} : memref<18x18x8xbf16, #tpu.memory_space<vmem>>, vector<18x1x8xbf16>,
    %c0_11 = arith.constant 0 : index
    %c0_12 = arith.constant 0 : index
    %c0_13 = arith.constant 0 : index
    %c0_14 = arith.constant 0 : index
    %6 = vector.load %arg1[%c0_11, %c0_12, %c0_13, %c0_14] : memref<1x18x18x4xbf16, #tpu.memory_space<vmem>>, vector<1x16x16x4xbf16>
    %7 = vector.shape_cast %6 : vector<1x16x16x4xbf16> to vector<16x16x4xbf16>
    %c0_15 = arith.constant 0 : index
    %c0_16 = arith.constant 0 : index
    %c0_17 = arith.constant 0 : index
    %8 = vector.load %arg11[%c0_15, %c0_16, %c0_17] : memref<16x16x72xbf16, #tpu.memory_space<vmem>>, vector<16x16x4xbf16>
    tpu.vector_store %arg11[%c0_15, %c0_16, %c0_17], %7 {strides = array<i32>} : memref<16x16x72xbf16, #tpu.memory_space<vmem>>, vector<16x16x4xbf16>,
    %c0_18 = arith.constant 0 : index
    %c0_19 = arith.constant 0 : index
    %c1 = arith.constant 1 : index
    %c0_20 = arith.constant 0 : index
    %9 = vector.load %arg1[%c0_18, %c0_19, %c1, %c0_20] : memref<1x18x18x4xbf16, #tpu.memory_space<vmem>>, vector<1x16x16x4xbf16>
    %10 = vector.shape_cast %9 : vector<1x16x16x4xbf16> to vector<16x16x4xbf16>
    %c0_21 = arith.constant 0 : index
    %c0_22 = arith.constant 0 : index
    %c4 = arith.constant 4 : index
    %11 = vector.load %arg11[%c0_21, %c0_22, %c4] : memref<16x16x72xbf16, #tpu.memory_space<vmem>>, vector<16x16x4xbf16>
    tpu.vector_store %arg11[%c0_21, %c0_22, %c4], %10 {strides = array<i32>} : memref<16x16x72xbf16, #tpu.memory_space<vmem>>, vector<16x16x4xbf16>,
    %c0_23 = arith.constant 0 : index
    %c0_24 = arith.constant 0 : index
    %c2 = arith.constant 2 : index
    %c0_25 = arith.constant 0 : index
    %12 = vector.load %arg1[%c0_23, %c0_24, %c2, %c0_25] : memref<1x18x18x4xbf16, #tpu.memory_space<vmem>>, vector<1x16x16x4xbf16>
    %13 = vector.shape_cast %12 : vector<1x16x16x4xbf16> to vector<16x16x4xbf16>
    %c0_26 = arith.constant 0 : index
    %c0_27 = arith.constant 0 : index
    %c8 = arith.constant 8 : index
    %14 = vector.load %arg11[%c0_26, %c0_27, %c8] : memref<16x16x72xbf16, #tpu.memory_space<vmem>>, vector<16x16x4xbf16>
    tpu.vector_store %arg11[%c0_26, %c0_27, %c8], %13 {strides = array<i32>} : memref<16x16x72xbf16, #tpu.memory_space<vmem>>, vector<16x16x4xbf16>,
    %c0_28 = arith.constant 0 : index
    %c1_29 = arith.constant 1 : index
    %c0_30 = arith.constant 0 : index
    %c0_31 = arith.constant 0 : index
    %15 = vector.load %arg1[%c0_28, %c1_29, %c0_30, %c0_31] : memref<1x18x18x4xbf16, #tpu.memory_space<vmem>>, vector<1x16x16x4xbf16>
    %16 = vector.shape_cast %15 : vector<1x16x16x4xbf16> to vector<16x16x4xbf16>
    %c0_32 = arith.constant 0 : index
    %c0_33 = arith.constant 0 : index
    %c12 = arith.constant 12 : index
    %17 = vector.load %arg11[%c0_32, %c0_33, %c12] : memref<16x16x72xbf16, #tpu.memory_space<vmem>>, vector<16x16x4xbf16>
    tpu.vector_store %arg11[%c0_32, %c0_33, %c12], %16 {strides = array<i32>} : memref<16x16x72xbf16, #tpu.memory_space<vmem>>, vector<16x16x4xbf16>,
    %c0_34 = arith.constant 0 : index
    %c1_35 = arith.constant 1 : index
    %c1_36 = arith.constant 1 : index
    %c0_37 = arith.constant 0 : index
    %18 = vector.load %arg1[%c0_34, %c1_35, %c1_36, %c0_37] : memref<1x18x18x4xbf16, #tpu.memory_space<vmem>>, vector<1x16x16x4xbf16>
    %19 = vector.shape_cast %18 : vector<1x16x16x4xbf16> to vector<16x16x4xbf16>
    %c0_38 = arith.constant 0 : index
    %c0_39 = arith.constant 0 : index
    %c16 = arith.constant 16 : index
    %20 = vector.load %arg11[%c0_38, %c0_39, %c16] : memref<16x16x72xbf16, #tpu.memory_space<vmem>>, vector<16x16x4xbf16>
    tpu.vector_store %arg11[%c0_38, %c0_39, %c16], %19 {strides = array<i32>} : memref<16x16x72xbf16, #tpu.memory_space<vmem>>, vector<16x16x4xbf16>,
    %c0_40 = arith.constant 0 : index
    %c1_41 = arith.constant 1 : index
    %c2_42 = arith.constant 2 : index
    %c0_43 = arith.constant 0 : index
    %21 = vector.load %arg1[%c0_40, %c1_41, %c2_42, %c0_43] : memref<1x18x18x4xbf16, #tpu.memory_space<vmem>>, vector<1x16x16x4xbf16>
    %22 = vector.shape_cast %21 : vector<1x16x16x4xbf16> to vector<16x16x4xbf16>
    %c0_44 = arith.constant 0 : index
    %c0_45 = arith.constant 0 : index
    %c20 = arith.constant 20 : index
    %23 = vector.load %arg11[%c0_44, %c0_45, %c20] : memref<16x16x72xbf16, #tpu.memory_space<vmem>>, vector<16x16x4xbf16>
    tpu.vector_store %arg11[%c0_44, %c0_45, %c20], %22 {strides = array<i32>} : memref<16x16x72xbf16, #tpu.memory_space<vmem>>, vector<16x16x4xbf16>,
    %c0_46 = arith.constant 0 : index
    %c2_47 = arith.constant 2 : index
    %c0_48 = arith.constant 0 : index
    %c0_49 = arith.constant 0 : index
    %24 = vector.load %arg1[%c0_46, %c2_47, %c0_48, %c0_49] : memref<1x18x18x4xbf16, #tpu.memory_space<vmem>>, vector<1x16x16x4xbf16>
    %25 = vector.shape_cast %24 : vector<1x16x16x4xbf16> to vector<16x16x4xbf16>
    %c0_50 = arith.constant 0 : index
    %c0_51 = arith.constant 0 : index
    %c24 = arith.constant 24 : index
    %26 = vector.load %arg11[%c0_50, %c0_51, %c24] : memref<16x16x72xbf16, #tpu.memory_space<vmem>>, vector<16x16x4xbf16>
    tpu.vector_store %arg11[%c0_50, %c0_51, %c24], %25 {strides = array<i32>} : memref<16x16x72xbf16, #tpu.memory_space<vmem>>, vector<16x16x4xbf16>,
    %c0_52 = arith.constant 0 : index
    %c2_53 = arith.constant 2 : index
    %c1_54 = arith.constant 1 : index
    %c0_55 = arith.constant 0 : index
    %27 = vector.load %arg1[%c0_52, %c2_53, %c1_54, %c0_55] : memref<1x18x18x4xbf16, #tpu.memory_space<vmem>>, vector<1x16x16x4xbf16>
    %28 = vector.shape_cast %27 : vector<1x16x16x4xbf16> to vector<16x16x4xbf16>
    %c0_56 = arith.constant 0 : index
    %c0_57 = arith.constant 0 : index
    %c28 = arith.constant 28 : index
    %29 = vector.load %arg11[%c0_56, %c0_57, %c28] : memref<16x16x72xbf16, #tpu.memory_space<vmem>>, vector<16x16x4xbf16>
    tpu.vector_store %arg11[%c0_56, %c0_57, %c28], %28 {strides = array<i32>} : memref<16x16x72xbf16, #tpu.memory_space<vmem>>, vector<16x16x4xbf16>,
    %c0_58 = arith.constant 0 : index
    %c2_59 = arith.constant 2 : index
    %c2_60 = arith.constant 2 : index
    %c0_61 = arith.constant 0 : index
    %30 = vector.load %arg1[%c0_58, %c2_59, %c2_60, %c0_61] : memref<1x18x18x4xbf16, #tpu.memory_space<vmem>>, vector<1x16x16x4xbf16>
    %31 = vector.shape_cast %30 : vector<1x16x16x4xbf16> to vector<16x16x4xbf16>
    %c0_62 = arith.constant 0 : index
    %c0_63 = arith.constant 0 : index
    %c32 = arith.constant 32 : index
    %32 = vector.load %arg11[%c0_62, %c0_63, %c32] : memref<16x16x72xbf16, #tpu.memory_space<vmem>>, vector<16x16x4xbf16>
    tpu.vector_store %arg11[%c0_62, %c0_63, %c32], %31 {strides = array<i32>} : memref<16x16x72xbf16, #tpu.memory_space<vmem>>, vector<16x16x4xbf16>,
    %c0_64 = arith.constant 0 : index
    %c0_65 = arith.constant 0 : index
    %c0_66 = arith.constant 0 : index
    %33 = vector.load %arg11[%c0_64, %c0_65, %c0_66] : memref<16x16x72xbf16, #tpu.memory_space<vmem>>, vector<16x16x36xbf16>
    %34 = vector.shape_cast %33 : vector<16x16x36xbf16> to vector<256x36xbf16>
    %c0_67 = arith.constant 0 : index
    %c0_68 = arith.constant 0 : index
    %35 = vector.load %arg2[%c0_67, %c0_68] : memref<36x8xbf16, #tpu.memory_space<vmem>>, vector<36x8xbf16>
    %cst_69 = arith.constant dense<0.000000e+00> : vector<256x8xf32>
    %36 = tpu.matmul %34, %35, %cst_69 {dimension_numbers = #tpu.dot_dimension_numbers<[1], [0], [0], [1], [0, 0, 1, 1], [], []>} : vector<256x36xbf16>, vector<36x8xbf16>, vector<256x8xf32> -> vector<256x8xf32>
    %c0_70 = arith.constant 0 : index
    %c0_71 = arith.constant 0 : index
    %37 = vector.load %arg3[%c0_70, %c0_71] : memref<1x8xf32, #tpu.memory_space<vmem>>, vector<1x8xf32>
    %38 = vector.broadcast %37 : vector<1x8xf32> to vector<256x8xf32>
    %39 = arith.addf %36, %38 : vector<256x8xf32>
    %40 = vector.shape_cast %39 : vector<256x8xf32> to vector<16x16x8xf32>
    %41 = arith.truncf %40 : vector<16x16x8xf32> to vector<16x16x8xbf16>
    %c1_72 = arith.constant 1 : index
    %c1_73 = arith.constant 1 : index
    %c0_74 = arith.constant 0 : index
    %42 = vector.load %arg10[%c1_72, %c1_73, %c0_74] : memref<18x18x8xbf16, #tpu.memory_space<vmem>>, vector<16x16x8xbf16>
    tpu.vector_store %arg10[%c1_72, %c1_73, %c0_74], %41 {strides = array<i32>} : memref<18x18x8xbf16, #tpu.memory_space<vmem>>, vector<16x16x8xbf16>,
    %c0_75 = arith.constant 0 : index
    %c0_76 = arith.constant 0 : index
    %c0_77 = arith.constant 0 : index
    %43 = vector.load %arg10[%c0_75, %c0_76, %c0_77] : memref<18x18x8xbf16, #tpu.memory_space<vmem>>, vector<16x16x8xbf16>
    %c0_78 = arith.constant 0 : index
    %c0_79 = arith.constant 0 : index
    %c0_80 = arith.constant 0 : index
    %44 = vector.load %arg11[%c0_78, %c0_79, %c0_80] : memref<16x16x72xbf16, #tpu.memory_space<vmem>>, vector<16x16x8xbf16>
    tpu.vector_store %arg11[%c0_78, %c0_79, %c0_80], %43 {strides = array<i32>} : memref<16x16x72xbf16, #tpu.memory_space<vmem>>, vector<16x16x8xbf16>,
    %c0_81 = arith.constant 0 : index
    %c1_82 = arith.constant 1 : index
    %c0_83 = arith.constant 0 : index
    %45 = vector.load %arg10[%c0_81, %c1_82, %c0_83] : memref<18x18x8xbf16, #tpu.memory_space<vmem>>, vector<16x16x8xbf16>
    %c0_84 = arith.constant 0 : index
    %c0_85 = arith.constant 0 : index
    %c8_86 = arith.constant 8 : index
    %46 = vector.load %arg11[%c0_84, %c0_85, %c8_86] : memref<16x16x72xbf16, #tpu.memory_space<vmem>>, vector<16x16x8xbf16>
    tpu.vector_store %arg11[%c0_84, %c0_85, %c8_86], %45 {strides = array<i32>} : memref<16x16x72xbf16, #tpu.memory_space<vmem>>, vector<16x16x8xbf16>,
    %c0_87 = arith.constant 0 : index
    %c2_88 = arith.constant 2 : index
    %c0_89 = arith.constant 0 : index
    %47 = vector.load %arg10[%c0_87, %c2_88, %c0_89] : memref<18x18x8xbf16, #tpu.memory_space<vmem>>, vector<16x16x8xbf16>
    %c0_90 = arith.constant 0 : index
    %c0_91 = arith.constant 0 : index
    %c16_92 = arith.constant 16 : index
    %48 = vector.load %arg11[%c0_90, %c0_91, %c16_92] : memref<16x16x72xbf16, #tpu.memory_space<vmem>>, vector<16x16x8xbf16>
    tpu.vector_store %arg11[%c0_90, %c0_91, %c16_92], %47 {strides = array<i32>} : memref<16x16x72xbf16, #tpu.memory_space<vmem>>, vector<16x16x8xbf16>,
    %c1_93 = arith.constant 1 : index
    %c0_94 = arith.constant 0 : index
    %c0_95 = arith.constant 0 : index
    %49 = vector.load %arg10[%c1_93, %c0_94, %c0_95] : memref<18x18x8xbf16, #tpu.memory_space<vmem>>, vector<16x16x8xbf16>
    %c0_96 = arith.constant 0 : index
    %c0_97 = arith.constant 0 : index
    %c24_98 = arith.constant 24 : index
    %50 = vector.load %arg11[%c0_96, %c0_97, %c24_98] : memref<16x16x72xbf16, #tpu.memory_space<vmem>>, vector<16x16x8xbf16>
    tpu.vector_store %arg11[%c0_96, %c0_97, %c24_98], %49 {strides = array<i32>} : memref<16x16x72xbf16, #tpu.memory_space<vmem>>, vector<16x16x8xbf16>,
    %c1_99 = arith.constant 1 : index
    %c1_100 = arith.constant 1 : index
    %c0_101 = arith.constant 0 : index
    %51 = vector.load %arg10[%c1_99, %c1_100, %c0_101] : memref<18x18x8xbf16, #tpu.memory_space<vmem>>, vector<16x16x8xbf16>
    %c0_102 = arith.constant 0 : index
    %c0_103 = arith.constant 0 : index
    %c32_104 = arith.constant 32 : index
    %52 = vector.load %arg11[%c0_102, %c0_103, %c32_104] : memref<16x16x72xbf16, #tpu.memory_space<vmem>>, vector<16x16x8xbf16>
    tpu.vector_store %arg11[%c0_102, %c0_103, %c32_104], %51 {strides = array<i32>} : memref<16x16x72xbf16, #tpu.memory_space<vmem>>, vector<16x16x8xbf16>,
    %c1_105 = arith.constant 1 : index
    %c2_106 = arith.constant 2 : index
    %c0_107 = arith.constant 0 : index
    %53 = vector.load %arg10[%c1_105, %c2_106, %c0_107] : memref<18x18x8xbf16, #tpu.memory_space<vmem>>, vector<16x16x8xbf16>
    %c0_108 = arith.constant 0 : index
    %c0_109 = arith.constant 0 : index
    %c40 = arith.constant 40 : index
    %54 = vector.load %arg11[%c0_108, %c0_109, %c40] : memref<16x16x72xbf16, #tpu.memory_space<vmem>>, vector<16x16x8xbf16>
    tpu.vector_store %arg11[%c0_108, %c0_109, %c40], %53 {strides = array<i32>} : memref<16x16x72xbf16, #tpu.memory_space<vmem>>, vector<16x16x8xbf16>,
    %c2_110 = arith.constant 2 : index
    %c0_111 = arith.constant 0 : index
    %c0_112 = arith.constant 0 : index
    %55 = vector.load %arg10[%c2_110, %c0_111, %c0_112] : memref<18x18x8xbf16, #tpu.memory_space<vmem>>, vector<16x16x8xbf16>
    %c0_113 = arith.constant 0 : index
    %c0_114 = arith.constant 0 : index
    %c48 = arith.constant 48 : index
    %56 = vector.load %arg11[%c0_113, %c0_114, %c48] : memref<16x16x72xbf16, #tpu.memory_space<vmem>>, vector<16x16x8xbf16>
    tpu.vector_store %arg11[%c0_113, %c0_114, %c48], %55 {strides = array<i32>} : memref<16x16x72xbf16, #tpu.memory_space<vmem>>, vector<16x16x8xbf16>,
    %c2_115 = arith.constant 2 : index
    %c1_116 = arith.constant 1 : index
    %c0_117 = arith.constant 0 : index
    %57 = vector.load %arg10[%c2_115, %c1_116, %c0_117] : memref<18x18x8xbf16, #tpu.memory_space<vmem>>, vector<16x16x8xbf16>
    %c0_118 = arith.constant 0 : index
    %c0_119 = arith.constant 0 : index
    %c56 = arith.constant 56 : index
    %58 = vector.load %arg11[%c0_118, %c0_119, %c56] : memref<16x16x72xbf16, #tpu.memory_space<vmem>>, vector<16x16x8xbf16>
    tpu.vector_store %arg11[%c0_118, %c0_119, %c56], %57 {strides = array<i32>} : memref<16x16x72xbf16, #tpu.memory_space<vmem>>, vector<16x16x8xbf16>,
    %c2_120 = arith.constant 2 : index
    %c2_121 = arith.constant 2 : index
    %c0_122 = arith.constant 0 : index
    %59 = vector.load %arg10[%c2_120, %c2_121, %c0_122] : memref<18x18x8xbf16, #tpu.memory_space<vmem>>, vector<16x16x8xbf16>
    %c0_123 = arith.constant 0 : index
    %c0_124 = arith.constant 0 : index
    %c64 = arith.constant 64 : index
    %60 = vector.load %arg11[%c0_123, %c0_124, %c64] : memref<16x16x72xbf16, #tpu.memory_space<vmem>>, vector<16x16x8xbf16>
    tpu.vector_store %arg11[%c0_123, %c0_124, %c64], %59 {strides = array<i32>} : memref<16x16x72xbf16, #tpu.memory_space<vmem>>, vector<16x16x8xbf16>,
    %c0_125 = arith.constant 0 : index
    %c0_126 = arith.constant 0 : index
    %c0_127 = arith.constant 0 : index
    %61 = vector.load %arg11[%c0_125, %c0_126, %c0_127] : memref<16x16x72xbf16, #tpu.memory_space<vmem>>, vector<16x16x72xbf16>
    %62 = vector.shape_cast %61 : vector<16x16x72xbf16> to vector<256x72xbf16>
    %c0_128 = arith.constant 0 : index
    %c0_129 = arith.constant 0 : index
    %63 = vector.load %arg4[%c0_128, %c0_129] : memref<72x8xbf16, #tpu.memory_space<vmem>>, vector<72x8xbf16>
    %cst_130 = arith.constant dense<0.000000e+00> : vector<256x8xf32>
    %64 = tpu.matmul %62, %63, %cst_130 {dimension_numbers = #tpu.dot_dimension_numbers<[1], [0], [0], [1], [0, 0, 1, 1], [], []>} : vector<256x72xbf16>, vector<72x8xbf16>, vector<256x8xf32> -> vector<256x8xf32>
    %c0_131 = arith.constant 0 : index
    %c0_132 = arith.constant 0 : index
    %65 = vector.load %arg5[%c0_131, %c0_132] : memref<1x8xf32, #tpu.memory_space<vmem>>, vector<1x8xf32>
    %66 = vector.broadcast %65 : vector<1x8xf32> to vector<256x8xf32>
    %67 = arith.addf %64, %66 : vector<256x8xf32>
    %68 = arith.truncf %67 : vector<256x8xf32> to vector<256x8xbf16>
    %c0_133 = arith.constant 0 : index
    %c0_134 = arith.constant 0 : index
    %69 = vector.load %arg6[%c0_133, %c0_134] : memref<8x128xbf16, #tpu.memory_space<vmem>>, vector<8x128xbf16>
    %cst_135 = arith.constant dense<0.000000e+00> : vector<256x128xf32>
    %70 = tpu.matmul %68, %69, %cst_135 {dimension_numbers = #tpu.dot_dimension_numbers<[1], [0], [0], [1], [0, 0, 1, 1], [], []>} : vector<256x8xbf16>, vector<8x128xbf16>, vector<256x128xf32> -> vector<256x128xf32>
    %c0_136 = arith.constant 0 : index
    %c0_137 = arith.constant 0 : index
    %71 = vector.load %arg7[%c0_136, %c0_137] : memref<1x128xf32, #tpu.memory_space<vmem>>, vector<1x128xf32>
    %72 = vector.broadcast %71 : vector<1x128xf32> to vector<256x128xf32>
    %73 = arith.addf %70, %72 : vector<256x128xf32>
    %74 = vector.extract_strided_slice %73 {offsets = [0, 0], sizes = [256, 8], strides = [1, 1]} : vector<256x128xf32> to vector<256x8xf32>
    %cst_138 = arith.constant 0.000000e+00 : f32
    %75 = vector.broadcast %cst_138 : f32 to vector<256x8xf32>
    %76 = arith.subf %75, %74 : vector<256x8xf32>
    %77 = math.exp %76 : vector<256x8xf32>
    %cst_139 = arith.constant 1.000000e+00 : f32
    %78 = vector.broadcast %cst_139 : f32 to vector<256x8xf32>
    %79 = arith.addf %78, %77 : vector<256x8xf32>
    %80 = tpu.reciprocal %79 {approx = true} : vector<256x8xf32> -> vector<256x8xf32>
    %81 = vector.extract_strided_slice %73 {offsets = [0, 8], sizes = [256, 16], strides = [1, 1]} : vector<256x128xf32> to vector<256x16xf32>
    %c0_140 = arith.constant 0 : index
    %c0_141 = arith.constant 0 : index
    %82 = vector.load %arg8[%c0_140, %c0_141] : memref<256x16xf32, #tpu.memory_space<vmem>>, vector<256x16xf32>
    %83 = vector.extract_strided_slice %82 {offsets = [0, 0], sizes = [256, 4], strides = [1, 1]} : vector<256x16xf32> to vector<256x4xf32>
    %84 = vector.extract_strided_slice %82 {offsets = [0, 4], sizes = [256, 4], strides = [1, 1]} : vector<256x16xf32> to vector<256x4xf32>
    %85 = vector.extract_strided_slice %82 {offsets = [0, 8], sizes = [256, 4], strides = [1, 1]} : vector<256x16xf32> to vector<256x4xf32>
    %86 = vector.extract_strided_slice %82 {offsets = [0, 12], sizes = [256, 4], strides = [1, 1]} : vector<256x16xf32> to vector<256x4xf32>
    %87 = vector.extract_strided_slice %81 {offsets = [0, 0], sizes = [256, 4], strides = [1, 1]} : vector<256x16xf32> to vector<256x4xf32>
    %88 = vector.extract_strided_slice %81 {offsets = [0, 4], sizes = [256, 4], strides = [1, 1]} : vector<256x16xf32> to vector<256x4xf32>
    %89 = vector.extract_strided_slice %81 {offsets = [0, 8], sizes = [256, 4], strides = [1, 1]} : vector<256x16xf32> to vector<256x4xf32>
    %90 = vector.extract_strided_slice %81 {offsets = [0, 12], sizes = [256, 4], strides = [1, 1]} : vector<256x16xf32> to vector<256x4xf32>
    %91 = arith.subf %85, %83 : vector<256x4xf32>
    %92 = arith.subf %86, %84 : vector<256x4xf32>
    %cst_142 = arith.constant 5.000000e-01 : f32
    %93 = vector.broadcast %cst_142 : f32 to vector<256x4xf32>
    %94 = arith.mulf %93, %91 : vector<256x4xf32>
    %95 = arith.addf %83, %94 : vector<256x4xf32>
    %cst_143 = arith.constant 5.000000e-01 : f32
    %96 = vector.broadcast %cst_143 : f32 to vector<256x4xf32>
    %97 = arith.mulf %96, %92 : vector<256x4xf32>
    %98 = arith.addf %84, %97 : vector<256x4xf32>
    %99 = arith.mulf %87, %91 : vector<256x4xf32>
    %100 = arith.addf %99, %95 : vector<256x4xf32>
    %101 = arith.mulf %88, %92 : vector<256x4xf32>
    %102 = arith.addf %101, %98 : vector<256x4xf32>
    %103 = math.exp %89 : vector<256x4xf32>
    %104 = arith.mulf %103, %91 : vector<256x4xf32>
    %105 = math.exp %90 : vector<256x4xf32>
    %106 = arith.mulf %105, %92 : vector<256x4xf32>
    %cst_144 = arith.constant 5.000000e-01 : f32
    %107 = vector.broadcast %cst_144 : f32 to vector<256x4xf32>
    %108 = arith.mulf %107, %104 : vector<256x4xf32>
    %109 = arith.subf %100, %108 : vector<256x4xf32>
    %cst_145 = arith.constant 5.000000e-01 : f32
    %110 = vector.broadcast %cst_145 : f32 to vector<256x4xf32>
    %111 = arith.mulf %110, %106 : vector<256x4xf32>
    %112 = arith.subf %102, %111 : vector<256x4xf32>
    %cst_146 = arith.constant 5.000000e-01 : f32
    %113 = vector.broadcast %cst_146 : f32 to vector<256x4xf32>
    %114 = arith.mulf %113, %104 : vector<256x4xf32>
    %115 = arith.addf %100, %114 : vector<256x4xf32>
    %cst_147 = arith.constant 5.000000e-01 : f32
    %116 = vector.broadcast %cst_147 : f32 to vector<256x4xf32>
    %117 = arith.mulf %116, %106 : vector<256x4xf32>
    %118 = arith.addf %102, %117 : vector<256x4xf32>
    %119 = tpu.concatenate %109, %112, %115, %118 in 1 : vector<256x4xf32>, vector<256x4xf32>, vector<256x4xf32>, vector<256x4xf32> -> vector<256x16xf32>
    %cst_148 = arith.constant 0.000000e+00 : f32
    %120 = vector.broadcast %cst_148 : f32 to vector<256x88xf32>
    %121 = tpu.concatenate %80, %81, %119, %120 in 1 : vector<256x8xf32>, vector<256x16xf32>, vector<256x16xf32>, vector<256x88xf32> -> vector<256x128xf32>
    %c0_149 = arith.constant 0 : index
    %c0_150 = arith.constant 0 : index
    %c0_151 = arith.constant 0 : index
    %122 = vector.load %arg9[%c0_149, %c0_150, %c0_151] : memref<1x256x128xf32, #tpu.memory_space<vmem>>, vector<1x256x128xf32>
    %123 = vector.shape_cast %122 : vector<1x256x128xf32> to vector<256x128xf32>
    %124 = vector.shape_cast %121 : vector<256x128xf32> to vector<1x256x128xf32>
    tpu.vector_store %arg9[%c0_149, %c0_150, %c0_151], %124 {strides = array<i32>} : memref<1x256x128xf32, #tpu.memory_space<vmem>>, vector<1x256x128xf32>,
    return
  }
  func.func @transform_0(%arg0: i32) -> (i32, i32, i32, i32) {
    %c0_i32 = arith.constant 0 : i32
    %c0_i32_0 = arith.constant 0 : i32
    %c0_i32_1 = arith.constant 0 : i32
    %c0_i32_2 = arith.constant 0 : i32
    return %arg0, %c0_i32, %c0_i32_0, %c0_i32_1 : i32, i32, i32, i32
  }
  func.func @transform_1(%arg0: i32) -> (i32, i32) {
    %c0_i32 = arith.constant 0 : i32
    %c0_i32_0 = arith.constant 0 : i32
    %c0_i32_1 = arith.constant 0 : i32
    return %c0_i32, %c0_i32_0 : i32, i32
  }
  func.func @transform_2(%arg0: i32) -> (i32, i32) {
    %c0_i32 = arith.constant 0 : i32
    %c0_i32_0 = arith.constant 0 : i32
    %c0_i32_1 = arith.constant 0 : i32
    return %c0_i32, %c0_i32_0 : i32, i32
  }
  func.func @transform_3(%arg0: i32) -> (i32, i32) {
    %c0_i32 = arith.constant 0 : i32
    %c0_i32_0 = arith.constant 0 : i32
    %c0_i32_1 = arith.constant 0 : i32
    return %c0_i32, %c0_i32_0 : i32, i32
  }
  func.func @transform_4(%arg0: i32) -> (i32, i32) {
    %c0_i32 = arith.constant 0 : i32
    %c0_i32_0 = arith.constant 0 : i32
    %c0_i32_1 = arith.constant 0 : i32
    return %c0_i32, %c0_i32_0 : i32, i32
  }
  func.func @transform_5(%arg0: i32) -> (i32, i32) {
    %c0_i32 = arith.constant 0 : i32
    %c0_i32_0 = arith.constant 0 : i32
    %c0_i32_1 = arith.constant 0 : i32
    return %c0_i32, %c0_i32_0 : i32, i32
  }
  func.func @transform_6(%arg0: i32) -> (i32, i32) {
    %c0_i32 = arith.constant 0 : i32
    %c0_i32_0 = arith.constant 0 : i32
    %c0_i32_1 = arith.constant 0 : i32
    return %c0_i32, %c0_i32_0 : i32, i32
  }
  func.func @transform_7(%arg0: i32) -> (i32, i32) {
    %c0_i32 = arith.constant 0 : i32
    %c0_i32_0 = arith.constant 0 : i32
    %c0_i32_1 = arith.constant 0 : i32
    return %c0_i32, %c0_i32_0 : i32, i32
  }
  func.func @transform_8(%arg0: i32) -> (i32, i32, i32) {
    %c0_i32 = arith.constant 0 : i32
    %c0_i32_0 = arith.constant 0 : i32
    %c0_i32_1 = arith.constant 0 : i32
    return %arg0, %c0_i32, %c0_i32_0 : i32, i32, i32
  }
}

</mosaic_0001>

<llo_original>
// kernel: tpu_custom_call.1
$region0: #{tpu_custom_call.1}
  #allocation0 [shape = 'u32[]', space=smem, size = 0x4, offset = 0x4, fixed_abs, tag = 'smem constant byte address 0x4 - core index']
  #allocation1 [shape = 'u32[144,128]{1,0:T(1,128)}', space=vmem, size = 0x12000, scoped, tag = 'internal scratch']
  #allocation2 [shape = 'bf16[18,18,8]{2,1,0:T(8,128)(2,1)}', space=vmem, size = 0x1b000, scoped, tag = 'scratch operand']
  #allocation3 [shape = 'bf16[16,16,72]{2,1,0:T(16,128)(2,1)}', space=vmem, size = 0x10000, scoped, tag = 'scratch operand']
  %s0 = inlined_call_operand.vmem [shape: bf16[2,18,18,4], index: 0, kind: input, shape index: {}]
  %s1 = inlined_call_operand.vmem [shape: bf16[36,8], index: 1, kind: input, shape index: {}]
  %s2 = inlined_call_operand.vmem [shape: f32[1,8], index: 2, kind: input, shape index: {}]
  %s3 = inlined_call_operand.vmem [shape: bf16[72,8], index: 3, kind: input, shape index: {}]
  %s4 = inlined_call_operand.vmem [shape: f32[1,8], index: 4, kind: input, shape index: {}]
  %s5 = inlined_call_operand.vmem [shape: bf16[8,128], index: 5, kind: input, shape index: {}]
  %s6 = inlined_call_operand.vmem [shape: f32[1,128], index: 6, kind: input, shape index: {}]
  %s7 = inlined_call_operand.vmem [shape: f32[256,16], index: 7, kind: input, shape index: {}]
  %s8 = inlined_call_operand.hbm [shape: f32[2,256,128], index: 8, kind: output, shape index: {}]
  %s9 = sld [smem:[#allocation0]]
  $region65: #{tpu_custom_call.1} parent=0
    _
  %s11 = ssub.s32 1, %s9
  %s12 = scalar_select 0, %s11, %s9
  $region1: #{tpu_custom_call.1} parent=0
    #allocation4 [shape = 'u8[262144]{0}', space=vmem, size = 0x40000, scoped, tag = 'output window, operand 0']
    #allocation5 [shape = 's32[2]{0}', space=sflag, size = 0x8, scoped, tag = 'scoped memory for tpu_custom_call.1']
    %13 = vsyncpa [#allocation5], 0
    %s14 = scalar_lea.sflag [#allocation5], 1
    %15 = vsyncpa %s14, 0
    loop: start=0, step=1, limit=4
    $region2: #{tpu_custom_call.1} parent=1 // loop_pre_header
      _
    $region3: #{tpu_custom_call.1} parent=1 // loop_header
      %s17 = sphi 0, %s21
      %p18 = scmp.ge.s32.totalorder %s17, 4
      %s27 = sphi 0, %s29
      %s30 = sphi 0, %s27
      %s31 = sphi 0, %s30
      %s47 = sphi 0, %s31
      %s51 = sphi 0, %s51
      %s53 = sphi 0, %s51
      %s54 = sphi 0, %s53
      %s68 = sphi 0, %s54
      %s72 = sphi 0, %s72
      %s74 = sphi 0, %s72
      %s75 = sphi 0, %s74
      %s89 = sphi 0, %s75
      %s93 = sphi 0, %s93
      %s95 = sphi 0, %s93
      %s96 = sphi 0, %s95
      %s110 = sphi 0, %s96
      %s114 = sphi 0, %s114
      %s116 = sphi 0, %s114
      %s117 = sphi 0, %s116
      %s131 = sphi 0, %s117
      %s135 = sphi 0, %s135
      %s137 = sphi 0, %s135
      %s138 = sphi 0, %s137
      %s152 = sphi 0, %s138
      %s156 = sphi 0, %s156
      %s158 = sphi 0, %s156
      %s159 = sphi 0, %s158
      %s173 = sphi 0, %s159
      %s177 = sphi 0, %s177
      %s179 = sphi 0, %s177
      %s180 = sphi 0, %s179
      %s194 = sphi 0, %s180
      %s200 = sphi 0, %s202
      %s203 = sphi 0, %s200
      %s204 = sphi 0, %s203
      %s220 = sphi 0, %s204
    $region4: #{tpu_custom_call.1} parent=1 // loop_header_branch
      %20 = sbr.rel (%p18) target = $region8
    $region5: #{tpu_custom_call.1} parent=1 // loop_body
      %s22 = ssub.s32 %s17, 1
      %s23 = ssub.s32 %s17, 2
      %s24 = sadd.s32 %s17, 1
      %s25 = ssub.s32 %s17, %s24
      %p26 = scmp.eq.s32.totalorder %s25, 0
      %s28 = sadd.s32 %s27, 1
      %s29 = scalar_select %p26, %s27, %s28
      %p32 = pneg %p26
      %p33 = scmp.eq.s32.totalorder %s17, 1
      %p34 = por %p32, %p33
      %p35 = scmp.ne.s32.totalorder %s27, %s30
      %p36 = scmp.eq.s32.totalorder %s17, 0
      %p37 = por %p35, %p36
      %p38 = scmp.ne.s32.totalorder %s27, %s30
      %p39 = scmp.eq.s32.totalorder %s22, 1
      %p40 = por %p38, %p39
      %p41 = scmp.ne.s32.totalorder %s30, %s31
      %p42 = scmp.eq.s32.totalorder %s22, 0
      %p43 = por %p41, %p42
      %p44 = scmp.ne.s32.totalorder %s30, %s31
      %p45 = scmp.eq.s32.totalorder %s23, 1
      %p46 = por %p44, %p45
      %p48 = scmp.ne.s32.totalorder %s31, %s47
      %p49 = scmp.eq.s32.totalorder %s23, 0
      %p50 = por %p48, %p49
      %s52 = sadd.s32 %s51, 1
      %p55 = scmp.eq.s32.totalorder %s17, 1
      %p56 = scmp.ne.s32.totalorder %s51, %s53
      %p57 = scmp.eq.s32.totalorder %s17, 0
      %p58 = por %p56, %p57
      %p59 = scmp.ne.s32.totalorder %s51, %s53
      %p60 = scmp.eq.s32.totalorder %s22, 1
      %p61 = por %p59, %p60
      %p62 = scmp.ne.s32.totalorder %s53, %s54
      %p63 = scmp.eq.s32.totalorder %s22, 0
      %p64 = por %p62, %p63
      %p65 = scmp.ne.s32.totalorder %s53, %s54
      %p66 = scmp.eq.s32.totalorder %s23, 1
      %p67 = por %p65, %p66
      %p69 = scmp.ne.s32.totalorder %s54, %s68
      %p70 = scmp.eq.s32.totalorder %s23, 0
      %p71 = por %p69, %p70
      %s73 = sadd.s32 %s72, 1
      %p76 = scmp.eq.s32.totalorder %s17, 1
      %p77 = scmp.ne.s32.totalorder %s72, %s74
      %p78 = scmp.eq.s32.totalorder %s17, 0
      %p79 = por %p77, %p78
      %p80 = scmp.ne.s32.totalorder %s72, %s74
      %p81 = scmp.eq.s32.totalorder %s22, 1
      %p82 = por %p80, %p81
      %p83 = scmp.ne.s32.totalorder %s74, %s75
      %p84 = scmp.eq.s32.totalorder %s22, 0
      %p85 = por %p83, %p84
      %p86 = scmp.ne.s32.totalorder %s74, %s75
      %p87 = scmp.eq.s32.totalorder %s23, 1
      %p88 = por %p86, %p87
      %p90 = scmp.ne.s32.totalorder %s75, %s89
      %p91 = scmp.eq.s32.totalorder %s23, 0
      %p92 = por %p90, %p91
      %s94 = sadd.s32 %s93, 1
      %p97 = scmp.eq.s32.totalorder %s17, 1
      %p98 = scmp.ne.s32.totalorder %s93, %s95
      %p99 = scmp.eq.s32.totalorder %s17, 0
      %p100 = por %p98, %p99
      %p101 = scmp.ne.s32.totalorder %s93, %s95
      %p102 = scmp.eq.s32.totalorder %s22, 1
      %p103 = por %p101, %p102
      %p104 = scmp.ne.s32.totalorder %s95, %s96
      %p105 = scmp.eq.s32.totalorder %s22, 0
      %p106 = por %p104, %p105
      %p107 = scmp.ne.s32.totalorder %s95, %s96
      %p108 = scmp.eq.s32.totalorder %s23, 1
      %p109 = por %p107, %p108
      %p111 = scmp.ne.s32.totalorder %s96, %s110
      %p112 = scmp.eq.s32.totalorder %s23, 0
      %p113 = por %p111, %p112
      %s115 = sadd.s32 %s114, 1
      %p118 = scmp.eq.s32.totalorder %s17, 1
      %p119 = scmp.ne.s32.totalorder %s114, %s116
      %p120 = scmp.eq.s32.totalorder %s17, 0
      %p121 = por %p119, %p120
      %p122 = scmp.ne.s32.totalorder %s114, %s116
      %p123 = scmp.eq.s32.totalorder %s22, 1
      %p124 = por %p122, %p123
      %p125 = scmp.ne.s32.totalorder %s116, %s117
      %p126 = scmp.eq.s32.totalorder %s22, 0
      %p127 = por %p125, %p126
      %p128 = scmp.ne.s32.totalorder %s116, %s117
      %p129 = scmp.eq.s32.totalorder %s23, 1
      %p130 = por %p128, %p129
      %p132 = scmp.ne.s32.totalorder %s117, %s131
      %p133 = scmp.eq.s32.totalorder %s23, 0
      %p134 = por %p132, %p133
      %s136 = sadd.s32 %s135, 1
      %p139 = scmp.eq.s32.totalorder %s17, 1
      %p140 = scmp.ne.s32.totalorder %s135, %s137
      %p141 = scmp.eq.s32.totalorder %s17, 0
      %p142 = por %p140, %p141
      %p143 = scmp.ne.s32.totalorder %s135, %s137
      %p144 = scmp.eq.s32.totalorder %s22, 1
      %p145 = por %p143, %p144
      %p146 = scmp.ne.s32.totalorder %s137, %s138
      %p147 = scmp.eq.s32.totalorder %s22, 0
      %p148 = por %p146, %p147
      %p149 = scmp.ne.s32.totalorder %s137, %s138
      %p150 = scmp.eq.s32.totalorder %s23, 1
      %p151 = por %p149, %p150
      %p153 = scmp.ne.s32.totalorder %s138, %s152
      %p154 = scmp.eq.s32.totalorder %s23, 0
      %p155 = por %p153, %p154
      %s157 = sadd.s32 %s156, 1
      %p160 = scmp.eq.s32.totalorder %s17, 1
      %p161 = scmp.ne.s32.totalorder %s156, %s158
      %p162 = scmp.eq.s32.totalorder %s17, 0
      %p163 = por %p161, %p162
      %p164 = scmp.ne.s32.totalorder %s156, %s158
      %p165 = scmp.eq.s32.totalorder %s22, 1
      %p166 = por %p164, %p165
      %p167 = scmp.ne.s32.totalorder %s158, %s159
      %p168 = scmp.eq.s32.totalorder %s22, 0
      %p169 = por %p167, %p168
      %p170 = scmp.ne.s32.totalorder %s158, %s159
      %p171 = scmp.eq.s32.totalorder %s23, 1
      %p172 = por %p170, %p171
      %p174 = scmp.ne.s32.totalorder %s159, %s173
      %p175 = scmp.eq.s32.totalorder %s23, 0
      %p176 = por %p174, %p175
      %s178 = sadd.s32 %s177, 1
      %p181 = scmp.eq.s32.totalorder %s17, 1
      %p182 = scmp.ne.s32.totalorder %s177, %s179
      %p183 = scmp.eq.s32.totalorder %s17, 0
      %p184 = por %p182, %p183
      %p185 = scmp.ne.s32.totalorder %s177, %s179
      %p186 = scmp.eq.s32.totalorder %s22, 1
      %p187 = por %p185, %p186
      %p188 = scmp.ne.s32.totalorder %s179, %s180
      %p189 = scmp.eq.s32.totalorder %s22, 0
      %p190 = por %p188, %p189
      %p191 = scmp.ne.s32.totalorder %s179, %s180
      %p192 = scmp.eq.s32.totalorder %s23, 1
      %p193 = por %p191, %p192
      %p195 = scmp.ne.s32.totalorder %s180, %s194
      %p196 = scmp.eq.s32.totalorder %s23, 0
      %p197 = por %p195, %p196
      %s198 = ssub.s32 %s17, %s24
      %p199 = scmp.eq.s32.totalorder %s198, 0
      %s201 = sadd.s32 %s200, 1
      %s202 = scalar_select %p199, %s200, %s201
      %p205 = pneg %p199
      %p206 = scmp.eq.s32.totalorder %s17, 1
      %p207 = por %p205, %p206
      %p208 = scmp.ne.s32.totalorder %s200, %s203
      %p209 = scmp.eq.s32.totalorder %s17, 0
      %p210 = por %p208, %p209
      %p211 = scmp.ne.s32.totalorder %s200, %s203
      %p212 = scmp.eq.s32.totalorder %s22, 1
      %p213 = por %p211, %p212
      %p214 = scmp.ne.s32.totalorder %s203, %s204
      %p215 = scmp.eq.s32.totalorder %s22, 0
      %p216 = por %p214, %p215
      %p217 = scmp.ne.s32.totalorder %s203, %s204
      %p218 = scmp.eq.s32.totalorder %s23, 1
      %p219 = por %p217, %p218
      %p221 = scmp.ne.s32.totalorder %s204, %s220
      %p222 = scmp.eq.s32.totalorder %s23, 0
      %p223 = por %p221, %p222
      %p224 = scmp.le.s32.totalorder 1, %s17
      %p225 = scmp.lt.s32.totalorder %s17, 3
      %p226 = pnand %p224, %p225
      %p227 = pneg %p226
      // Predicated region
      $region9: #{tpu_custom_call.1} parent=5 // pred_check
        _
      $region10: #{tpu_custom_call.1} parent=5 // pred_check_branch
        %229 = sbr.rel (%p226) target = $region12
      $region11: #{tpu_custom_call.1} parent=5 // pred_region
        %s230 = ssub.s32 %s17, 1
        // Predicated region
        $region13: #{tpu_custom_call.1} parent=11 // pred_check
          %p231 = pneg %p64
        $region14: #{tpu_custom_call.1} parent=11 // pred_check_branch
          %233 = sbr.rel (%p231) target = $region16
        $region15: #{tpu_custom_call.1} parent=11 // pred_region
          _
        $region16: #{tpu_custom_call.1} parent=11 // pred_fallthru
          _
        // Predicated region
        $region17: #{tpu_custom_call.1} parent=11 // pred_check
          %p234 = pneg %p85
        $region18: #{tpu_custom_call.1} parent=11 // pred_check_branch
          %236 = sbr.rel (%p234) target = $region20
        $region19: #{tpu_custom_call.1} parent=11 // pred_region
          _
        $region20: #{tpu_custom_call.1} parent=11 // pred_fallthru
          _
        // Predicated region
        $region21: #{tpu_custom_call.1} parent=11 // pred_check
          %p237 = pneg %p106
        $region22: #{tpu_custom_call.1} parent=11 // pred_check_branch
          %239 = sbr.rel (%p237) target = $region24
        $region23: #{tpu_custom_call.1} parent=11 // pred_region
          _
        $region24: #{tpu_custom_call.1} parent=11 // pred_fallthru
          _
        // Predicated region
        $region25: #{tpu_custom_call.1} parent=11 // pred_check
          %p240 = pneg %p127
        $region26: #{tpu_custom_call.1} parent=11 // pred_check_branch
          %242 = sbr.rel (%p240) target = $region28
        $region27: #{tpu_custom_call.1} parent=11 // pred_region
          _
        $region28: #{tpu_custom_call.1} parent=11 // pred_fallthru
          _
        // Predicated region
        $region29: #{tpu_custom_call.1} parent=11 // pred_check
          %p243 = pneg %p148
        $region30: #{tpu_custom_call.1} parent=11 // pred_check_branch
          %245 = sbr.rel (%p243) target = $region32
        $region31: #{tpu_custom_call.1} parent=11 // pred_region
          _
        $region32: #{tpu_custom_call.1} parent=11 // pred_fallthru
          _
        // Predicated region
        $region33: #{tpu_custom_call.1} parent=11 // pred_check
          %p246 = pneg %p169
        $region34: #{tpu_custom_call.1} parent=11 // pred_check_branch
          %248 = sbr.rel (%p246) target = $region36
        $region35: #{tpu_custom_call.1} parent=11 // pred_region
          _
        $region36: #{tpu_custom_call.1} parent=11 // pred_fallthru
          _
        // Predicated region
        $region37: #{tpu_custom_call.1} parent=11 // pred_check
          %p249 = pneg %p190
        $region38: #{tpu_custom_call.1} parent=11 // pred_check_branch
          %251 = sbr.rel (%p249) target = $region40
        $region39: #{tpu_custom_call.1} parent=11 // pred_region
          _
        $region40: #{tpu_custom_call.1} parent=11 // pred_fallthru
          _
      $region12: #{tpu_custom_call.1} parent=5 // pred_fallthru
        _
      %p252 = scmp.lt.s32.totalorder %s17, 2
      // Predicated region
      $region41: #{tpu_custom_call.1} parent=5 // pred_check
        %p253 = pneg %p252
      $region42: #{tpu_custom_call.1} parent=5 // pred_check_branch
        %255 = sbr.rel (%p253) target = $region44
      $region43: #{tpu_custom_call.1} parent=5 // pred_region
        // Predicated region
        $region45: #{tpu_custom_call.1} parent=43 // pred_check
          %p256 = pneg %p37
        $region46: #{tpu_custom_call.1} parent=43 // pred_check_branch
          %258 = sbr.rel (%p256) target = $region48
        $region47: #{tpu_custom_call.1} parent=43 // pred_region
          %p259 = scmp.lt.s32.totalorder %s17, 1
          %s260 = scalar_select %p259, %s17, 1
          %s261 = smul.addr %s260, 54
          %s262 = smul.addr %s261, 4
          %s263 = scalar_lea.vmem %s0, %s262
        $region48: #{tpu_custom_call.1} parent=43 // pred_fallthru
          _
      $region44: #{tpu_custom_call.1} parent=5 // pred_fallthru
        _
      %p264 = scmp.le.s32.totalorder 1, %s17
      %p265 = scmp.lt.s32.totalorder %s17, 3
      %p266 = pnand %p264, %p265
      %p267 = pneg %p266
      // Predicated region
      $region49: #{tpu_custom_call.1} parent=5 // pred_check
        _
      $region50: #{tpu_custom_call.1} parent=5 // pred_check_branch
        %269 = sbr.rel (%p266) target = $region52
      $region51: #{tpu_custom_call.1} parent=5 // pred_region
        %s270 = ssub.s32 %s17, 1
        %p271 = scmp.lt.s32.totalorder %s22, 1
        %s272 = scalar_select %p271, %s22, 1
        %s273 = smul.addr %s272, 54
        %s274 = smul.addr %s273, 4
        %s275 = scalar_lea.vmem %s0, %s274
        %p276 = pneg %p43
        %p277 = pneg %p40
        %p278 = pneg %p64
        %p279 = pneg %p61
        %p280 = pneg %p85
        %p281 = pneg %p82
        %p282 = pneg %p106
        %p283 = pneg %p103
        %p284 = pneg %p127
        %p285 = pneg %p124
        %p286 = pneg %p148
        %p287 = pneg %p145
        %p288 = pneg %p169
        %p289 = pneg %p166
        %p290 = pneg %p190
        %p291 = pneg %p187
        %p292 = pneg %p216
        %p293 = pneg %p213
        %s294 = sand.u32 %s203, 1
        %s295 = scalar_lea.sflag [#allocation5], %s294
        %s296 = sand.u32 %s203, 1
        %s297 = smul.addr %s296, 256
        %s298 = scalar_lea.vmem [#allocation4], %s297
        %p299 = scmp.lt.s32.totalorder %s22, 1
        %s300 = scalar_select %p299, %s22, 1
        %s301 = smul.addr %s300, 54
        %s302 = smul.addr %s301, 4
        %s303 = scalar_lea.vmem %s0, %s302
        %vm305 = vcmask 60416
        %306 = vst.msk [vmem:[#allocation2] sm:$0xf] %vm305, 0
        %307 = vst.msk [vmem:[#allocation2 + $0x4] sm:$0xf] %vm305, 0
        %vm308 = vcmask 57344
        %309 = vst.msk [vmem:[#allocation2 + $0x8] sm:$0x1] %vm308, 0
        %s310 = scalar_lea.vmem [#allocation2], 204
        %311 = vst.msk [vmem:[%s310] sm:$0xf] %vm305, 0
        %312 = vst.msk [vmem:[%s310 + $0x4] sm:$0xf] %vm305, 0
        %313 = vst.msk [vmem:[%s310 + $0x8] sm:$0x1] %vm308, 0
        %vm314 = vcmask 57344
        %vm315 = vsmask.f32 256
        %vm316 = vmand %vm314, %vm315
        %v317 = vld [vmem:[#allocation2] sm:$0x1]
        %v318 = vsel %vm316, 0, %v317
        %319 = vst [vmem:[#allocation2] sm:$0x1] %v318
        %v320 = vld [vmem:[#allocation2 + $0xc] sm:$0x1]
        %v321 = vsel %vm316, 0, %v320
        %322 = vst [vmem:[#allocation2 + $0xc] sm:$0x1] %v321
        %v323 = vld [vmem:[#allocation2 + $0x18] sm:$0x1]
        %v324 = vsel %vm316, 0, %v323
        %325 = vst [vmem:[#allocation2 + $0x18] sm:$0x1] %v324
        %v326 = vld [vmem:[#allocation2 + $0x24] sm:$0x1]
        %v327 = vsel %vm316, 0, %v326
        %328 = vst [vmem:[#allocation2 + $0x24] sm:$0x1] %v327
        %v329 = vld [vmem:[#allocation2 + $0x30] sm:$0x1]
        %v330 = vsel %vm316, 0, %v329
        %331 = vst [vmem:[#allocation2 + $0x30] sm:$0x1] %v330
        %v332 = vld [vmem:[#allocation2 + $0x3c] sm:$0x1]
        %v333 = vsel %vm316, 0, %v332
        %334 = vst [vmem:[#allocation2 + $0x3c] sm:$0x1] %v333
        %v335 = vld [vmem:[#allocation2 + $0x48] sm:$0x1]
        %v336 = vsel %vm316, 0, %v335
        %337 = vst [vmem:[#allocation2 + $0x48] sm:$0x1] %v336
        %v338 = vld [vmem:[#allocation2 + $0x54] sm:$0x1]
        %v339 = vsel %vm316, 0, %v338
        %340 = vst [vmem:[#allocation2 + $0x54] sm:$0x1] %v339
        %v341 = vld [vmem:[#allocation2 + $0x60] sm:$0x1]
        %v342 = vsel %vm316, 0, %v341
        %343 = vst [vmem:[#allocation2 + $0x60] sm:$0x1] %v342
        %v344 = vld [vmem:[#allocation2 + $0x6c] sm:$0x1]
        %v345 = vsel %vm316, 0, %v344
        %346 = vst [vmem:[#allocation2 + $0x6c] sm:$0x1] %v345
        %v347 = vld [vmem:[#allocation2 + $0x78] sm:$0x1]
        %v348 = vsel %vm316, 0, %v347
        %349 = vst [vmem:[#allocation2 + $0x78] sm:$0x1] %v348
        %v350 = vld [vmem:[#allocation2 + $0x84] sm:$0x1]
        %v351 = vsel %vm316, 0, %v350
        %352 = vst [vmem:[#allocation2 + $0x84] sm:$0x1] %v351
        %v353 = vld [vmem:[#allocation2 + $0x90] sm:$0x1]
        %v354 = vsel %vm316, 0, %v353
        %355 = vst [vmem:[#allocation2 + $0x90] sm:$0x1] %v354
        %v356 = vld [vmem:[#allocation2 + $0x9c] sm:$0x1]
        %v357 = vsel %vm316, 0, %v356
        %358 = vst [vmem:[#allocation2 + $0x9c] sm:$0x1] %v357
        %v359 = vld [vmem:[#allocation2 + $0xa8] sm:$0x1]
        %v360 = vsel %vm316, 0, %v359
        %361 = vst [vmem:[#allocation2 + $0xa8] sm:$0x1] %v360
        %v362 = vld [vmem:[#allocation2 + $0xb4] sm:$0x1]
        %v363 = vsel %vm316, 0, %v362
        %364 = vst [vmem:[#allocation2 + $0xb4] sm:$0x1] %v363
        %v365 = vld [vmem:[#allocation2 + $0xc0] sm:$0x1]
        %v366 = vsel %vm316, 0, %v365
        %367 = vst [vmem:[#allocation2 + $0xc0] sm:$0x1] %v366
        %v368 = vld [vmem:[#allocation2 + $0xcc] sm:$0x1]
        %v369 = vsel %vm316, 0, %v368
        %370 = vst [vmem:[#allocation2 + $0xcc] sm:$0x1] %v369
        %vm371 = vsmask.f32 7938
        %vm372 = vmand %vm314, %vm371
        %v373 = vld [vmem:[#allocation2 + $0x8] sm:$0x1]
        %v374 = vsel %vm372, 0, %v373
        %375 = vst [vmem:[#allocation2 + $0x8] sm:$0x1] %v374
        %v376 = vld [vmem:[#allocation2 + $0x14] sm:$0x1]
        %v377 = vsel %vm372, 0, %v376
        %378 = vst [vmem:[#allocation2 + $0x14] sm:$0x1] %v377
        %v379 = vld [vmem:[#allocation2 + $0x20] sm:$0x1]
        %v380 = vsel %vm372, 0, %v379
        %381 = vst [vmem:[#allocation2 + $0x20] sm:$0x1] %v380
        %v382 = vld [vmem:[#allocation2 + $0x2c] sm:$0x1]
        %v383 = vsel %vm372, 0, %v382
        %384 = vst [vmem:[#allocation2 + $0x2c] sm:$0x1] %v383
        %v385 = vld [vmem:[#allocation2 + $0x38] sm:$0x1]
        %v386 = vsel %vm372, 0, %v385
        %387 = vst [vmem:[#allocation2 + $0x38] sm:$0x1] %v386
        %v388 = vld [vmem:[#allocation2 + $0x44] sm:$0x1]
        %v389 = vsel %vm372, 0, %v388
        %390 = vst [vmem:[#allocation2 + $0x44] sm:$0x1] %v389
        %v391 = vld [vmem:[#allocation2 + $0x50] sm:$0x1]
        %v392 = vsel %vm372, 0, %v391
        %393 = vst [vmem:[#allocation2 + $0x50] sm:$0x1] %v392
        %v394 = vld [vmem:[#allocation2 + $0x5c] sm:$0x1]
        %v395 = vsel %vm372, 0, %v394
        %396 = vst [vmem:[#allocation2 + $0x5c] sm:$0x1] %v395
        %v397 = vld [vmem:[#allocation2 + $0x68] sm:$0x1]
        %v398 = vsel %vm372, 0, %v397
        %399 = vst [vmem:[#allocation2 + $0x68] sm:$0x1] %v398
        %v400 = vld [vmem:[#allocation2 + $0x74] sm:$0x1]
        %v401 = vsel %vm372, 0, %v400
        %402 = vst [vmem:[#allocation2 + $0x74] sm:$0x1] %v401
        %v403 = vld [vmem:[#allocation2 + $0x80] sm:$0x1]
        %v404 = vsel %vm372, 0, %v403
        %405 = vst [vmem:[#allocation2 + $0x80] sm:$0x1] %v404
        %v406 = vld [vmem:[#allocation2 + $0x8c] sm:$0x1]
        %v407 = vsel %vm372, 0, %v406
        %408 = vst [vmem:[#allocation2 + $0x8c] sm:$0x1] %v407
        %v409 = vld [vmem:[#allocation2 + $0x98] sm:$0x1]
        %v410 = vsel %vm372, 0, %v409
        %411 = vst [vmem:[#allocation2 + $0x98] sm:$0x1] %v410
        %v412 = vld [vmem:[#allocation2 + $0xa4] sm:$0x1]
        %v413 = vsel %vm372, 0, %v412
        %414 = vst [vmem:[#allocation2 + $0xa4] sm:$0x1] %v413
        %v415 = vld [vmem:[#allocation2 + $0xb0] sm:$0x1]
        %v416 = vsel %vm372, 0, %v415
        %417 = vst [vmem:[#allocation2 + $0xb0] sm:$0x1] %v416
        %v418 = vld [vmem:[#allocation2 + $0xbc] sm:$0x1]
        %v419 = vsel %vm372, 0, %v418
        %420 = vst [vmem:[#allocation2 + $0xbc] sm:$0x1] %v419
        %v421 = vld [vmem:[#allocation2 + $0xc8] sm:$0x1]
        %v422 = vsel %vm372, 0, %v421
        %423 = vst [vmem:[#allocation2 + $0xc8] sm:$0x1] %v422
        %v424 = vld [vmem:[#allocation2 + $0xd4] sm:$0x1]
        %v425 = vsel %vm372, 0, %v424
        %426 = vst [vmem:[#allocation2 + $0xd4] sm:$0x1] %v425
        %v427 = vld [vmem:[%s303] sm:$0xf]
        %v428 = vld [vmem:[%s303 + $0x4] sm:$0xf]
        %v429 = vld [vmem:[%s303 + $0xc] sm:$0xf]
        %v430 = vld [vmem:[%s303 + $0x10] sm:$0xf]
        %v431 = vld [vmem:[%s303 + $0x18] sm:$0xf]
        %v432 = vld [vmem:[%s303 + $0x1c] sm:$0xf]
        %v433 = vld [vmem:[%s303 + $0x24] sm:$0xf]
        %v434 = vld [vmem:[%s303 + $0x28] sm:$0xf]
        %v435 = vld [vmem:[%s303 + $0x30] sm:$0xf]
        %v436 = vld [vmem:[%s303 + $0x34] sm:$0xf]
        %v437 = vld [vmem:[%s303 + $0x3c] sm:$0xf]
        %v438 = vld [vmem:[%s303 + $0x40] sm:$0xf]
        %v439 = vld [vmem:[%s303 + $0x48] sm:$0xf]
        %v440 = vld [vmem:[%s303 + $0x4c] sm:$0xf]
        %v441 = vld [vmem:[%s303 + $0x54] sm:$0xf]
        %v442 = vld [vmem:[%s303 + $0x58] sm:$0xf]
        %v443 = vld [vmem:[%s303 + $0x60] sm:$0xf]
        %v444 = vld [vmem:[%s303 + $0x64] sm:$0xf]
        %v445 = vld [vmem:[%s303 + $0x6c] sm:$0xf]
        %v446 = vld [vmem:[%s303 + $0x70] sm:$0xf]
        %v447 = vld [vmem:[%s303 + $0x78] sm:$0xf]
        %v448 = vld [vmem:[%s303 + $0x7c] sm:$0xf]
        %v449 = vld [vmem:[%s303 + $0x84] sm:$0xf]
        %v450 = vld [vmem:[%s303 + $0x88] sm:$0xf]
        %v451 = vld [vmem:[%s303 + $0x90] sm:$0xf]
        %v452 = vld [vmem:[%s303 + $0x94] sm:$0xf]
        %v453 = vld [vmem:[%s303 + $0x9c] sm:$0xf]
        %v454 = vld [vmem:[%s303 + $0xa0] sm:$0xf]
        %v455 = vld [vmem:[%s303 + $0xa8] sm:$0xf]
        %v456 = vld [vmem:[%s303 + $0xac] sm:$0xf]
        %v457 = vld [vmem:[%s303 + $0xb4] sm:$0xf]
        %v458 = vld [vmem:[%s303 + $0xb8] sm:$0xf]
        %v491 = vunpack.c.l.b16 %v427
        %v492 = vunpack.c.l.b16 %v428
        %v493 = vunpack.c.l.b16 %v429
        %v494 = vunpack.c.l.b16 %v430
        %v495 = vunpack.c.l.b16 %v431
        %v496 = vunpack.c.l.b16 %v432
        %v497 = vunpack.c.l.b16 %v433
        %v498 = vunpack.c.l.b16 %v434
        %v499 = vunpack.c.l.b16 %v435
        %v500 = vunpack.c.l.b16 %v436
        %v501 = vunpack.c.l.b16 %v437
        %v502 = vunpack.c.l.b16 %v438
        %v503 = vunpack.c.l.b16 %v439
        %v504 = vunpack.c.l.b16 %v440
        %v505 = vunpack.c.l.b16 %v441
        %v506 = vunpack.c.l.b16 %v442
        %v507 = vunpack.c.l.b16 %v443
        %v508 = vunpack.c.l.b16 %v444
        %v509 = vunpack.c.l.b16 %v445
        %v510 = vunpack.c.l.b16 %v446
        %v511 = vunpack.c.l.b16 %v447
        %v512 = vunpack.c.l.b16 %v448
        %v513 = vunpack.c.l.b16 %v449
        %v514 = vunpack.c.l.b16 %v450
        %v515 = vunpack.c.l.b16 %v451
        %v516 = vunpack.c.l.b16 %v452
        %v517 = vunpack.c.l.b16 %v453
        %v518 = vunpack.c.l.b16 %v454
        %v519 = vunpack.c.l.b16 %v455
        %v520 = vunpack.c.l.b16 %v456
        %v521 = vunpack.c.l.b16 %v457
        %v522 = vunpack.c.l.b16 %v458
        %v523 = vpack.c.b16 %v492, %v491
        %v524 = vpack.c.b16 %v494, %v493
        %v525 = vpack.c.b16 %v496, %v495
        %v526 = vpack.c.b16 %v498, %v497
        %v527 = vpack.c.b16 %v500, %v499
        %v528 = vpack.c.b16 %v502, %v501
        %v529 = vpack.c.b16 %v504, %v503
        %v530 = vpack.c.b16 %v506, %v505
        %v531 = vpack.c.b16 %v508, %v507
        %v532 = vpack.c.b16 %v510, %v509
        %v533 = vpack.c.b16 %v512, %v511
        %v534 = vpack.c.b16 %v514, %v513
        %v535 = vpack.c.b16 %v516, %v515
        %v536 = vpack.c.b16 %v518, %v517
        %v537 = vpack.c.b16 %v520, %v519
        %v538 = vpack.c.b16 %v522, %v521
        %vm555 = vcmask 31744
        %556 = vst.msk [vmem:[#allocation3] sm:$0xff] %vm555, %v523
        %557 = vst.msk [vmem:[#allocation3 + $0x8] sm:$0xff] %vm555, %v524
        %558 = vst.msk [vmem:[#allocation3 + $0x10] sm:$0xff] %vm555, %v525
        %559 = vst.msk [vmem:[#allocation3 + $0x18] sm:$0xff] %vm555, %v526
        %560 = vst.msk [vmem:[#allocation3 + $0x20] sm:$0xff] %vm555, %v527
        %561 = vst.msk [vmem:[#allocation3 + $0x28] sm:$0xff] %vm555, %v528
        %562 = vst.msk [vmem:[#allocation3 + $0x30] sm:$0xff] %vm555, %v529
        %563 = vst.msk [vmem:[#allocation3 + $0x38] sm:$0xff] %vm555, %v530
        %564 = vst.msk [vmem:[#allocation3 + $0x40] sm:$0xff] %vm555, %v531
        %565 = vst.msk [vmem:[#allocation3 + $0x48] sm:$0xff] %vm555, %v532
        %566 = vst.msk [vmem:[#allocation3 + $0x50] sm:$0xff] %vm555, %v533
        %567 = vst.msk [vmem:[#allocation3 + $0x58] sm:$0xff] %vm555, %v534
        %568 = vst.msk [vmem:[#allocation3 + $0x60] sm:$0xff] %vm555, %v535
        %569 = vst.msk [vmem:[#allocation3 + $0x68] sm:$0xff] %vm555, %v536
        %570 = vst.msk [vmem:[#allocation3 + $0x70] sm:$0xff] %vm555, %v537
        %571 = vst.msk [vmem:[#allocation3 + $0x78] sm:$0xff] %vm555, %v538
        %v572 = vld [vmem:[%s303] sm:$0xf]
        %v573 = vld [vmem:[%s303 + $0x4] sm:$0xf]
        %v574 = vld [vmem:[%s303 + $0x8] sm:$0x1]
        %v575 = vld [vmem:[%s303 + $0xc] sm:$0xf]
        %v576 = vld [vmem:[%s303 + $0x10] sm:$0xf]
        %v577 = vld [vmem:[%s303 + $0x14] sm:$0x1]
        %v578 = vld [vmem:[%s303 + $0x18] sm:$0xf]
        %v579 = vld [vmem:[%s303 + $0x1c] sm:$0xf]
        %v580 = vld [vmem:[%s303 + $0x20] sm:$0x1]
        %v581 = vld [vmem:[%s303 + $0x24] sm:$0xf]
        %v582 = vld [vmem:[%s303 + $0x28] sm:$0xf]
        %v583 = vld [vmem:[%s303 + $0x2c] sm:$0x1]
        %v584 = vld [vmem:[%s303 + $0x30] sm:$0xf]
        %v585 = vld [vmem:[%s303 + $0x34] sm:$0xf]
        %v586 = vld [vmem:[%s303 + $0x38] sm:$0x1]
        %v587 = vld [vmem:[%s303 + $0x3c] sm:$0xf]
        %v588 = vld [vmem:[%s303 + $0x40] sm:$0xf]
        %v589 = vld [vmem:[%s303 + $0x44] sm:$0x1]
        %v590 = vld [vmem:[%s303 + $0x48] sm:$0xf]
        %v591 = vld [vmem:[%s303 + $0x4c] sm:$0xf]
        %v592 = vld [vmem:[%s303 + $0x50] sm:$0x1]
        %v593 = vld [vmem:[%s303 + $0x54] sm:$0xf]
        %v594 = vld [vmem:[%s303 + $0x58] sm:$0xf]
        %v595 = vld [vmem:[%s303 + $0x5c] sm:$0x1]
        %v596 = vld [vmem:[%s303 + $0x60] sm:$0xf]
        %v597 = vld [vmem:[%s303 + $0x64] sm:$0xf]
        %v598 = vld [vmem:[%s303 + $0x68] sm:$0x1]
        %v599 = vld [vmem:[%s303 + $0x6c] sm:$0xf]
        %v600 = vld [vmem:[%s303 + $0x70] sm:$0xf]
        %v601 = vld [vmem:[%s303 + $0x74] sm:$0x1]
        %v602 = vld [vmem:[%s303 + $0x78] sm:$0xf]
        %v603 = vld [vmem:[%s303 + $0x7c] sm:$0xf]
        %v604 = vld [vmem:[%s303 + $0x80] sm:$0x1]
        %v605 = vld [vmem:[%s303 + $0x84] sm:$0xf]
        %v606 = vld [vmem:[%s303 + $0x88] sm:$0xf]
        %v607 = vld [vmem:[%s303 + $0x8c] sm:$0x1]
        %v608 = vld [vmem:[%s303 + $0x90] sm:$0xf]
        %v609 = vld [vmem:[%s303 + $0x94] sm:$0xf]
        %v610 = vld [vmem:[%s303 + $0x98] sm:$0x1]
        %v611 = vld [vmem:[%s303 + $0x9c] sm:$0xf]
        %v612 = vld [vmem:[%s303 + $0xa0] sm:$0xf]
        %v613 = vld [vmem:[%s303 + $0xa4] sm:$0x1]
        %v614 = vld [vmem:[%s303 + $0xa8] sm:$0xf]
        %v615 = vld [vmem:[%s303 + $0xac] sm:$0xf]
        %v616 = vld [vmem:[%s303 + $0xb0] sm:$0x1]
        %v617 = vld [vmem:[%s303 + $0xb4] sm:$0xf]
        %v618 = vld [vmem:[%s303 + $0xb8] sm:$0xf]
        %v619 = vld [vmem:[%s303 + $0xbc] sm:$0x1]
        %v668 = vunpack.c.l.b16 %v572
        %v669 = vunpack.c.l.b16 %v573
        %v670 = vunpack.c.l.b16 %v574
        %v671 = vunpack.c.l.b16 %v575
        %v672 = vunpack.c.l.b16 %v576
        %v673 = vunpack.c.l.b16 %v577
        %v674 = vunpack.c.l.b16 %v578
        %v675 = vunpack.c.l.b16 %v579
        %v676 = vunpack.c.l.b16 %v580
        %v677 = vunpack.c.l.b16 %v581
        %v678 = vunpack.c.l.b16 %v582
        %v679 = vunpack.c.l.b16 %v583
        %v680 = vunpack.c.l.b16 %v584
        %v681 = vunpack.c.l.b16 %v585
        %v682 = vunpack.c.l.b16 %v586
        %v683 = vunpack.c.l.b16 %v587
        %v684 = vunpack.c.l.b16 %v588
        %v685 = vunpack.c.l.b16 %v589
        %v686 = vunpack.c.l.b16 %v590
        %v687 = vunpack.c.l.b16 %v591
        %v688 = vunpack.c.l.b16 %v592
        %v689 = vunpack.c.l.b16 %v593
        %v690 = vunpack.c.l.b16 %v594
        %v691 = vunpack.c.l.b16 %v595
        %v692 = vunpack.c.l.b16 %v596
        %v693 = vunpack.c.l.b16 %v597
        %v694 = vunpack.c.l.b16 %v598
        %v695 = vunpack.c.l.b16 %v599
        %v696 = vunpack.c.l.b16 %v600
        %v697 = vunpack.c.l.b16 %v601
        %v698 = vunpack.c.l.b16 %v602
        %v699 = vunpack.c.l.b16 %v603
        %v700 = vunpack.c.l.b16 %v604
        %v701 = vunpack.c.l.b16 %v605
        %v702 = vunpack.c.l.b16 %v606
        %v703 = vunpack.c.l.b16 %v607
        %v704 = vunpack.c.l.b16 %v608
        %v705 = vunpack.c.l.b16 %v609
        %v706 = vunpack.c.l.b16 %v610
        %v707 = vunpack.c.l.b16 %v611
        %v708 = vunpack.c.l.b16 %v612
        %v709 = vunpack.c.l.b16 %v613
        %v710 = vunpack.c.l.b16 %v614
        %v711 = vunpack.c.l.b16 %v615
        %v712 = vunpack.c.l.b16 %v616
        %v713 = vunpack.c.l.b16 %v617
        %v714 = vunpack.c.l.b16 %v618
        %v715 = vunpack.c.l.b16 %v619
        %v716 = vpack.c.b16 %v669, %v668
        %v717 = vpack.c.b16 %v670, %v670
        %v718 = vpack.c.b16 %v672, %v671
        %v719 = vpack.c.b16 %v673, %v673
        %v720 = vpack.c.b16 %v675, %v674
        %v721 = vpack.c.b16 %v676, %v676
        %v722 = vpack.c.b16 %v678, %v677
        %v723 = vpack.c.b16 %v679, %v679
        %v724 = vpack.c.b16 %v681, %v680
        %v725 = vpack.c.b16 %v682, %v682
        %v726 = vpack.c.b16 %v684, %v683
        %v727 = vpack.c.b16 %v685, %v685
        %v728 = vpack.c.b16 %v687, %v686
        %v729 = vpack.c.b16 %v688, %v688
        %v730 = vpack.c.b16 %v690, %v689
        %v731 = vpack.c.b16 %v691, %v691
        %v732 = vpack.c.b16 %v693, %v692
        %v733 = vpack.c.b16 %v694, %v694
        %v734 = vpack.c.b16 %v696, %v695
        %v735 = vpack.c.b16 %v697, %v697
        %v736 = vpack.c.b16 %v699, %v698
        %v737 = vpack.c.b16 %v700, %v700
        %v738 = vpack.c.b16 %v702, %v701
        %v739 = vpack.c.b16 %v703, %v703
        %v740 = vpack.c.b16 %v705, %v704
        %v741 = vpack.c.b16 %v706, %v706
        %v742 = vpack.c.b16 %v708, %v707
        %v743 = vpack.c.b16 %v709, %v709
        %v744 = vpack.c.b16 %v711, %v710
        %v745 = vpack.c.b16 %v712, %v712
        %v746 = vpack.c.b16 %v714, %v713
        %v747 = vpack.c.b16 %v715, %v715
        %vm748 = vsmask.f32 7424
        %v750 = vshrl.u32 %v716, 16
        %v752 = vshll.u32 %v716, 16
        %v754 = vrot.slane %v752, 1
        %v755 = vor.u32 %v750, %v754
        %v757 = vshll.u32 %v717, 16
        %v759 = vrot.slane %v757, 1
        %v760 = vsel %vm748, %v755, %v759
        %v762 = vshrl.u32 %v718, 16
        %v764 = vshll.u32 %v718, 16
        %v766 = vrot.slane %v764, 1
        %v767 = vor.u32 %v762, %v766
        %v769 = vshll.u32 %v719, 16
        %v771 = vrot.slane %v769, 1
        %v772 = vsel %vm748, %v767, %v771
        %v774 = vshrl.u32 %v720, 16
        %v776 = vshll.u32 %v720, 16
        %v778 = vrot.slane %v776, 1
        %v779 = vor.u32 %v774, %v778
        %v781 = vshll.u32 %v721, 16
        %v783 = vrot.slane %v781, 1
        %v784 = vsel %vm748, %v779, %v783
        %v786 = vshrl.u32 %v722, 16
        %v788 = vshll.u32 %v722, 16
        %v790 = vrot.slane %v788, 1
        %v791 = vor.u32 %v786, %v790
        %v793 = vshll.u32 %v723, 16
        %v795 = vrot.slane %v793, 1
        %v796 = vsel %vm748, %v791, %v795
        %v798 = vshrl.u32 %v724, 16
        %v800 = vshll.u32 %v724, 16
        %v802 = vrot.slane %v800, 1
        %v803 = vor.u32 %v798, %v802
        %v805 = vshll.u32 %v725, 16
        %v807 = vrot.slane %v805, 1
        %v808 = vsel %vm748, %v803, %v807
        %v810 = vshrl.u32 %v726, 16
        %v812 = vshll.u32 %v726, 16
        %v814 = vrot.slane %v812, 1
        %v815 = vor.u32 %v810, %v814
        %v817 = vshll.u32 %v727, 16
        %v819 = vrot.slane %v817, 1
        %v820 = vsel %vm748, %v815, %v819
        %v822 = vshrl.u32 %v728, 16
        %v824 = vshll.u32 %v728, 16
        %v826 = vrot.slane %v824, 1
        %v827 = vor.u32 %v822, %v826
        %v829 = vshll.u32 %v729, 16
        %v831 = vrot.slane %v829, 1
        %v832 = vsel %vm748, %v827, %v831
        %v834 = vshrl.u32 %v730, 16
        %v836 = vshll.u32 %v730, 16
        %v838 = vrot.slane %v836, 1
        %v839 = vor.u32 %v834, %v838
        %v841 = vshll.u32 %v731, 16
        %v843 = vrot.slane %v841, 1
        %v844 = vsel %vm748, %v839, %v843
        %v846 = vshrl.u32 %v732, 16
        %v848 = vshll.u32 %v732, 16
        %v850 = vrot.slane %v848, 1
        %v851 = vor.u32 %v846, %v850
        %v853 = vshll.u32 %v733, 16
        %v855 = vrot.slane %v853, 1
        %v856 = vsel %vm748, %v851, %v855
        %v858 = vshrl.u32 %v734, 16
        %v860 = vshll.u32 %v734, 16
        %v862 = vrot.slane %v860, 1
        %v863 = vor.u32 %v858, %v862
        %v865 = vshll.u32 %v735, 16
        %v867 = vrot.slane %v865, 1
        %v868 = vsel %vm748, %v863, %v867
        %v870 = vshrl.u32 %v736, 16
        %v872 = vshll.u32 %v736, 16
        %v874 = vrot.slane %v872, 1
        %v875 = vor.u32 %v870, %v874
        %v877 = vshll.u32 %v737, 16
        %v879 = vrot.slane %v877, 1
        %v880 = vsel %vm748, %v875, %v879
        %v882 = vshrl.u32 %v738, 16
        %v884 = vshll.u32 %v738, 16
        %v886 = vrot.slane %v884, 1
        %v887 = vor.u32 %v882, %v886
        %v889 = vshll.u32 %v739, 16
        %v891 = vrot.slane %v889, 1
        %v892 = vsel %vm748, %v887, %v891
        %v894 = vshrl.u32 %v740, 16
        %v896 = vshll.u32 %v740, 16
        %v898 = vrot.slane %v896, 1
        %v899 = vor.u32 %v894, %v898
        %v901 = vshll.u32 %v741, 16
        %v903 = vrot.slane %v901, 1
        %v904 = vsel %vm748, %v899, %v903
        %v906 = vshrl.u32 %v742, 16
        %v908 = vshll.u32 %v742, 16
        %v910 = vrot.slane %v908, 1
        %v911 = vor.u32 %v906, %v910
        %v913 = vshll.u32 %v743, 16
        %v915 = vrot.slane %v913, 1
        %v916 = vsel %vm748, %v911, %v915
        %v918 = vshrl.u32 %v744, 16
        %v920 = vshll.u32 %v744, 16
        %v922 = vrot.slane %v920, 1
        %v923 = vor.u32 %v918, %v922
        %v925 = vshll.u32 %v745, 16
        %v927 = vrot.slane %v925, 1
        %v928 = vsel %vm748, %v923, %v927
        %v930 = vshrl.u32 %v746, 16
        %v932 = vshll.u32 %v746, 16
        %v934 = vrot.slane %v932, 1
        %v935 = vor.u32 %v930, %v934
        %v937 = vshll.u32 %v747, 16
        %v939 = vrot.slane %v937, 1
        %v940 = vsel %vm748, %v935, %v939
        %941 = vrot.lane.b32.xlu0 %v760, 4
        %v942 = vpop.permute.xlu0 %941
        %943 = vrot.lane.b32.xlu0 %v772, 4
        %v944 = vpop.permute.xlu0 %943
        %945 = vrot.lane.b32.xlu0 %v784, 4
        %v946 = vpop.permute.xlu0 %945
        %947 = vrot.lane.b32.xlu0 %v796, 4
        %v948 = vpop.permute.xlu0 %947
        %949 = vrot.lane.b32.xlu0 %v808, 4
        %v950 = vpop.permute.xlu0 %949
        %951 = vrot.lane.b32.xlu0 %v820, 4
        %v952 = vpop.permute.xlu0 %951
        %953 = vrot.lane.b32.xlu0 %v832, 4
        %v954 = vpop.permute.xlu0 %953
        %955 = vrot.lane.b32.xlu0 %v844, 4
        %v956 = vpop.permute.xlu0 %955
        %957 = vrot.lane.b32.xlu0 %v856, 4
        %v958 = vpop.permute.xlu0 %957
        %959 = vrot.lane.b32.xlu0 %v868, 4
        %v960 = vpop.permute.xlu0 %959
        %961 = vrot.lane.b32.xlu0 %v880, 4
        %v962 = vpop.permute.xlu0 %961
        %963 = vrot.lane.b32.xlu0 %v892, 4
        %v964 = vpop.permute.xlu0 %963
        %965 = vrot.lane.b32.xlu0 %v904, 4
        %v966 = vpop.permute.xlu0 %965
        %967 = vrot.lane.b32.xlu0 %v916, 4
        %v968 = vpop.permute.xlu0 %967
        %969 = vrot.lane.b32.xlu0 %v928, 4
        %v970 = vpop.permute.xlu0 %969
        %971 = vrot.lane.b32.xlu0 %v940, 4
        %v972 = vpop.permute.xlu0 %971
        %vm989 = vcmask 64544
        %990 = vst.msk [vmem:[#allocation3] sm:$0xff] %vm989, %v942
        %991 = vst.msk [vmem:[#allocation3 + $0x8] sm:$0xff] %vm989, %v944
        %992 = vst.msk [vmem:[#allocation3 + $0x10] sm:$0xff] %vm989, %v946
        %993 = vst.msk [vmem:[#allocation3 + $0x18] sm:$0xff] %vm989, %v948
        %994 = vst.msk [vmem:[#allocation3 + $0x20] sm:$0xff] %vm989, %v950
        %995 = vst.msk [vmem:[#allocation3 + $0x28] sm:$0xff] %vm989, %v952
        %996 = vst.msk [vmem:[#allocation3 + $0x30] sm:$0xff] %vm989, %v954
        %997 = vst.msk [vmem:[#allocation3 + $0x38] sm:$0xff] %vm989, %v956
        %998 = vst.msk [vmem:[#allocation3 + $0x40] sm:$0xff] %vm989, %v958
        %999 = vst.msk [vmem:[#allocation3 + $0x48] sm:$0xff] %vm989, %v960
        %1000 = vst.msk [vmem:[#allocation3 + $0x50] sm:$0xff] %vm989, %v962
        %1001 = vst.msk [vmem:[#allocation3 + $0x58] sm:$0xff] %vm989, %v964
        %1002 = vst.msk [vmem:[#allocation3 + $0x60] sm:$0xff] %vm989, %v966
        %1003 = vst.msk [vmem:[#allocation3 + $0x68] sm:$0xff] %vm989, %v968
        %1004 = vst.msk [vmem:[#allocation3 + $0x70] sm:$0xff] %vm989, %v970
        %1005 = vst.msk [vmem:[#allocation3 + $0x78] sm:$0xff] %vm989, %v972
        %v1006 = vld [vmem:[%s303] sm:$0xe]
        %v1007 = vld [vmem:[%s303 + $0x4] sm:$0xf]
        %v1008 = vld [vmem:[%s303 + $0x8] sm:$0x1]
        %v1009 = vld [vmem:[%s303 + $0xc] sm:$0xe]
        %v1010 = vld [vmem:[%s303 + $0x10] sm:$0xf]
        %v1011 = vld [vmem:[%s303 + $0x14] sm:$0x1]
        %v1012 = vld [vmem:[%s303 + $0x18] sm:$0xe]
        %v1013 = vld [vmem:[%s303 + $0x1c] sm:$0xf]
        %v1014 = vld [vmem:[%s303 + $0x20] sm:$0x1]
        %v1015 = vld [vmem:[%s303 + $0x24] sm:$0xe]
        %v1016 = vld [vmem:[%s303 + $0x28] sm:$0xf]
        %v1017 = vld [vmem:[%s303 + $0x2c] sm:$0x1]
        %v1018 = vld [vmem:[%s303 + $0x30] sm:$0xe]
        %v1019 = vld [vmem:[%s303 + $0x34] sm:$0xf]
        %v1020 = vld [vmem:[%s303 + $0x38] sm:$0x1]
        %v1021 = vld [vmem:[%s303 + $0x3c] sm:$0xe]
        %v1022 = vld [vmem:[%s303 + $0x40] sm:$0xf]
        %v1023 = vld [vmem:[%s303 + $0x44] sm:$0x1]
        %v1024 = vld [vmem:[%s303 + $0x48] sm:$0xe]
        %v1025 = vld [vmem:[%s303 + $0x4c] sm:$0xf]
        %v1026 = vld [vmem:[%s303 + $0x50] sm:$0x1]
        %v1027 = vld [vmem:[%s303 + $0x54] sm:$0xe]
        %v1028 = vld [vmem:[%s303 + $0x58] sm:$0xf]
        %v1029 = vld [vmem:[%s303 + $0x5c] sm:$0x1]
        %v1030 = vld [vmem:[%s303 + $0x60] sm:$0xe]
        %v1031 = vld [vmem:[%s303 + $0x64] sm:$0xf]
        %v1032 = vld [vmem:[%s303 + $0x68] sm:$0x1]
        %v1033 = vld [vmem:[%s303 + $0x6c] sm:$0xe]
        %v1034 = vld [vmem:[%s303 + $0x70] sm:$0xf]
        %v1035 = vld [vmem:[%s303 + $0x74] sm:$0x1]
        %v1036 = vld [vmem:[%s303 + $0x78] sm:$0xe]
        %v1037 = vld [vmem:[%s303 + $0x7c] sm:$0xf]
        %v1038 = vld [vmem:[%s303 + $0x80] sm:$0x1]
        %v1039 = vld [vmem:[%s303 + $0x84] sm:$0xe]
        %v1040 = vld [vmem:[%s303 + $0x88] sm:$0xf]
        %v1041 = vld [vmem:[%s303 + $0x8c] sm:$0x1]
        %v1042 = vld [vmem:[%s303 + $0x90] sm:$0xe]
        %v1043 = vld [vmem:[%s303 + $0x94] sm:$0xf]
        %v1044 = vld [vmem:[%s303 + $0x98] sm:$0x1]
        %v1045 = vld [vmem:[%s303 + $0x9c] sm:$0xe]
        %v1046 = vld [vmem:[%s303 + $0xa0] sm:$0xf]
        %v1047 = vld [vmem:[%s303 + $0xa4] sm:$0x1]
        %v1048 = vld [vmem:[%s303 + $0xa8] sm:$0xe]
        %v1049 = vld [vmem:[%s303 + $0xac] sm:$0xf]
        %v1050 = vld [vmem:[%s303 + $0xb0] sm:$0x1]
        %v1051 = vld [vmem:[%s303 + $0xb4] sm:$0xe]
        %v1052 = vld [vmem:[%s303 + $0xb8] sm:$0xf]
        %v1053 = vld [vmem:[%s303 + $0xbc] sm:$0x1]
        %v1102 = vunpack.c.l.b16 %v1006
        %v1103 = vunpack.c.l.b16 %v1007
        %v1104 = vunpack.c.l.b16 %v1008
        %v1105 = vunpack.c.l.b16 %v1009
        %v1106 = vunpack.c.l.b16 %v1010
        %v1107 = vunpack.c.l.b16 %v1011
        %v1108 = vunpack.c.l.b16 %v1012
        %v1109 = vunpack.c.l.b16 %v1013
        %v1110 = vunpack.c.l.b16 %v1014
        %v1111 = vunpack.c.l.b16 %v1015
        %v1112 = vunpack.c.l.b16 %v1016
        %v1113 = vunpack.c.l.b16 %v1017
        %v1114 = vunpack.c.l.b16 %v1018
        %v1115 = vunpack.c.l.b16 %v1019
        %v1116 = vunpack.c.l.b16 %v1020
        %v1117 = vunpack.c.l.b16 %v1021
        %v1118 = vunpack.c.l.b16 %v1022
        %v1119 = vunpack.c.l.b16 %v1023
        %v1120 = vunpack.c.l.b16 %v1024
        %v1121 = vunpack.c.l.b16 %v1025
        %v1122 = vunpack.c.l.b16 %v1026
        %v1123 = vunpack.c.l.b16 %v1027
        %v1124 = vunpack.c.l.b16 %v1028
        %v1125 = vunpack.c.l.b16 %v1029
        %v1126 = vunpack.c.l.b16 %v1030
        %v1127 = vunpack.c.l.b16 %v1031
        %v1128 = vunpack.c.l.b16 %v1032
        %v1129 = vunpack.c.l.b16 %v1033
        %v1130 = vunpack.c.l.b16 %v1034
        %v1131 = vunpack.c.l.b16 %v1035
        %v1132 = vunpack.c.l.b16 %v1036
        %v1133 = vunpack.c.l.b16 %v1037
        %v1134 = vunpack.c.l.b16 %v1038
        %v1135 = vunpack.c.l.b16 %v1039
        %v1136 = vunpack.c.l.b16 %v1040
        %v1137 = vunpack.c.l.b16 %v1041
        %v1138 = vunpack.c.l.b16 %v1042
        %v1139 = vunpack.c.l.b16 %v1043
        %v1140 = vunpack.c.l.b16 %v1044
        %v1141 = vunpack.c.l.b16 %v1045
        %v1142 = vunpack.c.l.b16 %v1046
        %v1143 = vunpack.c.l.b16 %v1047
        %v1144 = vunpack.c.l.b16 %v1048
        %v1145 = vunpack.c.l.b16 %v1049
        %v1146 = vunpack.c.l.b16 %v1050
        %v1147 = vunpack.c.l.b16 %v1051
        %v1148 = vunpack.c.l.b16 %v1052
        %v1149 = vunpack.c.l.b16 %v1053
        %v1150 = vpack.c.b16 %v1103, %v1102
        %v1151 = vpack.c.b16 %v1104, %v1104
        %v1152 = vpack.c.b16 %v1106, %v1105
        %v1153 = vpack.c.b16 %v1107, %v1107
        %v1154 = vpack.c.b16 %v1109, %v1108
        %v1155 = vpack.c.b16 %v1110, %v1110
        %v1156 = vpack.c.b16 %v1112, %v1111
        %v1157 = vpack.c.b16 %v1113, %v1113
        %v1158 = vpack.c.b16 %v1115, %v1114
        %v1159 = vpack.c.b16 %v1116, %v1116
        %v1160 = vpack.c.b16 %v1118, %v1117
        %v1161 = vpack.c.b16 %v1119, %v1119
        %v1162 = vpack.c.b16 %v1121, %v1120
        %v1163 = vpack.c.b16 %v1122, %v1122
        %v1164 = vpack.c.b16 %v1124, %v1123
        %v1165 = vpack.c.b16 %v1125, %v1125
        %v1166 = vpack.c.b16 %v1127, %v1126
        %v1167 = vpack.c.b16 %v1128, %v1128
        %v1168 = vpack.c.b16 %v1130, %v1129
        %v1169 = vpack.c.b16 %v1131, %v1131
        %v1170 = vpack.c.b16 %v1133, %v1132
        %v1171 = vpack.c.b16 %v1134, %v1134
        %v1172 = vpack.c.b16 %v1136, %v1135
        %v1173 = vpack.c.b16 %v1137, %v1137
        %v1174 = vpack.c.b16 %v1139, %v1138
        %v1175 = vpack.c.b16 %v1140, %v1140
        %v1176 = vpack.c.b16 %v1142, %v1141
        %v1177 = vpack.c.b16 %v1143, %v1143
        %v1178 = vpack.c.b16 %v1145, %v1144
        %v1179 = vpack.c.b16 %v1146, %v1146
        %v1180 = vpack.c.b16 %v1148, %v1147
        %v1181 = vpack.c.b16 %v1149, %v1149
        %vm1182 = vcmask 1046528
        %v1183 = vrot.slane %v1150, 1
        %v1184 = vrot.slane %v1151, 1
        %v1185 = vsel %vm1182, %v1183, %v1184
        %v1186 = vrot.slane %v1152, 1
        %v1187 = vrot.slane %v1153, 1
        %v1188 = vsel %vm1182, %v1186, %v1187
        %v1189 = vrot.slane %v1154, 1
        %v1190 = vrot.slane %v1155, 1
        %v1191 = vsel %vm1182, %v1189, %v1190
        %v1192 = vrot.slane %v1156, 1
        %v1193 = vrot.slane %v1157, 1
        %v1194 = vsel %vm1182, %v1192, %v1193
        %v1195 = vrot.slane %v1158, 1
        %v1196 = vrot.slane %v1159, 1
        %v1197 = vsel %vm1182, %v1195, %v1196
        %v1198 = vrot.slane %v1160, 1
        %v1199 = vrot.slane %v1161, 1
        %v1200 = vsel %vm1182, %v1198, %v1199
        %v1201 = vrot.slane %v1162, 1
        %v1202 = vrot.slane %v1163, 1
        %v1203 = vsel %vm1182, %v1201, %v1202
        %v1204 = vrot.slane %v1164, 1
        %v1205 = vrot.slane %v1165, 1
        %v1206 = vsel %vm1182, %v1204, %v1205
        %v1207 = vrot.slane %v1166, 1
        %v1208 = vrot.slane %v1167, 1
        %v1209 = vsel %vm1182, %v1207, %v1208
        %v1210 = vrot.slane %v1168, 1
        %v1211 = vrot.slane %v1169, 1
        %v1212 = vsel %vm1182, %v1210, %v1211
        %v1213 = vrot.slane %v1170, 1
        %v1214 = vrot.slane %v1171, 1
        %v1215 = vsel %vm1182, %v1213, %v1214
        %v1216 = vrot.slane %v1172, 1
        %v1217 = vrot.slane %v1173, 1
        %v1218 = vsel %vm1182, %v1216, %v1217
        %v1219 = vrot.slane %v1174, 1
        %v1220 = vrot.slane %v1175, 1
        %v1221 = vsel %vm1182, %v1219, %v1220
        %v1222 = vrot.slane %v1176, 1
        %v1223 = vrot.slane %v1177, 1
        %v1224 = vsel %vm1182, %v1222, %v1223
        %v1225 = vrot.slane %v1178, 1
        %v1226 = vrot.slane %v1179, 1
        %v1227 = vsel %vm1182, %v1225, %v1226
        %v1228 = vrot.slane %v1180, 1
        %v1229 = vrot.slane %v1181, 1
        %v1230 = vsel %vm1182, %v1228, %v1229
        %1231 = vrot.lane.b32.xlu0 %v1185, 8
        %v1232 = vpop.permute.xlu0 %1231
        %1233 = vrot.lane.b32.xlu0 %v1188, 8
        %v1234 = vpop.permute.xlu0 %1233
        %1235 = vrot.lane.b32.xlu0 %v1191, 8
        %v1236 = vpop.permute.xlu0 %1235
        %1237 = vrot.lane.b32.xlu0 %v1194, 8
        %v1238 = vpop.permute.xlu0 %1237
        %1239 = vrot.lane.b32.xlu0 %v1197, 8
        %v1240 = vpop.permute.xlu0 %1239
        %1241 = vrot.lane.b32.xlu0 %v1200, 8
        %v1242 = vpop.permute.xlu0 %1241
        %1243 = vrot.lane.b32.xlu0 %v1203, 8
        %v1244 = vpop.permute.xlu0 %1243
        %1245 = vrot.lane.b32.xlu0 %v1206, 8
        %v1246 = vpop.permute.xlu0 %1245
        %1247 = vrot.lane.b32.xlu0 %v1209, 8
        %v1248 = vpop.permute.xlu0 %1247
        %1249 = vrot.lane.b32.xlu0 %v1212, 8
        %v1250 = vpop.permute.xlu0 %1249
        %1251 = vrot.lane.b32.xlu0 %v1215, 8
        %v1252 = vpop.permute.xlu0 %1251
        %1253 = vrot.lane.b32.xlu0 %v1218, 8
        %v1254 = vpop.permute.xlu0 %1253
        %1255 = vrot.lane.b32.xlu0 %v1221, 8
        %v1256 = vpop.permute.xlu0 %1255
        %1257 = vrot.lane.b32.xlu0 %v1224, 8
        %v1258 = vpop.permute.xlu0 %1257
        %1259 = vrot.lane.b32.xlu0 %v1227, 8
        %v1260 = vpop.permute.xlu0 %1259
        %1261 = vrot.lane.b32.xlu0 %v1230, 8
        %v1262 = vpop.permute.xlu0 %1261
        %vm1279 = vcmask 97344
        %1280 = vst.msk [vmem:[#allocation3] sm:$0xff] %vm1279, %v1232
        %1281 = vst.msk [vmem:[#allocation3 + $0x8] sm:$0xff] %vm1279, %v1234
        %1282 = vst.msk [vmem:[#allocation3 + $0x10] sm:$0xff] %vm1279, %v1236
        %1283 = vst.msk [vmem:[#allocation3 + $0x18] sm:$0xff] %vm1279, %v1238
        %1284 = vst.msk [vmem:[#allocation3 + $0x20] sm:$0xff] %vm1279, %v1240
        %1285 = vst.msk [vmem:[#allocation3 + $0x28] sm:$0xff] %vm1279, %v1242
        %1286 = vst.msk [vmem:[#allocation3 + $0x30] sm:$0xff] %vm1279, %v1244
        %1287 = vst.msk [vmem:[#allocation3 + $0x38] sm:$0xff] %vm1279, %v1246
        %1288 = vst.msk [vmem:[#allocation3 + $0x40] sm:$0xff] %vm1279, %v1248
        %1289 = vst.msk [vmem:[#allocation3 + $0x48] sm:$0xff] %vm1279, %v1250
        %1290 = vst.msk [vmem:[#allocation3 + $0x50] sm:$0xff] %vm1279, %v1252
        %1291 = vst.msk [vmem:[#allocation3 + $0x58] sm:$0xff] %vm1279, %v1254
        %1292 = vst.msk [vmem:[#allocation3 + $0x60] sm:$0xff] %vm1279, %v1256
        %1293 = vst.msk [vmem:[#allocation3 + $0x68] sm:$0xff] %vm1279, %v1258
        %1294 = vst.msk [vmem:[#allocation3 + $0x70] sm:$0xff] %vm1279, %v1260
        %1295 = vst.msk [vmem:[#allocation3 + $0x78] sm:$0xff] %vm1279, %v1262
        %s1296 = scalar_lea.vmem %s303, 12
        %v1297 = vld [vmem:[%s1296] sm:$0xf]
        %v1298 = vld [vmem:[%s1296 + $0x4] sm:$0xf]
        %v1299 = vld [vmem:[%s1296 + $0xc] sm:$0xf]
        %v1300 = vld [vmem:[%s1296 + $0x10] sm:$0xf]
        %v1301 = vld [vmem:[%s1296 + $0x18] sm:$0xf]
        %v1302 = vld [vmem:[%s1296 + $0x1c] sm:$0xf]
        %v1303 = vld [vmem:[%s1296 + $0x24] sm:$0xf]
        %v1304 = vld [vmem:[%s1296 + $0x28] sm:$0xf]
        %v1305 = vld [vmem:[%s1296 + $0x30] sm:$0xf]
        %v1306 = vld [vmem:[%s1296 + $0x34] sm:$0xf]
        %v1307 = vld [vmem:[%s1296 + $0x3c] sm:$0xf]
        %v1308 = vld [vmem:[%s1296 + $0x40] sm:$0xf]
        %v1309 = vld [vmem:[%s1296 + $0x48] sm:$0xf]
        %v1310 = vld [vmem:[%s1296 + $0x4c] sm:$0xf]
        %v1311 = vld [vmem:[%s1296 + $0x54] sm:$0xf]
        %v1312 = vld [vmem:[%s1296 + $0x58] sm:$0xf]
        %v1313 = vld [vmem:[%s1296 + $0x60] sm:$0xf]
        %v1314 = vld [vmem:[%s1296 + $0x64] sm:$0xf]
        %v1315 = vld [vmem:[%s1296 + $0x6c] sm:$0xf]
        %v1316 = vld [vmem:[%s1296 + $0x70] sm:$0xf]
        %v1317 = vld [vmem:[%s1296 + $0x78] sm:$0xf]
        %v1318 = vld [vmem:[%s1296 + $0x7c] sm:$0xf]
        %v1319 = vld [vmem:[%s1296 + $0x84] sm:$0xf]
        %v1320 = vld [vmem:[%s1296 + $0x88] sm:$0xf]
        %v1321 = vld [vmem:[%s1296 + $0x90] sm:$0xf]
        %v1322 = vld [vmem:[%s1296 + $0x94] sm:$0xf]
        %v1323 = vld [vmem:[%s1296 + $0x9c] sm:$0xf]
        %v1324 = vld [vmem:[%s1296 + $0xa0] sm:$0xf]
        %v1325 = vld [vmem:[%s1296 + $0xa8] sm:$0xf]
        %v1326 = vld [vmem:[%s1296 + $0xac] sm:$0xf]
        %v1327 = vld [vmem:[%s1296 + $0xb4] sm:$0xf]
        %v1328 = vld [vmem:[%s1296 + $0xb8] sm:$0xf]
        %v1361 = vunpack.c.l.b16 %v1297
        %v1362 = vunpack.c.l.b16 %v1298
        %v1363 = vunpack.c.l.b16 %v1299
        %v1364 = vunpack.c.l.b16 %v1300
        %v1365 = vunpack.c.l.b16 %v1301
        %v1366 = vunpack.c.l.b16 %v1302
        %v1367 = vunpack.c.l.b16 %v1303
        %v1368 = vunpack.c.l.b16 %v1304
        %v1369 = vunpack.c.l.b16 %v1305
        %v1370 = vunpack.c.l.b16 %v1306
        %v1371 = vunpack.c.l.b16 %v1307
        %v1372 = vunpack.c.l.b16 %v1308
        %v1373 = vunpack.c.l.b16 %v1309
        %v1374 = vunpack.c.l.b16 %v1310
        %v1375 = vunpack.c.l.b16 %v1311
        %v1376 = vunpack.c.l.b16 %v1312
        %v1377 = vunpack.c.l.b16 %v1313
        %v1378 = vunpack.c.l.b16 %v1314
        %v1379 = vunpack.c.l.b16 %v1315
        %v1380 = vunpack.c.l.b16 %v1316
        %v1381 = vunpack.c.l.b16 %v1317
        %v1382 = vunpack.c.l.b16 %v1318
        %v1383 = vunpack.c.l.b16 %v1319
        %v1384 = vunpack.c.l.b16 %v1320
        %v1385 = vunpack.c.l.b16 %v1321
        %v1386 = vunpack.c.l.b16 %v1322
        %v1387 = vunpack.c.l.b16 %v1323
        %v1388 = vunpack.c.l.b16 %v1324
        %v1389 = vunpack.c.l.b16 %v1325
        %v1390 = vunpack.c.l.b16 %v1326
        %v1391 = vunpack.c.l.b16 %v1327
        %v1392 = vunpack.c.l.b16 %v1328
        %v1393 = vpack.c.b16 %v1362, %v1361
        %v1394 = vpack.c.b16 %v1364, %v1363
        %v1395 = vpack.c.b16 %v1366, %v1365
        %v1396 = vpack.c.b16 %v1368, %v1367
        %v1397 = vpack.c.b16 %v1370, %v1369
        %v1398 = vpack.c.b16 %v1372, %v1371
        %v1399 = vpack.c.b16 %v1374, %v1373
        %v1400 = vpack.c.b16 %v1376, %v1375
        %v1401 = vpack.c.b16 %v1378, %v1377
        %v1402 = vpack.c.b16 %v1380, %v1379
        %v1403 = vpack.c.b16 %v1382, %v1381
        %v1404 = vpack.c.b16 %v1384, %v1383
        %v1405 = vpack.c.b16 %v1386, %v1385
        %v1406 = vpack.c.b16 %v1388, %v1387
        %v1407 = vpack.c.b16 %v1390, %v1389
        %v1408 = vpack.c.b16 %v1392, %v1391
        %1409 = vrot.lane.b32.xlu0 %v1393, 12
        %v1410 = vpop.permute.xlu0 %1409
        %1411 = vrot.lane.b32.xlu0 %v1394, 12
        %v1412 = vpop.permute.xlu0 %1411
        %1413 = vrot.lane.b32.xlu0 %v1395, 12
        %v1414 = vpop.permute.xlu0 %1413
        %1415 = vrot.lane.b32.xlu0 %v1396, 12
        %v1416 = vpop.permute.xlu0 %1415
        %1417 = vrot.lane.b32.xlu0 %v1397, 12
        %v1418 = vpop.permute.xlu0 %1417
        %1419 = vrot.lane.b32.xlu0 %v1398, 12
        %v1420 = vpop.permute.xlu0 %1419
        %1421 = vrot.lane.b32.xlu0 %v1399, 12
        %v1422 = vpop.permute.xlu0 %1421
        %1423 = vrot.lane.b32.xlu0 %v1400, 12
        %v1424 = vpop.permute.xlu0 %1423
        %1425 = vrot.lane.b32.xlu0 %v1401, 12
        %v1426 = vpop.permute.xlu0 %1425
        %1427 = vrot.lane.b32.xlu0 %v1402, 12
        %v1428 = vpop.permute.xlu0 %1427
        %1429 = vrot.lane.b32.xlu0 %v1403, 12
        %v1430 = vpop.permute.xlu0 %1429
        %1431 = vrot.lane.b32.xlu0 %v1404, 12
        %v1432 = vpop.permute.xlu0 %1431
        %1433 = vrot.lane.b32.xlu0 %v1405, 12
        %v1434 = vpop.permute.xlu0 %1433
        %1435 = vrot.lane.b32.xlu0 %v1406, 12
        %v1436 = vpop.permute.xlu0 %1435
        %1437 = vrot.lane.b32.xlu0 %v1407, 12
        %v1438 = vpop.permute.xlu0 %1437
        %1439 = vrot.lane.b32.xlu0 %v1408, 12
        %v1440 = vpop.permute.xlu0 %1439
        %vm1457 = vcmask 130144
        %1458 = vst.msk [vmem:[#allocation3] sm:$0xff] %vm1457, %v1410
        %1459 = vst.msk [vmem:[#allocation3 + $0x8] sm:$0xff] %vm1457, %v1412
        %1460 = vst.msk [vmem:[#allocation3 + $0x10] sm:$0xff] %vm1457, %v1414
        %1461 = vst.msk [vmem:[#allocation3 + $0x18] sm:$0xff] %vm1457, %v1416
        %1462 = vst.msk [vmem:[#allocation3 + $0x20] sm:$0xff] %vm1457, %v1418
        %1463 = vst.msk [vmem:[#allocation3 + $0x28] sm:$0xff] %vm1457, %v1420
        %1464 = vst.msk [vmem:[#allocation3 + $0x30] sm:$0xff] %vm1457, %v1422
        %1465 = vst.msk [vmem:[#allocation3 + $0x38] sm:$0xff] %vm1457, %v1424
        %1466 = vst.msk [vmem:[#allocation3 + $0x40] sm:$0xff] %vm1457, %v1426
        %1467 = vst.msk [vmem:[#allocation3 + $0x48] sm:$0xff] %vm1457, %v1428
        %1468 = vst.msk [vmem:[#allocation3 + $0x50] sm:$0xff] %vm1457, %v1430
        %1469 = vst.msk [vmem:[#allocation3 + $0x58] sm:$0xff] %vm1457, %v1432
        %1470 = vst.msk [vmem:[#allocation3 + $0x60] sm:$0xff] %vm1457, %v1434
        %1471 = vst.msk [vmem:[#allocation3 + $0x68] sm:$0xff] %vm1457, %v1436
        %1472 = vst.msk [vmem:[#allocation3 + $0x70] sm:$0xff] %vm1457, %v1438
        %1473 = vst.msk [vmem:[#allocation3 + $0x78] sm:$0xff] %vm1457, %v1440
        %v1474 = vld [vmem:[%s1296] sm:$0xf]
        %v1475 = vld [vmem:[%s1296 + $0x4] sm:$0xf]
        %v1476 = vld [vmem:[%s1296 + $0x8] sm:$0x1]
        %v1477 = vld [vmem:[%s1296 + $0xc] sm:$0xf]
        %v1478 = vld [vmem:[%s1296 + $0x10] sm:$0xf]
        %v1479 = vld [vmem:[%s1296 + $0x14] sm:$0x1]
        %v1480 = vld [vmem:[%s1296 + $0x18] sm:$0xf]
        %v1481 = vld [vmem:[%s1296 + $0x1c] sm:$0xf]
        %v1482 = vld [vmem:[%s1296 + $0x20] sm:$0x1]
        %v1483 = vld [vmem:[%s1296 + $0x24] sm:$0xf]
        %v1484 = vld [vmem:[%s1296 + $0x28] sm:$0xf]
        %v1485 = vld [vmem:[%s1296 + $0x2c] sm:$0x1]
        %v1486 = vld [vmem:[%s1296 + $0x30] sm:$0xf]
        %v1487 = vld [vmem:[%s1296 + $0x34] sm:$0xf]
        %v1488 = vld [vmem:[%s1296 + $0x38] sm:$0x1]
        %v1489 = vld [vmem:[%s1296 + $0x3c] sm:$0xf]
        %v1490 = vld [vmem:[%s1296 + $0x40] sm:$0xf]
        %v1491 = vld [vmem:[%s1296 + $0x44] sm:$0x1]
        %v1492 = vld [vmem:[%s1296 + $0x48] sm:$0xf]
        %v1493 = vld [vmem:[%s1296 + $0x4c] sm:$0xf]
        %v1494 = vld [vmem:[%s1296 + $0x50] sm:$0x1]
        %v1495 = vld [vmem:[%s1296 + $0x54] sm:$0xf]
        %v1496 = vld [vmem:[%s1296 + $0x58] sm:$0xf]
        %v1497 = vld [vmem:[%s1296 + $0x5c] sm:$0x1]
        %v1498 = vld [vmem:[%s1296 + $0x60] sm:$0xf]
        %v1499 = vld [vmem:[%s1296 + $0x64] sm:$0xf]
        %v1500 = vld [vmem:[%s1296 + $0x68] sm:$0x1]
        %v1501 = vld [vmem:[%s1296 + $0x6c] sm:$0xf]
        %v1502 = vld [vmem:[%s1296 + $0x70] sm:$0xf]
        %v1503 = vld [vmem:[%s1296 + $0x74] sm:$0x1]
        %v1504 = vld [vmem:[%s1296 + $0x78] sm:$0xf]
        %v1505 = vld [vmem:[%s1296 + $0x7c] sm:$0xf]
        %v1506 = vld [vmem:[%s1296 + $0x80] sm:$0x1]
        %v1507 = vld [vmem:[%s1296 + $0x84] sm:$0xf]
        %v1508 = vld [vmem:[%s1296 + $0x88] sm:$0xf]
        %v1509 = vld [vmem:[%s1296 + $0x8c] sm:$0x1]
        %v1510 = vld [vmem:[%s1296 + $0x90] sm:$0xf]
        %v1511 = vld [vmem:[%s1296 + $0x94] sm:$0xf]
        %v1512 = vld [vmem:[%s1296 + $0x98] sm:$0x1]
        %v1513 = vld [vmem:[%s1296 + $0x9c] sm:$0xf]
        %v1514 = vld [vmem:[%s1296 + $0xa0] sm:$0xf]
        %v1515 = vld [vmem:[%s1296 + $0xa4] sm:$0x1]
        %v1516 = vld [vmem:[%s1296 + $0xa8] sm:$0xf]
        %v1517 = vld [vmem:[%s1296 + $0xac] sm:$0xf]
        %v1518 = vld [vmem:[%s1296 + $0xb0] sm:$0x1]
        %v1519 = vld [vmem:[%s1296 + $0xb4] sm:$0xf]
        %v1520 = vld [vmem:[%s1296 + $0xb8] sm:$0xf]
        %v1521 = vld [vmem:[%s1296 + $0xbc] sm:$0x1]
        %v1570 = vunpack.c.l.b16 %v1474
        %v1571 = vunpack.c.l.b16 %v1475
        %v1572 = vunpack.c.l.b16 %v1476
        %v1573 = vunpack.c.l.b16 %v1477
        %v1574 = vunpack.c.l.b16 %v1478
        %v1575 = vunpack.c.l.b16 %v1479
        %v1576 = vunpack.c.l.b16 %v1480
        %v1577 = vunpack.c.l.b16 %v1481
        %v1578 = vunpack.c.l.b16 %v1482
        %v1579 = vunpack.c.l.b16 %v1483
        %v1580 = vunpack.c.l.b16 %v1484
        %v1581 = vunpack.c.l.b16 %v1485
        %v1582 = vunpack.c.l.b16 %v1486
        %v1583 = vunpack.c.l.b16 %v1487
        %v1584 = vunpack.c.l.b16 %v1488
        %v1585 = vunpack.c.l.b16 %v1489
        %v1586 = vunpack.c.l.b16 %v1490
        %v1587 = vunpack.c.l.b16 %v1491
        %v1588 = vunpack.c.l.b16 %v1492
        %v1589 = vunpack.c.l.b16 %v1493
        %v1590 = vunpack.c.l.b16 %v1494
        %v1591 = vunpack.c.l.b16 %v1495
        %v1592 = vunpack.c.l.b16 %v1496
        %v1593 = vunpack.c.l.b16 %v1497
        %v1594 = vunpack.c.l.b16 %v1498
        %v1595 = vunpack.c.l.b16 %v1499
        %v1596 = vunpack.c.l.b16 %v1500
        %v1597 = vunpack.c.l.b16 %v1501
        %v1598 = vunpack.c.l.b16 %v1502
        %v1599 = vunpack.c.l.b16 %v1503
        %v1600 = vunpack.c.l.b16 %v1504
        %v1601 = vunpack.c.l.b16 %v1505
        %v1602 = vunpack.c.l.b16 %v1506
        %v1603 = vunpack.c.l.b16 %v1507
        %v1604 = vunpack.c.l.b16 %v1508
        %v1605 = vunpack.c.l.b16 %v1509
        %v1606 = vunpack.c.l.b16 %v1510
        %v1607 = vunpack.c.l.b16 %v1511
        %v1608 = vunpack.c.l.b16 %v1512
        %v1609 = vunpack.c.l.b16 %v1513
        %v1610 = vunpack.c.l.b16 %v1514
        %v1611 = vunpack.c.l.b16 %v1515
        %v1612 = vunpack.c.l.b16 %v1516
        %v1613 = vunpack.c.l.b16 %v1517
        %v1614 = vunpack.c.l.b16 %v1518
        %v1615 = vunpack.c.l.b16 %v1519
        %v1616 = vunpack.c.l.b16 %v1520
        %v1617 = vunpack.c.l.b16 %v1521
        %v1618 = vpack.c.b16 %v1571, %v1570
        %v1619 = vpack.c.b16 %v1572, %v1572
        %v1620 = vpack.c.b16 %v1574, %v1573
        %v1621 = vpack.c.b16 %v1575, %v1575
        %v1622 = vpack.c.b16 %v1577, %v1576
        %v1623 = vpack.c.b16 %v1578, %v1578
        %v1624 = vpack.c.b16 %v1580, %v1579
        %v1625 = vpack.c.b16 %v1581, %v1581
        %v1626 = vpack.c.b16 %v1583, %v1582
        %v1627 = vpack.c.b16 %v1584, %v1584
        %v1628 = vpack.c.b16 %v1586, %v1585
        %v1629 = vpack.c.b16 %v1587, %v1587
        %v1630 = vpack.c.b16 %v1589, %v1588
        %v1631 = vpack.c.b16 %v1590, %v1590
        %v1632 = vpack.c.b16 %v1592, %v1591
        %v1633 = vpack.c.b16 %v1593, %v1593
        %v1634 = vpack.c.b16 %v1595, %v1594
        %v1635 = vpack.c.b16 %v1596, %v1596
        %v1636 = vpack.c.b16 %v1598, %v1597
        %v1637 = vpack.c.b16 %v1599, %v1599
        %v1638 = vpack.c.b16 %v1601, %v1600
        %v1639 = vpack.c.b16 %v1602, %v1602
        %v1640 = vpack.c.b16 %v1604, %v1603
        %v1641 = vpack.c.b16 %v1605, %v1605
        %v1642 = vpack.c.b16 %v1607, %v1606
        %v1643 = vpack.c.b16 %v1608, %v1608
        %v1644 = vpack.c.b16 %v1610, %v1609
        %v1645 = vpack.c.b16 %v1611, %v1611
        %v1646 = vpack.c.b16 %v1613, %v1612
        %v1647 = vpack.c.b16 %v1614, %v1614
        %v1648 = vpack.c.b16 %v1616, %v1615
        %v1649 = vpack.c.b16 %v1617, %v1617
        %v1651 = vshrl.u32 %v1618, 16
        %v1653 = vshll.u32 %v1618, 16
        %v1655 = vrot.slane %v1653, 1
        %v1656 = vor.u32 %v1651, %v1655
        %v1658 = vshll.u32 %v1619, 16
        %v1660 = vrot.slane %v1658, 1
        %v1661 = vsel %vm748, %v1656, %v1660
        %v1663 = vshrl.u32 %v1620, 16
        %v1665 = vshll.u32 %v1620, 16
        %v1667 = vrot.slane %v1665, 1
        %v1668 = vor.u32 %v1663, %v1667
        %v1670 = vshll.u32 %v1621, 16
        %v1672 = vrot.slane %v1670, 1
        %v1673 = vsel %vm748, %v1668, %v1672
        %v1675 = vshrl.u32 %v1622, 16
        %v1677 = vshll.u32 %v1622, 16
        %v1679 = vrot.slane %v1677, 1
        %v1680 = vor.u32 %v1675, %v1679
        %v1682 = vshll.u32 %v1623, 16
        %v1684 = vrot.slane %v1682, 1
        %v1685 = vsel %vm748, %v1680, %v1684
        %v1687 = vshrl.u32 %v1624, 16
        %v1689 = vshll.u32 %v1624, 16
        %v1691 = vrot.slane %v1689, 1
        %v1692 = vor.u32 %v1687, %v1691
        %v1694 = vshll.u32 %v1625, 16
        %v1696 = vrot.slane %v1694, 1
        %v1697 = vsel %vm748, %v1692, %v1696
        %v1699 = vshrl.u32 %v1626, 16
        %v1701 = vshll.u32 %v1626, 16
        %v1703 = vrot.slane %v1701, 1
        %v1704 = vor.u32 %v1699, %v1703
        %v1706 = vshll.u32 %v1627, 16
        %v1708 = vrot.slane %v1706, 1
        %v1709 = vsel %vm748, %v1704, %v1708
        %v1711 = vshrl.u32 %v1628, 16
        %v1713 = vshll.u32 %v1628, 16
        %v1715 = vrot.slane %v1713, 1
        %v1716 = vor.u32 %v1711, %v1715
        %v1718 = vshll.u32 %v1629, 16
        %v1720 = vrot.slane %v1718, 1
        %v1721 = vsel %vm748, %v1716, %v1720
        %v1723 = vshrl.u32 %v1630, 16
        %v1725 = vshll.u32 %v1630, 16
        %v1727 = vrot.slane %v1725, 1
        %v1728 = vor.u32 %v1723, %v1727
        %v1730 = vshll.u32 %v1631, 16
        %v1732 = vrot.slane %v1730, 1
        %v1733 = vsel %vm748, %v1728, %v1732
        %v1735 = vshrl.u32 %v1632, 16
        %v1737 = vshll.u32 %v1632, 16
        %v1739 = vrot.slane %v1737, 1
        %v1740 = vor.u32 %v1735, %v1739
        %v1742 = vshll.u32 %v1633, 16
        %v1744 = vrot.slane %v1742, 1
        %v1745 = vsel %vm748, %v1740, %v1744
        %v1747 = vshrl.u32 %v1634, 16
        %v1749 = vshll.u32 %v1634, 16
        %v1751 = vrot.slane %v1749, 1
        %v1752 = vor.u32 %v1747, %v1751
        %v1754 = vshll.u32 %v1635, 16
        %v1756 = vrot.slane %v1754, 1
        %v1757 = vsel %vm748, %v1752, %v1756
        %v1759 = vshrl.u32 %v1636, 16
        %v1761 = vshll.u32 %v1636, 16
        %v1763 = vrot.slane %v1761, 1
        %v1764 = vor.u32 %v1759, %v1763
        %v1766 = vshll.u32 %v1637, 16
        %v1768 = vrot.slane %v1766, 1
        %v1769 = vsel %vm748, %v1764, %v1768
        %v1771 = vshrl.u32 %v1638, 16
        %v1773 = vshll.u32 %v1638, 16
        %v1775 = vrot.slane %v1773, 1
        %v1776 = vor.u32 %v1771, %v1775
        %v1778 = vshll.u32 %v1639, 16
        %v1780 = vrot.slane %v1778, 1
        %v1781 = vsel %vm748, %v1776, %v1780
        %v1783 = vshrl.u32 %v1640, 16
        %v1785 = vshll.u32 %v1640, 16
        %v1787 = vrot.slane %v1785, 1
        %v1788 = vor.u32 %v1783, %v1787
        %v1790 = vshll.u32 %v1641, 16
        %v1792 = vrot.slane %v1790, 1
        %v1793 = vsel %vm748, %v1788, %v1792
        %v1795 = vshrl.u32 %v1642, 16
        %v1797 = vshll.u32 %v1642, 16
        %v1799 = vrot.slane %v1797, 1
        %v1800 = vor.u32 %v1795, %v1799
        %v1802 = vshll.u32 %v1643, 16
        %v1804 = vrot.slane %v1802, 1
        %v1805 = vsel %vm748, %v1800, %v1804
        %v1807 = vshrl.u32 %v1644, 16
        %v1809 = vshll.u32 %v1644, 16
        %v1811 = vrot.slane %v1809, 1
        %v1812 = vor.u32 %v1807, %v1811
        %v1814 = vshll.u32 %v1645, 16
        %v1816 = vrot.slane %v1814, 1
        %v1817 = vsel %vm748, %v1812, %v1816
        %v1819 = vshrl.u32 %v1646, 16
        %v1821 = vshll.u32 %v1646, 16
        %v1823 = vrot.slane %v1821, 1
        %v1824 = vor.u32 %v1819, %v1823
        %v1826 = vshll.u32 %v1647, 16
        %v1828 = vrot.slane %v1826, 1
        %v1829 = vsel %vm748, %v1824, %v1828
        %v1831 = vshrl.u32 %v1648, 16
        %v1833 = vshll.u32 %v1648, 16
        %v1835 = vrot.slane %v1833, 1
        %v1836 = vor.u32 %v1831, %v1835
        %v1838 = vshll.u32 %v1649, 16
        %v1840 = vrot.slane %v1838, 1
        %v1841 = vsel %vm748, %v1836, %v1840
        %1842 = vrot.lane.b32.xlu0 %v1661, 16
        %v1843 = vpop.permute.xlu0 %1842
        %1844 = vrot.lane.b32.xlu0 %v1673, 16
        %v1845 = vpop.permute.xlu0 %1844
        %1846 = vrot.lane.b32.xlu0 %v1685, 16
        %v1847 = vpop.permute.xlu0 %1846
        %1848 = vrot.lane.b32.xlu0 %v1697, 16
        %v1849 = vpop.permute.xlu0 %1848
        %1850 = vrot.lane.b32.xlu0 %v1709, 16
        %v1851 = vpop.permute.xlu0 %1850
        %1852 = vrot.lane.b32.xlu0 %v1721, 16
        %v1853 = vpop.permute.xlu0 %1852
        %1854 = vrot.lane.b32.xlu0 %v1733, 16
        %v1855 = vpop.permute.xlu0 %1854
        %1856 = vrot.lane.b32.xlu0 %v1745, 16
        %v1857 = vpop.permute.xlu0 %1856
        %1858 = vrot.lane.b32.xlu0 %v1757, 16
        %v1859 = vpop.permute.xlu0 %1858
        %1860 = vrot.lane.b32.xlu0 %v1769, 16
        %v1861 = vpop.permute.xlu0 %1860
        %1862 = vrot.lane.b32.xlu0 %v1781, 16
        %v1863 = vpop.permute.xlu0 %1862
        %1864 = vrot.lane.b32.xlu0 %v1793, 16
        %v1865 = vpop.permute.xlu0 %1864
        %1866 = vrot.lane.b32.xlu0 %v1805, 16
        %v1867 = vpop.permute.xlu0 %1866
        %1868 = vrot.lane.b32.xlu0 %v1817, 16
        %v1869 = vpop.permute.xlu0 %1868
        %1870 = vrot.lane.b32.xlu0 %v1829, 16
        %v1871 = vpop.permute.xlu0 %1870
        %1872 = vrot.lane.b32.xlu0 %v1841, 16
        %v1873 = vpop.permute.xlu0 %1872
        %vm1890 = vcmask 162944
        %1891 = vst.msk [vmem:[#allocation3] sm:$0xff] %vm1890, %v1843
        %1892 = vst.msk [vmem:[#allocation3 + $0x8] sm:$0xff] %vm1890, %v1845
        %1893 = vst.msk [vmem:[#allocation3 + $0x10] sm:$0xff] %vm1890, %v1847
        %1894 = vst.msk [vmem:[#allocation3 + $0x18] sm:$0xff] %vm1890, %v1849
        %1895 = vst.msk [vmem:[#allocation3 + $0x20] sm:$0xff] %vm1890, %v1851
        %1896 = vst.msk [vmem:[#allocation3 + $0x28] sm:$0xff] %vm1890, %v1853
        %1897 = vst.msk [vmem:[#allocation3 + $0x30] sm:$0xff] %vm1890, %v1855
        %1898 = vst.msk [vmem:[#allocation3 + $0x38] sm:$0xff] %vm1890, %v1857
        %1899 = vst.msk [vmem:[#allocation3 + $0x40] sm:$0xff] %vm1890, %v1859
        %1900 = vst.msk [vmem:[#allocation3 + $0x48] sm:$0xff] %vm1890, %v1861
        %1901 = vst.msk [vmem:[#allocation3 + $0x50] sm:$0xff] %vm1890, %v1863
        %1902 = vst.msk [vmem:[#allocation3 + $0x58] sm:$0xff] %vm1890, %v1865
        %1903 = vst.msk [vmem:[#allocation3 + $0x60] sm:$0xff] %vm1890, %v1867
        %1904 = vst.msk [vmem:[#allocation3 + $0x68] sm:$0xff] %vm1890, %v1869
        %1905 = vst.msk [vmem:[#allocation3 + $0x70] sm:$0xff] %vm1890, %v1871
        %1906 = vst.msk [vmem:[#allocation3 + $0x78] sm:$0xff] %vm1890, %v1873
        %v1907 = vld [vmem:[%s1296] sm:$0xe]
        %v1908 = vld [vmem:[%s1296 + $0x4] sm:$0xf]
        %v1909 = vld [vmem:[%s1296 + $0x8] sm:$0x1]
        %v1910 = vld [vmem:[%s1296 + $0xc] sm:$0xe]
        %v1911 = vld [vmem:[%s1296 + $0x10] sm:$0xf]
        %v1912 = vld [vmem:[%s1296 + $0x14] sm:$0x1]
        %v1913 = vld [vmem:[%s1296 + $0x18] sm:$0xe]
        %v1914 = vld [vmem:[%s1296 + $0x1c] sm:$0xf]
        %v1915 = vld [vmem:[%s1296 + $0x20] sm:$0x1]
        %v1916 = vld [vmem:[%s1296 + $0x24] sm:$0xe]
        %v1917 = vld [vmem:[%s1296 + $0x28] sm:$0xf]
        %v1918 = vld [vmem:[%s1296 + $0x2c] sm:$0x1]
        %v1919 = vld [vmem:[%s1296 + $0x30] sm:$0xe]
        %v1920 = vld [vmem:[%s1296 + $0x34] sm:$0xf]
        %v1921 = vld [vmem:[%s1296 + $0x38] sm:$0x1]
        %v1922 = vld [vmem:[%s1296 + $0x3c] sm:$0xe]
        %v1923 = vld [vmem:[%s1296 + $0x40] sm:$0xf]
        %v1924 = vld [vmem:[%s1296 + $0x44] sm:$0x1]
        %v1925 = vld [vmem:[%s1296 + $0x48] sm:$0xe]
        %v1926 = vld [vmem:[%s1296 + $0x4c] sm:$0xf]
        %v1927 = vld [vmem:[%s1296 + $0x50] sm:$0x1]
        %v1928 = vld [vmem:[%s1296 + $0x54] sm:$0xe]
        %v1929 = vld [vmem:[%s1296 + $0x58] sm:$0xf]
        %v1930 = vld [vmem:[%s1296 + $0x5c] sm:$0x1]
        %v1931 = vld [vmem:[%s1296 + $0x60] sm:$0xe]
        %v1932 = vld [vmem:[%s1296 + $0x64] sm:$0xf]
        %v1933 = vld [vmem:[%s1296 + $0x68] sm:$0x1]
        %v1934 = vld [vmem:[%s1296 + $0x6c] sm:$0xe]
        %v1935 = vld [vmem:[%s1296 + $0x70] sm:$0xf]
        %v1936 = vld [vmem:[%s1296 + $0x74] sm:$0x1]
        %v1937 = vld [vmem:[%s1296 + $0x78] sm:$0xe]
        %v1938 = vld [vmem:[%s1296 + $0x7c] sm:$0xf]
        %v1939 = vld [vmem:[%s1296 + $0x80] sm:$0x1]
        %v1940 = vld [vmem:[%s1296 + $0x84] sm:$0xe]
        %v1941 = vld [vmem:[%s1296 + $0x88] sm:$0xf]
        %v1942 = vld [vmem:[%s1296 + $0x8c] sm:$0x1]
        %v1943 = vld [vmem:[%s1296 + $0x90] sm:$0xe]
        %v1944 = vld [vmem:[%s1296 + $0x94] sm:$0xf]
        %v1945 = vld [vmem:[%s1296 + $0x98] sm:$0x1]
        %v1946 = vld [vmem:[%s1296 + $0x9c] sm:$0xe]
        %v1947 = vld [vmem:[%s1296 + $0xa0] sm:$0xf]
        %v1948 = vld [vmem:[%s1296 + $0xa4] sm:$0x1]
        %v1949 = vld [vmem:[%s1296 + $0xa8] sm:$0xe]
        %v1950 = vld [vmem:[%s1296 + $0xac] sm:$0xf]
        %v1951 = vld [vmem:[%s1296 + $0xb0] sm:$0x1]
        %v1952 = vld [vmem:[%s1296 + $0xb4] sm:$0xe]
        %v1953 = vld [vmem:[%s1296 + $0xb8] sm:$0xf]
        %v1954 = vld [vmem:[%s1296 + $0xbc] sm:$0x1]
        %v2003 = vunpack.c.l.b16 %v1907
        %v2004 = vunpack.c.l.b16 %v1908
        %v2005 = vunpack.c.l.b16 %v1909
        %v2006 = vunpack.c.l.b16 %v1910
        %v2007 = vunpack.c.l.b16 %v1911
        %v2008 = vunpack.c.l.b16 %v1912
        %v2009 = vunpack.c.l.b16 %v1913
        %v2010 = vunpack.c.l.b16 %v1914
        %v2011 = vunpack.c.l.b16 %v1915
        %v2012 = vunpack.c.l.b16 %v1916
        %v2013 = vunpack.c.l.b16 %v1917
        %v2014 = vunpack.c.l.b16 %v1918
        %v2015 = vunpack.c.l.b16 %v1919
        %v2016 = vunpack.c.l.b16 %v1920
        %v2017 = vunpack.c.l.b16 %v1921
        %v2018 = vunpack.c.l.b16 %v1922
        %v2019 = vunpack.c.l.b16 %v1923
        %v2020 = vunpack.c.l.b16 %v1924
        %v2021 = vunpack.c.l.b16 %v1925
        %v2022 = vunpack.c.l.b16 %v1926
        %v2023 = vunpack.c.l.b16 %v1927
        %v2024 = vunpack.c.l.b16 %v1928
        %v2025 = vunpack.c.l.b16 %v1929
        %v2026 = vunpack.c.l.b16 %v1930
        %v2027 = vunpack.c.l.b16 %v1931
        %v2028 = vunpack.c.l.b16 %v1932
        %v2029 = vunpack.c.l.b16 %v1933
        %v2030 = vunpack.c.l.b16 %v1934
        %v2031 = vunpack.c.l.b16 %v1935
        %v2032 = vunpack.c.l.b16 %v1936
        %v2033 = vunpack.c.l.b16 %v1937
        %v2034 = vunpack.c.l.b16 %v1938
        %v2035 = vunpack.c.l.b16 %v1939
        %v2036 = vunpack.c.l.b16 %v1940
        %v2037 = vunpack.c.l.b16 %v1941
        %v2038 = vunpack.c.l.b16 %v1942
        %v2039 = vunpack.c.l.b16 %v1943
        %v2040 = vunpack.c.l.b16 %v1944
        %v2041 = vunpack.c.l.b16 %v1945
        %v2042 = vunpack.c.l.b16 %v1946
        %v2043 = vunpack.c.l.b16 %v1947
        %v2044 = vunpack.c.l.b16 %v1948
        %v2045 = vunpack.c.l.b16 %v1949
        %v2046 = vunpack.c.l.b16 %v1950
        %v2047 = vunpack.c.l.b16 %v1951
        %v2048 = vunpack.c.l.b16 %v1952
        %v2049 = vunpack.c.l.b16 %v1953
        %v2050 = vunpack.c.l.b16 %v1954
        %v2051 = vpack.c.b16 %v2004, %v2003
        %v2052 = vpack.c.b16 %v2005, %v2005
        %v2053 = vpack.c.b16 %v2007, %v2006
        %v2054 = vpack.c.b16 %v2008, %v2008
        %v2055 = vpack.c.b16 %v2010, %v2009
        %v2056 = vpack.c.b16 %v2011, %v2011
        %v2057 = vpack.c.b16 %v2013, %v2012
        %v2058 = vpack.c.b16 %v2014, %v2014
        %v2059 = vpack.c.b16 %v2016, %v2015
        %v2060 = vpack.c.b16 %v2017, %v2017
        %v2061 = vpack.c.b16 %v2019, %v2018
        %v2062 = vpack.c.b16 %v2020, %v2020
        %v2063 = vpack.c.b16 %v2022, %v2021
        %v2064 = vpack.c.b16 %v2023, %v2023
        %v2065 = vpack.c.b16 %v2025, %v2024
        %v2066 = vpack.c.b16 %v2026, %v2026
        %v2067 = vpack.c.b16 %v2028, %v2027
        %v2068 = vpack.c.b16 %v2029, %v2029
        %v2069 = vpack.c.b16 %v2031, %v2030
        %v2070 = vpack.c.b16 %v2032, %v2032
        %v2071 = vpack.c.b16 %v2034, %v2033
        %v2072 = vpack.c.b16 %v2035, %v2035
        %v2073 = vpack.c.b16 %v2037, %v2036
        %v2074 = vpack.c.b16 %v2038, %v2038
        %v2075 = vpack.c.b16 %v2040, %v2039
        %v2076 = vpack.c.b16 %v2041, %v2041
        %v2077 = vpack.c.b16 %v2043, %v2042
        %v2078 = vpack.c.b16 %v2044, %v2044
        %v2079 = vpack.c.b16 %v2046, %v2045
        %v2080 = vpack.c.b16 %v2047, %v2047
        %v2081 = vpack.c.b16 %v2049, %v2048
        %v2082 = vpack.c.b16 %v2050, %v2050
        %v2083 = vrot.slane %v2051, 1
        %v2084 = vrot.slane %v2052, 1
        %v2085 = vsel %vm1182, %v2083, %v2084
        %v2086 = vrot.slane %v2053, 1
        %v2087 = vrot.slane %v2054, 1
        %v2088 = vsel %vm1182, %v2086, %v2087
        %v2089 = vrot.slane %v2055, 1
        %v2090 = vrot.slane %v2056, 1
        %v2091 = vsel %vm1182, %v2089, %v2090
        %v2092 = vrot.slane %v2057, 1
        %v2093 = vrot.slane %v2058, 1
        %v2094 = vsel %vm1182, %v2092, %v2093
        %v2095 = vrot.slane %v2059, 1
        %v2096 = vrot.slane %v2060, 1
        %v2097 = vsel %vm1182, %v2095, %v2096
        %v2098 = vrot.slane %v2061, 1
        %v2099 = vrot.slane %v2062, 1
        %v2100 = vsel %vm1182, %v2098, %v2099
        %v2101 = vrot.slane %v2063, 1
        %v2102 = vrot.slane %v2064, 1
        %v2103 = vsel %vm1182, %v2101, %v2102
        %v2104 = vrot.slane %v2065, 1
        %v2105 = vrot.slane %v2066, 1
        %v2106 = vsel %vm1182, %v2104, %v2105
        %v2107 = vrot.slane %v2067, 1
        %v2108 = vrot.slane %v2068, 1
        %v2109 = vsel %vm1182, %v2107, %v2108
        %v2110 = vrot.slane %v2069, 1
        %v2111 = vrot.slane %v2070, 1
        %v2112 = vsel %vm1182, %v2110, %v2111
        %v2113 = vrot.slane %v2071, 1
        %v2114 = vrot.slane %v2072, 1
        %v2115 = vsel %vm1182, %v2113, %v2114
        %v2116 = vrot.slane %v2073, 1
        %v2117 = vrot.slane %v2074, 1
        %v2118 = vsel %vm1182, %v2116, %v2117
        %v2119 = vrot.slane %v2075, 1
        %v2120 = vrot.slane %v2076, 1
        %v2121 = vsel %vm1182, %v2119, %v2120
        %v2122 = vrot.slane %v2077, 1
        %v2123 = vrot.slane %v2078, 1
        %v2124 = vsel %vm1182, %v2122, %v2123
        %v2125 = vrot.slane %v2079, 1
        %v2126 = vrot.slane %v2080, 1
        %v2127 = vsel %vm1182, %v2125, %v2126
        %v2128 = vrot.slane %v2081, 1
        %v2129 = vrot.slane %v2082, 1
        %v2130 = vsel %vm1182, %v2128, %v2129
        %2131 = vrot.lane.b32.xlu0 %v2085, 20
        %v2132 = vpop.permute.xlu0 %2131
        %2133 = vrot.lane.b32.xlu0 %v2088, 20
        %v2134 = vpop.permute.xlu0 %2133
        %2135 = vrot.lane.b32.xlu0 %v2091, 20
        %v2136 = vpop.permute.xlu0 %2135
        %2137 = vrot.lane.b32.xlu0 %v2094, 20
        %v2138 = vpop.permute.xlu0 %2137
        %2139 = vrot.lane.b32.xlu0 %v2097, 20
        %v2140 = vpop.permute.xlu0 %2139
        %2141 = vrot.lane.b32.xlu0 %v2100, 20
        %v2142 = vpop.permute.xlu0 %2141
        %2143 = vrot.lane.b32.xlu0 %v2103, 20
        %v2144 = vpop.permute.xlu0 %2143
        %2145 = vrot.lane.b32.xlu0 %v2106, 20
        %v2146 = vpop.permute.xlu0 %2145
        %2147 = vrot.lane.b32.xlu0 %v2109, 20
        %v2148 = vpop.permute.xlu0 %2147
        %2149 = vrot.lane.b32.xlu0 %v2112, 20
        %v2150 = vpop.permute.xlu0 %2149
        %2151 = vrot.lane.b32.xlu0 %v2115, 20
        %v2152 = vpop.permute.xlu0 %2151
        %2153 = vrot.lane.b32.xlu0 %v2118, 20
        %v2154 = vpop.permute.xlu0 %2153
        %2155 = vrot.lane.b32.xlu0 %v2121, 20
        %v2156 = vpop.permute.xlu0 %2155
        %2157 = vrot.lane.b32.xlu0 %v2124, 20
        %v2158 = vpop.permute.xlu0 %2157
        %2159 = vrot.lane.b32.xlu0 %v2127, 20
        %v2160 = vpop.permute.xlu0 %2159
        %2161 = vrot.lane.b32.xlu0 %v2130, 20
        %v2162 = vpop.permute.xlu0 %2161
        %vm2179 = vcmask 195744
        %2180 = vst.msk [vmem:[#allocation3] sm:$0xff] %vm2179, %v2132
        %2181 = vst.msk [vmem:[#allocation3 + $0x8] sm:$0xff] %vm2179, %v2134
        %2182 = vst.msk [vmem:[#allocation3 + $0x10] sm:$0xff] %vm2179, %v2136
        %2183 = vst.msk [vmem:[#allocation3 + $0x18] sm:$0xff] %vm2179, %v2138
        %2184 = vst.msk [vmem:[#allocation3 + $0x20] sm:$0xff] %vm2179, %v2140
        %2185 = vst.msk [vmem:[#allocation3 + $0x28] sm:$0xff] %vm2179, %v2142
        %2186 = vst.msk [vmem:[#allocation3 + $0x30] sm:$0xff] %vm2179, %v2144
        %2187 = vst.msk [vmem:[#allocation3 + $0x38] sm:$0xff] %vm2179, %v2146
        %2188 = vst.msk [vmem:[#allocation3 + $0x40] sm:$0xff] %vm2179, %v2148
        %2189 = vst.msk [vmem:[#allocation3 + $0x48] sm:$0xff] %vm2179, %v2150
        %2190 = vst.msk [vmem:[#allocation3 + $0x50] sm:$0xff] %vm2179, %v2152
        %2191 = vst.msk [vmem:[#allocation3 + $0x58] sm:$0xff] %vm2179, %v2154
        %2192 = vst.msk [vmem:[#allocation3 + $0x60] sm:$0xff] %vm2179, %v2156
        %2193 = vst.msk [vmem:[#allocation3 + $0x68] sm:$0xff] %vm2179, %v2158
        %2194 = vst.msk [vmem:[#allocation3 + $0x70] sm:$0xff] %vm2179, %v2160
        %2195 = vst.msk [vmem:[#allocation3 + $0x78] sm:$0xff] %vm2179, %v2162
        %s2196 = scalar_lea.vmem %s303, 24
        %v2197 = vld [vmem:[%s2196] sm:$0xf]
        %v2198 = vld [vmem:[%s2196 + $0x4] sm:$0xf]
        %v2199 = vld [vmem:[%s2196 + $0xc] sm:$0xf]
        %v2200 = vld [vmem:[%s2196 + $0x10] sm:$0xf]
        %v2201 = vld [vmem:[%s2196 + $0x18] sm:$0xf]
        %v2202 = vld [vmem:[%s2196 + $0x1c] sm:$0xf]
        %v2203 = vld [vmem:[%s2196 + $0x24] sm:$0xf]
        %v2204 = vld [vmem:[%s2196 + $0x28] sm:$0xf]
        %v2205 = vld [vmem:[%s2196 + $0x30] sm:$0xf]
        %v2206 = vld [vmem:[%s2196 + $0x34] sm:$0xf]
        %v2207 = vld [vmem:[%s2196 + $0x3c] sm:$0xf]
        %v2208 = vld [vmem:[%s2196 + $0x40] sm:$0xf]
        %v2209 = vld [vmem:[%s2196 + $0x48] sm:$0xf]
        %v2210 = vld [vmem:[%s2196 + $0x4c] sm:$0xf]
        %v2211 = vld [vmem:[%s2196 + $0x54] sm:$0xf]
        %v2212 = vld [vmem:[%s2196 + $0x58] sm:$0xf]
        %v2213 = vld [vmem:[%s2196 + $0x60] sm:$0xf]
        %v2214 = vld [vmem:[%s2196 + $0x64] sm:$0xf]
        %v2215 = vld [vmem:[%s2196 + $0x6c] sm:$0xf]
        %v2216 = vld [vmem:[%s2196 + $0x70] sm:$0xf]
        %v2217 = vld [vmem:[%s2196 + $0x78] sm:$0xf]
        %v2218 = vld [vmem:[%s2196 + $0x7c] sm:$0xf]
        %v2219 = vld [vmem:[%s2196 + $0x84] sm:$0xf]
        %v2220 = vld [vmem:[%s2196 + $0x88] sm:$0xf]
        %v2221 = vld [vmem:[%s2196 + $0x90] sm:$0xf]
        %v2222 = vld [vmem:[%s2196 + $0x94] sm:$0xf]
        %v2223 = vld [vmem:[%s2196 + $0x9c] sm:$0xf]
        %v2224 = vld [vmem:[%s2196 + $0xa0] sm:$0xf]
        %v2225 = vld [vmem:[%s2196 + $0xa8] sm:$0xf]
        %v2226 = vld [vmem:[%s2196 + $0xac] sm:$0xf]
        %v2227 = vld [vmem:[%s2196 + $0xb4] sm:$0xf]
        %v2228 = vld [vmem:[%s2196 + $0xb8] sm:$0xf]
        %v2261 = vunpack.c.l.b16 %v2197
        %v2262 = vunpack.c.l.b16 %v2198
        %v2263 = vunpack.c.l.b16 %v2199
        %v2264 = vunpack.c.l.b16 %v2200
        %v2265 = vunpack.c.l.b16 %v2201
        %v2266 = vunpack.c.l.b16 %v2202
        %v2267 = vunpack.c.l.b16 %v2203
        %v2268 = vunpack.c.l.b16 %v2204
        %v2269 = vunpack.c.l.b16 %v2205
        %v2270 = vunpack.c.l.b16 %v2206
        %v2271 = vunpack.c.l.b16 %v2207
        %v2272 = vunpack.c.l.b16 %v2208
        %v2273 = vunpack.c.l.b16 %v2209
        %v2274 = vunpack.c.l.b16 %v2210
        %v2275 = vunpack.c.l.b16 %v2211
        %v2276 = vunpack.c.l.b16 %v2212
        %v2277 = vunpack.c.l.b16 %v2213
        %v2278 = vunpack.c.l.b16 %v2214
        %v2279 = vunpack.c.l.b16 %v2215
        %v2280 = vunpack.c.l.b16 %v2216
        %v2281 = vunpack.c.l.b16 %v2217
        %v2282 = vunpack.c.l.b16 %v2218
        %v2283 = vunpack.c.l.b16 %v2219
        %v2284 = vunpack.c.l.b16 %v2220
        %v2285 = vunpack.c.l.b16 %v2221
        %v2286 = vunpack.c.l.b16 %v2222
        %v2287 = vunpack.c.l.b16 %v2223
        %v2288 = vunpack.c.l.b16 %v2224
        %v2289 = vunpack.c.l.b16 %v2225
        %v2290 = vunpack.c.l.b16 %v2226
        %v2291 = vunpack.c.l.b16 %v2227
        %v2292 = vunpack.c.l.b16 %v2228
        %v2293 = vpack.c.b16 %v2262, %v2261
        %v2294 = vpack.c.b16 %v2264, %v2263
        %v2295 = vpack.c.b16 %v2266, %v2265
        %v2296 = vpack.c.b16 %v2268, %v2267
        %v2297 = vpack.c.b16 %v2270, %v2269
        %v2298 = vpack.c.b16 %v2272, %v2271
        %v2299 = vpack.c.b16 %v2274, %v2273
        %v2300 = vpack.c.b16 %v2276, %v2275
        %v2301 = vpack.c.b16 %v2278, %v2277
        %v2302 = vpack.c.b16 %v2280, %v2279
        %v2303 = vpack.c.b16 %v2282, %v2281
        %v2304 = vpack.c.b16 %v2284, %v2283
        %v2305 = vpack.c.b16 %v2286, %v2285
        %v2306 = vpack.c.b16 %v2288, %v2287
        %v2307 = vpack.c.b16 %v2290, %v2289
        %v2308 = vpack.c.b16 %v2292, %v2291
        %2309 = vrot.lane.b32.xlu0 %v2293, 24
        %v2310 = vpop.permute.xlu0 %2309
        %2311 = vrot.lane.b32.xlu0 %v2294, 24
        %v2312 = vpop.permute.xlu0 %2311
        %2313 = vrot.lane.b32.xlu0 %v2295, 24
        %v2314 = vpop.permute.xlu0 %2313
        %2315 = vrot.lane.b32.xlu0 %v2296, 24
        %v2316 = vpop.permute.xlu0 %2315
        %2317 = vrot.lane.b32.xlu0 %v2297, 24
        %v2318 = vpop.permute.xlu0 %2317
        %2319 = vrot.lane.b32.xlu0 %v2298, 24
        %v2320 = vpop.permute.xlu0 %2319
        %2321 = vrot.lane.b32.xlu0 %v2299, 24
        %v2322 = vpop.permute.xlu0 %2321
        %2323 = vrot.lane.b32.xlu0 %v2300, 24
        %v2324 = vpop.permute.xlu0 %2323
        %2325 = vrot.lane.b32.xlu0 %v2301, 24
        %v2326 = vpop.permute.xlu0 %2325
        %2327 = vrot.lane.b32.xlu0 %v2302, 24
        %v2328 = vpop.permute.xlu0 %2327
        %2329 = vrot.lane.b32.xlu0 %v2303, 24
        %v2330 = vpop.permute.xlu0 %2329
        %2331 = vrot.lane.b32.xlu0 %v2304, 24
        %v2332 = vpop.permute.xlu0 %2331
        %2333 = vrot.lane.b32.xlu0 %v2305, 24
        %v2334 = vpop.permute.xlu0 %2333
        %2335 = vrot.lane.b32.xlu0 %v2306, 24
        %v2336 = vpop.permute.xlu0 %2335
        %2337 = vrot.lane.b32.xlu0 %v2307, 24
        %v2338 = vpop.permute.xlu0 %2337
        %2339 = vrot.lane.b32.xlu0 %v2308, 24
        %v2340 = vpop.permute.xlu0 %2339
        %vm2357 = vcmask 228544
        %2358 = vst.msk [vmem:[#allocation3] sm:$0xff] %vm2357, %v2310
        %2359 = vst.msk [vmem:[#allocation3 + $0x8] sm:$0xff] %vm2357, %v2312
        %2360 = vst.msk [vmem:[#allocation3 + $0x10] sm:$0xff] %vm2357, %v2314
        %2361 = vst.msk [vmem:[#allocation3 + $0x18] sm:$0xff] %vm2357, %v2316
        %2362 = vst.msk [vmem:[#allocation3 + $0x20] sm:$0xff] %vm2357, %v2318
        %2363 = vst.msk [vmem:[#allocation3 + $0x28] sm:$0xff] %vm2357, %v2320
        %2364 = vst.msk [vmem:[#allocation3 + $0x30] sm:$0xff] %vm2357, %v2322
        %2365 = vst.msk [vmem:[#allocation3 + $0x38] sm:$0xff] %vm2357, %v2324
        %2366 = vst.msk [vmem:[#allocation3 + $0x40] sm:$0xff] %vm2357, %v2326
        %2367 = vst.msk [vmem:[#allocation3 + $0x48] sm:$0xff] %vm2357, %v2328
        %2368 = vst.msk [vmem:[#allocation3 + $0x50] sm:$0xff] %vm2357, %v2330
        %2369 = vst.msk [vmem:[#allocation3 + $0x58] sm:$0xff] %vm2357, %v2332
        %2370 = vst.msk [vmem:[#allocation3 + $0x60] sm:$0xff] %vm2357, %v2334
        %2371 = vst.msk [vmem:[#allocation3 + $0x68] sm:$0xff] %vm2357, %v2336
        %2372 = vst.msk [vmem:[#allocation3 + $0x70] sm:$0xff] %vm2357, %v2338
        %2373 = vst.msk [vmem:[#allocation3 + $0x78] sm:$0xff] %vm2357, %v2340
        %v2374 = vld [vmem:[%s2196] sm:$0xf]
        %v2375 = vld [vmem:[%s2196 + $0x4] sm:$0xf]
        %v2376 = vld [vmem:[%s2196 + $0x8] sm:$0x1]
        %v2377 = vld [vmem:[%s2196 + $0xc] sm:$0xf]
        %v2378 = vld [vmem:[%s2196 + $0x10] sm:$0xf]
        %v2379 = vld [vmem:[%s2196 + $0x14] sm:$0x1]
        %v2380 = vld [vmem:[%s2196 + $0x18] sm:$0xf]
        %v2381 = vld [vmem:[%s2196 + $0x1c] sm:$0xf]
        %v2382 = vld [vmem:[%s2196 + $0x20] sm:$0x1]
        %v2383 = vld [vmem:[%s2196 + $0x24] sm:$0xf]
        %v2384 = vld [vmem:[%s2196 + $0x28] sm:$0xf]
        %v2385 = vld [vmem:[%s2196 + $0x2c] sm:$0x1]
        %v2386 = vld [vmem:[%s2196 + $0x30] sm:$0xf]
        %v2387 = vld [vmem:[%s2196 + $0x34] sm:$0xf]
        %v2388 = vld [vmem:[%s2196 + $0x38] sm:$0x1]
        %v2389 = vld [vmem:[%s2196 + $0x3c] sm:$0xf]
        %v2390 = vld [vmem:[%s2196 + $0x40] sm:$0xf]
        %v2391 = vld [vmem:[%s2196 + $0x44] sm:$0x1]
        %v2392 = vld [vmem:[%s2196 + $0x48] sm:$0xf]
        %v2393 = vld [vmem:[%s2196 + $0x4c] sm:$0xf]
        %v2394 = vld [vmem:[%s2196 + $0x50] sm:$0x1]
        %v2395 = vld [vmem:[%s2196 + $0x54] sm:$0xf]
        %v2396 = vld [vmem:[%s2196 + $0x58] sm:$0xf]
        %v2397 = vld [vmem:[%s2196 + $0x5c] sm:$0x1]
        %v2398 = vld [vmem:[%s2196 + $0x60] sm:$0xf]
        %v2399 = vld [vmem:[%s2196 + $0x64] sm:$0xf]
        %v2400 = vld [vmem:[%s2196 + $0x68] sm:$0x1]
        %v2401 = vld [vmem:[%s2196 + $0x6c] sm:$0xf]
        %v2402 = vld [vmem:[%s2196 + $0x70] sm:$0xf]
        %v2403 = vld [vmem:[%s2196 + $0x74] sm:$0x1]
        %v2404 = vld [vmem:[%s2196 + $0x78] sm:$0xf]
        %v2405 = vld [vmem:[%s2196 + $0x7c] sm:$0xf]
        %v2406 = vld [vmem:[%s2196 + $0x80] sm:$0x1]
        %v2407 = vld [vmem:[%s2196 + $0x84] sm:$0xf]
        %v2408 = vld [vmem:[%s2196 + $0x88] sm:$0xf]
        %v2409 = vld [vmem:[%s2196 + $0x8c] sm:$0x1]
        %v2410 = vld [vmem:[%s2196 + $0x90] sm:$0xf]
        %v2411 = vld [vmem:[%s2196 + $0x94] sm:$0xf]
        %v2412 = vld [vmem:[%s2196 + $0x98] sm:$0x1]
        %v2413 = vld [vmem:[%s2196 + $0x9c] sm:$0xf]
        %v2414 = vld [vmem:[%s2196 + $0xa0] sm:$0xf]
        %v2415 = vld [vmem:[%s2196 + $0xa4] sm:$0x1]
        %v2416 = vld [vmem:[%s2196 + $0xa8] sm:$0xf]
        %v2417 = vld [vmem:[%s2196 + $0xac] sm:$0xf]
        %v2418 = vld [vmem:[%s2196 + $0xb0] sm:$0x1]
        %v2419 = vld [vmem:[%s2196 + $0xb4] sm:$0xf]
        %v2420 = vld [vmem:[%s2196 + $0xb8] sm:$0xf]
        %v2421 = vld [vmem:[%s2196 + $0xbc] sm:$0x1]
        %v2470 = vunpack.c.l.b16 %v2374
        %v2471 = vunpack.c.l.b16 %v2375
        %v2472 = vunpack.c.l.b16 %v2376
        %v2473 = vunpack.c.l.b16 %v2377
        %v2474 = vunpack.c.l.b16 %v2378
        %v2475 = vunpack.c.l.b16 %v2379
        %v2476 = vunpack.c.l.b16 %v2380
        %v2477 = vunpack.c.l.b16 %v2381
        %v2478 = vunpack.c.l.b16 %v2382
        %v2479 = vunpack.c.l.b16 %v2383
        %v2480 = vunpack.c.l.b16 %v2384
        %v2481 = vunpack.c.l.b16 %v2385
        %v2482 = vunpack.c.l.b16 %v2386
        %v2483 = vunpack.c.l.b16 %v2387
        %v2484 = vunpack.c.l.b16 %v2388
        %v2485 = vunpack.c.l.b16 %v2389
        %v2486 = vunpack.c.l.b16 %v2390
        %v2487 = vunpack.c.l.b16 %v2391
        %v2488 = vunpack.c.l.b16 %v2392
        %v2489 = vunpack.c.l.b16 %v2393
        %v2490 = vunpack.c.l.b16 %v2394
        %v2491 = vunpack.c.l.b16 %v2395
        %v2492 = vunpack.c.l.b16 %v2396
        %v2493 = vunpack.c.l.b16 %v2397
        %v2494 = vunpack.c.l.b16 %v2398
        %v2495 = vunpack.c.l.b16 %v2399
        %v2496 = vunpack.c.l.b16 %v2400
        %v2497 = vunpack.c.l.b16 %v2401
        %v2498 = vunpack.c.l.b16 %v2402
        %v2499 = vunpack.c.l.b16 %v2403
        %v2500 = vunpack.c.l.b16 %v2404
        %v2501 = vunpack.c.l.b16 %v2405
        %v2502 = vunpack.c.l.b16 %v2406
        %v2503 = vunpack.c.l.b16 %v2407
        %v2504 = vunpack.c.l.b16 %v2408
        %v2505 = vunpack.c.l.b16 %v2409
        %v2506 = vunpack.c.l.b16 %v2410
        %v2507 = vunpack.c.l.b16 %v2411
        %v2508 = vunpack.c.l.b16 %v2412
        %v2509 = vunpack.c.l.b16 %v2413
        %v2510 = vunpack.c.l.b16 %v2414
        %v2511 = vunpack.c.l.b16 %v2415
        %v2512 = vunpack.c.l.b16 %v2416
        %v2513 = vunpack.c.l.b16 %v2417
        %v2514 = vunpack.c.l.b16 %v2418
        %v2515 = vunpack.c.l.b16 %v2419
        %v2516 = vunpack.c.l.b16 %v2420
        %v2517 = vunpack.c.l.b16 %v2421
        %v2518 = vpack.c.b16 %v2471, %v2470
        %v2519 = vpack.c.b16 %v2472, %v2472
        %v2520 = vpack.c.b16 %v2474, %v2473
        %v2521 = vpack.c.b16 %v2475, %v2475
        %v2522 = vpack.c.b16 %v2477, %v2476
        %v2523 = vpack.c.b16 %v2478, %v2478
        %v2524 = vpack.c.b16 %v2480, %v2479
        %v2525 = vpack.c.b16 %v2481, %v2481
        %v2526 = vpack.c.b16 %v2483, %v2482
        %v2527 = vpack.c.b16 %v2484, %v2484
        %v2528 = vpack.c.b16 %v2486, %v2485
        %v2529 = vpack.c.b16 %v2487, %v2487
        %v2530 = vpack.c.b16 %v2489, %v2488
        %v2531 = vpack.c.b16 %v2490, %v2490
        %v2532 = vpack.c.b16 %v2492, %v2491
        %v2533 = vpack.c.b16 %v2493, %v2493
        %v2534 = vpack.c.b16 %v2495, %v2494
        %v2535 = vpack.c.b16 %v2496, %v2496
        %v2536 = vpack.c.b16 %v2498, %v2497
        %v2537 = vpack.c.b16 %v2499, %v2499
        %v2538 = vpack.c.b16 %v2501, %v2500
        %v2539 = vpack.c.b16 %v2502, %v2502
        %v2540 = vpack.c.b16 %v2504, %v2503
        %v2541 = vpack.c.b16 %v2505, %v2505
        %v2542 = vpack.c.b16 %v2507, %v2506
        %v2543 = vpack.c.b16 %v2508, %v2508
        %v2544 = vpack.c.b16 %v2510, %v2509
        %v2545 = vpack.c.b16 %v2511, %v2511
        %v2546 = vpack.c.b16 %v2513, %v2512
        %v2547 = vpack.c.b16 %v2514, %v2514
        %v2548 = vpack.c.b16 %v2516, %v2515
        %v2549 = vpack.c.b16 %v2517, %v2517
        %v2551 = vshrl.u32 %v2518, 16
        %v2553 = vshll.u32 %v2518, 16
        %v2555 = vrot.slane %v2553, 1
        %v2556 = vor.u32 %v2551, %v2555
        %v2558 = vshll.u32 %v2519, 16
        %v2560 = vrot.slane %v2558, 1
        %v2561 = vsel %vm748, %v2556, %v2560
        %v2563 = vshrl.u32 %v2520, 16
        %v2565 = vshll.u32 %v2520, 16
        %v2567 = vrot.slane %v2565, 1
        %v2568 = vor.u32 %v2563, %v2567
        %v2570 = vshll.u32 %v2521, 16
        %v2572 = vrot.slane %v2570, 1
        %v2573 = vsel %vm748, %v2568, %v2572
        %v2575 = vshrl.u32 %v2522, 16
        %v2577 = vshll.u32 %v2522, 16
        %v2579 = vrot.slane %v2577, 1
        %v2580 = vor.u32 %v2575, %v2579
        %v2582 = vshll.u32 %v2523, 16
        %v2584 = vrot.slane %v2582, 1
        %v2585 = vsel %vm748, %v2580, %v2584
        %v2587 = vshrl.u32 %v2524, 16
        %v2589 = vshll.u32 %v2524, 16
        %v2591 = vrot.slane %v2589, 1
        %v2592 = vor.u32 %v2587, %v2591
        %v2594 = vshll.u32 %v2525, 16
        %v2596 = vrot.slane %v2594, 1
        %v2597 = vsel %vm748, %v2592, %v2596
        %v2599 = vshrl.u32 %v2526, 16
        %v2601 = vshll.u32 %v2526, 16
        %v2603 = vrot.slane %v2601, 1
        %v2604 = vor.u32 %v2599, %v2603
        %v2606 = vshll.u32 %v2527, 16
        %v2608 = vrot.slane %v2606, 1
        %v2609 = vsel %vm748, %v2604, %v2608
        %v2611 = vshrl.u32 %v2528, 16
        %v2613 = vshll.u32 %v2528, 16
        %v2615 = vrot.slane %v2613, 1
        %v2616 = vor.u32 %v2611, %v2615
        %v2618 = vshll.u32 %v2529, 16
        %v2620 = vrot.slane %v2618, 1
        %v2621 = vsel %vm748, %v2616, %v2620
        %v2623 = vshrl.u32 %v2530, 16
        %v2625 = vshll.u32 %v2530, 16
        %v2627 = vrot.slane %v2625, 1
        %v2628 = vor.u32 %v2623, %v2627
        %v2630 = vshll.u32 %v2531, 16
        %v2632 = vrot.slane %v2630, 1
        %v2633 = vsel %vm748, %v2628, %v2632
        %v2635 = vshrl.u32 %v2532, 16
        %v2637 = vshll.u32 %v2532, 16
        %v2639 = vrot.slane %v2637, 1
        %v2640 = vor.u32 %v2635, %v2639
        %v2642 = vshll.u32 %v2533, 16
        %v2644 = vrot.slane %v2642, 1
        %v2645 = vsel %vm748, %v2640, %v2644
        %v2647 = vshrl.u32 %v2534, 16
        %v2649 = vshll.u32 %v2534, 16
        %v2651 = vrot.slane %v2649, 1
        %v2652 = vor.u32 %v2647, %v2651
        %v2654 = vshll.u32 %v2535, 16
        %v2656 = vrot.slane %v2654, 1
        %v2657 = vsel %vm748, %v2652, %v2656
        %v2659 = vshrl.u32 %v2536, 16
        %v2661 = vshll.u32 %v2536, 16
        %v2663 = vrot.slane %v2661, 1
        %v2664 = vor.u32 %v2659, %v2663
        %v2666 = vshll.u32 %v2537, 16
        %v2668 = vrot.slane %v2666, 1
        %v2669 = vsel %vm748, %v2664, %v2668
        %v2671 = vshrl.u32 %v2538, 16
        %v2673 = vshll.u32 %v2538, 16
        %v2675 = vrot.slane %v2673, 1
        %v2676 = vor.u32 %v2671, %v2675
        %v2678 = vshll.u32 %v2539, 16
        %v2680 = vrot.slane %v2678, 1
        %v2681 = vsel %vm748, %v2676, %v2680
        %v2683 = vshrl.u32 %v2540, 16
        %v2685 = vshll.u32 %v2540, 16
        %v2687 = vrot.slane %v2685, 1
        %v2688 = vor.u32 %v2683, %v2687
        %v2690 = vshll.u32 %v2541, 16
        %v2692 = vrot.slane %v2690, 1
        %v2693 = vsel %vm748, %v2688, %v2692
        %v2695 = vshrl.u32 %v2542, 16
        %v2697 = vshll.u32 %v2542, 16
        %v2699 = vrot.slane %v2697, 1
        %v2700 = vor.u32 %v2695, %v2699
        %v2702 = vshll.u32 %v2543, 16
        %v2704 = vrot.slane %v2702, 1
        %v2705 = vsel %vm748, %v2700, %v2704
        %v2707 = vshrl.u32 %v2544, 16
        %v2709 = vshll.u32 %v2544, 16
        %v2711 = vrot.slane %v2709, 1
        %v2712 = vor.u32 %v2707, %v2711
        %v2714 = vshll.u32 %v2545, 16
        %v2716 = vrot.slane %v2714, 1
        %v2717 = vsel %vm748, %v2712, %v2716
        %v2719 = vshrl.u32 %v2546, 16
        %v2721 = vshll.u32 %v2546, 16
        %v2723 = vrot.slane %v2721, 1
        %v2724 = vor.u32 %v2719, %v2723
        %v2726 = vshll.u32 %v2547, 16
        %v2728 = vrot.slane %v2726, 1
        %v2729 = vsel %vm748, %v2724, %v2728
        %v2731 = vshrl.u32 %v2548, 16
        %v2733 = vshll.u32 %v2548, 16
        %v2735 = vrot.slane %v2733, 1
        %v2736 = vor.u32 %v2731, %v2735
        %v2738 = vshll.u32 %v2549, 16
        %v2740 = vrot.slane %v2738, 1
        %v2741 = vsel %vm748, %v2736, %v2740
        %2742 = vrot.lane.b32.xlu0 %v2561, 28
        %v2743 = vpop.permute.xlu0 %2742
        %2744 = vrot.lane.b32.xlu0 %v2573, 28
        %v2745 = vpop.permute.xlu0 %2744
        %2746 = vrot.lane.b32.xlu0 %v2585, 28
        %v2747 = vpop.permute.xlu0 %2746
        %2748 = vrot.lane.b32.xlu0 %v2597, 28
        %v2749 = vpop.permute.xlu0 %2748
        %2750 = vrot.lane.b32.xlu0 %v2609, 28
        %v2751 = vpop.permute.xlu0 %2750
        %2752 = vrot.lane.b32.xlu0 %v2621, 28
        %v2753 = vpop.permute.xlu0 %2752
        %2754 = vrot.lane.b32.xlu0 %v2633, 28
        %v2755 = vpop.permute.xlu0 %2754
        %2756 = vrot.lane.b32.xlu0 %v2645, 28
        %v2757 = vpop.permute.xlu0 %2756
        %2758 = vrot.lane.b32.xlu0 %v2657, 28
        %v2759 = vpop.permute.xlu0 %2758
        %2760 = vrot.lane.b32.xlu0 %v2669, 28
        %v2761 = vpop.permute.xlu0 %2760
        %2762 = vrot.lane.b32.xlu0 %v2681, 28
        %v2763 = vpop.permute.xlu0 %2762
        %2764 = vrot.lane.b32.xlu0 %v2693, 28
        %v2765 = vpop.permute.xlu0 %2764
        %2766 = vrot.lane.b32.xlu0 %v2705, 28
        %v2767 = vpop.permute.xlu0 %2766
        %2768 = vrot.lane.b32.xlu0 %v2717, 28
        %v2769 = vpop.permute.xlu0 %2768
        %2770 = vrot.lane.b32.xlu0 %v2729, 28
        %v2771 = vpop.permute.xlu0 %2770
        %2772 = vrot.lane.b32.xlu0 %v2741, 28
        %v2773 = vpop.permute.xlu0 %2772
        %vm2790 = vcmask 261344
        %2791 = vst.msk [vmem:[#allocation3] sm:$0xff] %vm2790, %v2743
        %2792 = vst.msk [vmem:[#allocation3 + $0x8] sm:$0xff] %vm2790, %v2745
        %2793 = vst.msk [vmem:[#allocation3 + $0x10] sm:$0xff] %vm2790, %v2747
        %2794 = vst.msk [vmem:[#allocation3 + $0x18] sm:$0xff] %vm2790, %v2749
        %2795 = vst.msk [vmem:[#allocation3 + $0x20] sm:$0xff] %vm2790, %v2751
        %2796 = vst.msk [vmem:[#allocation3 + $0x28] sm:$0xff] %vm2790, %v2753
        %2797 = vst.msk [vmem:[#allocation3 + $0x30] sm:$0xff] %vm2790, %v2755
        %2798 = vst.msk [vmem:[#allocation3 + $0x38] sm:$0xff] %vm2790, %v2757
        %2799 = vst.msk [vmem:[#allocation3 + $0x40] sm:$0xff] %vm2790, %v2759
        %2800 = vst.msk [vmem:[#allocation3 + $0x48] sm:$0xff] %vm2790, %v2761
        %2801 = vst.msk [vmem:[#allocation3 + $0x50] sm:$0xff] %vm2790, %v2763
        %2802 = vst.msk [vmem:[#allocation3 + $0x58] sm:$0xff] %vm2790, %v2765
        %2803 = vst.msk [vmem:[#allocation3 + $0x60] sm:$0xff] %vm2790, %v2767
        %2804 = vst.msk [vmem:[#allocation3 + $0x68] sm:$0xff] %vm2790, %v2769
        %2805 = vst.msk [vmem:[#allocation3 + $0x70] sm:$0xff] %vm2790, %v2771
        %2806 = vst.msk [vmem:[#allocation3 + $0x78] sm:$0xff] %vm2790, %v2773
        %v2807 = vld [vmem:[%s2196] sm:$0xe]
        %v2808 = vld [vmem:[%s2196 + $0x4] sm:$0xf]
        %v2809 = vld [vmem:[%s2196 + $0x8] sm:$0x1]
        %v2810 = vld [vmem:[%s2196 + $0xc] sm:$0xe]
        %v2811 = vld [vmem:[%s2196 + $0x10] sm:$0xf]
        %v2812 = vld [vmem:[%s2196 + $0x14] sm:$0x1]
        %v2813 = vld [vmem:[%s2196 + $0x18] sm:$0xe]
        %v2814 = vld [vmem:[%s2196 + $0x1c] sm:$0xf]
        %v2815 = vld [vmem:[%s2196 + $0x20] sm:$0x1]
        %v2816 = vld [vmem:[%s2196 + $0x24] sm:$0xe]
        %v2817 = vld [vmem:[%s2196 + $0x28] sm:$0xf]
        %v2818 = vld [vmem:[%s2196 + $0x2c] sm:$0x1]
        %v2819 = vld [vmem:[%s2196 + $0x30] sm:$0xe]
        %v2820 = vld [vmem:[%s2196 + $0x34] sm:$0xf]
        %v2821 = vld [vmem:[%s2196 + $0x38] sm:$0x1]
        %v2822 = vld [vmem:[%s2196 + $0x3c] sm:$0xe]
        %v2823 = vld [vmem:[%s2196 + $0x40] sm:$0xf]
        %v2824 = vld [vmem:[%s2196 + $0x44] sm:$0x1]
        %v2825 = vld [vmem:[%s2196 + $0x48] sm:$0xe]
        %v2826 = vld [vmem:[%s2196 + $0x4c] sm:$0xf]
        %v2827 = vld [vmem:[%s2196 + $0x50] sm:$0x1]
        %v2828 = vld [vmem:[%s2196 + $0x54] sm:$0xe]
        %v2829 = vld [vmem:[%s2196 + $0x58] sm:$0xf]
        %v2830 = vld [vmem:[%s2196 + $0x5c] sm:$0x1]
        %v2831 = vld [vmem:[%s2196 + $0x60] sm:$0xe]
        %v2832 = vld [vmem:[%s2196 + $0x64] sm:$0xf]
        %v2833 = vld [vmem:[%s2196 + $0x68] sm:$0x1]
        %v2834 = vld [vmem:[%s2196 + $0x6c] sm:$0xe]
        %v2835 = vld [vmem:[%s2196 + $0x70] sm:$0xf]
        %v2836 = vld [vmem:[%s2196 + $0x74] sm:$0x1]
        %v2837 = vld [vmem:[%s2196 + $0x78] sm:$0xe]
        %v2838 = vld [vmem:[%s2196 + $0x7c] sm:$0xf]
        %v2839 = vld [vmem:[%s2196 + $0x80] sm:$0x1]
        %v2840 = vld [vmem:[%s2196 + $0x84] sm:$0xe]
        %v2841 = vld [vmem:[%s2196 + $0x88] sm:$0xf]
        %v2842 = vld [vmem:[%s2196 + $0x8c] sm:$0x1]
        %v2843 = vld [vmem:[%s2196 + $0x90] sm:$0xe]
        %v2844 = vld [vmem:[%s2196 + $0x94] sm:$0xf]
        %v2845 = vld [vmem:[%s2196 + $0x98] sm:$0x1]
        %v2846 = vld [vmem:[%s2196 + $0x9c] sm:$0xe]
        %v2847 = vld [vmem:[%s2196 + $0xa0] sm:$0xf]
        %v2848 = vld [vmem:[%s2196 + $0xa4] sm:$0x1]
        %v2849 = vld [vmem:[%s2196 + $0xa8] sm:$0xe]
        %v2850 = vld [vmem:[%s2196 + $0xac] sm:$0xf]
        %v2851 = vld [vmem:[%s2196 + $0xb0] sm:$0x1]
        %v2852 = vld [vmem:[%s2196 + $0xb4] sm:$0xe]
        %v2853 = vld [vmem:[%s2196 + $0xb8] sm:$0xf]
        %v2854 = vld [vmem:[%s2196 + $0xbc] sm:$0x1]
        %v2903 = vunpack.c.l.b16 %v2807
        %v2904 = vunpack.c.l.b16 %v2808
        %v2905 = vunpack.c.l.b16 %v2809
        %v2906 = vunpack.c.l.b16 %v2810
        %v2907 = vunpack.c.l.b16 %v2811
        %v2908 = vunpack.c.l.b16 %v2812
        %v2909 = vunpack.c.l.b16 %v2813
        %v2910 = vunpack.c.l.b16 %v2814
        %v2911 = vunpack.c.l.b16 %v2815
        %v2912 = vunpack.c.l.b16 %v2816
        %v2913 = vunpack.c.l.b16 %v2817
        %v2914 = vunpack.c.l.b16 %v2818
        %v2915 = vunpack.c.l.b16 %v2819
        %v2916 = vunpack.c.l.b16 %v2820
        %v2917 = vunpack.c.l.b16 %v2821
        %v2918 = vunpack.c.l.b16 %v2822
        %v2919 = vunpack.c.l.b16 %v2823
        %v2920 = vunpack.c.l.b16 %v2824
        %v2921 = vunpack.c.l.b16 %v2825
        %v2922 = vunpack.c.l.b16 %v2826
        %v2923 = vunpack.c.l.b16 %v2827
        %v2924 = vunpack.c.l.b16 %v2828
        %v2925 = vunpack.c.l.b16 %v2829
        %v2926 = vunpack.c.l.b16 %v2830
        %v2927 = vunpack.c.l.b16 %v2831
        %v2928 = vunpack.c.l.b16 %v2832
        %v2929 = vunpack.c.l.b16 %v2833
        %v2930 = vunpack.c.l.b16 %v2834
        %v2931 = vunpack.c.l.b16 %v2835
        %v2932 = vunpack.c.l.b16 %v2836
        %v2933 = vunpack.c.l.b16 %v2837
        %v2934 = vunpack.c.l.b16 %v2838
        %v2935 = vunpack.c.l.b16 %v2839
        %v2936 = vunpack.c.l.b16 %v2840
        %v2937 = vunpack.c.l.b16 %v2841
        %v2938 = vunpack.c.l.b16 %v2842
        %v2939 = vunpack.c.l.b16 %v2843
        %v2940 = vunpack.c.l.b16 %v2844
        %v2941 = vunpack.c.l.b16 %v2845
        %v2942 = vunpack.c.l.b16 %v2846
        %v2943 = vunpack.c.l.b16 %v2847
        %v2944 = vunpack.c.l.b16 %v2848
        %v2945 = vunpack.c.l.b16 %v2849
        %v2946 = vunpack.c.l.b16 %v2850
        %v2947 = vunpack.c.l.b16 %v2851
        %v2948 = vunpack.c.l.b16 %v2852
        %v2949 = vunpack.c.l.b16 %v2853
        %v2950 = vunpack.c.l.b16 %v2854
        %v2951 = vpack.c.b16 %v2904, %v2903
        %v2952 = vpack.c.b16 %v2905, %v2905
        %v2953 = vpack.c.b16 %v2907, %v2906
        %v2954 = vpack.c.b16 %v2908, %v2908
        %v2955 = vpack.c.b16 %v2910, %v2909
        %v2956 = vpack.c.b16 %v2911, %v2911
        %v2957 = vpack.c.b16 %v2913, %v2912
        %v2958 = vpack.c.b16 %v2914, %v2914
        %v2959 = vpack.c.b16 %v2916, %v2915
        %v2960 = vpack.c.b16 %v2917, %v2917
        %v2961 = vpack.c.b16 %v2919, %v2918
        %v2962 = vpack.c.b16 %v2920, %v2920
        %v2963 = vpack.c.b16 %v2922, %v2921
        %v2964 = vpack.c.b16 %v2923, %v2923
        %v2965 = vpack.c.b16 %v2925, %v2924
        %v2966 = vpack.c.b16 %v2926, %v2926
        %v2967 = vpack.c.b16 %v2928, %v2927
        %v2968 = vpack.c.b16 %v2929, %v2929
        %v2969 = vpack.c.b16 %v2931, %v2930
        %v2970 = vpack.c.b16 %v2932, %v2932
        %v2971 = vpack.c.b16 %v2934, %v2933
        %v2972 = vpack.c.b16 %v2935, %v2935
        %v2973 = vpack.c.b16 %v2937, %v2936
        %v2974 = vpack.c.b16 %v2938, %v2938
        %v2975 = vpack.c.b16 %v2940, %v2939
        %v2976 = vpack.c.b16 %v2941, %v2941
        %v2977 = vpack.c.b16 %v2943, %v2942
        %v2978 = vpack.c.b16 %v2944, %v2944
        %v2979 = vpack.c.b16 %v2946, %v2945
        %v2980 = vpack.c.b16 %v2947, %v2947
        %v2981 = vpack.c.b16 %v2949, %v2948
        %v2982 = vpack.c.b16 %v2950, %v2950
        %v2983 = vrot.slane %v2951, 1
        %v2984 = vrot.slane %v2952, 1
        %v2985 = vsel %vm1182, %v2983, %v2984
        %v2986 = vrot.slane %v2953, 1
        %v2987 = vrot.slane %v2954, 1
        %v2988 = vsel %vm1182, %v2986, %v2987
        %v2989 = vrot.slane %v2955, 1
        %v2990 = vrot.slane %v2956, 1
        %v2991 = vsel %vm1182, %v2989, %v2990
        %v2992 = vrot.slane %v2957, 1
        %v2993 = vrot.slane %v2958, 1
        %v2994 = vsel %vm1182, %v2992, %v2993
        %v2995 = vrot.slane %v2959, 1
        %v2996 = vrot.slane %v2960, 1
        %v2997 = vsel %vm1182, %v2995, %v2996
        %v2998 = vrot.slane %v2961, 1
        %v2999 = vrot.slane %v2962, 1
        %v3000 = vsel %vm1182, %v2998, %v2999
        %v3001 = vrot.slane %v2963, 1
        %v3002 = vrot.slane %v2964, 1
        %v3003 = vsel %vm1182, %v3001, %v3002
        %v3004 = vrot.slane %v2965, 1
        %v3005 = vrot.slane %v2966, 1
        %v3006 = vsel %vm1182, %v3004, %v3005
        %v3007 = vrot.slane %v2967, 1
        %v3008 = vrot.slane %v2968, 1
        %v3009 = vsel %vm1182, %v3007, %v3008
        %v3010 = vrot.slane %v2969, 1
        %v3011 = vrot.slane %v2970, 1
        %v3012 = vsel %vm1182, %v3010, %v3011
        %v3013 = vrot.slane %v2971, 1
        %v3014 = vrot.slane %v2972, 1
        %v3015 = vsel %vm1182, %v3013, %v3014
        %v3016 = vrot.slane %v2973, 1
        %v3017 = vrot.slane %v2974, 1
        %v3018 = vsel %vm1182, %v3016, %v3017
        %v3019 = vrot.slane %v2975, 1
        %v3020 = vrot.slane %v2976, 1
        %v3021 = vsel %vm1182, %v3019, %v3020
        %v3022 = vrot.slane %v2977, 1
        %v3023 = vrot.slane %v2978, 1
        %v3024 = vsel %vm1182, %v3022, %v3023
        %v3025 = vrot.slane %v2979, 1
        %v3026 = vrot.slane %v2980, 1
        %v3027 = vsel %vm1182, %v3025, %v3026
        %v3028 = vrot.slane %v2981, 1
        %v3029 = vrot.slane %v2982, 1
        %v3030 = vsel %vm1182, %v3028, %v3029
        %3031 = vrot.lane.b32.xlu0 %v2985, 32
        %v3032 = vpop.permute.xlu0 %3031
        %3033 = vrot.lane.b32.xlu0 %v2988, 32
        %v3034 = vpop.permute.xlu0 %3033
        %3035 = vrot.lane.b32.xlu0 %v2991, 32
        %v3036 = vpop.permute.xlu0 %3035
        %3037 = vrot.lane.b32.xlu0 %v2994, 32
        %v3038 = vpop.permute.xlu0 %3037
        %3039 = vrot.lane.b32.xlu0 %v2997, 32
        %v3040 = vpop.permute.xlu0 %3039
        %3041 = vrot.lane.b32.xlu0 %v3000, 32
        %v3042 = vpop.permute.xlu0 %3041
        %3043 = vrot.lane.b32.xlu0 %v3003, 32
        %v3044 = vpop.permute.xlu0 %3043
        %3045 = vrot.lane.b32.xlu0 %v3006, 32
        %v3046 = vpop.permute.xlu0 %3045
        %3047 = vrot.lane.b32.xlu0 %v3009, 32
        %v3048 = vpop.permute.xlu0 %3047
        %3049 = vrot.lane.b32.xlu0 %v3012, 32
        %v3050 = vpop.permute.xlu0 %3049
        %3051 = vrot.lane.b32.xlu0 %v3015, 32
        %v3052 = vpop.permute.xlu0 %3051
        %3053 = vrot.lane.b32.xlu0 %v3018, 32
        %v3054 = vpop.permute.xlu0 %3053
        %3055 = vrot.lane.b32.xlu0 %v3021, 32
        %v3056 = vpop.permute.xlu0 %3055
        %3057 = vrot.lane.b32.xlu0 %v3024, 32
        %v3058 = vpop.permute.xlu0 %3057
        %3059 = vrot.lane.b32.xlu0 %v3027, 32
        %v3060 = vpop.permute.xlu0 %3059
        %3061 = vrot.lane.b32.xlu0 %v3030, 32
        %v3062 = vpop.permute.xlu0 %3061
        %vm3079 = vcmask 294144
        %3080 = vst.msk [vmem:[#allocation3] sm:$0xff] %vm3079, %v3032
        %3081 = vst.msk [vmem:[#allocation3 + $0x8] sm:$0xff] %vm3079, %v3034
        %3082 = vst.msk [vmem:[#allocation3 + $0x10] sm:$0xff] %vm3079, %v3036
        %3083 = vst.msk [vmem:[#allocation3 + $0x18] sm:$0xff] %vm3079, %v3038
        %3084 = vst.msk [vmem:[#allocation3 + $0x20] sm:$0xff] %vm3079, %v3040
        %3085 = vst.msk [vmem:[#allocation3 + $0x28] sm:$0xff] %vm3079, %v3042
        %3086 = vst.msk [vmem:[#allocation3 + $0x30] sm:$0xff] %vm3079, %v3044
        %3087 = vst.msk [vmem:[#allocation3 + $0x38] sm:$0xff] %vm3079, %v3046
        %3088 = vst.msk [vmem:[#allocation3 + $0x40] sm:$0xff] %vm3079, %v3048
        %3089 = vst.msk [vmem:[#allocation3 + $0x48] sm:$0xff] %vm3079, %v3050
        %3090 = vst.msk [vmem:[#allocation3 + $0x50] sm:$0xff] %vm3079, %v3052
        %3091 = vst.msk [vmem:[#allocation3 + $0x58] sm:$0xff] %vm3079, %v3054
        %3092 = vst.msk [vmem:[#allocation3 + $0x60] sm:$0xff] %vm3079, %v3056
        %3093 = vst.msk [vmem:[#allocation3 + $0x68] sm:$0xff] %vm3079, %v3058
        %3094 = vst.msk [vmem:[#allocation3 + $0x70] sm:$0xff] %vm3079, %v3060
        %3095 = vst.msk [vmem:[#allocation3 + $0x78] sm:$0xff] %vm3079, %v3062
        %v3096 = vld [vmem:[#allocation3] sm:$0xff]
        %v3097 = vld [vmem:[#allocation3 + $0x8] sm:$0xff]
        %v3098 = vld [vmem:[#allocation3 + $0x10] sm:$0xff]
        %v3099 = vld [vmem:[#allocation3 + $0x18] sm:$0xff]
        %v3100 = vld [vmem:[#allocation3 + $0x20] sm:$0xff]
        %v3101 = vld [vmem:[#allocation3 + $0x28] sm:$0xff]
        %v3102 = vld [vmem:[#allocation3 + $0x30] sm:$0xff]
        %v3103 = vld [vmem:[#allocation3 + $0x38] sm:$0xff]
        %v3104 = vld [vmem:[#allocation3 + $0x40] sm:$0xff]
        %v3105 = vld [vmem:[#allocation3 + $0x48] sm:$0xff]
        %v3106 = vld [vmem:[#allocation3 + $0x50] sm:$0xff]
        %v3107 = vld [vmem:[#allocation3 + $0x58] sm:$0xff]
        %v3108 = vld [vmem:[#allocation3 + $0x60] sm:$0xff]
        %v3109 = vld [vmem:[#allocation3 + $0x68] sm:$0xff]
        %v3110 = vld [vmem:[#allocation3 + $0x70] sm:$0xff]
        %v3111 = vld [vmem:[#allocation3 + $0x78] sm:$0xff]
        %v3112 = vld [vmem:[%s1] sm:$0xf]
        %v3113 = vld [vmem:[%s1 + $0x4] sm:$0xf]
        %v3114 = vld [vmem:[%s1 + $0x8] sm:$0xf]
        %v3115 = vld [vmem:[%s1 + $0xc] sm:$0xf]
        %v3116 = vld [vmem:[%s1 + $0x10] sm:$0x3]
        %v3117 = vld [vmem:[%s2] sm:$0x1]
        %v3119 = vlaneseq
        %v3120 = vshrl.u32 %v3119, 7
        %v3121 = vsub.s32 0, %v3120
        %v3122 = vrot.slane %v3117, %v3121
        %v3129 = vunpack.c.l.b16 %v3112
        %v3130 = vunpack.c.l.b16 %v3113
        %v3131 = vunpack.c.l.b16 %v3114
        %v3132 = vunpack.c.l.b16 %v3115
        %v3133 = vunpack.c.l.b16 %v3116
        %v3134 = vpack.c.b16 %v3130, %v3129
        %v3135 = vpack.c.b16 %v3132, %v3131
        %v3136 = vpack.c.b16 %v3133, %v3133
        %vm3139 = vcmask 293888
        %v3141 = vsel %vm3139, %v3096, 0
        %v3144 = vsel %vm3139, %v3097, 0
        %v3147 = vsel %vm3139, %v3098, 0
        %v3150 = vsel %vm3139, %v3099, 0
        %v3153 = vsel %vm3139, %v3100, 0
        %v3156 = vsel %vm3139, %v3101, 0
        %v3159 = vsel %vm3139, %v3102, 0
        %v3162 = vsel %vm3139, %v3103, 0
        %v3165 = vsel %vm3139, %v3104, 0
        %v3168 = vsel %vm3139, %v3105, 0
        %v3171 = vsel %vm3139, %v3106, 0
        %v3174 = vsel %vm3139, %v3107, 0
        %v3177 = vsel %vm3139, %v3108, 0
        %v3180 = vsel %vm3139, %v3109, 0
        %v3183 = vsel %vm3139, %v3110, 0
        %v3186 = vsel %vm3139, %v3111, 0
        %vm3188 = vcmask 1041408
        %v3190 = vsel %vm3188, %v3136, 0
        %3192 = vmatprep.subr.bf16.mxu0 0
        %3193 = vmatpush1.bf16.msra.mxu0 %v3134
        %3194 = vmatprep.subr.bf16.mxu0 0
        %3195 = vmatpush1.bf16.msra.mxu0 %v3135
        %3196 = vmatprep.subr.bf16.mxu0 0
        %3197 = vmatpush1.bf16.msra.mxu0 %v3190
        %3198 = vmatprep.subr.bf16.mxu0 0
        %3199 = vmatpush1.bf16.msra.mxu0 0
        %3200 = vmatprep.subr.bf16.mxu0 0
        %3201 = vmatpush1.bf16.msra.mxu0 0
        %3202 = vmatprep.subr.bf16.mxu0 0
        %3203 = vmatpush1.bf16.msra.mxu0 0
        %3204 = vmatprep.subr.bf16.mxu0 0
        %3205 = vmatpush1.bf16.msra.mxu0 0
        %3206 = vmatprep.subr.bf16.mxu0 0
        %3207 = vmatpush1.bf16.msra.mxu0 0
        %3208 = vmatprep.subr.bf16.mxu0 0
        %3209 = vmatpush1.bf16.msra.mxu0 0
        %3210 = vmatprep.subr.bf16.mxu0 0
        %3211 = vmatpush1.bf16.msra.mxu0 0
        %3212 = vmatprep.subr.bf16.mxu0 0
        %3213 = vmatpush1.bf16.msra.mxu0 0
        %3214 = vmatprep.subr.bf16.mxu0 0
        %3215 = vmatpush1.bf16.msra.mxu0 0
        %3216 = vmatprep.subr.bf16.mxu0 0
        %3217 = vmatpush1.bf16.msra.mxu0 0
        %3218 = vmatprep.subr.bf16.mxu0 0
        %3219 = vmatpush1.bf16.msra.mxu0 0
        %3220 = vmatprep.subr.bf16.mxu0 0
        %3221 = vmatpush1.bf16.msra.mxu0 0
        %3222 = vmatprep.subr.bf16.mxu0 0
        %3223 = vmatpush1.bf16.msra.mxu0 0
        %3224 = vmatprep.mubr.bf16.mxu0 0
        %3225 = vmatmul.mubr.bf16.gmra.mrb[0].mxu0 %v3141
        %v3226 = vpop.f32.mrb[0].mxu0
        %v3227 = vadd.f32 %v3122, %v3226
        %v3228 = vpop.f32.mrb[0].mxu0
        %v3229 = vpop.f32.mrb[0].mxu0
        %v3230 = vadd.f32 %v3122, %v3229
        %v3231 = vpop.f32.mrb[0].mxu0
        %3232 = vmatprep.mubr.bf16.mxu0 0
        %3233 = vmatmul.mubr.bf16.gmra.mrb[0].mxu0 %v3144
        %v3234 = vpop.f32.mrb[0].mxu0
        %v3235 = vadd.f32 %v3122, %v3234
        %v3236 = vpop.f32.mrb[0].mxu0
        %v3237 = vpop.f32.mrb[0].mxu0
        %v3238 = vadd.f32 %v3122, %v3237
        %v3239 = vpop.f32.mrb[0].mxu0
        %3240 = vmatprep.mubr.bf16.mxu0 0
        %3241 = vmatmul.mubr.bf16.gmra.mrb[0].mxu0 %v3147
        %v3242 = vpop.f32.mrb[0].mxu0
        %v3243 = vadd.f32 %v3122, %v3242
        %v3244 = vpop.f32.mrb[0].mxu0
        %v3245 = vpop.f32.mrb[0].mxu0
        %v3246 = vadd.f32 %v3122, %v3245
        %v3247 = vpop.f32.mrb[0].mxu0
        %3248 = vmatprep.mubr.bf16.mxu0 0
        %3249 = vmatmul.mubr.bf16.gmra.mrb[0].mxu0 %v3150
        %v3250 = vpop.f32.mrb[0].mxu0
        %v3251 = vadd.f32 %v3122, %v3250
        %v3252 = vpop.f32.mrb[0].mxu0
        %v3253 = vpop.f32.mrb[0].mxu0
        %v3254 = vadd.f32 %v3122, %v3253
        %v3255 = vpop.f32.mrb[0].mxu0
        %3256 = vmatprep.mubr.bf16.mxu0 0
        %3257 = vmatmul.mubr.bf16.gmra.mrb[0].mxu0 %v3153
        %v3258 = vpop.f32.mrb[0].mxu0
        %v3259 = vadd.f32 %v3122, %v3258
        %v3260 = vpop.f32.mrb[0].mxu0
        %v3261 = vpop.f32.mrb[0].mxu0
        %v3262 = vadd.f32 %v3122, %v3261
        %v3263 = vpop.f32.mrb[0].mxu0
        %3264 = vmatprep.mubr.bf16.mxu0 0
        %3265 = vmatmul.mubr.bf16.gmra.mrb[0].mxu0 %v3156
        %v3266 = vpop.f32.mrb[0].mxu0
        %v3267 = vadd.f32 %v3122, %v3266
        %v3268 = vpop.f32.mrb[0].mxu0
        %v3269 = vpop.f32.mrb[0].mxu0
        %v3270 = vadd.f32 %v3122, %v3269
        %v3271 = vpop.f32.mrb[0].mxu0
        %3272 = vmatprep.mubr.bf16.mxu0 0
        %3273 = vmatmul.mubr.bf16.gmra.mrb[0].mxu0 %v3159
        %v3274 = vpop.f32.mrb[0].mxu0
        %v3275 = vadd.f32 %v3122, %v3274
        %v3276 = vpop.f32.mrb[0].mxu0
        %v3277 = vpop.f32.mrb[0].mxu0
        %v3278 = vadd.f32 %v3122, %v3277
        %v3279 = vpop.f32.mrb[0].mxu0
        %3280 = vmatprep.mubr.bf16.mxu0 0
        %3281 = vmatmul.mubr.bf16.gmra.mrb[0].mxu0 %v3162
        %v3282 = vpop.f32.mrb[0].mxu0
        %v3283 = vadd.f32 %v3122, %v3282
        %v3284 = vpop.f32.mrb[0].mxu0
        %v3285 = vpop.f32.mrb[0].mxu0
        %v3286 = vadd.f32 %v3122, %v3285
        %v3287 = vpop.f32.mrb[0].mxu0
        %3288 = vmatprep.mubr.bf16.mxu0 0
        %3289 = vmatmul.mubr.bf16.gmra.mrb[0].mxu0 %v3165
        %v3290 = vpop.f32.mrb[0].mxu0
        %v3291 = vadd.f32 %v3122, %v3290
        %v3292 = vpop.f32.mrb[0].mxu0
        %v3293 = vpop.f32.mrb[0].mxu0
        %v3294 = vadd.f32 %v3122, %v3293
        %v3295 = vpop.f32.mrb[0].mxu0
        %3296 = vmatprep.mubr.bf16.mxu0 0
        %3297 = vmatmul.mubr.bf16.gmra.mrb[0].mxu0 %v3168
        %v3298 = vpop.f32.mrb[0].mxu0
        %v3299 = vadd.f32 %v3122, %v3298
        %v3300 = vpop.f32.mrb[0].mxu0
        %v3301 = vpop.f32.mrb[0].mxu0
        %v3302 = vadd.f32 %v3122, %v3301
        %v3303 = vpop.f32.mrb[0].mxu0
        %3304 = vmatprep.mubr.bf16.mxu0 0
        %3305 = vmatmul.mubr.bf16.gmra.mrb[0].mxu0 %v3171
        %v3306 = vpop.f32.mrb[0].mxu0
        %v3307 = vadd.f32 %v3122, %v3306
        %v3308 = vpop.f32.mrb[0].mxu0
        %v3309 = vpop.f32.mrb[0].mxu0
        %v3310 = vadd.f32 %v3122, %v3309
        %v3311 = vpop.f32.mrb[0].mxu0
        %3312 = vmatprep.mubr.bf16.mxu0 0
        %3313 = vmatmul.mubr.bf16.gmra.mrb[0].mxu0 %v3174
        %v3314 = vpop.f32.mrb[0].mxu0
        %v3315 = vadd.f32 %v3122, %v3314
        %v3316 = vpop.f32.mrb[0].mxu0
        %v3317 = vpop.f32.mrb[0].mxu0
        %v3318 = vadd.f32 %v3122, %v3317
        %v3319 = vpop.f32.mrb[0].mxu0
        %3320 = vmatprep.mubr.bf16.mxu0 0
        %3321 = vmatmul.mubr.bf16.gmra.mrb[0].mxu0 %v3177
        %v3322 = vpop.f32.mrb[0].mxu0
        %v3323 = vadd.f32 %v3122, %v3322
        %v3324 = vpop.f32.mrb[0].mxu0
        %v3325 = vpop.f32.mrb[0].mxu0
        %v3326 = vadd.f32 %v3122, %v3325
        %v3327 = vpop.f32.mrb[0].mxu0
        %3328 = vmatprep.mubr.bf16.mxu0 0
        %3329 = vmatmul.mubr.bf16.gmra.mrb[0].mxu0 %v3180
        %v3330 = vpop.f32.mrb[0].mxu0
        %v3331 = vadd.f32 %v3122, %v3330
        %v3332 = vpop.f32.mrb[0].mxu0
        %v3333 = vpop.f32.mrb[0].mxu0
        %v3334 = vadd.f32 %v3122, %v3333
        %v3335 = vpop.f32.mrb[0].mxu0
        %3336 = vmatprep.mubr.bf16.mxu0 0
        %3337 = vmatmul.mubr.bf16.gmra.mrb[0].mxu0 %v3183
        %v3338 = vpop.f32.mrb[0].mxu0
        %v3339 = vadd.f32 %v3122, %v3338
        %v3340 = vpop.f32.mrb[0].mxu0
        %v3341 = vpop.f32.mrb[0].mxu0
        %v3342 = vadd.f32 %v3122, %v3341
        %v3343 = vpop.f32.mrb[0].mxu0
        %3344 = vmatprep.mubr.bf16.mxu0 0
        %3345 = vmatmul.mubr.bf16.gmra.mrb[0].mxu0 %v3186
        %v3346 = vpop.f32.mrb[0].mxu0
        %v3347 = vadd.f32 %v3122, %v3346
        %v3348 = vpop.f32.mrb[0].mxu0
        %v3349 = vpop.f32.mrb[0].mxu0
        %v3350 = vadd.f32 %v3122, %v3349
        %v3351 = vpop.f32.mrb[0].mxu0
        %3352 = vdwg.mxu0
        %v3353 = vpack.c.bf16 %v3230, %v3227
        %v3354 = vpack.c.bf16 %v3238, %v3235
        %v3355 = vpack.c.bf16 %v3246, %v3243
        %v3356 = vpack.c.bf16 %v3254, %v3251
        %v3357 = vpack.c.bf16 %v3262, %v3259
        %v3358 = vpack.c.bf16 %v3270, %v3267
        %v3359 = vpack.c.bf16 %v3278, %v3275
        %v3360 = vpack.c.bf16 %v3286, %v3283
        %v3361 = vpack.c.bf16 %v3294, %v3291
        %v3362 = vpack.c.bf16 %v3302, %v3299
        %v3363 = vpack.c.bf16 %v3310, %v3307
        %v3364 = vpack.c.bf16 %v3318, %v3315
        %v3365 = vpack.c.bf16 %v3326, %v3323
        %v3366 = vpack.c.bf16 %v3334, %v3331
        %v3367 = vpack.c.bf16 %v3342, %v3339
        %v3368 = vpack.c.bf16 %v3350, %v3347
        %v3385 = vunpack.c.l.b16 %v3353
        %v3386 = vunpack.c.h.b16 %v3353
        %v3387 = vunpack.c.l.b16 %v3354
        %v3388 = vunpack.c.h.b16 %v3354
        %v3389 = vunpack.c.l.b16 %v3355
        %v3390 = vunpack.c.h.b16 %v3355
        %v3391 = vunpack.c.l.b16 %v3356
        %v3392 = vunpack.c.h.b16 %v3356
        %v3393 = vunpack.c.l.b16 %v3357
        %v3394 = vunpack.c.h.b16 %v3357
        %v3395 = vunpack.c.l.b16 %v3358
        %v3396 = vunpack.c.h.b16 %v3358
        %v3397 = vunpack.c.l.b16 %v3359
        %v3398 = vunpack.c.h.b16 %v3359
        %v3399 = vunpack.c.l.b16 %v3360
        %v3400 = vunpack.c.h.b16 %v3360
        %v3401 = vunpack.c.l.b16 %v3361
        %v3402 = vunpack.c.h.b16 %v3361
        %v3403 = vunpack.c.l.b16 %v3362
        %v3404 = vunpack.c.h.b16 %v3362
        %v3405 = vunpack.c.l.b16 %v3363
        %v3406 = vunpack.c.h.b16 %v3363
        %v3407 = vunpack.c.l.b16 %v3364
        %v3408 = vunpack.c.h.b16 %v3364
        %v3409 = vunpack.c.l.b16 %v3365
        %v3410 = vunpack.c.h.b16 %v3365
        %v3411 = vunpack.c.l.b16 %v3366
        %v3412 = vunpack.c.h.b16 %v3366
        %v3413 = vunpack.c.l.b16 %v3367
        %v3414 = vunpack.c.h.b16 %v3367
        %v3415 = vunpack.c.l.b16 %v3368
        %v3416 = vunpack.c.h.b16 %v3368
        %v3417 = vpack.c.b16 %v3385, %v3385
        %v3418 = vpack.c.b16 %v3386, %v3386
        %v3419 = vpack.c.b16 %v3387, %v3387
        %v3420 = vpack.c.b16 %v3388, %v3388
        %v3421 = vpack.c.b16 %v3389, %v3389
        %v3422 = vpack.c.b16 %v3390, %v3390
        %v3423 = vpack.c.b16 %v3391, %v3391
        %v3424 = vpack.c.b16 %v3392, %v3392
        %v3425 = vpack.c.b16 %v3393, %v3393
        %v3426 = vpack.c.b16 %v3394, %v3394
        %v3427 = vpack.c.b16 %v3395, %v3395
        %v3428 = vpack.c.b16 %v3396, %v3396
        %v3429 = vpack.c.b16 %v3397, %v3397
        %v3430 = vpack.c.b16 %v3398, %v3398
        %v3431 = vpack.c.b16 %v3399, %v3399
        %v3432 = vpack.c.b16 %v3400, %v3400
        %v3433 = vpack.c.b16 %v3401, %v3401
        %v3434 = vpack.c.b16 %v3402, %v3402
        %v3435 = vpack.c.b16 %v3403, %v3403
        %v3436 = vpack.c.b16 %v3404, %v3404
        %v3437 = vpack.c.b16 %v3405, %v3405
        %v3438 = vpack.c.b16 %v3406, %v3406
        %v3439 = vpack.c.b16 %v3407, %v3407
        %v3440 = vpack.c.b16 %v3408, %v3408
        %v3441 = vpack.c.b16 %v3409, %v3409
        %v3442 = vpack.c.b16 %v3410, %v3410
        %v3443 = vpack.c.b16 %v3411, %v3411
        %v3444 = vpack.c.b16 %v3412, %v3412
        %v3445 = vpack.c.b16 %v3413, %v3413
        %v3446 = vpack.c.b16 %v3414, %v3414
        %v3447 = vpack.c.b16 %v3415, %v3415
        %v3448 = vpack.c.b16 %v3416, %v3416
        %vm3449 = vsmask.f32 4368
        %vm3450 = vmor %vm315, %vm3449
        %v3452 = vshrl.u32 %v3417, 16
        %v3454 = vrot.slane %v3452, 7
        %v3455 = vshll.u32 %v3417, 16
        %v3457 = vor.u32 %v3454, %v3455
        %v3458 = vrot.slane %v3454, 4
        %v3460 = vshrl.u32 %v3418, 16
        %v3462 = vrot.slane %v3460, 7
        %v3463 = vshll.u32 %v3418, 16
        %v3465 = vor.u32 %v3462, %v3463
        %v3466 = vsel %vm3450, %v3458, %v3465
        %v3467 = vrot.slane %v3462, 4
        %v3469 = vshrl.u32 %v3419, 16
        %v3471 = vrot.slane %v3469, 7
        %v3472 = vshll.u32 %v3419, 16
        %v3474 = vor.u32 %v3471, %v3472
        %v3475 = vrot.slane %v3471, 4
        %v3477 = vshrl.u32 %v3420, 16
        %v3479 = vrot.slane %v3477, 7
        %v3480 = vshll.u32 %v3420, 16
        %v3482 = vor.u32 %v3479, %v3480
        %v3483 = vsel %vm3450, %v3475, %v3482
        %v3484 = vrot.slane %v3479, 4
        %v3486 = vshrl.u32 %v3421, 16
        %v3488 = vrot.slane %v3486, 7
        %v3489 = vshll.u32 %v3421, 16
        %v3491 = vor.u32 %v3488, %v3489
        %v3492 = vrot.slane %v3488, 4
        %v3494 = vshrl.u32 %v3422, 16
        %v3496 = vrot.slane %v3494, 7
        %v3497 = vshll.u32 %v3422, 16
        %v3499 = vor.u32 %v3496, %v3497
        %v3500 = vsel %vm3450, %v3492, %v3499
        %v3501 = vrot.slane %v3496, 4
        %v3503 = vshrl.u32 %v3423, 16
        %v3505 = vrot.slane %v3503, 7
        %v3506 = vshll.u32 %v3423, 16
        %v3508 = vor.u32 %v3505, %v3506
        %v3509 = vrot.slane %v3505, 4
        %v3511 = vshrl.u32 %v3424, 16
        %v3513 = vrot.slane %v3511, 7
        %v3514 = vshll.u32 %v3424, 16
        %v3516 = vor.u32 %v3513, %v3514
        %v3517 = vsel %vm3450, %v3509, %v3516
        %v3518 = vrot.slane %v3513, 4
        %v3520 = vshrl.u32 %v3425, 16
        %v3522 = vrot.slane %v3520, 7
        %v3523 = vshll.u32 %v3425, 16
        %v3525 = vor.u32 %v3522, %v3523
        %v3526 = vrot.slane %v3522, 4
        %v3528 = vshrl.u32 %v3426, 16
        %v3530 = vrot.slane %v3528, 7
        %v3531 = vshll.u32 %v3426, 16
        %v3533 = vor.u32 %v3530, %v3531
        %v3534 = vsel %vm3450, %v3526, %v3533
        %v3535 = vrot.slane %v3530, 4
        %v3537 = vshrl.u32 %v3427, 16
        %v3539 = vrot.slane %v3537, 7
        %v3540 = vshll.u32 %v3427, 16
        %v3542 = vor.u32 %v3539, %v3540
        %v3543 = vrot.slane %v3539, 4
        %v3545 = vshrl.u32 %v3428, 16
        %v3547 = vrot.slane %v3545, 7
        %v3548 = vshll.u32 %v3428, 16
        %v3550 = vor.u32 %v3547, %v3548
        %v3551 = vsel %vm3450, %v3543, %v3550
        %v3552 = vrot.slane %v3547, 4
        %v3554 = vshrl.u32 %v3429, 16
        %v3556 = vrot.slane %v3554, 7
        %v3557 = vshll.u32 %v3429, 16
        %v3559 = vor.u32 %v3556, %v3557
        %v3560 = vrot.slane %v3556, 4
        %v3562 = vshrl.u32 %v3430, 16
        %v3564 = vrot.slane %v3562, 7
        %v3565 = vshll.u32 %v3430, 16
        %v3567 = vor.u32 %v3564, %v3565
        %v3568 = vsel %vm3450, %v3560, %v3567
        %v3569 = vrot.slane %v3564, 4
        %v3571 = vshrl.u32 %v3431, 16
        %v3573 = vrot.slane %v3571, 7
        %v3574 = vshll.u32 %v3431, 16
        %v3576 = vor.u32 %v3573, %v3574
        %v3577 = vrot.slane %v3573, 4
        %v3579 = vshrl.u32 %v3432, 16
        %v3581 = vrot.slane %v3579, 7
        %v3582 = vshll.u32 %v3432, 16
        %v3584 = vor.u32 %v3581, %v3582
        %v3585 = vsel %vm3450, %v3577, %v3584
        %v3586 = vrot.slane %v3581, 4
        %v3588 = vshrl.u32 %v3433, 16
        %v3590 = vrot.slane %v3588, 7
        %v3591 = vshll.u32 %v3433, 16
        %v3593 = vor.u32 %v3590, %v3591
        %v3594 = vrot.slane %v3590, 4
        %v3596 = vshrl.u32 %v3434, 16
        %v3598 = vrot.slane %v3596, 7
        %v3599 = vshll.u32 %v3434, 16
        %v3601 = vor.u32 %v3598, %v3599
        %v3602 = vsel %vm3450, %v3594, %v3601
        %v3603 = vrot.slane %v3598, 4
        %v3605 = vshrl.u32 %v3435, 16
        %v3607 = vrot.slane %v3605, 7
        %v3608 = vshll.u32 %v3435, 16
        %v3610 = vor.u32 %v3607, %v3608
        %v3611 = vrot.slane %v3607, 4
        %v3613 = vshrl.u32 %v3436, 16
        %v3615 = vrot.slane %v3613, 7
        %v3616 = vshll.u32 %v3436, 16
        %v3618 = vor.u32 %v3615, %v3616
        %v3619 = vsel %vm3450, %v3611, %v3618
        %v3620 = vrot.slane %v3615, 4
        %v3622 = vshrl.u32 %v3437, 16
        %v3624 = vrot.slane %v3622, 7
        %v3625 = vshll.u32 %v3437, 16
        %v3627 = vor.u32 %v3624, %v3625
        %v3628 = vrot.slane %v3624, 4
        %v3630 = vshrl.u32 %v3438, 16
        %v3632 = vrot.slane %v3630, 7
        %v3633 = vshll.u32 %v3438, 16
        %v3635 = vor.u32 %v3632, %v3633
        %v3636 = vsel %vm3450, %v3628, %v3635
        %v3637 = vrot.slane %v3632, 4
        %v3639 = vshrl.u32 %v3439, 16
        %v3641 = vrot.slane %v3639, 7
        %v3642 = vshll.u32 %v3439, 16
        %v3644 = vor.u32 %v3641, %v3642
        %v3645 = vrot.slane %v3641, 4
        %v3647 = vshrl.u32 %v3440, 16
        %v3649 = vrot.slane %v3647, 7
        %v3650 = vshll.u32 %v3440, 16
        %v3652 = vor.u32 %v3649, %v3650
        %v3653 = vsel %vm3450, %v3645, %v3652
        %v3654 = vrot.slane %v3649, 4
        %v3656 = vshrl.u32 %v3441, 16
        %v3658 = vrot.slane %v3656, 7
        %v3659 = vshll.u32 %v3441, 16
        %v3661 = vor.u32 %v3658, %v3659
        %v3662 = vrot.slane %v3658, 4
        %v3664 = vshrl.u32 %v3442, 16
        %v3666 = vrot.slane %v3664, 7
        %v3667 = vshll.u32 %v3442, 16
        %v3669 = vor.u32 %v3666, %v3667
        %v3670 = vsel %vm3450, %v3662, %v3669
        %v3671 = vrot.slane %v3666, 4
        %v3673 = vshrl.u32 %v3443, 16
        %v3675 = vrot.slane %v3673, 7
        %v3676 = vshll.u32 %v3443, 16
        %v3678 = vor.u32 %v3675, %v3676
        %v3679 = vrot.slane %v3675, 4
        %v3681 = vshrl.u32 %v3444, 16
        %v3683 = vrot.slane %v3681, 7
        %v3684 = vshll.u32 %v3444, 16
        %v3686 = vor.u32 %v3683, %v3684
        %v3687 = vsel %vm3450, %v3679, %v3686
        %v3688 = vrot.slane %v3683, 4
        %v3690 = vshrl.u32 %v3445, 16
        %v3692 = vrot.slane %v3690, 7
        %v3693 = vshll.u32 %v3445, 16
        %v3695 = vor.u32 %v3692, %v3693
        %v3696 = vrot.slane %v3692, 4
        %v3698 = vshrl.u32 %v3446, 16
        %v3700 = vrot.slane %v3698, 7
        %v3701 = vshll.u32 %v3446, 16
        %v3703 = vor.u32 %v3700, %v3701
        %v3704 = vsel %vm3450, %v3696, %v3703
        %v3705 = vrot.slane %v3700, 4
        %v3707 = vshrl.u32 %v3447, 16
        %v3709 = vrot.slane %v3707, 7
        %v3710 = vshll.u32 %v3447, 16
        %v3712 = vor.u32 %v3709, %v3710
        %v3713 = vrot.slane %v3709, 4
        %v3715 = vshrl.u32 %v3448, 16
        %v3717 = vrot.slane %v3715, 7
        %v3718 = vshll.u32 %v3448, 16
        %v3720 = vor.u32 %v3717, %v3718
        %v3721 = vsel %vm3450, %v3713, %v3720
        %v3722 = vrot.slane %v3717, 4
        %s3771 = scalar_lea.vmem [#allocation2], 12
        %vm3772 = vcmask 60416
        %vm3773 = vmand %vm3772, %vm371
        %v3774 = vld [vmem:[%s3771] sm:$0xf]
        %v3775 = vsel %vm3773, %v3457, %v3774
        %3776 = vst [vmem:[%s3771] sm:$0xf] %v3775
        %3777 = vst.msk [vmem:[%s3771 + $0x4] sm:$0xf] %vm305, %v3466
        %v3778 = vld [vmem:[%s3771 + $0x8] sm:$0x1]
        %v3779 = vsel %vm316, %v3467, %v3778
        %3780 = vst [vmem:[%s3771 + $0x8] sm:$0x1] %v3779
        %v3781 = vld [vmem:[%s3771 + $0xc] sm:$0xf]
        %v3782 = vsel %vm3773, %v3474, %v3781
        %3783 = vst [vmem:[%s3771 + $0xc] sm:$0xf] %v3782
        %3784 = vst.msk [vmem:[%s3771 + $0x10] sm:$0xf] %vm305, %v3483
        %v3785 = vld [vmem:[%s3771 + $0x14] sm:$0x1]
        %v3786 = vsel %vm316, %v3484, %v3785
        %3787 = vst [vmem:[%s3771 + $0x14] sm:$0x1] %v3786
        %v3788 = vld [vmem:[%s3771 + $0x18] sm:$0xf]
        %v3789 = vsel %vm3773, %v3491, %v3788
        %3790 = vst [vmem:[%s3771 + $0x18] sm:$0xf] %v3789
        %3791 = vst.msk [vmem:[%s3771 + $0x1c] sm:$0xf] %vm305, %v3500
        %v3792 = vld [vmem:[%s3771 + $0x20] sm:$0x1]
        %v3793 = vsel %vm316, %v3501, %v3792
        %3794 = vst [vmem:[%s3771 + $0x20] sm:$0x1] %v3793
        %v3795 = vld [vmem:[%s3771 + $0x24] sm:$0xf]
        %v3796 = vsel %vm3773, %v3508, %v3795
        %3797 = vst [vmem:[%s3771 + $0x24] sm:$0xf] %v3796
        %3798 = vst.msk [vmem:[%s3771 + $0x28] sm:$0xf] %vm305, %v3517
        %v3799 = vld [vmem:[%s3771 + $0x2c] sm:$0x1]
        %v3800 = vsel %vm316, %v3518, %v3799
        %3801 = vst [vmem:[%s3771 + $0x2c] sm:$0x1] %v3800
        %v3802 = vld [vmem:[%s3771 + $0x30] sm:$0xf]
        %v3803 = vsel %vm3773, %v3525, %v3802
        %3804 = vst [vmem:[%s3771 + $0x30] sm:$0xf] %v3803
        %3805 = vst.msk [vmem:[%s3771 + $0x34] sm:$0xf] %vm305, %v3534
        %v3806 = vld [vmem:[%s3771 + $0x38] sm:$0x1]
        %v3807 = vsel %vm316, %v3535, %v3806
        %3808 = vst [vmem:[%s3771 + $0x38] sm:$0x1] %v3807
        %v3809 = vld [vmem:[%s3771 + $0x3c] sm:$0xf]
        %v3810 = vsel %vm3773, %v3542, %v3809
        %3811 = vst [vmem:[%s3771 + $0x3c] sm:$0xf] %v3810
        %3812 = vst.msk [vmem:[%s3771 + $0x40] sm:$0xf] %vm305, %v3551
        %v3813 = vld [vmem:[%s3771 + $0x44] sm:$0x1]
        %v3814 = vsel %vm316, %v3552, %v3813
        %3815 = vst [vmem:[%s3771 + $0x44] sm:$0x1] %v3814
        %v3816 = vld [vmem:[%s3771 + $0x48] sm:$0xf]
        %v3817 = vsel %vm3773, %v3559, %v3816
        %3818 = vst [vmem:[%s3771 + $0x48] sm:$0xf] %v3817
        %3819 = vst.msk [vmem:[%s3771 + $0x4c] sm:$0xf] %vm305, %v3568
        %v3820 = vld [vmem:[%s3771 + $0x50] sm:$0x1]
        %v3821 = vsel %vm316, %v3569, %v3820
        %3822 = vst [vmem:[%s3771 + $0x50] sm:$0x1] %v3821
        %v3823 = vld [vmem:[%s3771 + $0x54] sm:$0xf]
        %v3824 = vsel %vm3773, %v3576, %v3823
        %3825 = vst [vmem:[%s3771 + $0x54] sm:$0xf] %v3824
        %3826 = vst.msk [vmem:[%s3771 + $0x58] sm:$0xf] %vm305, %v3585
        %v3827 = vld [vmem:[%s3771 + $0x5c] sm:$0x1]
        %v3828 = vsel %vm316, %v3586, %v3827
        %3829 = vst [vmem:[%s3771 + $0x5c] sm:$0x1] %v3828
        %v3830 = vld [vmem:[%s3771 + $0x60] sm:$0xf]
        %v3831 = vsel %vm3773, %v3593, %v3830
        %3832 = vst [vmem:[%s3771 + $0x60] sm:$0xf] %v3831
        %3833 = vst.msk [vmem:[%s3771 + $0x64] sm:$0xf] %vm305, %v3602
        %v3834 = vld [vmem:[%s3771 + $0x68] sm:$0x1]
        %v3835 = vsel %vm316, %v3603, %v3834
        %3836 = vst [vmem:[%s3771 + $0x68] sm:$0x1] %v3835
        %v3837 = vld [vmem:[%s3771 + $0x6c] sm:$0xf]
        %v3838 = vsel %vm3773, %v3610, %v3837
        %3839 = vst [vmem:[%s3771 + $0x6c] sm:$0xf] %v3838
        %3840 = vst.msk [vmem:[%s3771 + $0x70] sm:$0xf] %vm305, %v3619
        %v3841 = vld [vmem:[%s3771 + $0x74] sm:$0x1]
        %v3842 = vsel %vm316, %v3620, %v3841
        %3843 = vst [vmem:[%s3771 + $0x74] sm:$0x1] %v3842
        %v3844 = vld [vmem:[%s3771 + $0x78] sm:$0xf]
        %v3845 = vsel %vm3773, %v3627, %v3844
        %3846 = vst [vmem:[%s3771 + $0x78] sm:$0xf] %v3845
        %3847 = vst.msk [vmem:[%s3771 + $0x7c] sm:$0xf] %vm305, %v3636
        %v3848 = vld [vmem:[%s3771 + $0x80] sm:$0x1]
        %v3849 = vsel %vm316, %v3637, %v3848
        %3850 = vst [vmem:[%s3771 + $0x80] sm:$0x1] %v3849
        %v3851 = vld [vmem:[%s3771 + $0x84] sm:$0xf]
        %v3852 = vsel %vm3773, %v3644, %v3851
        %3853 = vst [vmem:[%s3771 + $0x84] sm:$0xf] %v3852
        %3854 = vst.msk [vmem:[%s3771 + $0x88] sm:$0xf] %vm305, %v3653
        %v3855 = vld [vmem:[%s3771 + $0x8c] sm:$0x1]
        %v3856 = vsel %vm316, %v3654, %v3855
        %3857 = vst [vmem:[%s3771 + $0x8c] sm:$0x1] %v3856
        %v3858 = vld [vmem:[%s3771 + $0x90] sm:$0xf]
        %v3859 = vsel %vm3773, %v3661, %v3858
        %3860 = vst [vmem:[%s3771 + $0x90] sm:$0xf] %v3859
        %3861 = vst.msk [vmem:[%s3771 + $0x94] sm:$0xf] %vm305, %v3670
        %v3862 = vld [vmem:[%s3771 + $0x98] sm:$0x1]
        %v3863 = vsel %vm316, %v3671, %v3862
        %3864 = vst [vmem:[%s3771 + $0x98] sm:$0x1] %v3863
        %v3865 = vld [vmem:[%s3771 + $0x9c] sm:$0xf]
        %v3866 = vsel %vm3773, %v3678, %v3865
        %3867 = vst [vmem:[%s3771 + $0x9c] sm:$0xf] %v3866
        %3868 = vst.msk [vmem:[%s3771 + $0xa0] sm:$0xf] %vm305, %v3687
        %v3869 = vld [vmem:[%s3771 + $0xa4] sm:$0x1]
        %v3870 = vsel %vm316, %v3688, %v3869
        %3871 = vst [vmem:[%s3771 + $0xa4] sm:$0x1] %v3870
        %v3872 = vld [vmem:[%s3771 + $0xa8] sm:$0xf]
        %v3873 = vsel %vm3773, %v3695, %v3872
        %3874 = vst [vmem:[%s3771 + $0xa8] sm:$0xf] %v3873
        %3875 = vst.msk [vmem:[%s3771 + $0xac] sm:$0xf] %vm305, %v3704
        %v3876 = vld [vmem:[%s3771 + $0xb0] sm:$0x1]
        %v3877 = vsel %vm316, %v3705, %v3876
        %3878 = vst [vmem:[%s3771 + $0xb0] sm:$0x1] %v3877
        %v3879 = vld [vmem:[%s3771 + $0xb4] sm:$0xf]
        %v3880 = vsel %vm3773, %v3712, %v3879
        %3881 = vst [vmem:[%s3771 + $0xb4] sm:$0xf] %v3880
        %3882 = vst.msk [vmem:[%s3771 + $0xb8] sm:$0xf] %vm305, %v3721
        %v3883 = vld [vmem:[%s3771 + $0xbc] sm:$0x1]
        %v3884 = vsel %vm316, %v3722, %v3883
        %3885 = vst [vmem:[%s3771 + $0xbc] sm:$0x1] %v3884
        %v3886 = vld [vmem:[#allocation2] sm:$0xf]
        %v3887 = vld [vmem:[#allocation2 + $0x4] sm:$0xf]
        %v3888 = vld [vmem:[#allocation2 + $0xc] sm:$0xf]
        %v3889 = vld [vmem:[#allocation2 + $0x10] sm:$0xf]
        %v3890 = vld [vmem:[#allocation2 + $0x18] sm:$0xf]
        %v3891 = vld [vmem:[#allocation2 + $0x1c] sm:$0xf]
        %v3892 = vld [vmem:[#allocation2 + $0x24] sm:$0xf]
        %v3893 = vld [vmem:[#allocation2 + $0x28] sm:$0xf]
        %v3894 = vld [vmem:[#allocation2 + $0x30] sm:$0xf]
        %v3895 = vld [vmem:[#allocation2 + $0x34] sm:$0xf]
        %v3896 = vld [vmem:[#allocation2 + $0x3c] sm:$0xf]
        %v3897 = vld [vmem:[#allocation2 + $0x40] sm:$0xf]
        %v3898 = vld [vmem:[#allocation2 + $0x48] sm:$0xf]
        %v3899 = vld [vmem:[#allocation2 + $0x4c] sm:$0xf]
        %v3900 = vld [vmem:[#allocation2 + $0x54] sm:$0xf]
        %v3901 = vld [vmem:[#allocation2 + $0x58] sm:$0xf]
        %v3902 = vld [vmem:[#allocation2 + $0x60] sm:$0xf]
        %v3903 = vld [vmem:[#allocation2 + $0x64] sm:$0xf]
        %v3904 = vld [vmem:[#allocation2 + $0x6c] sm:$0xf]
        %v3905 = vld [vmem:[#allocation2 + $0x70] sm:$0xf]
        %v3906 = vld [vmem:[#allocation2 + $0x78] sm:$0xf]
        %v3907 = vld [vmem:[#allocation2 + $0x7c] sm:$0xf]
        %v3908 = vld [vmem:[#allocation2 + $0x84] sm:$0xf]
        %v3909 = vld [vmem:[#allocation2 + $0x88] sm:$0xf]
        %v3910 = vld [vmem:[#allocation2 + $0x90] sm:$0xf]
        %v3911 = vld [vmem:[#allocation2 + $0x94] sm:$0xf]
        %v3912 = vld [vmem:[#allocation2 + $0x9c] sm:$0xf]
        %v3913 = vld [vmem:[#allocation2 + $0xa0] sm:$0xf]
        %v3914 = vld [vmem:[#allocation2 + $0xa8] sm:$0xf]
        %v3915 = vld [vmem:[#allocation2 + $0xac] sm:$0xf]
        %v3916 = vld [vmem:[#allocation2 + $0xb4] sm:$0xf]
        %v3917 = vld [vmem:[#allocation2 + $0xb8] sm:$0xf]
        %v3950 = vunpack.c.l.b16 %v3886
        %v3951 = vunpack.c.l.b16 %v3887
        %v3952 = vunpack.c.l.b16 %v3888
        %v3953 = vunpack.c.l.b16 %v3889
        %v3954 = vunpack.c.l.b16 %v3890
        %v3955 = vunpack.c.l.b16 %v3891
        %v3956 = vunpack.c.l.b16 %v3892
        %v3957 = vunpack.c.l.b16 %v3893
        %v3958 = vunpack.c.l.b16 %v3894
        %v3959 = vunpack.c.l.b16 %v3895
        %v3960 = vunpack.c.l.b16 %v3896
        %v3961 = vunpack.c.l.b16 %v3897
        %v3962 = vunpack.c.l.b16 %v3898
        %v3963 = vunpack.c.l.b16 %v3899
        %v3964 = vunpack.c.l.b16 %v3900
        %v3965 = vunpack.c.l.b16 %v3901
        %v3966 = vunpack.c.l.b16 %v3902
        %v3967 = vunpack.c.l.b16 %v3903
        %v3968 = vunpack.c.l.b16 %v3904
        %v3969 = vunpack.c.l.b16 %v3905
        %v3970 = vunpack.c.l.b16 %v3906
        %v3971 = vunpack.c.l.b16 %v3907
        %v3972 = vunpack.c.l.b16 %v3908
        %v3973 = vunpack.c.l.b16 %v3909
        %v3974 = vunpack.c.l.b16 %v3910
        %v3975 = vunpack.c.l.b16 %v3911
        %v3976 = vunpack.c.l.b16 %v3912
        %v3977 = vunpack.c.l.b16 %v3913
        %v3978 = vunpack.c.l.b16 %v3914
        %v3979 = vunpack.c.l.b16 %v3915
        %v3980 = vunpack.c.l.b16 %v3916
        %v3981 = vunpack.c.l.b16 %v3917
        %v3982 = vpack.c.b16 %v3951, %v3950
        %v3983 = vpack.c.b16 %v3953, %v3952
        %v3984 = vpack.c.b16 %v3955, %v3954
        %v3985 = vpack.c.b16 %v3957, %v3956
        %v3986 = vpack.c.b16 %v3959, %v3958
        %v3987 = vpack.c.b16 %v3961, %v3960
        %v3988 = vpack.c.b16 %v3963, %v3962
        %v3989 = vpack.c.b16 %v3965, %v3964
        %v3990 = vpack.c.b16 %v3967, %v3966
        %v3991 = vpack.c.b16 %v3969, %v3968
        %v3992 = vpack.c.b16 %v3971, %v3970
        %v3993 = vpack.c.b16 %v3973, %v3972
        %v3994 = vpack.c.b16 %v3975, %v3974
        %v3995 = vpack.c.b16 %v3977, %v3976
        %v3996 = vpack.c.b16 %v3979, %v3978
        %v3997 = vpack.c.b16 %v3981, %v3980
        %vm4014 = vcmask 64512
        %4015 = vst.msk [vmem:[#allocation3] sm:$0xff] %vm4014, %v3982
        %4016 = vst.msk [vmem:[#allocation3 + $0x8] sm:$0xff] %vm4014, %v3983
        %4017 = vst.msk [vmem:[#allocation3 + $0x10] sm:$0xff] %vm4014, %v3984
        %4018 = vst.msk [vmem:[#allocation3 + $0x18] sm:$0xff] %vm4014, %v3985
        %4019 = vst.msk [vmem:[#allocation3 + $0x20] sm:$0xff] %vm4014, %v3986
        %4020 = vst.msk [vmem:[#allocation3 + $0x28] sm:$0xff] %vm4014, %v3987
        %4021 = vst.msk [vmem:[#allocation3 + $0x30] sm:$0xff] %vm4014, %v3988
        %4022 = vst.msk [vmem:[#allocation3 + $0x38] sm:$0xff] %vm4014, %v3989
        %4023 = vst.msk [vmem:[#allocation3 + $0x40] sm:$0xff] %vm4014, %v3990
        %4024 = vst.msk [vmem:[#allocation3 + $0x48] sm:$0xff] %vm4014, %v3991
        %4025 = vst.msk [vmem:[#allocation3 + $0x50] sm:$0xff] %vm4014, %v3992
        %4026 = vst.msk [vmem:[#allocation3 + $0x58] sm:$0xff] %vm4014, %v3993
        %4027 = vst.msk [vmem:[#allocation3 + $0x60] sm:$0xff] %vm4014, %v3994
        %4028 = vst.msk [vmem:[#allocation3 + $0x68] sm:$0xff] %vm4014, %v3995
        %4029 = vst.msk [vmem:[#allocation3 + $0x70] sm:$0xff] %vm4014, %v3996
        %4030 = vst.msk [vmem:[#allocation3 + $0x78] sm:$0xff] %vm4014, %v3997
        %v4031 = vld [vmem:[#allocation2] sm:$0xf]
        %v4032 = vld [vmem:[#allocation2 + $0x4] sm:$0xf]
        %v4033 = vld [vmem:[#allocation2 + $0x8] sm:$0x1]
        %v4034 = vld [vmem:[#allocation2 + $0xc] sm:$0xf]
        %v4035 = vld [vmem:[#allocation2 + $0x10] sm:$0xf]
        %v4036 = vld [vmem:[#allocation2 + $0x14] sm:$0x1]
        %v4037 = vld [vmem:[#allocation2 + $0x18] sm:$0xf]
        %v4038 = vld [vmem:[#allocation2 + $0x1c] sm:$0xf]
        %v4039 = vld [vmem:[#allocation2 + $0x20] sm:$0x1]
        %v4040 = vld [vmem:[#allocation2 + $0x24] sm:$0xf]
        %v4041 = vld [vmem:[#allocation2 + $0x28] sm:$0xf]
        %v4042 = vld [vmem:[#allocation2 + $0x2c] sm:$0x1]
        %v4043 = vld [vmem:[#allocation2 + $0x30] sm:$0xf]
        %v4044 = vld [vmem:[#allocation2 + $0x34] sm:$0xf]
        %v4045 = vld [vmem:[#allocation2 + $0x38] sm:$0x1]
        %v4046 = vld [vmem:[#allocation2 + $0x3c] sm:$0xf]
        %v4047 = vld [vmem:[#allocation2 + $0x40] sm:$0xf]
        %v4048 = vld [vmem:[#allocation2 + $0x44] sm:$0x1]
        %v4049 = vld [vmem:[#allocation2 + $0x48] sm:$0xf]
        %v4050 = vld [vmem:[#allocation2 + $0x4c] sm:$0xf]
        %v4051 = vld [vmem:[#allocation2 + $0x50] sm:$0x1]
        %v4052 = vld [vmem:[#allocation2 + $0x54] sm:$0xf]
        %v4053 = vld [vmem:[#allocation2 + $0x58] sm:$0xf]
        %v4054 = vld [vmem:[#allocation2 + $0x5c] sm:$0x1]
        %v4055 = vld [vmem:[#allocation2 + $0x60] sm:$0xf]
        %v4056 = vld [vmem:[#allocation2 + $0x64] sm:$0xf]
        %v4057 = vld [vmem:[#allocation2 + $0x68] sm:$0x1]
        %v4058 = vld [vmem:[#allocation2 + $0x6c] sm:$0xf]
        %v4059 = vld [vmem:[#allocation2 + $0x70] sm:$0xf]
        %v4060 = vld [vmem:[#allocation2 + $0x74] sm:$0x1]
        %v4061 = vld [vmem:[#allocation2 + $0x78] sm:$0xf]
        %v4062 = vld [vmem:[#allocation2 + $0x7c] sm:$0xf]
        %v4063 = vld [vmem:[#allocation2 + $0x80] sm:$0x1]
        %v4064 = vld [vmem:[#allocation2 + $0x84] sm:$0xf]
        %v4065 = vld [vmem:[#allocation2 + $0x88] sm:$0xf]
        %v4066 = vld [vmem:[#allocation2 + $0x8c] sm:$0x1]
        %v4067 = vld [vmem:[#allocation2 + $0x90] sm:$0xf]
        %v4068 = vld [vmem:[#allocation2 + $0x94] sm:$0xf]
        %v4069 = vld [vmem:[#allocation2 + $0x98] sm:$0x1]
        %v4070 = vld [vmem:[#allocation2 + $0x9c] sm:$0xf]
        %v4071 = vld [vmem:[#allocation2 + $0xa0] sm:$0xf]
        %v4072 = vld [vmem:[#allocation2 + $0xa4] sm:$0x1]
        %v4073 = vld [vmem:[#allocation2 + $0xa8] sm:$0xf]
        %v4074 = vld [vmem:[#allocation2 + $0xac] sm:$0xf]
        %v4075 = vld [vmem:[#allocation2 + $0xb0] sm:$0x1]
        %v4076 = vld [vmem:[#allocation2 + $0xb4] sm:$0xf]
        %v4077 = vld [vmem:[#allocation2 + $0xb8] sm:$0xf]
        %v4078 = vld [vmem:[#allocation2 + $0xbc] sm:$0x1]
        %v4127 = vunpack.c.l.b16 %v4031
        %v4128 = vunpack.c.l.b16 %v4032
        %v4129 = vunpack.c.l.b16 %v4033
        %v4130 = vunpack.c.l.b16 %v4034
        %v4131 = vunpack.c.l.b16 %v4035
        %v4132 = vunpack.c.l.b16 %v4036
        %v4133 = vunpack.c.l.b16 %v4037
        %v4134 = vunpack.c.l.b16 %v4038
        %v4135 = vunpack.c.l.b16 %v4039
        %v4136 = vunpack.c.l.b16 %v4040
        %v4137 = vunpack.c.l.b16 %v4041
        %v4138 = vunpack.c.l.b16 %v4042
        %v4139 = vunpack.c.l.b16 %v4043
        %v4140 = vunpack.c.l.b16 %v4044
        %v4141 = vunpack.c.l.b16 %v4045
        %v4142 = vunpack.c.l.b16 %v4046
        %v4143 = vunpack.c.l.b16 %v4047
        %v4144 = vunpack.c.l.b16 %v4048
        %v4145 = vunpack.c.l.b16 %v4049
        %v4146 = vunpack.c.l.b16 %v4050
        %v4147 = vunpack.c.l.b16 %v4051
        %v4148 = vunpack.c.l.b16 %v4052
        %v4149 = vunpack.c.l.b16 %v4053
        %v4150 = vunpack.c.l.b16 %v4054
        %v4151 = vunpack.c.l.b16 %v4055
        %v4152 = vunpack.c.l.b16 %v4056
        %v4153 = vunpack.c.l.b16 %v4057
        %v4154 = vunpack.c.l.b16 %v4058
        %v4155 = vunpack.c.l.b16 %v4059
        %v4156 = vunpack.c.l.b16 %v4060
        %v4157 = vunpack.c.l.b16 %v4061
        %v4158 = vunpack.c.l.b16 %v4062
        %v4159 = vunpack.c.l.b16 %v4063
        %v4160 = vunpack.c.l.b16 %v4064
        %v4161 = vunpack.c.l.b16 %v4065
        %v4162 = vunpack.c.l.b16 %v4066
        %v4163 = vunpack.c.l.b16 %v4067
        %v4164 = vunpack.c.l.b16 %v4068
        %v4165 = vunpack.c.l.b16 %v4069
        %v4166 = vunpack.c.l.b16 %v4070
        %v4167 = vunpack.c.l.b16 %v4071
        %v4168 = vunpack.c.l.b16 %v4072
        %v4169 = vunpack.c.l.b16 %v4073
        %v4170 = vunpack.c.l.b16 %v4074
        %v4171 = vunpack.c.l.b16 %v4075
        %v4172 = vunpack.c.l.b16 %v4076
        %v4173 = vunpack.c.l.b16 %v4077
        %v4174 = vunpack.c.l.b16 %v4078
        %v4175 = vpack.c.b16 %v4128, %v4127
        %v4176 = vpack.c.b16 %v4129, %v4129
        %v4177 = vpack.c.b16 %v4131, %v4130
        %v4178 = vpack.c.b16 %v4132, %v4132
        %v4179 = vpack.c.b16 %v4134, %v4133
        %v4180 = vpack.c.b16 %v4135, %v4135
        %v4181 = vpack.c.b16 %v4137, %v4136
        %v4182 = vpack.c.b16 %v4138, %v4138
        %v4183 = vpack.c.b16 %v4140, %v4139
        %v4184 = vpack.c.b16 %v4141, %v4141
        %v4185 = vpack.c.b16 %v4143, %v4142
        %v4186 = vpack.c.b16 %v4144, %v4144
        %v4187 = vpack.c.b16 %v4146, %v4145
        %v4188 = vpack.c.b16 %v4147, %v4147
        %v4189 = vpack.c.b16 %v4149, %v4148
        %v4190 = vpack.c.b16 %v4150, %v4150
        %v4191 = vpack.c.b16 %v4152, %v4151
        %v4192 = vpack.c.b16 %v4153, %v4153
        %v4193 = vpack.c.b16 %v4155, %v4154
        %v4194 = vpack.c.b16 %v4156, %v4156
        %v4195 = vpack.c.b16 %v4158, %v4157
        %v4196 = vpack.c.b16 %v4159, %v4159
        %v4197 = vpack.c.b16 %v4161, %v4160
        %v4198 = vpack.c.b16 %v4162, %v4162
        %v4199 = vpack.c.b16 %v4164, %v4163
        %v4200 = vpack.c.b16 %v4165, %v4165
        %v4201 = vpack.c.b16 %v4167, %v4166
        %v4202 = vpack.c.b16 %v4168, %v4168
        %v4203 = vpack.c.b16 %v4170, %v4169
        %v4204 = vpack.c.b16 %v4171, %v4171
        %v4205 = vpack.c.b16 %v4173, %v4172
        %v4206 = vpack.c.b16 %v4174, %v4174
        %v4208 = vshrl.u32 %v4175, 16
        %v4210 = vshll.u32 %v4175, 16
        %v4212 = vrot.slane %v4210, 1
        %v4213 = vor.u32 %v4208, %v4212
        %v4215 = vshll.u32 %v4176, 16
        %v4217 = vrot.slane %v4215, 1
        %v4218 = vsel %vm748, %v4213, %v4217
        %v4220 = vshrl.u32 %v4177, 16
        %v4222 = vshll.u32 %v4177, 16
        %v4224 = vrot.slane %v4222, 1
        %v4225 = vor.u32 %v4220, %v4224
        %v4227 = vshll.u32 %v4178, 16
        %v4229 = vrot.slane %v4227, 1
        %v4230 = vsel %vm748, %v4225, %v4229
        %v4232 = vshrl.u32 %v4179, 16
        %v4234 = vshll.u32 %v4179, 16
        %v4236 = vrot.slane %v4234, 1
        %v4237 = vor.u32 %v4232, %v4236
        %v4239 = vshll.u32 %v4180, 16
        %v4241 = vrot.slane %v4239, 1
        %v4242 = vsel %vm748, %v4237, %v4241
        %v4244 = vshrl.u32 %v4181, 16
        %v4246 = vshll.u32 %v4181, 16
        %v4248 = vrot.slane %v4246, 1
        %v4249 = vor.u32 %v4244, %v4248
        %v4251 = vshll.u32 %v4182, 16
        %v4253 = vrot.slane %v4251, 1
        %v4254 = vsel %vm748, %v4249, %v4253
        %v4256 = vshrl.u32 %v4183, 16
        %v4258 = vshll.u32 %v4183, 16
        %v4260 = vrot.slane %v4258, 1
        %v4261 = vor.u32 %v4256, %v4260
        %v4263 = vshll.u32 %v4184, 16
        %v4265 = vrot.slane %v4263, 1
        %v4266 = vsel %vm748, %v4261, %v4265
        %v4268 = vshrl.u32 %v4185, 16
        %v4270 = vshll.u32 %v4185, 16
        %v4272 = vrot.slane %v4270, 1
        %v4273 = vor.u32 %v4268, %v4272
        %v4275 = vshll.u32 %v4186, 16
        %v4277 = vrot.slane %v4275, 1
        %v4278 = vsel %vm748, %v4273, %v4277
        %v4280 = vshrl.u32 %v4187, 16
        %v4282 = vshll.u32 %v4187, 16
        %v4284 = vrot.slane %v4282, 1
        %v4285 = vor.u32 %v4280, %v4284
        %v4287 = vshll.u32 %v4188, 16
        %v4289 = vrot.slane %v4287, 1
        %v4290 = vsel %vm748, %v4285, %v4289
        %v4292 = vshrl.u32 %v4189, 16
        %v4294 = vshll.u32 %v4189, 16
        %v4296 = vrot.slane %v4294, 1
        %v4297 = vor.u32 %v4292, %v4296
        %v4299 = vshll.u32 %v4190, 16
        %v4301 = vrot.slane %v4299, 1
        %v4302 = vsel %vm748, %v4297, %v4301
        %v4304 = vshrl.u32 %v4191, 16
        %v4306 = vshll.u32 %v4191, 16
        %v4308 = vrot.slane %v4306, 1
        %v4309 = vor.u32 %v4304, %v4308
        %v4311 = vshll.u32 %v4192, 16
        %v4313 = vrot.slane %v4311, 1
        %v4314 = vsel %vm748, %v4309, %v4313
        %v4316 = vshrl.u32 %v4193, 16
        %v4318 = vshll.u32 %v4193, 16
        %v4320 = vrot.slane %v4318, 1
        %v4321 = vor.u32 %v4316, %v4320
        %v4323 = vshll.u32 %v4194, 16
        %v4325 = vrot.slane %v4323, 1
        %v4326 = vsel %vm748, %v4321, %v4325
        %v4328 = vshrl.u32 %v4195, 16
        %v4330 = vshll.u32 %v4195, 16
        %v4332 = vrot.slane %v4330, 1
        %v4333 = vor.u32 %v4328, %v4332
        %v4335 = vshll.u32 %v4196, 16
        %v4337 = vrot.slane %v4335, 1
        %v4338 = vsel %vm748, %v4333, %v4337
        %v4340 = vshrl.u32 %v4197, 16
        %v4342 = vshll.u32 %v4197, 16
        %v4344 = vrot.slane %v4342, 1
        %v4345 = vor.u32 %v4340, %v4344
        %v4347 = vshll.u32 %v4198, 16
        %v4349 = vrot.slane %v4347, 1
        %v4350 = vsel %vm748, %v4345, %v4349
        %v4352 = vshrl.u32 %v4199, 16
        %v4354 = vshll.u32 %v4199, 16
        %v4356 = vrot.slane %v4354, 1
        %v4357 = vor.u32 %v4352, %v4356
        %v4359 = vshll.u32 %v4200, 16
        %v4361 = vrot.slane %v4359, 1
        %v4362 = vsel %vm748, %v4357, %v4361
        %v4364 = vshrl.u32 %v4201, 16
        %v4366 = vshll.u32 %v4201, 16
        %v4368 = vrot.slane %v4366, 1
        %v4369 = vor.u32 %v4364, %v4368
        %v4371 = vshll.u32 %v4202, 16
        %v4373 = vrot.slane %v4371, 1
        %v4374 = vsel %vm748, %v4369, %v4373
        %v4376 = vshrl.u32 %v4203, 16
        %v4378 = vshll.u32 %v4203, 16
        %v4380 = vrot.slane %v4378, 1
        %v4381 = vor.u32 %v4376, %v4380
        %v4383 = vshll.u32 %v4204, 16
        %v4385 = vrot.slane %v4383, 1
        %v4386 = vsel %vm748, %v4381, %v4385
        %v4388 = vshrl.u32 %v4205, 16
        %v4390 = vshll.u32 %v4205, 16
        %v4392 = vrot.slane %v4390, 1
        %v4393 = vor.u32 %v4388, %v4392
        %v4395 = vshll.u32 %v4206, 16
        %v4397 = vrot.slane %v4395, 1
        %v4398 = vsel %vm748, %v4393, %v4397
        %4399 = vrot.lane.b32.xlu0 %v4218, 8
        %v4400 = vpop.permute.xlu0 %4399
        %4401 = vrot.lane.b32.xlu0 %v4230, 8
        %v4402 = vpop.permute.xlu0 %4401
        %4403 = vrot.lane.b32.xlu0 %v4242, 8
        %v4404 = vpop.permute.xlu0 %4403
        %4405 = vrot.lane.b32.xlu0 %v4254, 8
        %v4406 = vpop.permute.xlu0 %4405
        %4407 = vrot.lane.b32.xlu0 %v4266, 8
        %v4408 = vpop.permute.xlu0 %4407
        %4409 = vrot.lane.b32.xlu0 %v4278, 8
        %v4410 = vpop.permute.xlu0 %4409
        %4411 = vrot.lane.b32.xlu0 %v4290, 8
        %v4412 = vpop.permute.xlu0 %4411
        %4413 = vrot.lane.b32.xlu0 %v4302, 8
        %v4414 = vpop.permute.xlu0 %4413
        %4415 = vrot.lane.b32.xlu0 %v4314, 8
        %v4416 = vpop.permute.xlu0 %4415
        %4417 = vrot.lane.b32.xlu0 %v4326, 8
        %v4418 = vpop.permute.xlu0 %4417
        %4419 = vrot.lane.b32.xlu0 %v4338, 8
        %v4420 = vpop.permute.xlu0 %4419
        %4421 = vrot.lane.b32.xlu0 %v4350, 8
        %v4422 = vpop.permute.xlu0 %4421
        %4423 = vrot.lane.b32.xlu0 %v4362, 8
        %v4424 = vpop.permute.xlu0 %4423
        %4425 = vrot.lane.b32.xlu0 %v4374, 8
        %v4426 = vpop.permute.xlu0 %4425
        %4427 = vrot.lane.b32.xlu0 %v4386, 8
        %v4428 = vpop.permute.xlu0 %4427
        %4429 = vrot.lane.b32.xlu0 %v4398, 8
        %v4430 = vpop.permute.xlu0 %4429
        %vm4447 = vcmask 130112
        %4448 = vst.msk [vmem:[#allocation3] sm:$0xff] %vm4447, %v4400
        %4449 = vst.msk [vmem:[#allocation3 + $0x8] sm:$0xff] %vm4447, %v4402
        %4450 = vst.msk [vmem:[#allocation3 + $0x10] sm:$0xff] %vm4447, %v4404
        %4451 = vst.msk [vmem:[#allocation3 + $0x18] sm:$0xff] %vm4447, %v4406
        %4452 = vst.msk [vmem:[#allocation3 + $0x20] sm:$0xff] %vm4447, %v4408
        %4453 = vst.msk [vmem:[#allocation3 + $0x28] sm:$0xff] %vm4447, %v4410
        %4454 = vst.msk [vmem:[#allocation3 + $0x30] sm:$0xff] %vm4447, %v4412
        %4455 = vst.msk [vmem:[#allocation3 + $0x38] sm:$0xff] %vm4447, %v4414
        %4456 = vst.msk [vmem:[#allocation3 + $0x40] sm:$0xff] %vm4447, %v4416
        %4457 = vst.msk [vmem:[#allocation3 + $0x48] sm:$0xff] %vm4447, %v4418
        %4458 = vst.msk [vmem:[#allocation3 + $0x50] sm:$0xff] %vm4447, %v4420
        %4459 = vst.msk [vmem:[#allocation3 + $0x58] sm:$0xff] %vm4447, %v4422
        %4460 = vst.msk [vmem:[#allocation3 + $0x60] sm:$0xff] %vm4447, %v4424
        %4461 = vst.msk [vmem:[#allocation3 + $0x68] sm:$0xff] %vm4447, %v4426
        %4462 = vst.msk [vmem:[#allocation3 + $0x70] sm:$0xff] %vm4447, %v4428
        %4463 = vst.msk [vmem:[#allocation3 + $0x78] sm:$0xff] %vm4447, %v4430
        %v4464 = vld [vmem:[#allocation2] sm:$0xe]
        %v4465 = vld [vmem:[#allocation2 + $0x4] sm:$0xf]
        %v4466 = vld [vmem:[#allocation2 + $0x8] sm:$0x1]
        %v4467 = vld [vmem:[#allocation2 + $0xc] sm:$0xe]
        %v4468 = vld [vmem:[#allocation2 + $0x10] sm:$0xf]
        %v4469 = vld [vmem:[#allocation2 + $0x14] sm:$0x1]
        %v4470 = vld [vmem:[#allocation2 + $0x18] sm:$0xe]
        %v4471 = vld [vmem:[#allocation2 + $0x1c] sm:$0xf]
        %v4472 = vld [vmem:[#allocation2 + $0x20] sm:$0x1]
        %v4473 = vld [vmem:[#allocation2 + $0x24] sm:$0xe]
        %v4474 = vld [vmem:[#allocation2 + $0x28] sm:$0xf]
        %v4475 = vld [vmem:[#allocation2 + $0x2c] sm:$0x1]
        %v4476 = vld [vmem:[#allocation2 + $0x30] sm:$0xe]
        %v4477 = vld [vmem:[#allocation2 + $0x34] sm:$0xf]
        %v4478 = vld [vmem:[#allocation2 + $0x38] sm:$0x1]
        %v4479 = vld [vmem:[#allocation2 + $0x3c] sm:$0xe]
        %v4480 = vld [vmem:[#allocation2 + $0x40] sm:$0xf]
        %v4481 = vld [vmem:[#allocation2 + $0x44] sm:$0x1]
        %v4482 = vld [vmem:[#allocation2 + $0x48] sm:$0xe]
        %v4483 = vld [vmem:[#allocation2 + $0x4c] sm:$0xf]
        %v4484 = vld [vmem:[#allocation2 + $0x50] sm:$0x1]
        %v4485 = vld [vmem:[#allocation2 + $0x54] sm:$0xe]
        %v4486 = vld [vmem:[#allocation2 + $0x58] sm:$0xf]
        %v4487 = vld [vmem:[#allocation2 + $0x5c] sm:$0x1]
        %v4488 = vld [vmem:[#allocation2 + $0x60] sm:$0xe]
        %v4489 = vld [vmem:[#allocation2 + $0x64] sm:$0xf]
        %v4490 = vld [vmem:[#allocation2 + $0x68] sm:$0x1]
        %v4491 = vld [vmem:[#allocation2 + $0x6c] sm:$0xe]
        %v4492 = vld [vmem:[#allocation2 + $0x70] sm:$0xf]
        %v4493 = vld [vmem:[#allocation2 + $0x74] sm:$0x1]
        %v4494 = vld [vmem:[#allocation2 + $0x78] sm:$0xe]
        %v4495 = vld [vmem:[#allocation2 + $0x7c] sm:$0xf]
        %v4496 = vld [vmem:[#allocation2 + $0x80] sm:$0x1]
        %v4497 = vld [vmem:[#allocation2 + $0x84] sm:$0xe]
        %v4498 = vld [vmem:[#allocation2 + $0x88] sm:$0xf]
        %v4499 = vld [vmem:[#allocation2 + $0x8c] sm:$0x1]
        %v4500 = vld [vmem:[#allocation2 + $0x90] sm:$0xe]
        %v4501 = vld [vmem:[#allocation2 + $0x94] sm:$0xf]
        %v4502 = vld [vmem:[#allocation2 + $0x98] sm:$0x1]
        %v4503 = vld [vmem:[#allocation2 + $0x9c] sm:$0xe]
        %v4504 = vld [vmem:[#allocation2 + $0xa0] sm:$0xf]
        %v4505 = vld [vmem:[#allocation2 + $0xa4] sm:$0x1]
        %v4506 = vld [vmem:[#allocation2 + $0xa8] sm:$0xe]
        %v4507 = vld [vmem:[#allocation2 + $0xac] sm:$0xf]
        %v4508 = vld [vmem:[#allocation2 + $0xb0] sm:$0x1]
        %v4509 = vld [vmem:[#allocation2 + $0xb4] sm:$0xe]
        %v4510 = vld [vmem:[#allocation2 + $0xb8] sm:$0xf]
        %v4511 = vld [vmem:[#allocation2 + $0xbc] sm:$0x1]
        %v4560 = vunpack.c.l.b16 %v4464
        %v4561 = vunpack.c.l.b16 %v4465
        %v4562 = vunpack.c.l.b16 %v4466
        %v4563 = vunpack.c.l.b16 %v4467
        %v4564 = vunpack.c.l.b16 %v4468
        %v4565 = vunpack.c.l.b16 %v4469
        %v4566 = vunpack.c.l.b16 %v4470
        %v4567 = vunpack.c.l.b16 %v4471
        %v4568 = vunpack.c.l.b16 %v4472
        %v4569 = vunpack.c.l.b16 %v4473
        %v4570 = vunpack.c.l.b16 %v4474
        %v4571 = vunpack.c.l.b16 %v4475
        %v4572 = vunpack.c.l.b16 %v4476
        %v4573 = vunpack.c.l.b16 %v4477
        %v4574 = vunpack.c.l.b16 %v4478
        %v4575 = vunpack.c.l.b16 %v4479
        %v4576 = vunpack.c.l.b16 %v4480
        %v4577 = vunpack.c.l.b16 %v4481
        %v4578 = vunpack.c.l.b16 %v4482
        %v4579 = vunpack.c.l.b16 %v4483
        %v4580 = vunpack.c.l.b16 %v4484
        %v4581 = vunpack.c.l.b16 %v4485
        %v4582 = vunpack.c.l.b16 %v4486
        %v4583 = vunpack.c.l.b16 %v4487
        %v4584 = vunpack.c.l.b16 %v4488
        %v4585 = vunpack.c.l.b16 %v4489
        %v4586 = vunpack.c.l.b16 %v4490
        %v4587 = vunpack.c.l.b16 %v4491
        %v4588 = vunpack.c.l.b16 %v4492
        %v4589 = vunpack.c.l.b16 %v4493
        %v4590 = vunpack.c.l.b16 %v4494
        %v4591 = vunpack.c.l.b16 %v4495
        %v4592 = vunpack.c.l.b16 %v4496
        %v4593 = vunpack.c.l.b16 %v4497
        %v4594 = vunpack.c.l.b16 %v4498
        %v4595 = vunpack.c.l.b16 %v4499
        %v4596 = vunpack.c.l.b16 %v4500
        %v4597 = vunpack.c.l.b16 %v4501
        %v4598 = vunpack.c.l.b16 %v4502
        %v4599 = vunpack.c.l.b16 %v4503
        %v4600 = vunpack.c.l.b16 %v4504
        %v4601 = vunpack.c.l.b16 %v4505
        %v4602 = vunpack.c.l.b16 %v4506
        %v4603 = vunpack.c.l.b16 %v4507
        %v4604 = vunpack.c.l.b16 %v4508
        %v4605 = vunpack.c.l.b16 %v4509
        %v4606 = vunpack.c.l.b16 %v4510
        %v4607 = vunpack.c.l.b16 %v4511
        %v4608 = vpack.c.b16 %v4561, %v4560
        %v4609 = vpack.c.b16 %v4562, %v4562
        %v4610 = vpack.c.b16 %v4564, %v4563
        %v4611 = vpack.c.b16 %v4565, %v4565
        %v4612 = vpack.c.b16 %v4567, %v4566
        %v4613 = vpack.c.b16 %v4568, %v4568
        %v4614 = vpack.c.b16 %v4570, %v4569
        %v4615 = vpack.c.b16 %v4571, %v4571
        %v4616 = vpack.c.b16 %v4573, %v4572
        %v4617 = vpack.c.b16 %v4574, %v4574
        %v4618 = vpack.c.b16 %v4576, %v4575
        %v4619 = vpack.c.b16 %v4577, %v4577
        %v4620 = vpack.c.b16 %v4579, %v4578
        %v4621 = vpack.c.b16 %v4580, %v4580
        %v4622 = vpack.c.b16 %v4582, %v4581
        %v4623 = vpack.c.b16 %v4583, %v4583
        %v4624 = vpack.c.b16 %v4585, %v4584
        %v4625 = vpack.c.b16 %v4586, %v4586
        %v4626 = vpack.c.b16 %v4588, %v4587
        %v4627 = vpack.c.b16 %v4589, %v4589
        %v4628 = vpack.c.b16 %v4591, %v4590
        %v4629 = vpack.c.b16 %v4592, %v4592
        %v4630 = vpack.c.b16 %v4594, %v4593
        %v4631 = vpack.c.b16 %v4595, %v4595
        %v4632 = vpack.c.b16 %v4597, %v4596
        %v4633 = vpack.c.b16 %v4598, %v4598
        %v4634 = vpack.c.b16 %v4600, %v4599
        %v4635 = vpack.c.b16 %v4601, %v4601
        %v4636 = vpack.c.b16 %v4603, %v4602
        %v4637 = vpack.c.b16 %v4604, %v4604
        %v4638 = vpack.c.b16 %v4606, %v4605
        %v4639 = vpack.c.b16 %v4607, %v4607
        %v4640 = vrot.slane %v4608, 1
        %v4641 = vrot.slane %v4609, 1
        %v4642 = vsel %vm1182, %v4640, %v4641
        %v4643 = vrot.slane %v4610, 1
        %v4644 = vrot.slane %v4611, 1
        %v4645 = vsel %vm1182, %v4643, %v4644
        %v4646 = vrot.slane %v4612, 1
        %v4647 = vrot.slane %v4613, 1
        %v4648 = vsel %vm1182, %v4646, %v4647
        %v4649 = vrot.slane %v4614, 1
        %v4650 = vrot.slane %v4615, 1
        %v4651 = vsel %vm1182, %v4649, %v4650
        %v4652 = vrot.slane %v4616, 1
        %v4653 = vrot.slane %v4617, 1
        %v4654 = vsel %vm1182, %v4652, %v4653
        %v4655 = vrot.slane %v4618, 1
        %v4656 = vrot.slane %v4619, 1
        %v4657 = vsel %vm1182, %v4655, %v4656
        %v4658 = vrot.slane %v4620, 1
        %v4659 = vrot.slane %v4621, 1
        %v4660 = vsel %vm1182, %v4658, %v4659
        %v4661 = vrot.slane %v4622, 1
        %v4662 = vrot.slane %v4623, 1
        %v4663 = vsel %vm1182, %v4661, %v4662
        %v4664 = vrot.slane %v4624, 1
        %v4665 = vrot.slane %v4625, 1
        %v4666 = vsel %vm1182, %v4664, %v4665
        %v4667 = vrot.slane %v4626, 1
        %v4668 = vrot.slane %v4627, 1
        %v4669 = vsel %vm1182, %v4667, %v4668
        %v4670 = vrot.slane %v4628, 1
        %v4671 = vrot.slane %v4629, 1
        %v4672 = vsel %vm1182, %v4670, %v4671
        %v4673 = vrot.slane %v4630, 1
        %v4674 = vrot.slane %v4631, 1
        %v4675 = vsel %vm1182, %v4673, %v4674
        %v4676 = vrot.slane %v4632, 1
        %v4677 = vrot.slane %v4633, 1
        %v4678 = vsel %vm1182, %v4676, %v4677
        %v4679 = vrot.slane %v4634, 1
        %v4680 = vrot.slane %v4635, 1
        %v4681 = vsel %vm1182, %v4679, %v4680
        %v4682 = vrot.slane %v4636, 1
        %v4683 = vrot.slane %v4637, 1
        %v4684 = vsel %vm1182, %v4682, %v4683
        %v4685 = vrot.slane %v4638, 1
        %v4686 = vrot.slane %v4639, 1
        %v4687 = vsel %vm1182, %v4685, %v4686
        %4688 = vrot.lane.b32.xlu0 %v4642, 16
        %v4689 = vpop.permute.xlu0 %4688
        %4690 = vrot.lane.b32.xlu0 %v4645, 16
        %v4691 = vpop.permute.xlu0 %4690
        %4692 = vrot.lane.b32.xlu0 %v4648, 16
        %v4693 = vpop.permute.xlu0 %4692
        %4694 = vrot.lane.b32.xlu0 %v4651, 16
        %v4695 = vpop.permute.xlu0 %4694
        %4696 = vrot.lane.b32.xlu0 %v4654, 16
        %v4697 = vpop.permute.xlu0 %4696
        %4698 = vrot.lane.b32.xlu0 %v4657, 16
        %v4699 = vpop.permute.xlu0 %4698
        %4700 = vrot.lane.b32.xlu0 %v4660, 16
        %v4701 = vpop.permute.xlu0 %4700
        %4702 = vrot.lane.b32.xlu0 %v4663, 16
        %v4703 = vpop.permute.xlu0 %4702
        %4704 = vrot.lane.b32.xlu0 %v4666, 16
        %v4705 = vpop.permute.xlu0 %4704
        %4706 = vrot.lane.b32.xlu0 %v4669, 16
        %v4707 = vpop.permute.xlu0 %4706
        %4708 = vrot.lane.b32.xlu0 %v4672, 16
        %v4709 = vpop.permute.xlu0 %4708
        %4710 = vrot.lane.b32.xlu0 %v4675, 16
        %v4711 = vpop.permute.xlu0 %4710
        %4712 = vrot.lane.b32.xlu0 %v4678, 16
        %v4713 = vpop.permute.xlu0 %4712
        %4714 = vrot.lane.b32.xlu0 %v4681, 16
        %v4715 = vpop.permute.xlu0 %4714
        %4716 = vrot.lane.b32.xlu0 %v4684, 16
        %v4717 = vpop.permute.xlu0 %4716
        %4718 = vrot.lane.b32.xlu0 %v4687, 16
        %v4719 = vpop.permute.xlu0 %4718
        %vm4736 = vcmask 195712
        %4737 = vst.msk [vmem:[#allocation3] sm:$0xff] %vm4736, %v4689
        %4738 = vst.msk [vmem:[#allocation3 + $0x8] sm:$0xff] %vm4736, %v4691
        %4739 = vst.msk [vmem:[#allocation3 + $0x10] sm:$0xff] %vm4736, %v4693
        %4740 = vst.msk [vmem:[#allocation3 + $0x18] sm:$0xff] %vm4736, %v4695
        %4741 = vst.msk [vmem:[#allocation3 + $0x20] sm:$0xff] %vm4736, %v4697
        %4742 = vst.msk [vmem:[#allocation3 + $0x28] sm:$0xff] %vm4736, %v4699
        %4743 = vst.msk [vmem:[#allocation3 + $0x30] sm:$0xff] %vm4736, %v4701
        %4744 = vst.msk [vmem:[#allocation3 + $0x38] sm:$0xff] %vm4736, %v4703
        %4745 = vst.msk [vmem:[#allocation3 + $0x40] sm:$0xff] %vm4736, %v4705
        %4746 = vst.msk [vmem:[#allocation3 + $0x48] sm:$0xff] %vm4736, %v4707
        %4747 = vst.msk [vmem:[#allocation3 + $0x50] sm:$0xff] %vm4736, %v4709
        %4748 = vst.msk [vmem:[#allocation3 + $0x58] sm:$0xff] %vm4736, %v4711
        %4749 = vst.msk [vmem:[#allocation3 + $0x60] sm:$0xff] %vm4736, %v4713
        %4750 = vst.msk [vmem:[#allocation3 + $0x68] sm:$0xff] %vm4736, %v4715
        %4751 = vst.msk [vmem:[#allocation3 + $0x70] sm:$0xff] %vm4736, %v4717
        %4752 = vst.msk [vmem:[#allocation3 + $0x78] sm:$0xff] %vm4736, %v4719
        %v4753 = vld [vmem:[%s3771] sm:$0xf]
        %v4754 = vld [vmem:[%s3771 + $0x4] sm:$0xf]
        %v4755 = vld [vmem:[%s3771 + $0xc] sm:$0xf]
        %v4756 = vld [vmem:[%s3771 + $0x10] sm:$0xf]
        %v4757 = vld [vmem:[%s3771 + $0x18] sm:$0xf]
        %v4758 = vld [vmem:[%s3771 + $0x1c] sm:$0xf]
        %v4759 = vld [vmem:[%s3771 + $0x24] sm:$0xf]
        %v4760 = vld [vmem:[%s3771 + $0x28] sm:$0xf]
        %v4761 = vld [vmem:[%s3771 + $0x30] sm:$0xf]
        %v4762 = vld [vmem:[%s3771 + $0x34] sm:$0xf]
        %v4763 = vld [vmem:[%s3771 + $0x3c] sm:$0xf]
        %v4764 = vld [vmem:[%s3771 + $0x40] sm:$0xf]
        %v4765 = vld [vmem:[%s3771 + $0x48] sm:$0xf]
        %v4766 = vld [vmem:[%s3771 + $0x4c] sm:$0xf]
        %v4767 = vld [vmem:[%s3771 + $0x54] sm:$0xf]
        %v4768 = vld [vmem:[%s3771 + $0x58] sm:$0xf]
        %v4769 = vld [vmem:[%s3771 + $0x60] sm:$0xf]
        %v4770 = vld [vmem:[%s3771 + $0x64] sm:$0xf]
        %v4771 = vld [vmem:[%s3771 + $0x6c] sm:$0xf]
        %v4772 = vld [vmem:[%s3771 + $0x70] sm:$0xf]
        %v4773 = vld [vmem:[%s3771 + $0x78] sm:$0xf]
        %v4774 = vld [vmem:[%s3771 + $0x7c] sm:$0xf]
        %v4775 = vld [vmem:[%s3771 + $0x84] sm:$0xf]
        %v4776 = vld [vmem:[%s3771 + $0x88] sm:$0xf]
        %v4777 = vld [vmem:[%s3771 + $0x90] sm:$0xf]
        %v4778 = vld [vmem:[%s3771 + $0x94] sm:$0xf]
        %v4779 = vld [vmem:[%s3771 + $0x9c] sm:$0xf]
        %v4780 = vld [vmem:[%s3771 + $0xa0] sm:$0xf]
        %v4781 = vld [vmem:[%s3771 + $0xa8] sm:$0xf]
        %v4782 = vld [vmem:[%s3771 + $0xac] sm:$0xf]
        %v4783 = vld [vmem:[%s3771 + $0xb4] sm:$0xf]
        %v4784 = vld [vmem:[%s3771 + $0xb8] sm:$0xf]
        %v4817 = vunpack.c.l.b16 %v4753
        %v4818 = vunpack.c.l.b16 %v4754
        %v4819 = vunpack.c.l.b16 %v4755
        %v4820 = vunpack.c.l.b16 %v4756
        %v4821 = vunpack.c.l.b16 %v4757
        %v4822 = vunpack.c.l.b16 %v4758
        %v4823 = vunpack.c.l.b16 %v4759
        %v4824 = vunpack.c.l.b16 %v4760
        %v4825 = vunpack.c.l.b16 %v4761
        %v4826 = vunpack.c.l.b16 %v4762
        %v4827 = vunpack.c.l.b16 %v4763
        %v4828 = vunpack.c.l.b16 %v4764
        %v4829 = vunpack.c.l.b16 %v4765
        %v4830 = vunpack.c.l.b16 %v4766
        %v4831 = vunpack.c.l.b16 %v4767
        %v4832 = vunpack.c.l.b16 %v4768
        %v4833 = vunpack.c.l.b16 %v4769
        %v4834 = vunpack.c.l.b16 %v4770
        %v4835 = vunpack.c.l.b16 %v4771
        %v4836 = vunpack.c.l.b16 %v4772
        %v4837 = vunpack.c.l.b16 %v4773
        %v4838 = vunpack.c.l.b16 %v4774
        %v4839 = vunpack.c.l.b16 %v4775
        %v4840 = vunpack.c.l.b16 %v4776
        %v4841 = vunpack.c.l.b16 %v4777
        %v4842 = vunpack.c.l.b16 %v4778
        %v4843 = vunpack.c.l.b16 %v4779
        %v4844 = vunpack.c.l.b16 %v4780
        %v4845 = vunpack.c.l.b16 %v4781
        %v4846 = vunpack.c.l.b16 %v4782
        %v4847 = vunpack.c.l.b16 %v4783
        %v4848 = vunpack.c.l.b16 %v4784
        %v4849 = vpack.c.b16 %v4818, %v4817
        %v4850 = vpack.c.b16 %v4820, %v4819
        %v4851 = vpack.c.b16 %v4822, %v4821
        %v4852 = vpack.c.b16 %v4824, %v4823
        %v4853 = vpack.c.b16 %v4826, %v4825
        %v4854 = vpack.c.b16 %v4828, %v4827
        %v4855 = vpack.c.b16 %v4830, %v4829
        %v4856 = vpack.c.b16 %v4832, %v4831
        %v4857 = vpack.c.b16 %v4834, %v4833
        %v4858 = vpack.c.b16 %v4836, %v4835
        %v4859 = vpack.c.b16 %v4838, %v4837
        %v4860 = vpack.c.b16 %v4840, %v4839
        %v4861 = vpack.c.b16 %v4842, %v4841
        %v4862 = vpack.c.b16 %v4844, %v4843
        %v4863 = vpack.c.b16 %v4846, %v4845
        %v4864 = vpack.c.b16 %v4848, %v4847
        %4865 = vrot.lane.b32.xlu0 %v4849, 24
        %v4866 = vpop.permute.xlu0 %4865
        %4867 = vrot.lane.b32.xlu0 %v4850, 24
        %v4868 = vpop.permute.xlu0 %4867
        %4869 = vrot.lane.b32.xlu0 %v4851, 24
        %v4870 = vpop.permute.xlu0 %4869
        %4871 = vrot.lane.b32.xlu0 %v4852, 24
        %v4872 = vpop.permute.xlu0 %4871
        %4873 = vrot.lane.b32.xlu0 %v4853, 24
        %v4874 = vpop.permute.xlu0 %4873
        %4875 = vrot.lane.b32.xlu0 %v4854, 24
        %v4876 = vpop.permute.xlu0 %4875
        %4877 = vrot.lane.b32.xlu0 %v4855, 24
        %v4878 = vpop.permute.xlu0 %4877
        %4879 = vrot.lane.b32.xlu0 %v4856, 24
        %v4880 = vpop.permute.xlu0 %4879
        %4881 = vrot.lane.b32.xlu0 %v4857, 24
        %v4882 = vpop.permute.xlu0 %4881
        %4883 = vrot.lane.b32.xlu0 %v4858, 24
        %v4884 = vpop.permute.xlu0 %4883
        %4885 = vrot.lane.b32.xlu0 %v4859, 24
        %v4886 = vpop.permute.xlu0 %4885
        %4887 = vrot.lane.b32.xlu0 %v4860, 24
        %v4888 = vpop.permute.xlu0 %4887
        %4889 = vrot.lane.b32.xlu0 %v4861, 24
        %v4890 = vpop.permute.xlu0 %4889
        %4891 = vrot.lane.b32.xlu0 %v4862, 24
        %v4892 = vpop.permute.xlu0 %4891
        %4893 = vrot.lane.b32.xlu0 %v4863, 24
        %v4894 = vpop.permute.xlu0 %4893
        %4895 = vrot.lane.b32.xlu0 %v4864, 24
        %v4896 = vpop.permute.xlu0 %4895
        %vm4913 = vcmask 261312
        %4914 = vst.msk [vmem:[#allocation3] sm:$0xff] %vm4913, %v4866
        %4915 = vst.msk [vmem:[#allocation3 + $0x8] sm:$0xff] %vm4913, %v4868
        %4916 = vst.msk [vmem:[#allocation3 + $0x10] sm:$0xff] %vm4913, %v4870
        %4917 = vst.msk [vmem:[#allocation3 + $0x18] sm:$0xff] %vm4913, %v4872
        %4918 = vst.msk [vmem:[#allocation3 + $0x20] sm:$0xff] %vm4913, %v4874
        %4919 = vst.msk [vmem:[#allocation3 + $0x28] sm:$0xff] %vm4913, %v4876
        %4920 = vst.msk [vmem:[#allocation3 + $0x30] sm:$0xff] %vm4913, %v4878
        %4921 = vst.msk [vmem:[#allocation3 + $0x38] sm:$0xff] %vm4913, %v4880
        %4922 = vst.msk [vmem:[#allocation3 + $0x40] sm:$0xff] %vm4913, %v4882
        %4923 = vst.msk [vmem:[#allocation3 + $0x48] sm:$0xff] %vm4913, %v4884
        %4924 = vst.msk [vmem:[#allocation3 + $0x50] sm:$0xff] %vm4913, %v4886
        %4925 = vst.msk [vmem:[#allocation3 + $0x58] sm:$0xff] %vm4913, %v4888
        %4926 = vst.msk [vmem:[#allocation3 + $0x60] sm:$0xff] %vm4913, %v4890
        %4927 = vst.msk [vmem:[#allocation3 + $0x68] sm:$0xff] %vm4913, %v4892
        %4928 = vst.msk [vmem:[#allocation3 + $0x70] sm:$0xff] %vm4913, %v4894
        %4929 = vst.msk [vmem:[#allocation3 + $0x78] sm:$0xff] %vm4913, %v4896
        %v4930 = vld [vmem:[%s3771] sm:$0xf]
        %v4931 = vld [vmem:[%s3771 + $0x4] sm:$0xf]
        %v4932 = vld [vmem:[%s3771 + $0x8] sm:$0x1]
        %v4933 = vld [vmem:[%s3771 + $0xc] sm:$0xf]
        %v4934 = vld [vmem:[%s3771 + $0x10] sm:$0xf]
        %v4935 = vld [vmem:[%s3771 + $0x14] sm:$0x1]
        %v4936 = vld [vmem:[%s3771 + $0x18] sm:$0xf]
        %v4937 = vld [vmem:[%s3771 + $0x1c] sm:$0xf]
        %v4938 = vld [vmem:[%s3771 + $0x20] sm:$0x1]
        %v4939 = vld [vmem:[%s3771 + $0x24] sm:$0xf]
        %v4940 = vld [vmem:[%s3771 + $0x28] sm:$0xf]
        %v4941 = vld [vmem:[%s3771 + $0x2c] sm:$0x1]
        %v4942 = vld [vmem:[%s3771 + $0x30] sm:$0xf]
        %v4943 = vld [vmem:[%s3771 + $0x34] sm:$0xf]
        %v4944 = vld [vmem:[%s3771 + $0x38] sm:$0x1]
        %v4945 = vld [vmem:[%s3771 + $0x3c] sm:$0xf]
        %v4946 = vld [vmem:[%s3771 + $0x40] sm:$0xf]
        %v4947 = vld [vmem:[%s3771 + $0x44] sm:$0x1]
        %v4948 = vld [vmem:[%s3771 + $0x48] sm:$0xf]
        %v4949 = vld [vmem:[%s3771 + $0x4c] sm:$0xf]
        %v4950 = vld [vmem:[%s3771 + $0x50] sm:$0x1]
        %v4951 = vld [vmem:[%s3771 + $0x54] sm:$0xf]
        %v4952 = vld [vmem:[%s3771 + $0x58] sm:$0xf]
        %v4953 = vld [vmem:[%s3771 + $0x5c] sm:$0x1]
        %v4954 = vld [vmem:[%s3771 + $0x60] sm:$0xf]
        %v4955 = vld [vmem:[%s3771 + $0x64] sm:$0xf]
        %v4956 = vld [vmem:[%s3771 + $0x68] sm:$0x1]
        %v4957 = vld [vmem:[%s3771 + $0x6c] sm:$0xf]
        %v4958 = vld [vmem:[%s3771 + $0x70] sm:$0xf]
        %v4959 = vld [vmem:[%s3771 + $0x74] sm:$0x1]
        %v4960 = vld [vmem:[%s3771 + $0x78] sm:$0xf]
        %v4961 = vld [vmem:[%s3771 + $0x7c] sm:$0xf]
        %v4962 = vld [vmem:[%s3771 + $0x80] sm:$0x1]
        %v4963 = vld [vmem:[%s3771 + $0x84] sm:$0xf]
        %v4964 = vld [vmem:[%s3771 + $0x88] sm:$0xf]
        %v4965 = vld [vmem:[%s3771 + $0x8c] sm:$0x1]
        %v4966 = vld [vmem:[%s3771 + $0x90] sm:$0xf]
        %v4967 = vld [vmem:[%s3771 + $0x94] sm:$0xf]
        %v4968 = vld [vmem:[%s3771 + $0x98] sm:$0x1]
        %v4969 = vld [vmem:[%s3771 + $0x9c] sm:$0xf]
        %v4970 = vld [vmem:[%s3771 + $0xa0] sm:$0xf]
        %v4971 = vld [vmem:[%s3771 + $0xa4] sm:$0x1]
        %v4972 = vld [vmem:[%s3771 + $0xa8] sm:$0xf]
        %v4973 = vld [vmem:[%s3771 + $0xac] sm:$0xf]
        %v4974 = vld [vmem:[%s3771 + $0xb0] sm:$0x1]
        %v4975 = vld [vmem:[%s3771 + $0xb4] sm:$0xf]
        %v4976 = vld [vmem:[%s3771 + $0xb8] sm:$0xf]
        %v4977 = vld [vmem:[%s3771 + $0xbc] sm:$0x1]
        %v5026 = vunpack.c.l.b16 %v4930
        %v5027 = vunpack.c.l.b16 %v4931
        %v5028 = vunpack.c.l.b16 %v4932
        %v5029 = vunpack.c.l.b16 %v4933
        %v5030 = vunpack.c.l.b16 %v4934
        %v5031 = vunpack.c.l.b16 %v4935
        %v5032 = vunpack.c.l.b16 %v4936
        %v5033 = vunpack.c.l.b16 %v4937
        %v5034 = vunpack.c.l.b16 %v4938
        %v5035 = vunpack.c.l.b16 %v4939
        %v5036 = vunpack.c.l.b16 %v4940
        %v5037 = vunpack.c.l.b16 %v4941
        %v5038 = vunpack.c.l.b16 %v4942
        %v5039 = vunpack.c.l.b16 %v4943
        %v5040 = vunpack.c.l.b16 %v4944
        %v5041 = vunpack.c.l.b16 %v4945
        %v5042 = vunpack.c.l.b16 %v4946
        %v5043 = vunpack.c.l.b16 %v4947
        %v5044 = vunpack.c.l.b16 %v4948
        %v5045 = vunpack.c.l.b16 %v4949
        %v5046 = vunpack.c.l.b16 %v4950
        %v5047 = vunpack.c.l.b16 %v4951
        %v5048 = vunpack.c.l.b16 %v4952
        %v5049 = vunpack.c.l.b16 %v4953
        %v5050 = vunpack.c.l.b16 %v4954
        %v5051 = vunpack.c.l.b16 %v4955
        %v5052 = vunpack.c.l.b16 %v4956
        %v5053 = vunpack.c.l.b16 %v4957
        %v5054 = vunpack.c.l.b16 %v4958
        %v5055 = vunpack.c.l.b16 %v4959
        %v5056 = vunpack.c.l.b16 %v4960
        %v5057 = vunpack.c.l.b16 %v4961
        %v5058 = vunpack.c.l.b16 %v4962
        %v5059 = vunpack.c.l.b16 %v4963
        %v5060 = vunpack.c.l.b16 %v4964
        %v5061 = vunpack.c.l.b16 %v4965
        %v5062 = vunpack.c.l.b16 %v4966
        %v5063 = vunpack.c.l.b16 %v4967
        %v5064 = vunpack.c.l.b16 %v4968
        %v5065 = vunpack.c.l.b16 %v4969
        %v5066 = vunpack.c.l.b16 %v4970
        %v5067 = vunpack.c.l.b16 %v4971
        %v5068 = vunpack.c.l.b16 %v4972
        %v5069 = vunpack.c.l.b16 %v4973
        %v5070 = vunpack.c.l.b16 %v4974
        %v5071 = vunpack.c.l.b16 %v4975
        %v5072 = vunpack.c.l.b16 %v4976
        %v5073 = vunpack.c.l.b16 %v4977
        %v5074 = vpack.c.b16 %v5027, %v5026
        %v5075 = vpack.c.b16 %v5028, %v5028
        %v5076 = vpack.c.b16 %v5030, %v5029
        %v5077 = vpack.c.b16 %v5031, %v5031
        %v5078 = vpack.c.b16 %v5033, %v5032
        %v5079 = vpack.c.b16 %v5034, %v5034
        %v5080 = vpack.c.b16 %v5036, %v5035
        %v5081 = vpack.c.b16 %v5037, %v5037
        %v5082 = vpack.c.b16 %v5039, %v5038
        %v5083 = vpack.c.b16 %v5040, %v5040
        %v5084 = vpack.c.b16 %v5042, %v5041
        %v5085 = vpack.c.b16 %v5043, %v5043
        %v5086 = vpack.c.b16 %v5045, %v5044
        %v5087 = vpack.c.b16 %v5046, %v5046
        %v5088 = vpack.c.b16 %v5048, %v5047
        %v5089 = vpack.c.b16 %v5049, %v5049
        %v5090 = vpack.c.b16 %v5051, %v5050
        %v5091 = vpack.c.b16 %v5052, %v5052
        %v5092 = vpack.c.b16 %v5054, %v5053
        %v5093 = vpack.c.b16 %v5055, %v5055
        %v5094 = vpack.c.b16 %v5057, %v5056
        %v5095 = vpack.c.b16 %v5058, %v5058
        %v5096 = vpack.c.b16 %v5060, %v5059
        %v5097 = vpack.c.b16 %v5061, %v5061
        %v5098 = vpack.c.b16 %v5063, %v5062
        %v5099 = vpack.c.b16 %v5064, %v5064
        %v5100 = vpack.c.b16 %v5066, %v5065
        %v5101 = vpack.c.b16 %v5067, %v5067
        %v5102 = vpack.c.b16 %v5069, %v5068
        %v5103 = vpack.c.b16 %v5070, %v5070
        %v5104 = vpack.c.b16 %v5072, %v5071
        %v5105 = vpack.c.b16 %v5073, %v5073
        %v5107 = vshrl.u32 %v5074, 16
        %v5109 = vshll.u32 %v5074, 16
        %v5111 = vrot.slane %v5109, 1
        %v5112 = vor.u32 %v5107, %v5111
        %v5114 = vshll.u32 %v5075, 16
        %v5116 = vrot.slane %v5114, 1
        %v5117 = vsel %vm748, %v5112, %v5116
        %v5119 = vshrl.u32 %v5076, 16
        %v5121 = vshll.u32 %v5076, 16
        %v5123 = vrot.slane %v5121, 1
        %v5124 = vor.u32 %v5119, %v5123
        %v5126 = vshll.u32 %v5077, 16
        %v5128 = vrot.slane %v5126, 1
        %v5129 = vsel %vm748, %v5124, %v5128
        %v5131 = vshrl.u32 %v5078, 16
        %v5133 = vshll.u32 %v5078, 16
        %v5135 = vrot.slane %v5133, 1
        %v5136 = vor.u32 %v5131, %v5135
        %v5138 = vshll.u32 %v5079, 16
        %v5140 = vrot.slane %v5138, 1
        %v5141 = vsel %vm748, %v5136, %v5140
        %v5143 = vshrl.u32 %v5080, 16
        %v5145 = vshll.u32 %v5080, 16
        %v5147 = vrot.slane %v5145, 1
        %v5148 = vor.u32 %v5143, %v5147
        %v5150 = vshll.u32 %v5081, 16
        %v5152 = vrot.slane %v5150, 1
        %v5153 = vsel %vm748, %v5148, %v5152
        %v5155 = vshrl.u32 %v5082, 16
        %v5157 = vshll.u32 %v5082, 16
        %v5159 = vrot.slane %v5157, 1
        %v5160 = vor.u32 %v5155, %v5159
        %v5162 = vshll.u32 %v5083, 16
        %v5164 = vrot.slane %v5162, 1
        %v5165 = vsel %vm748, %v5160, %v5164
        %v5167 = vshrl.u32 %v5084, 16
        %v5169 = vshll.u32 %v5084, 16
        %v5171 = vrot.slane %v5169, 1
        %v5172 = vor.u32 %v5167, %v5171
        %v5174 = vshll.u32 %v5085, 16
        %v5176 = vrot.slane %v5174, 1
        %v5177 = vsel %vm748, %v5172, %v5176
        %v5179 = vshrl.u32 %v5086, 16
        %v5181 = vshll.u32 %v5086, 16
        %v5183 = vrot.slane %v5181, 1
        %v5184 = vor.u32 %v5179, %v5183
        %v5186 = vshll.u32 %v5087, 16
        %v5188 = vrot.slane %v5186, 1
        %v5189 = vsel %vm748, %v5184, %v5188
        %v5191 = vshrl.u32 %v5088, 16
        %v5193 = vshll.u32 %v5088, 16
        %v5195 = vrot.slane %v5193, 1
        %v5196 = vor.u32 %v5191, %v5195
        %v5198 = vshll.u32 %v5089, 16
        %v5200 = vrot.slane %v5198, 1
        %v5201 = vsel %vm748, %v5196, %v5200
        %v5203 = vshrl.u32 %v5090, 16
        %v5205 = vshll.u32 %v5090, 16
        %v5207 = vrot.slane %v5205, 1
        %v5208 = vor.u32 %v5203, %v5207
        %v5210 = vshll.u32 %v5091, 16
        %v5212 = vrot.slane %v5210, 1
        %v5213 = vsel %vm748, %v5208, %v5212
        %v5215 = vshrl.u32 %v5092, 16
        %v5217 = vshll.u32 %v5092, 16
        %v5219 = vrot.slane %v5217, 1
        %v5220 = vor.u32 %v5215, %v5219
        %v5222 = vshll.u32 %v5093, 16
        %v5224 = vrot.slane %v5222, 1
        %v5225 = vsel %vm748, %v5220, %v5224
        %v5227 = vshrl.u32 %v5094, 16
        %v5229 = vshll.u32 %v5094, 16
        %v5231 = vrot.slane %v5229, 1
        %v5232 = vor.u32 %v5227, %v5231
        %v5234 = vshll.u32 %v5095, 16
        %v5236 = vrot.slane %v5234, 1
        %v5237 = vsel %vm748, %v5232, %v5236
        %v5239 = vshrl.u32 %v5096, 16
        %v5241 = vshll.u32 %v5096, 16
        %v5243 = vrot.slane %v5241, 1
        %v5244 = vor.u32 %v5239, %v5243
        %v5246 = vshll.u32 %v5097, 16
        %v5248 = vrot.slane %v5246, 1
        %v5249 = vsel %vm748, %v5244, %v5248
        %v5251 = vshrl.u32 %v5098, 16
        %v5253 = vshll.u32 %v5098, 16
        %v5255 = vrot.slane %v5253, 1
        %v5256 = vor.u32 %v5251, %v5255
        %v5258 = vshll.u32 %v5099, 16
        %v5260 = vrot.slane %v5258, 1
        %v5261 = vsel %vm748, %v5256, %v5260
        %v5263 = vshrl.u32 %v5100, 16
        %v5265 = vshll.u32 %v5100, 16
        %v5267 = vrot.slane %v5265, 1
        %v5268 = vor.u32 %v5263, %v5267
        %v5270 = vshll.u32 %v5101, 16
        %v5272 = vrot.slane %v5270, 1
        %v5273 = vsel %vm748, %v5268, %v5272
        %v5275 = vshrl.u32 %v5102, 16
        %v5277 = vshll.u32 %v5102, 16
        %v5279 = vrot.slane %v5277, 1
        %v5280 = vor.u32 %v5275, %v5279
        %v5282 = vshll.u32 %v5103, 16
        %v5284 = vrot.slane %v5282, 1
        %v5285 = vsel %vm748, %v5280, %v5284
        %v5287 = vshrl.u32 %v5104, 16
        %v5289 = vshll.u32 %v5104, 16
        %v5291 = vrot.slane %v5289, 1
        %v5292 = vor.u32 %v5287, %v5291
        %v5294 = vshll.u32 %v5105, 16
        %v5296 = vrot.slane %v5294, 1
        %v5297 = vsel %vm748, %v5292, %v5296
        %5298 = vrot.lane.b32.xlu0 %v5117, 32
        %v5299 = vpop.permute.xlu0 %5298
        %5300 = vrot.lane.b32.xlu0 %v5129, 32
        %v5301 = vpop.permute.xlu0 %5300
        %5302 = vrot.lane.b32.xlu0 %v5141, 32
        %v5303 = vpop.permute.xlu0 %5302
        %5304 = vrot.lane.b32.xlu0 %v5153, 32
        %v5305 = vpop.permute.xlu0 %5304
        %5306 = vrot.lane.b32.xlu0 %v5165, 32
        %v5307 = vpop.permute.xlu0 %5306
        %5308 = vrot.lane.b32.xlu0 %v5177, 32
        %v5309 = vpop.permute.xlu0 %5308
        %5310 = vrot.lane.b32.xlu0 %v5189, 32
        %v5311 = vpop.permute.xlu0 %5310
        %5312 = vrot.lane.b32.xlu0 %v5201, 32
        %v5313 = vpop.permute.xlu0 %5312
        %5314 = vrot.lane.b32.xlu0 %v5213, 32
        %v5315 = vpop.permute.xlu0 %5314
        %5316 = vrot.lane.b32.xlu0 %v5225, 32
        %v5317 = vpop.permute.xlu0 %5316
        %5318 = vrot.lane.b32.xlu0 %v5237, 32
        %v5319 = vpop.permute.xlu0 %5318
        %5320 = vrot.lane.b32.xlu0 %v5249, 32
        %v5321 = vpop.permute.xlu0 %5320
        %5322 = vrot.lane.b32.xlu0 %v5261, 32
        %v5323 = vpop.permute.xlu0 %5322
        %5324 = vrot.lane.b32.xlu0 %v5273, 32
        %v5325 = vpop.permute.xlu0 %5324
        %5326 = vrot.lane.b32.xlu0 %v5285, 32
        %v5327 = vpop.permute.xlu0 %5326
        %5328 = vrot.lane.b32.xlu0 %v5297, 32
        %v5329 = vpop.permute.xlu0 %5328
        %vm5346 = vcmask 326912
        %5347 = vst.msk [vmem:[#allocation3] sm:$0xff] %vm5346, %v5299
        %5348 = vst.msk [vmem:[#allocation3 + $0x8] sm:$0xff] %vm5346, %v5301
        %5349 = vst.msk [vmem:[#allocation3 + $0x10] sm:$0xff] %vm5346, %v5303
        %5350 = vst.msk [vmem:[#allocation3 + $0x18] sm:$0xff] %vm5346, %v5305
        %5351 = vst.msk [vmem:[#allocation3 + $0x20] sm:$0xff] %vm5346, %v5307
        %5352 = vst.msk [vmem:[#allocation3 + $0x28] sm:$0xff] %vm5346, %v5309
        %5353 = vst.msk [vmem:[#allocation3 + $0x30] sm:$0xff] %vm5346, %v5311
        %5354 = vst.msk [vmem:[#allocation3 + $0x38] sm:$0xff] %vm5346, %v5313
        %5355 = vst.msk [vmem:[#allocation3 + $0x40] sm:$0xff] %vm5346, %v5315
        %5356 = vst.msk [vmem:[#allocation3 + $0x48] sm:$0xff] %vm5346, %v5317
        %5357 = vst.msk [vmem:[#allocation3 + $0x50] sm:$0xff] %vm5346, %v5319
        %5358 = vst.msk [vmem:[#allocation3 + $0x58] sm:$0xff] %vm5346, %v5321
        %5359 = vst.msk [vmem:[#allocation3 + $0x60] sm:$0xff] %vm5346, %v5323
        %5360 = vst.msk [vmem:[#allocation3 + $0x68] sm:$0xff] %vm5346, %v5325
        %5361 = vst.msk [vmem:[#allocation3 + $0x70] sm:$0xff] %vm5346, %v5327
        %5362 = vst.msk [vmem:[#allocation3 + $0x78] sm:$0xff] %vm5346, %v5329
        %v5363 = vld [vmem:[%s3771] sm:$0xe]
        %v5364 = vld [vmem:[%s3771 + $0x4] sm:$0xf]
        %v5365 = vld [vmem:[%s3771 + $0x8] sm:$0x1]
        %v5366 = vld [vmem:[%s3771 + $0xc] sm:$0xe]
        %v5367 = vld [vmem:[%s3771 + $0x10] sm:$0xf]
        %v5368 = vld [vmem:[%s3771 + $0x14] sm:$0x1]
        %v5369 = vld [vmem:[%s3771 + $0x18] sm:$0xe]
        %v5370 = vld [vmem:[%s3771 + $0x1c] sm:$0xf]
        %v5371 = vld [vmem:[%s3771 + $0x20] sm:$0x1]
        %v5372 = vld [vmem:[%s3771 + $0x24] sm:$0xe]
        %v5373 = vld [vmem:[%s3771 + $0x28] sm:$0xf]
        %v5374 = vld [vmem:[%s3771 + $0x2c] sm:$0x1]
        %v5375 = vld [vmem:[%s3771 + $0x30] sm:$0xe]
        %v5376 = vld [vmem:[%s3771 + $0x34] sm:$0xf]
        %v5377 = vld [vmem:[%s3771 + $0x38] sm:$0x1]
        %v5378 = vld [vmem:[%s3771 + $0x3c] sm:$0xe]
        %v5379 = vld [vmem:[%s3771 + $0x40] sm:$0xf]
        %v5380 = vld [vmem:[%s3771 + $0x44] sm:$0x1]
        %v5381 = vld [vmem:[%s3771 + $0x48] sm:$0xe]
        %v5382 = vld [vmem:[%s3771 + $0x4c] sm:$0xf]
        %v5383 = vld [vmem:[%s3771 + $0x50] sm:$0x1]
        %v5384 = vld [vmem:[%s3771 + $0x54] sm:$0xe]
        %v5385 = vld [vmem:[%s3771 + $0x58] sm:$0xf]
        %v5386 = vld [vmem:[%s3771 + $0x5c] sm:$0x1]
        %v5387 = vld [vmem:[%s3771 + $0x60] sm:$0xe]
        %v5388 = vld [vmem:[%s3771 + $0x64] sm:$0xf]
        %v5389 = vld [vmem:[%s3771 + $0x68] sm:$0x1]
        %v5390 = vld [vmem:[%s3771 + $0x6c] sm:$0xe]
        %v5391 = vld [vmem:[%s3771 + $0x70] sm:$0xf]
        %v5392 = vld [vmem:[%s3771 + $0x74] sm:$0x1]
        %v5393 = vld [vmem:[%s3771 + $0x78] sm:$0xe]
        %v5394 = vld [vmem:[%s3771 + $0x7c] sm:$0xf]
        %v5395 = vld [vmem:[%s3771 + $0x80] sm:$0x1]
        %v5396 = vld [vmem:[%s3771 + $0x84] sm:$0xe]
        %v5397 = vld [vmem:[%s3771 + $0x88] sm:$0xf]
        %v5398 = vld [vmem:[%s3771 + $0x8c] sm:$0x1]
        %v5399 = vld [vmem:[%s3771 + $0x90] sm:$0xe]
        %v5400 = vld [vmem:[%s3771 + $0x94] sm:$0xf]
        %v5401 = vld [vmem:[%s3771 + $0x98] sm:$0x1]
        %v5402 = vld [vmem:[%s3771 + $0x9c] sm:$0xe]
        %v5403 = vld [vmem:[%s3771 + $0xa0] sm:$0xf]
        %v5404 = vld [vmem:[%s3771 + $0xa4] sm:$0x1]
        %v5405 = vld [vmem:[%s3771 + $0xa8] sm:$0xe]
        %v5406 = vld [vmem:[%s3771 + $0xac] sm:$0xf]
        %v5407 = vld [vmem:[%s3771 + $0xb0] sm:$0x1]
        %v5408 = vld [vmem:[%s3771 + $0xb4] sm:$0xe]
        %v5409 = vld [vmem:[%s3771 + $0xb8] sm:$0xf]
        %v5410 = vld [vmem:[%s3771 + $0xbc] sm:$0x1]
        %v5459 = vunpack.c.l.b16 %v5363
        %v5460 = vunpack.c.l.b16 %v5364
        %v5461 = vunpack.c.l.b16 %v5365
        %v5462 = vunpack.c.l.b16 %v5366
        %v5463 = vunpack.c.l.b16 %v5367
        %v5464 = vunpack.c.l.b16 %v5368
        %v5465 = vunpack.c.l.b16 %v5369
        %v5466 = vunpack.c.l.b16 %v5370
        %v5467 = vunpack.c.l.b16 %v5371
        %v5468 = vunpack.c.l.b16 %v5372
        %v5469 = vunpack.c.l.b16 %v5373
        %v5470 = vunpack.c.l.b16 %v5374
        %v5471 = vunpack.c.l.b16 %v5375
        %v5472 = vunpack.c.l.b16 %v5376
        %v5473 = vunpack.c.l.b16 %v5377
        %v5474 = vunpack.c.l.b16 %v5378
        %v5475 = vunpack.c.l.b16 %v5379
        %v5476 = vunpack.c.l.b16 %v5380
        %v5477 = vunpack.c.l.b16 %v5381
        %v5478 = vunpack.c.l.b16 %v5382
        %v5479 = vunpack.c.l.b16 %v5383
        %v5480 = vunpack.c.l.b16 %v5384
        %v5481 = vunpack.c.l.b16 %v5385
        %v5482 = vunpack.c.l.b16 %v5386
        %v5483 = vunpack.c.l.b16 %v5387
        %v5484 = vunpack.c.l.b16 %v5388
        %v5485 = vunpack.c.l.b16 %v5389
        %v5486 = vunpack.c.l.b16 %v5390
        %v5487 = vunpack.c.l.b16 %v5391
        %v5488 = vunpack.c.l.b16 %v5392
        %v5489 = vunpack.c.l.b16 %v5393
        %v5490 = vunpack.c.l.b16 %v5394
        %v5491 = vunpack.c.l.b16 %v5395
        %v5492 = vunpack.c.l.b16 %v5396
        %v5493 = vunpack.c.l.b16 %v5397
        %v5494 = vunpack.c.l.b16 %v5398
        %v5495 = vunpack.c.l.b16 %v5399
        %v5496 = vunpack.c.l.b16 %v5400
        %v5497 = vunpack.c.l.b16 %v5401
        %v5498 = vunpack.c.l.b16 %v5402
        %v5499 = vunpack.c.l.b16 %v5403
        %v5500 = vunpack.c.l.b16 %v5404
        %v5501 = vunpack.c.l.b16 %v5405
        %v5502 = vunpack.c.l.b16 %v5406
        %v5503 = vunpack.c.l.b16 %v5407
        %v5504 = vunpack.c.l.b16 %v5408
        %v5505 = vunpack.c.l.b16 %v5409
        %v5506 = vunpack.c.l.b16 %v5410
        %v5507 = vpack.c.b16 %v5460, %v5459
        %v5508 = vpack.c.b16 %v5461, %v5461
        %v5509 = vpack.c.b16 %v5463, %v5462
        %v5510 = vpack.c.b16 %v5464, %v5464
        %v5511 = vpack.c.b16 %v5466, %v5465
        %v5512 = vpack.c.b16 %v5467, %v5467
        %v5513 = vpack.c.b16 %v5469, %v5468
        %v5514 = vpack.c.b16 %v5470, %v5470
        %v5515 = vpack.c.b16 %v5472, %v5471
        %v5516 = vpack.c.b16 %v5473, %v5473
        %v5517 = vpack.c.b16 %v5475, %v5474
        %v5518 = vpack.c.b16 %v5476, %v5476
        %v5519 = vpack.c.b16 %v5478, %v5477
        %v5520 = vpack.c.b16 %v5479, %v5479
        %v5521 = vpack.c.b16 %v5481, %v5480
        %v5522 = vpack.c.b16 %v5482, %v5482
        %v5523 = vpack.c.b16 %v5484, %v5483
        %v5524 = vpack.c.b16 %v5485, %v5485
        %v5525 = vpack.c.b16 %v5487, %v5486
        %v5526 = vpack.c.b16 %v5488, %v5488
        %v5527 = vpack.c.b16 %v5490, %v5489
        %v5528 = vpack.c.b16 %v5491, %v5491
        %v5529 = vpack.c.b16 %v5493, %v5492
        %v5530 = vpack.c.b16 %v5494, %v5494
        %v5531 = vpack.c.b16 %v5496, %v5495
        %v5532 = vpack.c.b16 %v5497, %v5497
        %v5533 = vpack.c.b16 %v5499, %v5498
        %v5534 = vpack.c.b16 %v5500, %v5500
        %v5535 = vpack.c.b16 %v5502, %v5501
        %v5536 = vpack.c.b16 %v5503, %v5503
        %v5537 = vpack.c.b16 %v5505, %v5504
        %v5538 = vpack.c.b16 %v5506, %v5506
        %v5539 = vrot.slane %v5507, 1
        %v5540 = vrot.slane %v5508, 1
        %v5541 = vsel %vm1182, %v5539, %v5540
        %v5542 = vrot.slane %v5509, 1
        %v5543 = vrot.slane %v5510, 1
        %v5544 = vsel %vm1182, %v5542, %v5543
        %v5545 = vrot.slane %v5511, 1
        %v5546 = vrot.slane %v5512, 1
        %v5547 = vsel %vm1182, %v5545, %v5546
        %v5548 = vrot.slane %v5513, 1
        %v5549 = vrot.slane %v5514, 1
        %v5550 = vsel %vm1182, %v5548, %v5549
        %v5551 = vrot.slane %v5515, 1
        %v5552 = vrot.slane %v5516, 1
        %v5553 = vsel %vm1182, %v5551, %v5552
        %v5554 = vrot.slane %v5517, 1
        %v5555 = vrot.slane %v5518, 1
        %v5556 = vsel %vm1182, %v5554, %v5555
        %v5557 = vrot.slane %v5519, 1
        %v5558 = vrot.slane %v5520, 1
        %v5559 = vsel %vm1182, %v5557, %v5558
        %v5560 = vrot.slane %v5521, 1
        %v5561 = vrot.slane %v5522, 1
        %v5562 = vsel %vm1182, %v5560, %v5561
        %v5563 = vrot.slane %v5523, 1
        %v5564 = vrot.slane %v5524, 1
        %v5565 = vsel %vm1182, %v5563, %v5564
        %v5566 = vrot.slane %v5525, 1
        %v5567 = vrot.slane %v5526, 1
        %v5568 = vsel %vm1182, %v5566, %v5567
        %v5569 = vrot.slane %v5527, 1
        %v5570 = vrot.slane %v5528, 1
        %v5571 = vsel %vm1182, %v5569, %v5570
        %v5572 = vrot.slane %v5529, 1
        %v5573 = vrot.slane %v5530, 1
        %v5574 = vsel %vm1182, %v5572, %v5573
        %v5575 = vrot.slane %v5531, 1
        %v5576 = vrot.slane %v5532, 1
        %v5577 = vsel %vm1182, %v5575, %v5576
        %v5578 = vrot.slane %v5533, 1
        %v5579 = vrot.slane %v5534, 1
        %v5580 = vsel %vm1182, %v5578, %v5579
        %v5581 = vrot.slane %v5535, 1
        %v5582 = vrot.slane %v5536, 1
        %v5583 = vsel %vm1182, %v5581, %v5582
        %v5584 = vrot.slane %v5537, 1
        %v5585 = vrot.slane %v5538, 1
        %v5586 = vsel %vm1182, %v5584, %v5585
        %5587 = vrot.lane.b32.xlu0 %v5541, 40
        %v5588 = vpop.permute.xlu0 %5587
        %5589 = vrot.lane.b32.xlu0 %v5544, 40
        %v5590 = vpop.permute.xlu0 %5589
        %5591 = vrot.lane.b32.xlu0 %v5547, 40
        %v5592 = vpop.permute.xlu0 %5591
        %5593 = vrot.lane.b32.xlu0 %v5550, 40
        %v5594 = vpop.permute.xlu0 %5593
        %5595 = vrot.lane.b32.xlu0 %v5553, 40
        %v5596 = vpop.permute.xlu0 %5595
        %5597 = vrot.lane.b32.xlu0 %v5556, 40
        %v5598 = vpop.permute.xlu0 %5597
        %5599 = vrot.lane.b32.xlu0 %v5559, 40
        %v5600 = vpop.permute.xlu0 %5599
        %5601 = vrot.lane.b32.xlu0 %v5562, 40
        %v5602 = vpop.permute.xlu0 %5601
        %5603 = vrot.lane.b32.xlu0 %v5565, 40
        %v5604 = vpop.permute.xlu0 %5603
        %5605 = vrot.lane.b32.xlu0 %v5568, 40
        %v5606 = vpop.permute.xlu0 %5605
        %5607 = vrot.lane.b32.xlu0 %v5571, 40
        %v5608 = vpop.permute.xlu0 %5607
        %5609 = vrot.lane.b32.xlu0 %v5574, 40
        %v5610 = vpop.permute.xlu0 %5609
        %5611 = vrot.lane.b32.xlu0 %v5577, 40
        %v5612 = vpop.permute.xlu0 %5611
        %5613 = vrot.lane.b32.xlu0 %v5580, 40
        %v5614 = vpop.permute.xlu0 %5613
        %5615 = vrot.lane.b32.xlu0 %v5583, 40
        %v5616 = vpop.permute.xlu0 %5615
        %5617 = vrot.lane.b32.xlu0 %v5586, 40
        %v5618 = vpop.permute.xlu0 %5617
        %vm5635 = vcmask 392512
        %5636 = vst.msk [vmem:[#allocation3] sm:$0xff] %vm5635, %v5588
        %5637 = vst.msk [vmem:[#allocation3 + $0x8] sm:$0xff] %vm5635, %v5590
        %5638 = vst.msk [vmem:[#allocation3 + $0x10] sm:$0xff] %vm5635, %v5592
        %5639 = vst.msk [vmem:[#allocation3 + $0x18] sm:$0xff] %vm5635, %v5594
        %5640 = vst.msk [vmem:[#allocation3 + $0x20] sm:$0xff] %vm5635, %v5596
        %5641 = vst.msk [vmem:[#allocation3 + $0x28] sm:$0xff] %vm5635, %v5598
        %5642 = vst.msk [vmem:[#allocation3 + $0x30] sm:$0xff] %vm5635, %v5600
        %5643 = vst.msk [vmem:[#allocation3 + $0x38] sm:$0xff] %vm5635, %v5602
        %5644 = vst.msk [vmem:[#allocation3 + $0x40] sm:$0xff] %vm5635, %v5604
        %5645 = vst.msk [vmem:[#allocation3 + $0x48] sm:$0xff] %vm5635, %v5606
        %5646 = vst.msk [vmem:[#allocation3 + $0x50] sm:$0xff] %vm5635, %v5608
        %5647 = vst.msk [vmem:[#allocation3 + $0x58] sm:$0xff] %vm5635, %v5610
        %5648 = vst.msk [vmem:[#allocation3 + $0x60] sm:$0xff] %vm5635, %v5612
        %5649 = vst.msk [vmem:[#allocation3 + $0x68] sm:$0xff] %vm5635, %v5614
        %5650 = vst.msk [vmem:[#allocation3 + $0x70] sm:$0xff] %vm5635, %v5616
        %5651 = vst.msk [vmem:[#allocation3 + $0x78] sm:$0xff] %vm5635, %v5618
        %s5652 = scalar_lea.vmem [#allocation2], 24
        %v5653 = vld [vmem:[%s5652] sm:$0xf]
        %v5654 = vld [vmem:[%s5652 + $0x4] sm:$0xf]
        %v5655 = vld [vmem:[%s5652 + $0xc] sm:$0xf]
        %v5656 = vld [vmem:[%s5652 + $0x10] sm:$0xf]
        %v5657 = vld [vmem:[%s5652 + $0x18] sm:$0xf]
        %v5658 = vld [vmem:[%s5652 + $0x1c] sm:$0xf]
        %v5659 = vld [vmem:[%s5652 + $0x24] sm:$0xf]
        %v5660 = vld [vmem:[%s5652 + $0x28] sm:$0xf]
        %v5661 = vld [vmem:[%s5652 + $0x30] sm:$0xf]
        %v5662 = vld [vmem:[%s5652 + $0x34] sm:$0xf]
        %v5663 = vld [vmem:[%s5652 + $0x3c] sm:$0xf]
        %v5664 = vld [vmem:[%s5652 + $0x40] sm:$0xf]
        %v5665 = vld [vmem:[%s5652 + $0x48] sm:$0xf]
        %v5666 = vld [vmem:[%s5652 + $0x4c] sm:$0xf]
        %v5667 = vld [vmem:[%s5652 + $0x54] sm:$0xf]
        %v5668 = vld [vmem:[%s5652 + $0x58] sm:$0xf]
        %v5669 = vld [vmem:[%s5652 + $0x60] sm:$0xf]
        %v5670 = vld [vmem:[%s5652 + $0x64] sm:$0xf]
        %v5671 = vld [vmem:[%s5652 + $0x6c] sm:$0xf]
        %v5672 = vld [vmem:[%s5652 + $0x70] sm:$0xf]
        %v5673 = vld [vmem:[%s5652 + $0x78] sm:$0xf]
        %v5674 = vld [vmem:[%s5652 + $0x7c] sm:$0xf]
        %v5675 = vld [vmem:[%s5652 + $0x84] sm:$0xf]
        %v5676 = vld [vmem:[%s5652 + $0x88] sm:$0xf]
        %v5677 = vld [vmem:[%s5652 + $0x90] sm:$0xf]
        %v5678 = vld [vmem:[%s5652 + $0x94] sm:$0xf]
        %v5679 = vld [vmem:[%s5652 + $0x9c] sm:$0xf]
        %v5680 = vld [vmem:[%s5652 + $0xa0] sm:$0xf]
        %v5681 = vld [vmem:[%s5652 + $0xa8] sm:$0xf]
        %v5682 = vld [vmem:[%s5652 + $0xac] sm:$0xf]
        %v5683 = vld [vmem:[%s5652 + $0xb4] sm:$0xf]
        %v5684 = vld [vmem:[%s5652 + $0xb8] sm:$0xf]
        %v5717 = vunpack.c.l.b16 %v5653
        %v5718 = vunpack.c.l.b16 %v5654
        %v5719 = vunpack.c.l.b16 %v5655
        %v5720 = vunpack.c.l.b16 %v5656
        %v5721 = vunpack.c.l.b16 %v5657
        %v5722 = vunpack.c.l.b16 %v5658
        %v5723 = vunpack.c.l.b16 %v5659
        %v5724 = vunpack.c.l.b16 %v5660
        %v5725 = vunpack.c.l.b16 %v5661
        %v5726 = vunpack.c.l.b16 %v5662
        %v5727 = vunpack.c.l.b16 %v5663
        %v5728 = vunpack.c.l.b16 %v5664
        %v5729 = vunpack.c.l.b16 %v5665
        %v5730 = vunpack.c.l.b16 %v5666
        %v5731 = vunpack.c.l.b16 %v5667
        %v5732 = vunpack.c.l.b16 %v5668
        %v5733 = vunpack.c.l.b16 %v5669
        %v5734 = vunpack.c.l.b16 %v5670
        %v5735 = vunpack.c.l.b16 %v5671
        %v5736 = vunpack.c.l.b16 %v5672
        %v5737 = vunpack.c.l.b16 %v5673
        %v5738 = vunpack.c.l.b16 %v5674
        %v5739 = vunpack.c.l.b16 %v5675
        %v5740 = vunpack.c.l.b16 %v5676
        %v5741 = vunpack.c.l.b16 %v5677
        %v5742 = vunpack.c.l.b16 %v5678
        %v5743 = vunpack.c.l.b16 %v5679
        %v5744 = vunpack.c.l.b16 %v5680
        %v5745 = vunpack.c.l.b16 %v5681
        %v5746 = vunpack.c.l.b16 %v5682
        %v5747 = vunpack.c.l.b16 %v5683
        %v5748 = vunpack.c.l.b16 %v5684
        %v5749 = vpack.c.b16 %v5718, %v5717
        %v5750 = vpack.c.b16 %v5720, %v5719
        %v5751 = vpack.c.b16 %v5722, %v5721
        %v5752 = vpack.c.b16 %v5724, %v5723
        %v5753 = vpack.c.b16 %v5726, %v5725
        %v5754 = vpack.c.b16 %v5728, %v5727
        %v5755 = vpack.c.b16 %v5730, %v5729
        %v5756 = vpack.c.b16 %v5732, %v5731
        %v5757 = vpack.c.b16 %v5734, %v5733
        %v5758 = vpack.c.b16 %v5736, %v5735
        %v5759 = vpack.c.b16 %v5738, %v5737
        %v5760 = vpack.c.b16 %v5740, %v5739
        %v5761 = vpack.c.b16 %v5742, %v5741
        %v5762 = vpack.c.b16 %v5744, %v5743
        %v5763 = vpack.c.b16 %v5746, %v5745
        %v5764 = vpack.c.b16 %v5748, %v5747
        %5765 = vrot.lane.b32.xlu0 %v5749, 48
        %v5766 = vpop.permute.xlu0 %5765
        %5767 = vrot.lane.b32.xlu0 %v5750, 48
        %v5768 = vpop.permute.xlu0 %5767
        %5769 = vrot.lane.b32.xlu0 %v5751, 48
        %v5770 = vpop.permute.xlu0 %5769
        %5771 = vrot.lane.b32.xlu0 %v5752, 48
        %v5772 = vpop.permute.xlu0 %5771
        %5773 = vrot.lane.b32.xlu0 %v5753, 48
        %v5774 = vpop.permute.xlu0 %5773
        %5775 = vrot.lane.b32.xlu0 %v5754, 48
        %v5776 = vpop.permute.xlu0 %5775
        %5777 = vrot.lane.b32.xlu0 %v5755, 48
        %v5778 = vpop.permute.xlu0 %5777
        %5779 = vrot.lane.b32.xlu0 %v5756, 48
        %v5780 = vpop.permute.xlu0 %5779
        %5781 = vrot.lane.b32.xlu0 %v5757, 48
        %v5782 = vpop.permute.xlu0 %5781
        %5783 = vrot.lane.b32.xlu0 %v5758, 48
        %v5784 = vpop.permute.xlu0 %5783
        %5785 = vrot.lane.b32.xlu0 %v5759, 48
        %v5786 = vpop.permute.xlu0 %5785
        %5787 = vrot.lane.b32.xlu0 %v5760, 48
        %v5788 = vpop.permute.xlu0 %5787
        %5789 = vrot.lane.b32.xlu0 %v5761, 48
        %v5790 = vpop.permute.xlu0 %5789
        %5791 = vrot.lane.b32.xlu0 %v5762, 48
        %v5792 = vpop.permute.xlu0 %5791
        %5793 = vrot.lane.b32.xlu0 %v5763, 48
        %v5794 = vpop.permute.xlu0 %5793
        %5795 = vrot.lane.b32.xlu0 %v5764, 48
        %v5796 = vpop.permute.xlu0 %5795
        %vm5813 = vcmask 458112
        %5814 = vst.msk [vmem:[#allocation3] sm:$0xff] %vm5813, %v5766
        %5815 = vst.msk [vmem:[#allocation3 + $0x8] sm:$0xff] %vm5813, %v5768
        %5816 = vst.msk [vmem:[#allocation3 + $0x10] sm:$0xff] %vm5813, %v5770
        %5817 = vst.msk [vmem:[#allocation3 + $0x18] sm:$0xff] %vm5813, %v5772
        %5818 = vst.msk [vmem:[#allocation3 + $0x20] sm:$0xff] %vm5813, %v5774
        %5819 = vst.msk [vmem:[#allocation3 + $0x28] sm:$0xff] %vm5813, %v5776
        %5820 = vst.msk [vmem:[#allocation3 + $0x30] sm:$0xff] %vm5813, %v5778
        %5821 = vst.msk [vmem:[#allocation3 + $0x38] sm:$0xff] %vm5813, %v5780
        %5822 = vst.msk [vmem:[#allocation3 + $0x40] sm:$0xff] %vm5813, %v5782
        %5823 = vst.msk [vmem:[#allocation3 + $0x48] sm:$0xff] %vm5813, %v5784
        %5824 = vst.msk [vmem:[#allocation3 + $0x50] sm:$0xff] %vm5813, %v5786
        %5825 = vst.msk [vmem:[#allocation3 + $0x58] sm:$0xff] %vm5813, %v5788
        %5826 = vst.msk [vmem:[#allocation3 + $0x60] sm:$0xff] %vm5813, %v5790
        %5827 = vst.msk [vmem:[#allocation3 + $0x68] sm:$0xff] %vm5813, %v5792
        %5828 = vst.msk [vmem:[#allocation3 + $0x70] sm:$0xff] %vm5813, %v5794
        %5829 = vst.msk [vmem:[#allocation3 + $0x78] sm:$0xff] %vm5813, %v5796
        %v5830 = vld [vmem:[%s5652] sm:$0xf]
        %v5831 = vld [vmem:[%s5652 + $0x4] sm:$0xf]
        %v5832 = vld [vmem:[%s5652 + $0x8] sm:$0x1]
        %v5833 = vld [vmem:[%s5652 + $0xc] sm:$0xf]
        %v5834 = vld [vmem:[%s5652 + $0x10] sm:$0xf]
        %v5835 = vld [vmem:[%s5652 + $0x14] sm:$0x1]
        %v5836 = vld [vmem:[%s5652 + $0x18] sm:$0xf]
        %v5837 = vld [vmem:[%s5652 + $0x1c] sm:$0xf]
        %v5838 = vld [vmem:[%s5652 + $0x20] sm:$0x1]
        %v5839 = vld [vmem:[%s5652 + $0x24] sm:$0xf]
        %v5840 = vld [vmem:[%s5652 + $0x28] sm:$0xf]
        %v5841 = vld [vmem:[%s5652 + $0x2c] sm:$0x1]
        %v5842 = vld [vmem:[%s5652 + $0x30] sm:$0xf]
        %v5843 = vld [vmem:[%s5652 + $0x34] sm:$0xf]
        %v5844 = vld [vmem:[%s5652 + $0x38] sm:$0x1]
        %v5845 = vld [vmem:[%s5652 + $0x3c] sm:$0xf]
        %v5846 = vld [vmem:[%s5652 + $0x40] sm:$0xf]
        %v5847 = vld [vmem:[%s5652 + $0x44] sm:$0x1]
        %v5848 = vld [vmem:[%s5652 + $0x48] sm:$0xf]
        %v5849 = vld [vmem:[%s5652 + $0x4c] sm:$0xf]
        %v5850 = vld [vmem:[%s5652 + $0x50] sm:$0x1]
        %v5851 = vld [vmem:[%s5652 + $0x54] sm:$0xf]
        %v5852 = vld [vmem:[%s5652 + $0x58] sm:$0xf]
        %v5853 = vld [vmem:[%s5652 + $0x5c] sm:$0x1]
        %v5854 = vld [vmem:[%s5652 + $0x60] sm:$0xf]
        %v5855 = vld [vmem:[%s5652 + $0x64] sm:$0xf]
        %v5856 = vld [vmem:[%s5652 + $0x68] sm:$0x1]
        %v5857 = vld [vmem:[%s5652 + $0x6c] sm:$0xf]
        %v5858 = vld [vmem:[%s5652 + $0x70] sm:$0xf]
        %v5859 = vld [vmem:[%s5652 + $0x74] sm:$0x1]
        %v5860 = vld [vmem:[%s5652 + $0x78] sm:$0xf]
        %v5861 = vld [vmem:[%s5652 + $0x7c] sm:$0xf]
        %v5862 = vld [vmem:[%s5652 + $0x80] sm:$0x1]
        %v5863 = vld [vmem:[%s5652 + $0x84] sm:$0xf]
        %v5864 = vld [vmem:[%s5652 + $0x88] sm:$0xf]
        %v5865 = vld [vmem:[%s5652 + $0x8c] sm:$0x1]
        %v5866 = vld [vmem:[%s5652 + $0x90] sm:$0xf]
        %v5867 = vld [vmem:[%s5652 + $0x94] sm:$0xf]
        %v5868 = vld [vmem:[%s5652 + $0x98] sm:$0x1]
        %v5869 = vld [vmem:[%s5652 + $0x9c] sm:$0xf]
        %v5870 = vld [vmem:[%s5652 + $0xa0] sm:$0xf]
        %v5871 = vld [vmem:[%s5652 + $0xa4] sm:$0x1]
        %v5872 = vld [vmem:[%s5652 + $0xa8] sm:$0xf]
        %v5873 = vld [vmem:[%s5652 + $0xac] sm:$0xf]
        %v5874 = vld [vmem:[%s5652 + $0xb0] sm:$0x1]
        %v5875 = vld [vmem:[%s5652 + $0xb4] sm:$0xf]
        %v5876 = vld [vmem:[%s5652 + $0xb8] sm:$0xf]
        %v5877 = vld [vmem:[%s5652 + $0xbc] sm:$0x1]
        %v5926 = vunpack.c.l.b16 %v5830
        %v5927 = vunpack.c.l.b16 %v5831
        %v5928 = vunpack.c.l.b16 %v5832
        %v5929 = vunpack.c.l.b16 %v5833
        %v5930 = vunpack.c.l.b16 %v5834
        %v5931 = vunpack.c.l.b16 %v5835
        %v5932 = vunpack.c.l.b16 %v5836
        %v5933 = vunpack.c.l.b16 %v5837
        %v5934 = vunpack.c.l.b16 %v5838
        %v5935 = vunpack.c.l.b16 %v5839
        %v5936 = vunpack.c.l.b16 %v5840
        %v5937 = vunpack.c.l.b16 %v5841
        %v5938 = vunpack.c.l.b16 %v5842
        %v5939 = vunpack.c.l.b16 %v5843
        %v5940 = vunpack.c.l.b16 %v5844
        %v5941 = vunpack.c.l.b16 %v5845
        %v5942 = vunpack.c.l.b16 %v5846
        %v5943 = vunpack.c.l.b16 %v5847
        %v5944 = vunpack.c.l.b16 %v5848
        %v5945 = vunpack.c.l.b16 %v5849
        %v5946 = vunpack.c.l.b16 %v5850
        %v5947 = vunpack.c.l.b16 %v5851
        %v5948 = vunpack.c.l.b16 %v5852
        %v5949 = vunpack.c.l.b16 %v5853
        %v5950 = vunpack.c.l.b16 %v5854
        %v5951 = vunpack.c.l.b16 %v5855
        %v5952 = vunpack.c.l.b16 %v5856
        %v5953 = vunpack.c.l.b16 %v5857
        %v5954 = vunpack.c.l.b16 %v5858
        %v5955 = vunpack.c.l.b16 %v5859
        %v5956 = vunpack.c.l.b16 %v5860
        %v5957 = vunpack.c.l.b16 %v5861
        %v5958 = vunpack.c.l.b16 %v5862
        %v5959 = vunpack.c.l.b16 %v5863
        %v5960 = vunpack.c.l.b16 %v5864
        %v5961 = vunpack.c.l.b16 %v5865
        %v5962 = vunpack.c.l.b16 %v5866
        %v5963 = vunpack.c.l.b16 %v5867
        %v5964 = vunpack.c.l.b16 %v5868
        %v5965 = vunpack.c.l.b16 %v5869
        %v5966 = vunpack.c.l.b16 %v5870
        %v5967 = vunpack.c.l.b16 %v5871
        %v5968 = vunpack.c.l.b16 %v5872
        %v5969 = vunpack.c.l.b16 %v5873
        %v5970 = vunpack.c.l.b16 %v5874
        %v5971 = vunpack.c.l.b16 %v5875
        %v5972 = vunpack.c.l.b16 %v5876
        %v5973 = vunpack.c.l.b16 %v5877
        %v5974 = vpack.c.b16 %v5927, %v5926
        %v5975 = vpack.c.b16 %v5928, %v5928
        %v5976 = vpack.c.b16 %v5930, %v5929
        %v5977 = vpack.c.b16 %v5931, %v5931
        %v5978 = vpack.c.b16 %v5933, %v5932
        %v5979 = vpack.c.b16 %v5934, %v5934
        %v5980 = vpack.c.b16 %v5936, %v5935
        %v5981 = vpack.c.b16 %v5937, %v5937
        %v5982 = vpack.c.b16 %v5939, %v5938
        %v5983 = vpack.c.b16 %v5940, %v5940
        %v5984 = vpack.c.b16 %v5942, %v5941
        %v5985 = vpack.c.b16 %v5943, %v5943
        %v5986 = vpack.c.b16 %v5945, %v5944
        %v5987 = vpack.c.b16 %v5946, %v5946
        %v5988 = vpack.c.b16 %v5948, %v5947
        %v5989 = vpack.c.b16 %v5949, %v5949
        %v5990 = vpack.c.b16 %v5951, %v5950
        %v5991 = vpack.c.b16 %v5952, %v5952
        %v5992 = vpack.c.b16 %v5954, %v5953
        %v5993 = vpack.c.b16 %v5955, %v5955
        %v5994 = vpack.c.b16 %v5957, %v5956
        %v5995 = vpack.c.b16 %v5958, %v5958
        %v5996 = vpack.c.b16 %v5960, %v5959
        %v5997 = vpack.c.b16 %v5961, %v5961
        %v5998 = vpack.c.b16 %v5963, %v5962
        %v5999 = vpack.c.b16 %v5964, %v5964
        %v6000 = vpack.c.b16 %v5966, %v5965
        %v6001 = vpack.c.b16 %v5967, %v5967
        %v6002 = vpack.c.b16 %v5969, %v5968
        %v6003 = vpack.c.b16 %v5970, %v5970
        %v6004 = vpack.c.b16 %v5972, %v5971
        %v6005 = vpack.c.b16 %v5973, %v5973
        %v6007 = vshrl.u32 %v5974, 16
        %v6009 = vshll.u32 %v5974, 16
        %v6011 = vrot.slane %v6009, 1
        %v6012 = vor.u32 %v6007, %v6011
        %v6014 = vshll.u32 %v5975, 16
        %v6016 = vrot.slane %v6014, 1
        %v6017 = vsel %vm748, %v6012, %v6016
        %v6019 = vshrl.u32 %v5976, 16
        %v6021 = vshll.u32 %v5976, 16
        %v6023 = vrot.slane %v6021, 1
        %v6024 = vor.u32 %v6019, %v6023
        %v6026 = vshll.u32 %v5977, 16
        %v6028 = vrot.slane %v6026, 1
        %v6029 = vsel %vm748, %v6024, %v6028
        %v6031 = vshrl.u32 %v5978, 16
        %v6033 = vshll.u32 %v5978, 16
        %v6035 = vrot.slane %v6033, 1
        %v6036 = vor.u32 %v6031, %v6035
        %v6038 = vshll.u32 %v5979, 16
        %v6040 = vrot.slane %v6038, 1
        %v6041 = vsel %vm748, %v6036, %v6040
        %v6043 = vshrl.u32 %v5980, 16
        %v6045 = vshll.u32 %v5980, 16
        %v6047 = vrot.slane %v6045, 1
        %v6048 = vor.u32 %v6043, %v6047
        %v6050 = vshll.u32 %v5981, 16
        %v6052 = vrot.slane %v6050, 1
        %v6053 = vsel %vm748, %v6048, %v6052
        %v6055 = vshrl.u32 %v5982, 16
        %v6057 = vshll.u32 %v5982, 16
        %v6059 = vrot.slane %v6057, 1
        %v6060 = vor.u32 %v6055, %v6059
        %v6062 = vshll.u32 %v5983, 16
        %v6064 = vrot.slane %v6062, 1
        %v6065 = vsel %vm748, %v6060, %v6064
        %v6067 = vshrl.u32 %v5984, 16
        %v6069 = vshll.u32 %v5984, 16
        %v6071 = vrot.slane %v6069, 1
        %v6072 = vor.u32 %v6067, %v6071
        %v6074 = vshll.u32 %v5985, 16
        %v6076 = vrot.slane %v6074, 1
        %v6077 = vsel %vm748, %v6072, %v6076
        %v6079 = vshrl.u32 %v5986, 16
        %v6081 = vshll.u32 %v5986, 16
        %v6083 = vrot.slane %v6081, 1
        %v6084 = vor.u32 %v6079, %v6083
        %v6086 = vshll.u32 %v5987, 16
        %v6088 = vrot.slane %v6086, 1
        %v6089 = vsel %vm748, %v6084, %v6088
        %v6091 = vshrl.u32 %v5988, 16
        %v6093 = vshll.u32 %v5988, 16
        %v6095 = vrot.slane %v6093, 1
        %v6096 = vor.u32 %v6091, %v6095
        %v6098 = vshll.u32 %v5989, 16
        %v6100 = vrot.slane %v6098, 1
        %v6101 = vsel %vm748, %v6096, %v6100
        %v6103 = vshrl.u32 %v5990, 16
        %v6105 = vshll.u32 %v5990, 16
        %v6107 = vrot.slane %v6105, 1
        %v6108 = vor.u32 %v6103, %v6107
        %v6110 = vshll.u32 %v5991, 16
        %v6112 = vrot.slane %v6110, 1
        %v6113 = vsel %vm748, %v6108, %v6112
        %v6115 = vshrl.u32 %v5992, 16
        %v6117 = vshll.u32 %v5992, 16
        %v6119 = vrot.slane %v6117, 1
        %v6120 = vor.u32 %v6115, %v6119
        %v6122 = vshll.u32 %v5993, 16
        %v6124 = vrot.slane %v6122, 1
        %v6125 = vsel %vm748, %v6120, %v6124
        %v6127 = vshrl.u32 %v5994, 16
        %v6129 = vshll.u32 %v5994, 16
        %v6131 = vrot.slane %v6129, 1
        %v6132 = vor.u32 %v6127, %v6131
        %v6134 = vshll.u32 %v5995, 16
        %v6136 = vrot.slane %v6134, 1
        %v6137 = vsel %vm748, %v6132, %v6136
        %v6139 = vshrl.u32 %v5996, 16
        %v6141 = vshll.u32 %v5996, 16
        %v6143 = vrot.slane %v6141, 1
        %v6144 = vor.u32 %v6139, %v6143
        %v6146 = vshll.u32 %v5997, 16
        %v6148 = vrot.slane %v6146, 1
        %v6149 = vsel %vm748, %v6144, %v6148
        %v6151 = vshrl.u32 %v5998, 16
        %v6153 = vshll.u32 %v5998, 16
        %v6155 = vrot.slane %v6153, 1
        %v6156 = vor.u32 %v6151, %v6155
        %v6158 = vshll.u32 %v5999, 16
        %v6160 = vrot.slane %v6158, 1
        %v6161 = vsel %vm748, %v6156, %v6160
        %v6163 = vshrl.u32 %v6000, 16
        %v6165 = vshll.u32 %v6000, 16
        %v6167 = vrot.slane %v6165, 1
        %v6168 = vor.u32 %v6163, %v6167
        %v6170 = vshll.u32 %v6001, 16
        %v6172 = vrot.slane %v6170, 1
        %v6173 = vsel %vm748, %v6168, %v6172
        %v6175 = vshrl.u32 %v6002, 16
        %v6177 = vshll.u32 %v6002, 16
        %v6179 = vrot.slane %v6177, 1
        %v6180 = vor.u32 %v6175, %v6179
        %v6182 = vshll.u32 %v6003, 16
        %v6184 = vrot.slane %v6182, 1
        %v6185 = vsel %vm748, %v6180, %v6184
        %v6187 = vshrl.u32 %v6004, 16
        %v6189 = vshll.u32 %v6004, 16
        %v6191 = vrot.slane %v6189, 1
        %v6192 = vor.u32 %v6187, %v6191
        %v6194 = vshll.u32 %v6005, 16
        %v6196 = vrot.slane %v6194, 1
        %v6197 = vsel %vm748, %v6192, %v6196
        %6198 = vrot.lane.b32.xlu0 %v6017, 56
        %v6199 = vpop.permute.xlu0 %6198
        %6200 = vrot.lane.b32.xlu0 %v6029, 56
        %v6201 = vpop.permute.xlu0 %6200
        %6202 = vrot.lane.b32.xlu0 %v6041, 56
        %v6203 = vpop.permute.xlu0 %6202
        %6204 = vrot.lane.b32.xlu0 %v6053, 56
        %v6205 = vpop.permute.xlu0 %6204
        %6206 = vrot.lane.b32.xlu0 %v6065, 56
        %v6207 = vpop.permute.xlu0 %6206
        %6208 = vrot.lane.b32.xlu0 %v6077, 56
        %v6209 = vpop.permute.xlu0 %6208
        %6210 = vrot.lane.b32.xlu0 %v6089, 56
        %v6211 = vpop.permute.xlu0 %6210
        %6212 = vrot.lane.b32.xlu0 %v6101, 56
        %v6213 = vpop.permute.xlu0 %6212
        %6214 = vrot.lane.b32.xlu0 %v6113, 56
        %v6215 = vpop.permute.xlu0 %6214
        %6216 = vrot.lane.b32.xlu0 %v6125, 56
        %v6217 = vpop.permute.xlu0 %6216
        %6218 = vrot.lane.b32.xlu0 %v6137, 56
        %v6219 = vpop.permute.xlu0 %6218
        %6220 = vrot.lane.b32.xlu0 %v6149, 56
        %v6221 = vpop.permute.xlu0 %6220
        %6222 = vrot.lane.b32.xlu0 %v6161, 56
        %v6223 = vpop.permute.xlu0 %6222
        %6224 = vrot.lane.b32.xlu0 %v6173, 56
        %v6225 = vpop.permute.xlu0 %6224
        %6226 = vrot.lane.b32.xlu0 %v6185, 56
        %v6227 = vpop.permute.xlu0 %6226
        %6228 = vrot.lane.b32.xlu0 %v6197, 56
        %v6229 = vpop.permute.xlu0 %6228
        %vm6246 = vcmask 523712
        %6247 = vst.msk [vmem:[#allocation3] sm:$0xff] %vm6246, %v6199
        %6248 = vst.msk [vmem:[#allocation3 + $0x8] sm:$0xff] %vm6246, %v6201
        %6249 = vst.msk [vmem:[#allocation3 + $0x10] sm:$0xff] %vm6246, %v6203
        %6250 = vst.msk [vmem:[#allocation3 + $0x18] sm:$0xff] %vm6246, %v6205
        %6251 = vst.msk [vmem:[#allocation3 + $0x20] sm:$0xff] %vm6246, %v6207
        %6252 = vst.msk [vmem:[#allocation3 + $0x28] sm:$0xff] %vm6246, %v6209
        %6253 = vst.msk [vmem:[#allocation3 + $0x30] sm:$0xff] %vm6246, %v6211
        %6254 = vst.msk [vmem:[#allocation3 + $0x38] sm:$0xff] %vm6246, %v6213
        %6255 = vst.msk [vmem:[#allocation3 + $0x40] sm:$0xff] %vm6246, %v6215
        %6256 = vst.msk [vmem:[#allocation3 + $0x48] sm:$0xff] %vm6246, %v6217
        %6257 = vst.msk [vmem:[#allocation3 + $0x50] sm:$0xff] %vm6246, %v6219
        %6258 = vst.msk [vmem:[#allocation3 + $0x58] sm:$0xff] %vm6246, %v6221
        %6259 = vst.msk [vmem:[#allocation3 + $0x60] sm:$0xff] %vm6246, %v6223
        %6260 = vst.msk [vmem:[#allocation3 + $0x68] sm:$0xff] %vm6246, %v6225
        %6261 = vst.msk [vmem:[#allocation3 + $0x70] sm:$0xff] %vm6246, %v6227
        %6262 = vst.msk [vmem:[#allocation3 + $0x78] sm:$0xff] %vm6246, %v6229
        %v6263 = vld [vmem:[%s5652] sm:$0xe]
        %v6264 = vld [vmem:[%s5652 + $0x4] sm:$0xf]
        %v6265 = vld [vmem:[%s5652 + $0x8] sm:$0x1]
        %v6266 = vld [vmem:[%s5652 + $0xc] sm:$0xe]
        %v6267 = vld [vmem:[%s5652 + $0x10] sm:$0xf]
        %v6268 = vld [vmem:[%s5652 + $0x14] sm:$0x1]
        %v6269 = vld [vmem:[%s5652 + $0x18] sm:$0xe]
        %v6270 = vld [vmem:[%s5652 + $0x1c] sm:$0xf]
        %v6271 = vld [vmem:[%s5652 + $0x20] sm:$0x1]
        %v6272 = vld [vmem:[%s5652 + $0x24] sm:$0xe]
        %v6273 = vld [vmem:[%s5652 + $0x28] sm:$0xf]
        %v6274 = vld [vmem:[%s5652 + $0x2c] sm:$0x1]
        %v6275 = vld [vmem:[%s5652 + $0x30] sm:$0xe]
        %v6276 = vld [vmem:[%s5652 + $0x34] sm:$0xf]
        %v6277 = vld [vmem:[%s5652 + $0x38] sm:$0x1]
        %v6278 = vld [vmem:[%s5652 + $0x3c] sm:$0xe]
        %v6279 = vld [vmem:[%s5652 + $0x40] sm:$0xf]
        %v6280 = vld [vmem:[%s5652 + $0x44] sm:$0x1]
        %v6281 = vld [vmem:[%s5652 + $0x48] sm:$0xe]
        %v6282 = vld [vmem:[%s5652 + $0x4c] sm:$0xf]
        %v6283 = vld [vmem:[%s5652 + $0x50] sm:$0x1]
        %v6284 = vld [vmem:[%s5652 + $0x54] sm:$0xe]
        %v6285 = vld [vmem:[%s5652 + $0x58] sm:$0xf]
        %v6286 = vld [vmem:[%s5652 + $0x5c] sm:$0x1]
        %v6287 = vld [vmem:[%s5652 + $0x60] sm:$0xe]
        %v6288 = vld [vmem:[%s5652 + $0x64] sm:$0xf]
        %v6289 = vld [vmem:[%s5652 + $0x68] sm:$0x1]
        %v6290 = vld [vmem:[%s5652 + $0x6c] sm:$0xe]
        %v6291 = vld [vmem:[%s5652 + $0x70] sm:$0xf]
        %v6292 = vld [vmem:[%s5652 + $0x74] sm:$0x1]
        %v6293 = vld [vmem:[%s5652 + $0x78] sm:$0xe]
        %v6294 = vld [vmem:[%s5652 + $0x7c] sm:$0xf]
        %v6295 = vld [vmem:[%s5652 + $0x80] sm:$0x1]
        %v6296 = vld [vmem:[%s5652 + $0x84] sm:$0xe]
        %v6297 = vld [vmem:[%s5652 + $0x88] sm:$0xf]
        %v6298 = vld [vmem:[%s5652 + $0x8c] sm:$0x1]
        %v6299 = vld [vmem:[%s5652 + $0x90] sm:$0xe]
        %v6300 = vld [vmem:[%s5652 + $0x94] sm:$0xf]
        %v6301 = vld [vmem:[%s5652 + $0x98] sm:$0x1]
        %v6302 = vld [vmem:[%s5652 + $0x9c] sm:$0xe]
        %v6303 = vld [vmem:[%s5652 + $0xa0] sm:$0xf]
        %v6304 = vld [vmem:[%s5652 + $0xa4] sm:$0x1]
        %v6305 = vld [vmem:[%s5652 + $0xa8] sm:$0xe]
        %v6306 = vld [vmem:[%s5652 + $0xac] sm:$0xf]
        %v6307 = vld [vmem:[%s5652 + $0xb0] sm:$0x1]
        %v6308 = vld [vmem:[%s5652 + $0xb4] sm:$0xe]
        %v6309 = vld [vmem:[%s5652 + $0xb8] sm:$0xf]
        %v6310 = vld [vmem:[%s5652 + $0xbc] sm:$0x1]
        %v6359 = vunpack.c.l.b16 %v6263
        %v6360 = vunpack.c.l.b16 %v6264
        %v6361 = vunpack.c.l.b16 %v6265
        %v6362 = vunpack.c.l.b16 %v6266
        %v6363 = vunpack.c.l.b16 %v6267
        %v6364 = vunpack.c.l.b16 %v6268
        %v6365 = vunpack.c.l.b16 %v6269
        %v6366 = vunpack.c.l.b16 %v6270
        %v6367 = vunpack.c.l.b16 %v6271
        %v6368 = vunpack.c.l.b16 %v6272
        %v6369 = vunpack.c.l.b16 %v6273
        %v6370 = vunpack.c.l.b16 %v6274
        %v6371 = vunpack.c.l.b16 %v6275
        %v6372 = vunpack.c.l.b16 %v6276
        %v6373 = vunpack.c.l.b16 %v6277
        %v6374 = vunpack.c.l.b16 %v6278
        %v6375 = vunpack.c.l.b16 %v6279
        %v6376 = vunpack.c.l.b16 %v6280
        %v6377 = vunpack.c.l.b16 %v6281
        %v6378 = vunpack.c.l.b16 %v6282
        %v6379 = vunpack.c.l.b16 %v6283
        %v6380 = vunpack.c.l.b16 %v6284
        %v6381 = vunpack.c.l.b16 %v6285
        %v6382 = vunpack.c.l.b16 %v6286
        %v6383 = vunpack.c.l.b16 %v6287
        %v6384 = vunpack.c.l.b16 %v6288
        %v6385 = vunpack.c.l.b16 %v6289
        %v6386 = vunpack.c.l.b16 %v6290
        %v6387 = vunpack.c.l.b16 %v6291
        %v6388 = vunpack.c.l.b16 %v6292
        %v6389 = vunpack.c.l.b16 %v6293
        %v6390 = vunpack.c.l.b16 %v6294
        %v6391 = vunpack.c.l.b16 %v6295
        %v6392 = vunpack.c.l.b16 %v6296
        %v6393 = vunpack.c.l.b16 %v6297
        %v6394 = vunpack.c.l.b16 %v6298
        %v6395 = vunpack.c.l.b16 %v6299
        %v6396 = vunpack.c.l.b16 %v6300
        %v6397 = vunpack.c.l.b16 %v6301
        %v6398 = vunpack.c.l.b16 %v6302
        %v6399 = vunpack.c.l.b16 %v6303
        %v6400 = vunpack.c.l.b16 %v6304
        %v6401 = vunpack.c.l.b16 %v6305
        %v6402 = vunpack.c.l.b16 %v6306
        %v6403 = vunpack.c.l.b16 %v6307
        %v6404 = vunpack.c.l.b16 %v6308
        %v6405 = vunpack.c.l.b16 %v6309
        %v6406 = vunpack.c.l.b16 %v6310
        %v6407 = vpack.c.b16 %v6360, %v6359
        %v6408 = vpack.c.b16 %v6361, %v6361
        %v6409 = vpack.c.b16 %v6363, %v6362
        %v6410 = vpack.c.b16 %v6364, %v6364
        %v6411 = vpack.c.b16 %v6366, %v6365
        %v6412 = vpack.c.b16 %v6367, %v6367
        %v6413 = vpack.c.b16 %v6369, %v6368
        %v6414 = vpack.c.b16 %v6370, %v6370
        %v6415 = vpack.c.b16 %v6372, %v6371
        %v6416 = vpack.c.b16 %v6373, %v6373
        %v6417 = vpack.c.b16 %v6375, %v6374
        %v6418 = vpack.c.b16 %v6376, %v6376
        %v6419 = vpack.c.b16 %v6378, %v6377
        %v6420 = vpack.c.b16 %v6379, %v6379
        %v6421 = vpack.c.b16 %v6381, %v6380
        %v6422 = vpack.c.b16 %v6382, %v6382
        %v6423 = vpack.c.b16 %v6384, %v6383
        %v6424 = vpack.c.b16 %v6385, %v6385
        %v6425 = vpack.c.b16 %v6387, %v6386
        %v6426 = vpack.c.b16 %v6388, %v6388
        %v6427 = vpack.c.b16 %v6390, %v6389
        %v6428 = vpack.c.b16 %v6391, %v6391
        %v6429 = vpack.c.b16 %v6393, %v6392
        %v6430 = vpack.c.b16 %v6394, %v6394
        %v6431 = vpack.c.b16 %v6396, %v6395
        %v6432 = vpack.c.b16 %v6397, %v6397
        %v6433 = vpack.c.b16 %v6399, %v6398
        %v6434 = vpack.c.b16 %v6400, %v6400
        %v6435 = vpack.c.b16 %v6402, %v6401
        %v6436 = vpack.c.b16 %v6403, %v6403
        %v6437 = vpack.c.b16 %v6405, %v6404
        %v6438 = vpack.c.b16 %v6406, %v6406
        %v6439 = vrot.slane %v6407, 1
        %v6440 = vrot.slane %v6408, 1
        %v6441 = vsel %vm1182, %v6439, %v6440
        %v6442 = vrot.slane %v6409, 1
        %v6443 = vrot.slane %v6410, 1
        %v6444 = vsel %vm1182, %v6442, %v6443
        %v6445 = vrot.slane %v6411, 1
        %v6446 = vrot.slane %v6412, 1
        %v6447 = vsel %vm1182, %v6445, %v6446
        %v6448 = vrot.slane %v6413, 1
        %v6449 = vrot.slane %v6414, 1
        %v6450 = vsel %vm1182, %v6448, %v6449
        %v6451 = vrot.slane %v6415, 1
        %v6452 = vrot.slane %v6416, 1
        %v6453 = vsel %vm1182, %v6451, %v6452
        %v6454 = vrot.slane %v6417, 1
        %v6455 = vrot.slane %v6418, 1
        %v6456 = vsel %vm1182, %v6454, %v6455
        %v6457 = vrot.slane %v6419, 1
        %v6458 = vrot.slane %v6420, 1
        %v6459 = vsel %vm1182, %v6457, %v6458
        %v6460 = vrot.slane %v6421, 1
        %v6461 = vrot.slane %v6422, 1
        %v6462 = vsel %vm1182, %v6460, %v6461
        %v6463 = vrot.slane %v6423, 1
        %v6464 = vrot.slane %v6424, 1
        %v6465 = vsel %vm1182, %v6463, %v6464
        %v6466 = vrot.slane %v6425, 1
        %v6467 = vrot.slane %v6426, 1
        %v6468 = vsel %vm1182, %v6466, %v6467
        %v6469 = vrot.slane %v6427, 1
        %v6470 = vrot.slane %v6428, 1
        %v6471 = vsel %vm1182, %v6469, %v6470
        %v6472 = vrot.slane %v6429, 1
        %v6473 = vrot.slane %v6430, 1
        %v6474 = vsel %vm1182, %v6472, %v6473
        %v6475 = vrot.slane %v6431, 1
        %v6476 = vrot.slane %v6432, 1
        %v6477 = vsel %vm1182, %v6475, %v6476
        %v6478 = vrot.slane %v6433, 1
        %v6479 = vrot.slane %v6434, 1
        %v6480 = vsel %vm1182, %v6478, %v6479
        %v6481 = vrot.slane %v6435, 1
        %v6482 = vrot.slane %v6436, 1
        %v6483 = vsel %vm1182, %v6481, %v6482
        %v6484 = vrot.slane %v6437, 1
        %v6485 = vrot.slane %v6438, 1
        %v6486 = vsel %vm1182, %v6484, %v6485
        %6487 = vrot.lane.b32.xlu0 %v6441, 64
        %v6488 = vpop.permute.xlu0 %6487
        %6489 = vrot.lane.b32.xlu0 %v6444, 64
        %v6490 = vpop.permute.xlu0 %6489
        %6491 = vrot.lane.b32.xlu0 %v6447, 64
        %v6492 = vpop.permute.xlu0 %6491
        %6493 = vrot.lane.b32.xlu0 %v6450, 64
        %v6494 = vpop.permute.xlu0 %6493
        %6495 = vrot.lane.b32.xlu0 %v6453, 64
        %v6496 = vpop.permute.xlu0 %6495
        %6497 = vrot.lane.b32.xlu0 %v6456, 64
        %v6498 = vpop.permute.xlu0 %6497
        %6499 = vrot.lane.b32.xlu0 %v6459, 64
        %v6500 = vpop.permute.xlu0 %6499
        %6501 = vrot.lane.b32.xlu0 %v6462, 64
        %v6502 = vpop.permute.xlu0 %6501
        %6503 = vrot.lane.b32.xlu0 %v6465, 64
        %v6504 = vpop.permute.xlu0 %6503
        %6505 = vrot.lane.b32.xlu0 %v6468, 64
        %v6506 = vpop.permute.xlu0 %6505
        %6507 = vrot.lane.b32.xlu0 %v6471, 64
        %v6508 = vpop.permute.xlu0 %6507
        %6509 = vrot.lane.b32.xlu0 %v6474, 64
        %v6510 = vpop.permute.xlu0 %6509
        %6511 = vrot.lane.b32.xlu0 %v6477, 64
        %v6512 = vpop.permute.xlu0 %6511
        %6513 = vrot.lane.b32.xlu0 %v6480, 64
        %v6514 = vpop.permute.xlu0 %6513
        %6515 = vrot.lane.b32.xlu0 %v6483, 64
        %v6516 = vpop.permute.xlu0 %6515
        %6517 = vrot.lane.b32.xlu0 %v6486, 64
        %v6518 = vpop.permute.xlu0 %6517
        %vm6535 = vcmask 589312
        %6536 = vst.msk [vmem:[#allocation3] sm:$0xff] %vm6535, %v6488
        %6537 = vst.msk [vmem:[#allocation3 + $0x8] sm:$0xff] %vm6535, %v6490
        %6538 = vst.msk [vmem:[#allocation3 + $0x10] sm:$0xff] %vm6535, %v6492
        %6539 = vst.msk [vmem:[#allocation3 + $0x18] sm:$0xff] %vm6535, %v6494
        %6540 = vst.msk [vmem:[#allocation3 + $0x20] sm:$0xff] %vm6535, %v6496
        %6541 = vst.msk [vmem:[#allocation3 + $0x28] sm:$0xff] %vm6535, %v6498
        %6542 = vst.msk [vmem:[#allocation3 + $0x30] sm:$0xff] %vm6535, %v6500
        %6543 = vst.msk [vmem:[#allocation3 + $0x38] sm:$0xff] %vm6535, %v6502
        %6544 = vst.msk [vmem:[#allocation3 + $0x40] sm:$0xff] %vm6535, %v6504
        %6545 = vst.msk [vmem:[#allocation3 + $0x48] sm:$0xff] %vm6535, %v6506
        %6546 = vst.msk [vmem:[#allocation3 + $0x50] sm:$0xff] %vm6535, %v6508
        %6547 = vst.msk [vmem:[#allocation3 + $0x58] sm:$0xff] %vm6535, %v6510
        %6548 = vst.msk [vmem:[#allocation3 + $0x60] sm:$0xff] %vm6535, %v6512
        %6549 = vst.msk [vmem:[#allocation3 + $0x68] sm:$0xff] %vm6535, %v6514
        %6550 = vst.msk [vmem:[#allocation3 + $0x70] sm:$0xff] %vm6535, %v6516
        %6551 = vst.msk [vmem:[#allocation3 + $0x78] sm:$0xff] %vm6535, %v6518
        %v6552 = vld [vmem:[#allocation3] sm:$0xff]
        %v6553 = vld [vmem:[#allocation3 + $0x8] sm:$0xff]
        %v6554 = vld [vmem:[#allocation3 + $0x10] sm:$0xff]
        %v6555 = vld [vmem:[#allocation3 + $0x18] sm:$0xff]
        %v6556 = vld [vmem:[#allocation3 + $0x20] sm:$0xff]
        %v6557 = vld [vmem:[#allocation3 + $0x28] sm:$0xff]
        %v6558 = vld [vmem:[#allocation3 + $0x30] sm:$0xff]
        %v6559 = vld [vmem:[#allocation3 + $0x38] sm:$0xff]
        %v6560 = vld [vmem:[#allocation3 + $0x40] sm:$0xff]
        %v6561 = vld [vmem:[#allocation3 + $0x48] sm:$0xff]
        %v6562 = vld [vmem:[#allocation3 + $0x50] sm:$0xff]
        %v6563 = vld [vmem:[#allocation3 + $0x58] sm:$0xff]
        %v6564 = vld [vmem:[#allocation3 + $0x60] sm:$0xff]
        %v6565 = vld [vmem:[#allocation3 + $0x68] sm:$0xff]
        %v6566 = vld [vmem:[#allocation3 + $0x70] sm:$0xff]
        %v6567 = vld [vmem:[#allocation3 + $0x78] sm:$0xff]
        %v6568 = vld [vmem:[%s3] sm:$0xf]
        %v6569 = vld [vmem:[%s3 + $0x4] sm:$0xf]
        %v6570 = vld [vmem:[%s3 + $0x8] sm:$0xf]
        %v6571 = vld [vmem:[%s3 + $0xc] sm:$0xf]
        %v6572 = vld [vmem:[%s3 + $0x10] sm:$0xf]
        %v6573 = vld [vmem:[%s3 + $0x14] sm:$0xf]
        %v6574 = vld [vmem:[%s3 + $0x18] sm:$0xf]
        %v6575 = vld [vmem:[%s3 + $0x1c] sm:$0xf]
        %v6576 = vld [vmem:[%s3 + $0x20] sm:$0xf]
        %v6577 = vld [vmem:[%s4] sm:$0x1]
        %v6579 = vlaneseq
        %v6580 = vshrl.u32 %v6579, 7
        %v6581 = vsub.s32 0, %v6580
        %v6582 = vrot.slane %v6577, %v6581
        %v6593 = vunpack.c.l.b16 %v6568
        %v6594 = vunpack.c.l.b16 %v6569
        %v6595 = vunpack.c.l.b16 %v6570
        %v6596 = vunpack.c.l.b16 %v6571
        %v6597 = vunpack.c.l.b16 %v6572
        %v6598 = vunpack.c.l.b16 %v6573
        %v6599 = vunpack.c.l.b16 %v6574
        %v6600 = vunpack.c.l.b16 %v6575
        %v6601 = vunpack.c.l.b16 %v6576
        %v6602 = vpack.c.b16 %v6594, %v6593
        %v6603 = vpack.c.b16 %v6596, %v6595
        %v6604 = vpack.c.b16 %v6598, %v6597
        %v6605 = vpack.c.b16 %v6600, %v6599
        %v6606 = vpack.c.b16 %v6601, %v6601
        %vm6611 = vcmask 588800
        %v6613 = vsel %vm6611, %v6552, 0
        %v6616 = vsel %vm6611, %v6553, 0
        %v6619 = vsel %vm6611, %v6554, 0
        %v6622 = vsel %vm6611, %v6555, 0
        %v6625 = vsel %vm6611, %v6556, 0
        %v6628 = vsel %vm6611, %v6557, 0
        %v6631 = vsel %vm6611, %v6558, 0
        %v6634 = vsel %vm6611, %v6559, 0
        %v6637 = vsel %vm6611, %v6560, 0
        %v6640 = vsel %vm6611, %v6561, 0
        %v6643 = vsel %vm6611, %v6562, 0
        %v6646 = vsel %vm6611, %v6563, 0
        %v6649 = vsel %vm6611, %v6564, 0
        %v6652 = vsel %vm6611, %v6565, 0
        %v6655 = vsel %vm6611, %v6566, 0
        %v6658 = vsel %vm6611, %v6567, 0
        %vm6660 = vcmask 1043456
        %v6662 = vsel %vm6660, %v6606, 0
        %6664 = vmatprep.subr.bf16.mxu0 0
        %6665 = vmatpush1.bf16.msra.mxu0 %v6602
        %6666 = vmatprep.subr.bf16.mxu0 0
        %6667 = vmatpush1.bf16.msra.mxu0 %v6603
        %6668 = vmatprep.subr.bf16.mxu0 0
        %6669 = vmatpush1.bf16.msra.mxu0 %v6604
        %6670 = vmatprep.subr.bf16.mxu0 0
        %6671 = vmatpush1.bf16.msra.mxu0 %v6605
        %6672 = vmatprep.subr.bf16.mxu0 0
        %6673 = vmatpush1.bf16.msra.mxu0 %v6662
        %6674 = vmatprep.subr.bf16.mxu0 0
        %6675 = vmatpush1.bf16.msra.mxu0 0
        %6676 = vmatprep.subr.bf16.mxu0 0
        %6677 = vmatpush1.bf16.msra.mxu0 0
        %6678 = vmatprep.subr.bf16.mxu0 0
        %6679 = vmatpush1.bf16.msra.mxu0 0
        %6680 = vmatprep.subr.bf16.mxu0 0
        %6681 = vmatpush1.bf16.msra.mxu0 0
        %6682 = vmatprep.subr.bf16.mxu0 0
        %6683 = vmatpush1.bf16.msra.mxu0 0
        %6684 = vmatprep.subr.bf16.mxu0 0
        %6685 = vmatpush1.bf16.msra.mxu0 0
        %6686 = vmatprep.subr.bf16.mxu0 0
        %6687 = vmatpush1.bf16.msra.mxu0 0
        %6688 = vmatprep.subr.bf16.mxu0 0
        %6689 = vmatpush1.bf16.msra.mxu0 0
        %6690 = vmatprep.subr.bf16.mxu0 0
        %6691 = vmatpush1.bf16.msra.mxu0 0
        %6692 = vmatprep.subr.bf16.mxu0 0
        %6693 = vmatpush1.bf16.msra.mxu0 0
        %6694 = vmatprep.subr.bf16.mxu0 0
        %6695 = vmatpush1.bf16.msra.mxu0 0
        %6696 = vmatprep.mubr.bf16.mxu0 0
        %6697 = vmatmul.mubr.bf16.gmra.mrb[0].mxu0 %v6613
        %v6698 = vpop.f32.mrb[0].mxu0
        %v6699 = vadd.f32 %v6582, %v6698
        %v6700 = vpop.f32.mrb[0].mxu0
        %v6701 = vpop.f32.mrb[0].mxu0
        %v6702 = vadd.f32 %v6582, %v6701
        %v6703 = vpop.f32.mrb[0].mxu0
        %6704 = vmatprep.mubr.bf16.mxu0 0
        %6705 = vmatmul.mubr.bf16.gmra.mrb[0].mxu0 %v6616
        %v6706 = vpop.f32.mrb[0].mxu0
        %v6707 = vadd.f32 %v6582, %v6706
        %v6708 = vpop.f32.mrb[0].mxu0
        %v6709 = vpop.f32.mrb[0].mxu0
        %v6710 = vadd.f32 %v6582, %v6709
        %v6711 = vpop.f32.mrb[0].mxu0
        %6712 = vmatprep.mubr.bf16.mxu0 0
        %6713 = vmatmul.mubr.bf16.gmra.mrb[0].mxu0 %v6619
        %v6714 = vpop.f32.mrb[0].mxu0
        %v6715 = vadd.f32 %v6582, %v6714
        %v6716 = vpop.f32.mrb[0].mxu0
        %v6717 = vpop.f32.mrb[0].mxu0
        %v6718 = vadd.f32 %v6582, %v6717
        %v6719 = vpop.f32.mrb[0].mxu0
        %6720 = vmatprep.mubr.bf16.mxu0 0
        %6721 = vmatmul.mubr.bf16.gmra.mrb[0].mxu0 %v6622
        %v6722 = vpop.f32.mrb[0].mxu0
        %v6723 = vadd.f32 %v6582, %v6722
        %v6724 = vpop.f32.mrb[0].mxu0
        %v6725 = vpop.f32.mrb[0].mxu0
        %v6726 = vadd.f32 %v6582, %v6725
        %v6727 = vpop.f32.mrb[0].mxu0
        %6728 = vmatprep.mubr.bf16.mxu0 0
        %6729 = vmatmul.mubr.bf16.gmra.mrb[0].mxu0 %v6625
        %v6730 = vpop.f32.mrb[0].mxu0
        %v6731 = vadd.f32 %v6582, %v6730
        %v6732 = vpop.f32.mrb[0].mxu0
        %v6733 = vpop.f32.mrb[0].mxu0
        %v6734 = vadd.f32 %v6582, %v6733
        %v6735 = vpop.f32.mrb[0].mxu0
        %6736 = vmatprep.mubr.bf16.mxu0 0
        %6737 = vmatmul.mubr.bf16.gmra.mrb[0].mxu0 %v6628
        %v6738 = vpop.f32.mrb[0].mxu0
        %v6739 = vadd.f32 %v6582, %v6738
        %v6740 = vpop.f32.mrb[0].mxu0
        %v6741 = vpop.f32.mrb[0].mxu0
        %v6742 = vadd.f32 %v6582, %v6741
        %v6743 = vpop.f32.mrb[0].mxu0
        %6744 = vmatprep.mubr.bf16.mxu0 0
        %6745 = vmatmul.mubr.bf16.gmra.mrb[0].mxu0 %v6631
        %v6746 = vpop.f32.mrb[0].mxu0
        %v6747 = vadd.f32 %v6582, %v6746
        %v6748 = vpop.f32.mrb[0].mxu0
        %v6749 = vpop.f32.mrb[0].mxu0
        %v6750 = vadd.f32 %v6582, %v6749
        %v6751 = vpop.f32.mrb[0].mxu0
        %6752 = vmatprep.mubr.bf16.mxu0 0
        %6753 = vmatmul.mubr.bf16.gmra.mrb[0].mxu0 %v6634
        %v6754 = vpop.f32.mrb[0].mxu0
        %v6755 = vadd.f32 %v6582, %v6754
        %v6756 = vpop.f32.mrb[0].mxu0
        %v6757 = vpop.f32.mrb[0].mxu0
        %v6758 = vadd.f32 %v6582, %v6757
        %v6759 = vpop.f32.mrb[0].mxu0
        %6760 = vmatprep.mubr.bf16.mxu0 0
        %6761 = vmatmul.mubr.bf16.gmra.mrb[0].mxu0 %v6637
        %v6762 = vpop.f32.mrb[0].mxu0
        %v6763 = vadd.f32 %v6582, %v6762
        %v6764 = vpop.f32.mrb[0].mxu0
        %v6765 = vpop.f32.mrb[0].mxu0
        %v6766 = vadd.f32 %v6582, %v6765
        %v6767 = vpop.f32.mrb[0].mxu0
        %6768 = vmatprep.mubr.bf16.mxu0 0
        %6769 = vmatmul.mubr.bf16.gmra.mrb[0].mxu0 %v6640
        %v6770 = vpop.f32.mrb[0].mxu0
        %v6771 = vadd.f32 %v6582, %v6770
        %v6772 = vpop.f32.mrb[0].mxu0
        %v6773 = vpop.f32.mrb[0].mxu0
        %v6774 = vadd.f32 %v6582, %v6773
        %v6775 = vpop.f32.mrb[0].mxu0
        %6776 = vmatprep.mubr.bf16.mxu0 0
        %6777 = vmatmul.mubr.bf16.gmra.mrb[0].mxu0 %v6643
        %v6778 = vpop.f32.mrb[0].mxu0
        %v6779 = vadd.f32 %v6582, %v6778
        %v6780 = vpop.f32.mrb[0].mxu0
        %v6781 = vpop.f32.mrb[0].mxu0
        %v6782 = vadd.f32 %v6582, %v6781
        %v6783 = vpop.f32.mrb[0].mxu0
        %6784 = vmatprep.mubr.bf16.mxu0 0
        %6785 = vmatmul.mubr.bf16.gmra.mrb[0].mxu0 %v6646
        %v6786 = vpop.f32.mrb[0].mxu0
        %v6787 = vadd.f32 %v6582, %v6786
        %v6788 = vpop.f32.mrb[0].mxu0
        %v6789 = vpop.f32.mrb[0].mxu0
        %v6790 = vadd.f32 %v6582, %v6789
        %v6791 = vpop.f32.mrb[0].mxu0
        %6792 = vmatprep.mubr.bf16.mxu0 0
        %6793 = vmatmul.mubr.bf16.gmra.mrb[0].mxu0 %v6649
        %v6794 = vpop.f32.mrb[0].mxu0
        %v6795 = vadd.f32 %v6582, %v6794
        %v6796 = vpop.f32.mrb[0].mxu0
        %v6797 = vpop.f32.mrb[0].mxu0
        %v6798 = vadd.f32 %v6582, %v6797
        %v6799 = vpop.f32.mrb[0].mxu0
        %6800 = vmatprep.mubr.bf16.mxu0 0
        %6801 = vmatmul.mubr.bf16.gmra.mrb[0].mxu0 %v6652
        %v6802 = vpop.f32.mrb[0].mxu0
        %v6803 = vadd.f32 %v6582, %v6802
        %v6804 = vpop.f32.mrb[0].mxu0
        %v6805 = vpop.f32.mrb[0].mxu0
        %v6806 = vadd.f32 %v6582, %v6805
        %v6807 = vpop.f32.mrb[0].mxu0
        %6808 = vmatprep.mubr.bf16.mxu0 0
        %6809 = vmatmul.mubr.bf16.gmra.mrb[0].mxu0 %v6655
        %v6810 = vpop.f32.mrb[0].mxu0
        %v6811 = vadd.f32 %v6582, %v6810
        %v6812 = vpop.f32.mrb[0].mxu0
        %v6813 = vpop.f32.mrb[0].mxu0
        %v6814 = vadd.f32 %v6582, %v6813
        %v6815 = vpop.f32.mrb[0].mxu0
        %6816 = vmatprep.mubr.bf16.mxu0 0
        %6817 = vmatmul.mubr.bf16.gmra.mrb[0].mxu0 %v6658
        %v6818 = vpop.f32.mrb[0].mxu0
        %v6819 = vadd.f32 %v6582, %v6818
        %v6820 = vpop.f32.mrb[0].mxu0
        %v6821 = vpop.f32.mrb[0].mxu0
        %v6822 = vadd.f32 %v6582, %v6821
        %v6823 = vpop.f32.mrb[0].mxu0
        %6824 = vdwg.mxu0
        %v6825 = vpack.c.bf16 %v6702, %v6699
        %v6826 = vpack.c.bf16 %v6710, %v6707
        %v6827 = vpack.c.bf16 %v6718, %v6715
        %v6828 = vpack.c.bf16 %v6726, %v6723
        %v6829 = vpack.c.bf16 %v6734, %v6731
        %v6830 = vpack.c.bf16 %v6742, %v6739
        %v6831 = vpack.c.bf16 %v6750, %v6747
        %v6832 = vpack.c.bf16 %v6758, %v6755
        %v6833 = vpack.c.bf16 %v6766, %v6763
        %v6834 = vpack.c.bf16 %v6774, %v6771
        %v6835 = vpack.c.bf16 %v6782, %v6779
        %v6836 = vpack.c.bf16 %v6790, %v6787
        %v6837 = vpack.c.bf16 %v6798, %v6795
        %v6838 = vpack.c.bf16 %v6806, %v6803
        %v6839 = vpack.c.bf16 %v6814, %v6811
        %v6840 = vpack.c.bf16 %v6822, %v6819
        %v6841 = vld [vmem:[%s5] sm:$0xf]
        %v6842 = vld [vmem:[%s6] sm:$0x1]
        %v6844 = vlaneseq
        %v6845 = vshrl.u32 %v6844, 7
        %v6846 = vsub.s32 0, %v6845
        %v6847 = vrot.slane %v6842, %v6846
        %v6850 = vsel %vm4014, %v6825, 0
        %v6853 = vsel %vm4014, %v6826, 0
        %v6856 = vsel %vm4014, %v6827, 0
        %v6859 = vsel %vm4014, %v6828, 0
        %v6862 = vsel %vm4014, %v6829, 0
        %v6865 = vsel %vm4014, %v6830, 0
        %v6868 = vsel %vm4014, %v6831, 0
        %v6871 = vsel %vm4014, %v6832, 0
        %v6874 = vsel %vm4014, %v6833, 0
        %v6877 = vsel %vm4014, %v6834, 0
        %v6880 = vsel %vm4014, %v6835, 0
        %v6883 = vsel %vm4014, %v6836, 0
        %v6886 = vsel %vm4014, %v6837, 0
        %v6889 = vsel %vm4014, %v6838, 0
        %v6892 = vsel %vm4014, %v6839, 0
        %v6895 = vsel %vm4014, %v6840, 0
        %v6898 = vsel %vm6660, %v6841, 0
        %6900 = vmatprep.subr.bf16.mxu0 0
        %6901 = vmatpush1.bf16.msra.mxu0 %v6898
        %6902 = vmatprep.subr.bf16.mxu0 0
        %6903 = vmatpush1.bf16.msra.mxu0 0
        %6904 = vmatprep.subr.bf16.mxu0 0
        %6905 = vmatpush1.bf16.msra.mxu0 0
        %6906 = vmatprep.subr.bf16.mxu0 0
        %6907 = vmatpush1.bf16.msra.mxu0 0
        %6908 = vmatprep.subr.bf16.mxu0 0
        %6909 = vmatpush1.bf16.msra.mxu0 0
        %6910 = vmatprep.subr.bf16.mxu0 0
        %6911 = vmatpush1.bf16.msra.mxu0 0
        %6912 = vmatprep.subr.bf16.mxu0 0
        %6913 = vmatpush1.bf16.msra.mxu0 0
        %6914 = vmatprep.subr.bf16.mxu0 0
        %6915 = vmatpush1.bf16.msra.mxu0 0
        %6916 = vmatprep.subr.bf16.mxu0 0
        %6917 = vmatpush1.bf16.msra.mxu0 0
        %6918 = vmatprep.subr.bf16.mxu0 0
        %6919 = vmatpush1.bf16.msra.mxu0 0
        %6920 = vmatprep.subr.bf16.mxu0 0
        %6921 = vmatpush1.bf16.msra.mxu0 0
        %6922 = vmatprep.subr.bf16.mxu0 0
        %6923 = vmatpush1.bf16.msra.mxu0 0
        %6924 = vmatprep.subr.bf16.mxu0 0
        %6925 = vmatpush1.bf16.msra.mxu0 0
        %6926 = vmatprep.subr.bf16.mxu0 0
        %6927 = vmatpush1.bf16.msra.mxu0 0
        %6928 = vmatprep.subr.bf16.mxu0 0
        %6929 = vmatpush1.bf16.msra.mxu0 0
        %6930 = vmatprep.subr.bf16.mxu0 0
        %6931 = vmatpush1.bf16.msra.mxu0 0
        %6932 = vmatprep.mubr.bf16.mxu0 0
        %6933 = vmatmul.mubr.bf16.gmra.mrb[0].mxu0 %v6850
        %v6934 = vpop.f32.mrb[0].mxu0
        %v6935 = vadd.f32 %v6847, %v6934
        %v6936 = vpop.f32.mrb[0].mxu0
        %v6937 = vpop.f32.mrb[0].mxu0
        %v6938 = vadd.f32 %v6847, %v6937
        %v6939 = vpop.f32.mrb[0].mxu0
        %6940 = vmatprep.mubr.bf16.mxu0 0
        %6941 = vmatmul.mubr.bf16.gmra.mrb[0].mxu0 %v6853
        %v6942 = vpop.f32.mrb[0].mxu0
        %v6943 = vadd.f32 %v6847, %v6942
        %v6944 = vpop.f32.mrb[0].mxu0
        %v6945 = vpop.f32.mrb[0].mxu0
        %v6946 = vadd.f32 %v6847, %v6945
        %v6947 = vpop.f32.mrb[0].mxu0
        %6948 = vmatprep.mubr.bf16.mxu0 0
        %6949 = vmatmul.mubr.bf16.gmra.mrb[0].mxu0 %v6856
        %v6950 = vpop.f32.mrb[0].mxu0
        %v6951 = vadd.f32 %v6847, %v6950
        %v6952 = vpop.f32.mrb[0].mxu0
        %v6953 = vpop.f32.mrb[0].mxu0
        %v6954 = vadd.f32 %v6847, %v6953
        %v6955 = vpop.f32.mrb[0].mxu0
        %6956 = vmatprep.mubr.bf16.mxu0 0
        %6957 = vmatmul.mubr.bf16.gmra.mrb[0].mxu0 %v6859
        %v6958 = vpop.f32.mrb[0].mxu0
        %v6959 = vadd.f32 %v6847, %v6958
        %v6960 = vpop.f32.mrb[0].mxu0
        %v6961 = vpop.f32.mrb[0].mxu0
        %v6962 = vadd.f32 %v6847, %v6961
        %v6963 = vpop.f32.mrb[0].mxu0
        %6964 = vmatprep.mubr.bf16.mxu0 0
        %6965 = vmatmul.mubr.bf16.gmra.mrb[0].mxu0 %v6862
        %v6966 = vpop.f32.mrb[0].mxu0
        %v6967 = vadd.f32 %v6847, %v6966
        %v6968 = vpop.f32.mrb[0].mxu0
        %v6969 = vpop.f32.mrb[0].mxu0
        %v6970 = vadd.f32 %v6847, %v6969
        %v6971 = vpop.f32.mrb[0].mxu0
        %6972 = vmatprep.mubr.bf16.mxu0 0
        %6973 = vmatmul.mubr.bf16.gmra.mrb[0].mxu0 %v6865
        %v6974 = vpop.f32.mrb[0].mxu0
        %v6975 = vadd.f32 %v6847, %v6974
        %v6976 = vpop.f32.mrb[0].mxu0
        %v6977 = vpop.f32.mrb[0].mxu0
        %v6978 = vadd.f32 %v6847, %v6977
        %v6979 = vpop.f32.mrb[0].mxu0
        %6980 = vmatprep.mubr.bf16.mxu0 0
        %6981 = vmatmul.mubr.bf16.gmra.mrb[0].mxu0 %v6868
        %v6982 = vpop.f32.mrb[0].mxu0
        %v6983 = vadd.f32 %v6847, %v6982
        %v6984 = vpop.f32.mrb[0].mxu0
        %v6985 = vpop.f32.mrb[0].mxu0
        %v6986 = vadd.f32 %v6847, %v6985
        %v6987 = vpop.f32.mrb[0].mxu0
        %6988 = vmatprep.mubr.bf16.mxu0 0
        %6989 = vmatmul.mubr.bf16.gmra.mrb[0].mxu0 %v6871
        %v6990 = vpop.f32.mrb[0].mxu0
        %v6991 = vadd.f32 %v6847, %v6990
        %v6992 = vpop.f32.mrb[0].mxu0
        %v6993 = vpop.f32.mrb[0].mxu0
        %v6994 = vadd.f32 %v6847, %v6993
        %v6995 = vpop.f32.mrb[0].mxu0
        %6996 = vmatprep.mubr.bf16.mxu0 0
        %6997 = vmatmul.mubr.bf16.gmra.mrb[0].mxu0 %v6874
        %v6998 = vpop.f32.mrb[0].mxu0
        %v6999 = vadd.f32 %v6847, %v6998
        %v7000 = vpop.f32.mrb[0].mxu0
        %v7001 = vpop.f32.mrb[0].mxu0
        %v7002 = vadd.f32 %v6847, %v7001
        %v7003 = vpop.f32.mrb[0].mxu0
        %7004 = vmatprep.mubr.bf16.mxu0 0
        %7005 = vmatmul.mubr.bf16.gmra.mrb[0].mxu0 %v6877
        %v7006 = vpop.f32.mrb[0].mxu0
        %v7007 = vadd.f32 %v6847, %v7006
        %v7008 = vpop.f32.mrb[0].mxu0
        %v7009 = vpop.f32.mrb[0].mxu0
        %v7010 = vadd.f32 %v6847, %v7009
        %v7011 = vpop.f32.mrb[0].mxu0
        %7012 = vmatprep.mubr.bf16.mxu0 0
        %7013 = vmatmul.mubr.bf16.gmra.mrb[0].mxu0 %v6880
        %v7014 = vpop.f32.mrb[0].mxu0
        %v7015 = vadd.f32 %v6847, %v7014
        %v7016 = vpop.f32.mrb[0].mxu0
        %v7017 = vpop.f32.mrb[0].mxu0
        %v7018 = vadd.f32 %v6847, %v7017
        %v7019 = vpop.f32.mrb[0].mxu0
        %7020 = vmatprep.mubr.bf16.mxu0 0
        %7021 = vmatmul.mubr.bf16.gmra.mrb[0].mxu0 %v6883
        %v7022 = vpop.f32.mrb[0].mxu0
        %v7023 = vadd.f32 %v6847, %v7022
        %v7024 = vpop.f32.mrb[0].mxu0
        %v7025 = vpop.f32.mrb[0].mxu0
        %v7026 = vadd.f32 %v6847, %v7025
        %v7027 = vpop.f32.mrb[0].mxu0
        %7028 = vmatprep.mubr.bf16.mxu0 0
        %7029 = vmatmul.mubr.bf16.gmra.mrb[0].mxu0 %v6886
        %v7030 = vpop.f32.mrb[0].mxu0
        %v7031 = vadd.f32 %v6847, %v7030
        %v7032 = vpop.f32.mrb[0].mxu0
        %v7033 = vpop.f32.mrb[0].mxu0
        %v7034 = vadd.f32 %v6847, %v7033
        %v7035 = vpop.f32.mrb[0].mxu0
        %7036 = vmatprep.mubr.bf16.mxu0 0
        %7037 = vmatmul.mubr.bf16.gmra.mrb[0].mxu0 %v6889
        %v7038 = vpop.f32.mrb[0].mxu0
        %v7039 = vadd.f32 %v6847, %v7038
        %v7040 = vpop.f32.mrb[0].mxu0
        %v7041 = vpop.f32.mrb[0].mxu0
        %v7042 = vadd.f32 %v6847, %v7041
        %v7043 = vpop.f32.mrb[0].mxu0
        %7044 = vmatprep.mubr.bf16.mxu0 0
        %7045 = vmatmul.mubr.bf16.gmra.mrb[0].mxu0 %v6892
        %v7046 = vpop.f32.mrb[0].mxu0
        %v7047 = vadd.f32 %v6847, %v7046
        %v7048 = vpop.f32.mrb[0].mxu0
        %v7049 = vpop.f32.mrb[0].mxu0
        %v7050 = vadd.f32 %v6847, %v7049
        %v7051 = vpop.f32.mrb[0].mxu0
        %7052 = vmatprep.mubr.bf16.mxu0 0
        %7053 = vmatmul.mubr.bf16.gmra.mrb[0].mxu0 %v6895
        %v7054 = vpop.f32.mrb[0].mxu0
        %v7055 = vadd.f32 %v6847, %v7054
        %v7056 = vpop.f32.mrb[0].mxu0
        %v7057 = vpop.f32.mrb[0].mxu0
        %v7058 = vadd.f32 %v6847, %v7057
        %v7059 = vpop.f32.mrb[0].mxu0
        %7060 = vdwg.mxu0
        %v7061 = vsub.f32 0.0, %v6935
        %v7062 = vsub.f32 0.0, %v6938
        %v7063 = vsub.f32 0.0, %v6943
        %v7064 = vsub.f32 0.0, %v6946
        %v7065 = vsub.f32 0.0, %v6951
        %v7066 = vsub.f32 0.0, %v6954
        %v7067 = vsub.f32 0.0, %v6959
        %v7068 = vsub.f32 0.0, %v6962
        %v7069 = vsub.f32 0.0, %v6967
        %v7070 = vsub.f32 0.0, %v6970
        %v7071 = vsub.f32 0.0, %v6975
        %v7072 = vsub.f32 0.0, %v6978
        %v7073 = vsub.f32 0.0, %v6983
        %v7074 = vsub.f32 0.0, %v6986
        %v7075 = vsub.f32 0.0, %v6991
        %v7076 = vsub.f32 0.0, %v6994
        %v7077 = vsub.f32 0.0, %v6999
        %v7078 = vsub.f32 0.0, %v7002
        %v7079 = vsub.f32 0.0, %v7007
        %v7080 = vsub.f32 0.0, %v7010
        %v7081 = vsub.f32 0.0, %v7015
        %v7082 = vsub.f32 0.0, %v7018
        %v7083 = vsub.f32 0.0, %v7023
        %v7084 = vsub.f32 0.0, %v7026
        %v7085 = vsub.f32 0.0, %v7031
        %v7086 = vsub.f32 0.0, %v7034
        %v7087 = vsub.f32 0.0, %v7039
        %v7088 = vsub.f32 0.0, %v7042
        %v7089 = vsub.f32 0.0, %v7047
        %v7090 = vsub.f32 0.0, %v7050
        %v7091 = vsub.f32 0.0, %v7055
        %v7092 = vsub.f32 0.0, %v7058
        %v7093 = vmul.f32 %v7061, 1.442695
        %v7094 = vpow.pop %v7093
        %v7095 = vmul.f32 %v7062, 1.442695
        %v7096 = vpow.pop %v7095
        %v7097 = vmul.f32 %v7063, 1.442695
        %v7098 = vpow.pop %v7097
        %v7099 = vmul.f32 %v7064, 1.442695
        %v7100 = vpow.pop %v7099
        %v7101 = vmul.f32 %v7065, 1.442695
        %v7102 = vpow.pop %v7101
        %v7103 = vmul.f32 %v7066, 1.442695
        %v7104 = vpow.pop %v7103
        %v7105 = vmul.f32 %v7067, 1.442695
        %v7106 = vpow.pop %v7105
        %v7107 = vmul.f32 %v7068, 1.442695
        %v7108 = vpow.pop %v7107
        %v7109 = vmul.f32 %v7069, 1.442695
        %v7110 = vpow.pop %v7109
        %v7111 = vmul.f32 %v7070, 1.442695
        %v7112 = vpow.pop %v7111
        %v7113 = vmul.f32 %v7071, 1.442695
        %v7114 = vpow.pop %v7113
        %v7115 = vmul.f32 %v7072, 1.442695
        %v7116 = vpow.pop %v7115
        %v7117 = vmul.f32 %v7073, 1.442695
        %v7118 = vpow.pop %v7117
        %v7119 = vmul.f32 %v7074, 1.442695
        %v7120 = vpow.pop %v7119
        %v7121 = vmul.f32 %v7075, 1.442695
        %v7122 = vpow.pop %v7121
        %v7123 = vmul.f32 %v7076, 1.442695
        %v7124 = vpow.pop %v7123
        %v7125 = vmul.f32 %v7077, 1.442695
        %v7126 = vpow.pop %v7125
        %v7127 = vmul.f32 %v7078, 1.442695
        %v7128 = vpow.pop %v7127
        %v7129 = vmul.f32 %v7079, 1.442695
        %v7130 = vpow.pop %v7129
        %v7131 = vmul.f32 %v7080, 1.442695
        %v7132 = vpow.pop %v7131
        %v7133 = vmul.f32 %v7081, 1.442695
        %v7134 = vpow.pop %v7133
        %v7135 = vmul.f32 %v7082, 1.442695
        %v7136 = vpow.pop %v7135
        %v7137 = vmul.f32 %v7083, 1.442695
        %v7138 = vpow.pop %v7137
        %v7139 = vmul.f32 %v7084, 1.442695
        %v7140 = vpow.pop %v7139
        %v7141 = vmul.f32 %v7085, 1.442695
        %v7142 = vpow.pop %v7141
        %v7143 = vmul.f32 %v7086, 1.442695
        %v7144 = vpow.pop %v7143
        %v7145 = vmul.f32 %v7087, 1.442695
        %v7146 = vpow.pop %v7145
        %v7147 = vmul.f32 %v7088, 1.442695
        %v7148 = vpow.pop %v7147
        %v7149 = vmul.f32 %v7089, 1.442695
        %v7150 = vpow.pop %v7149
        %v7151 = vmul.f32 %v7090, 1.442695
        %v7152 = vpow.pop %v7151
        %v7153 = vmul.f32 %v7091, 1.442695
        %v7154 = vpow.pop %v7153
        %v7155 = vmul.f32 %v7092, 1.442695
        %v7156 = vpow.pop %v7155
        %v7157 = vadd.f32 %v7094, 1.0
        %v7158 = vadd.f32 %v7096, 1.0
        %v7159 = vadd.f32 %v7098, 1.0
        %v7160 = vadd.f32 %v7100, 1.0
        %v7161 = vadd.f32 %v7102, 1.0
        %v7162 = vadd.f32 %v7104, 1.0
        %v7163 = vadd.f32 %v7106, 1.0
        %v7164 = vadd.f32 %v7108, 1.0
        %v7165 = vadd.f32 %v7110, 1.0
        %v7166 = vadd.f32 %v7112, 1.0
        %v7167 = vadd.f32 %v7114, 1.0
        %v7168 = vadd.f32 %v7116, 1.0
        %v7169 = vadd.f32 %v7118, 1.0
        %v7170 = vadd.f32 %v7120, 1.0
        %v7171 = vadd.f32 %v7122, 1.0
        %v7172 = vadd.f32 %v7124, 1.0
        %v7173 = vadd.f32 %v7126, 1.0
        %v7174 = vadd.f32 %v7128, 1.0
        %v7175 = vadd.f32 %v7130, 1.0
        %v7176 = vadd.f32 %v7132, 1.0
        %v7177 = vadd.f32 %v7134, 1.0
        %v7178 = vadd.f32 %v7136, 1.0
        %v7179 = vadd.f32 %v7138, 1.0
        %v7180 = vadd.f32 %v7140, 1.0
        %v7181 = vadd.f32 %v7142, 1.0
        %v7182 = vadd.f32 %v7144, 1.0
        %v7183 = vadd.f32 %v7146, 1.0
        %v7184 = vadd.f32 %v7148, 1.0
        %v7185 = vadd.f32 %v7150, 1.0
        %v7186 = vadd.f32 %v7152, 1.0
        %v7187 = vadd.f32 %v7154, 1.0
        %v7188 = vadd.f32 %v7156, 1.0
        %v7189 = vrcp.pop %v7157
        %v7190 = vrcp.pop %v7158
        %v7191 = vrcp.pop %v7159
        %v7192 = vrcp.pop %v7160
        %v7193 = vrcp.pop %v7161
        %v7194 = vrcp.pop %v7162
        %v7195 = vrcp.pop %v7163
        %v7196 = vrcp.pop %v7164
        %v7197 = vrcp.pop %v7165
        %v7198 = vrcp.pop %v7166
        %v7199 = vrcp.pop %v7167
        %v7200 = vrcp.pop %v7168
        %v7201 = vrcp.pop %v7169
        %v7202 = vrcp.pop %v7170
        %v7203 = vrcp.pop %v7171
        %v7204 = vrcp.pop %v7172
        %v7205 = vrcp.pop %v7173
        %v7206 = vrcp.pop %v7174
        %v7207 = vrcp.pop %v7175
        %v7208 = vrcp.pop %v7176
        %v7209 = vrcp.pop %v7177
        %v7210 = vrcp.pop %v7178
        %v7211 = vrcp.pop %v7179
        %v7212 = vrcp.pop %v7180
        %v7213 = vrcp.pop %v7181
        %v7214 = vrcp.pop %v7182
        %v7215 = vrcp.pop %v7183
        %v7216 = vrcp.pop %v7184
        %v7217 = vrcp.pop %v7185
        %v7218 = vrcp.pop %v7186
        %v7219 = vrcp.pop %v7187
        %v7220 = vrcp.pop %v7188
        %v7221 = vld [vmem:[%s7] sm:$0xff]
        %v7222 = vld [vmem:[%s7 + $0x8] sm:$0xff]
        %v7223 = vld [vmem:[%s7 + $0x10] sm:$0xff]
        %v7224 = vld [vmem:[%s7 + $0x18] sm:$0xff]
        %v7225 = vld [vmem:[%s7 + $0x20] sm:$0xff]
        %v7226 = vld [vmem:[%s7 + $0x28] sm:$0xff]
        %v7227 = vld [vmem:[%s7 + $0x30] sm:$0xff]
        %v7228 = vld [vmem:[%s7 + $0x38] sm:$0xff]
        %v7229 = vld [vmem:[%s7 + $0x40] sm:$0xff]
        %v7230 = vld [vmem:[%s7 + $0x48] sm:$0xff]
        %v7231 = vld [vmem:[%s7 + $0x50] sm:$0xff]
        %v7232 = vld [vmem:[%s7 + $0x58] sm:$0xff]
        %v7233 = vld [vmem:[%s7 + $0x60] sm:$0xff]
        %v7234 = vld [vmem:[%s7 + $0x68] sm:$0xff]
        %v7235 = vld [vmem:[%s7 + $0x70] sm:$0xff]
        %v7236 = vld [vmem:[%s7 + $0x78] sm:$0xff]
        %v7237 = vld [vmem:[%s7 + $0x80] sm:$0xff]
        %v7238 = vld [vmem:[%s7 + $0x88] sm:$0xff]
        %v7239 = vld [vmem:[%s7 + $0x90] sm:$0xff]
        %v7240 = vld [vmem:[%s7 + $0x98] sm:$0xff]
        %v7241 = vld [vmem:[%s7 + $0xa0] sm:$0xff]
        %v7242 = vld [vmem:[%s7 + $0xa8] sm:$0xff]
        %v7243 = vld [vmem:[%s7 + $0xb0] sm:$0xff]
        %v7244 = vld [vmem:[%s7 + $0xb8] sm:$0xff]
        %v7245 = vld [vmem:[%s7 + $0xc0] sm:$0xff]
        %v7246 = vld [vmem:[%s7 + $0xc8] sm:$0xff]
        %v7247 = vld [vmem:[%s7 + $0xd0] sm:$0xff]
        %v7248 = vld [vmem:[%s7 + $0xd8] sm:$0xff]
        %v7249 = vld [vmem:[%s7 + $0xe0] sm:$0xff]
        %v7250 = vld [vmem:[%s7 + $0xe8] sm:$0xff]
        %v7251 = vld [vmem:[%s7 + $0xf0] sm:$0xff]
        %v7252 = vld [vmem:[%s7 + $0xf8] sm:$0xff]
        %7285 = vrot.lane.b32.xlu0 %v7221, 8
        %v7286 = vpop.permute.xlu0 %7285
        %7287 = vrot.lane.b32.xlu0 %v7222, 8
        %v7288 = vpop.permute.xlu0 %7287
        %7289 = vrot.lane.b32.xlu0 %v7223, 8
        %v7290 = vpop.permute.xlu0 %7289
        %7291 = vrot.lane.b32.xlu0 %v7224, 8
        %v7292 = vpop.permute.xlu0 %7291
        %7293 = vrot.lane.b32.xlu0 %v7225, 8
        %v7294 = vpop.permute.xlu0 %7293
        %7295 = vrot.lane.b32.xlu0 %v7226, 8
        %v7296 = vpop.permute.xlu0 %7295
        %7297 = vrot.lane.b32.xlu0 %v7227, 8
        %v7298 = vpop.permute.xlu0 %7297
        %7299 = vrot.lane.b32.xlu0 %v7228, 8
        %v7300 = vpop.permute.xlu0 %7299
        %7301 = vrot.lane.b32.xlu0 %v7229, 8
        %v7302 = vpop.permute.xlu0 %7301
        %7303 = vrot.lane.b32.xlu0 %v7230, 8
        %v7304 = vpop.permute.xlu0 %7303
        %7305 = vrot.lane.b32.xlu0 %v7231, 8
        %v7306 = vpop.permute.xlu0 %7305
        %7307 = vrot.lane.b32.xlu0 %v7232, 8
        %v7308 = vpop.permute.xlu0 %7307
        %7309 = vrot.lane.b32.xlu0 %v7233, 8
        %v7310 = vpop.permute.xlu0 %7309
        %7311 = vrot.lane.b32.xlu0 %v7234, 8
        %v7312 = vpop.permute.xlu0 %7311
        %7313 = vrot.lane.b32.xlu0 %v7235, 8
        %v7314 = vpop.permute.xlu0 %7313
        %7315 = vrot.lane.b32.xlu0 %v7236, 8
        %v7316 = vpop.permute.xlu0 %7315
        %7317 = vrot.lane.b32.xlu0 %v7237, 8
        %v7318 = vpop.permute.xlu0 %7317
        %7319 = vrot.lane.b32.xlu0 %v7238, 8
        %v7320 = vpop.permute.xlu0 %7319
        %7321 = vrot.lane.b32.xlu0 %v7239, 8
        %v7322 = vpop.permute.xlu0 %7321
        %7323 = vrot.lane.b32.xlu0 %v7240, 8
        %v7324 = vpop.permute.xlu0 %7323
        %7325 = vrot.lane.b32.xlu0 %v7241, 8
        %v7326 = vpop.permute.xlu0 %7325
        %7327 = vrot.lane.b32.xlu0 %v7242, 8
        %v7328 = vpop.permute.xlu0 %7327
        %7329 = vrot.lane.b32.xlu0 %v7243, 8
        %v7330 = vpop.permute.xlu0 %7329
        %7331 = vrot.lane.b32.xlu0 %v7244, 8
        %v7332 = vpop.permute.xlu0 %7331
        %7333 = vrot.lane.b32.xlu0 %v7245, 8
        %v7334 = vpop.permute.xlu0 %7333
        %7335 = vrot.lane.b32.xlu0 %v7246, 8
        %v7336 = vpop.permute.xlu0 %7335
        %7337 = vrot.lane.b32.xlu0 %v7247, 8
        %v7338 = vpop.permute.xlu0 %7337
        %7339 = vrot.lane.b32.xlu0 %v7248, 8
        %v7340 = vpop.permute.xlu0 %7339
        %7341 = vrot.lane.b32.xlu0 %v7249, 8
        %v7342 = vpop.permute.xlu0 %7341
        %7343 = vrot.lane.b32.xlu0 %v7250, 8
        %v7344 = vpop.permute.xlu0 %7343
        %7345 = vrot.lane.b32.xlu0 %v7251, 8
        %v7346 = vpop.permute.xlu0 %7345
        %7347 = vrot.lane.b32.xlu0 %v7252, 8
        %v7348 = vpop.permute.xlu0 %7347
        %v7381 = vsub.f32 %v7221, %v7286
        %v7382 = vsub.f32 %v7222, %v7288
        %v7383 = vsub.f32 %v7223, %v7290
        %v7384 = vsub.f32 %v7224, %v7292
        %v7385 = vsub.f32 %v7225, %v7294
        %v7386 = vsub.f32 %v7226, %v7296
        %v7387 = vsub.f32 %v7227, %v7298
        %v7388 = vsub.f32 %v7228, %v7300
        %v7389 = vsub.f32 %v7229, %v7302
        %v7390 = vsub.f32 %v7230, %v7304
        %v7391 = vsub.f32 %v7231, %v7306
        %v7392 = vsub.f32 %v7232, %v7308
        %v7393 = vsub.f32 %v7233, %v7310
        %v7394 = vsub.f32 %v7234, %v7312
        %v7395 = vsub.f32 %v7235, %v7314
        %v7396 = vsub.f32 %v7236, %v7316
        %v7397 = vsub.f32 %v7237, %v7318
        %v7398 = vsub.f32 %v7238, %v7320
        %v7399 = vsub.f32 %v7239, %v7322
        %v7400 = vsub.f32 %v7240, %v7324
        %v7401 = vsub.f32 %v7241, %v7326
        %v7402 = vsub.f32 %v7242, %v7328
        %v7403 = vsub.f32 %v7243, %v7330
        %v7404 = vsub.f32 %v7244, %v7332
        %v7405 = vsub.f32 %v7245, %v7334
        %v7406 = vsub.f32 %v7246, %v7336
        %v7407 = vsub.f32 %v7247, %v7338
        %v7408 = vsub.f32 %v7248, %v7340
        %v7409 = vsub.f32 %v7249, %v7342
        %v7410 = vsub.f32 %v7250, %v7344
        %v7411 = vsub.f32 %v7251, %v7346
        %v7412 = vsub.f32 %v7252, %v7348
        %v7413 = vmul.f32 %v7381, 0.5
        %v7414 = vmul.f32 %v7382, 0.5
        %v7415 = vmul.f32 %v7383, 0.5
        %v7416 = vmul.f32 %v7384, 0.5
        %v7417 = vmul.f32 %v7385, 0.5
        %v7418 = vmul.f32 %v7386, 0.5
        %v7419 = vmul.f32 %v7387, 0.5
        %v7420 = vmul.f32 %v7388, 0.5
        %v7421 = vmul.f32 %v7389, 0.5
        %v7422 = vmul.f32 %v7390, 0.5
        %v7423 = vmul.f32 %v7391, 0.5
        %v7424 = vmul.f32 %v7392, 0.5
        %v7425 = vmul.f32 %v7393, 0.5
        %v7426 = vmul.f32 %v7394, 0.5
        %v7427 = vmul.f32 %v7395, 0.5
        %v7428 = vmul.f32 %v7396, 0.5
        %v7429 = vmul.f32 %v7397, 0.5
        %v7430 = vmul.f32 %v7398, 0.5
        %v7431 = vmul.f32 %v7399, 0.5
        %v7432 = vmul.f32 %v7400, 0.5
        %v7433 = vmul.f32 %v7401, 0.5
        %v7434 = vmul.f32 %v7402, 0.5
        %v7435 = vmul.f32 %v7403, 0.5
        %v7436 = vmul.f32 %v7404, 0.5
        %v7437 = vmul.f32 %v7405, 0.5
        %v7438 = vmul.f32 %v7406, 0.5
        %v7439 = vmul.f32 %v7407, 0.5
        %v7440 = vmul.f32 %v7408, 0.5
        %v7441 = vmul.f32 %v7409, 0.5
        %v7442 = vmul.f32 %v7410, 0.5
        %v7443 = vmul.f32 %v7411, 0.5
        %v7444 = vmul.f32 %v7412, 0.5
        %7477 = vrot.lane.b32.xlu0 %v7413, 120
        %v7478 = vpop.permute.xlu0 %7477
        %7479 = vrot.lane.b32.xlu0 %v7414, 120
        %v7480 = vpop.permute.xlu0 %7479
        %7481 = vrot.lane.b32.xlu0 %v7415, 120
        %v7482 = vpop.permute.xlu0 %7481
        %7483 = vrot.lane.b32.xlu0 %v7416, 120
        %v7484 = vpop.permute.xlu0 %7483
        %7485 = vrot.lane.b32.xlu0 %v7417, 120
        %v7486 = vpop.permute.xlu0 %7485
        %7487 = vrot.lane.b32.xlu0 %v7418, 120
        %v7488 = vpop.permute.xlu0 %7487
        %7489 = vrot.lane.b32.xlu0 %v7419, 120
        %v7490 = vpop.permute.xlu0 %7489
        %7491 = vrot.lane.b32.xlu0 %v7420, 120
        %v7492 = vpop.permute.xlu0 %7491
        %7493 = vrot.lane.b32.xlu0 %v7421, 120
        %v7494 = vpop.permute.xlu0 %7493
        %7495 = vrot.lane.b32.xlu0 %v7422, 120
        %v7496 = vpop.permute.xlu0 %7495
        %7497 = vrot.lane.b32.xlu0 %v7423, 120
        %v7498 = vpop.permute.xlu0 %7497
        %7499 = vrot.lane.b32.xlu0 %v7424, 120
        %v7500 = vpop.permute.xlu0 %7499
        %7501 = vrot.lane.b32.xlu0 %v7425, 120
        %v7502 = vpop.permute.xlu0 %7501
        %7503 = vrot.lane.b32.xlu0 %v7426, 120
        %v7504 = vpop.permute.xlu0 %7503
        %7505 = vrot.lane.b32.xlu0 %v7427, 120
        %v7506 = vpop.permute.xlu0 %7505
        %7507 = vrot.lane.b32.xlu0 %v7428, 120
        %v7508 = vpop.permute.xlu0 %7507
        %7509 = vrot.lane.b32.xlu0 %v7429, 120
        %v7510 = vpop.permute.xlu0 %7509
        %7511 = vrot.lane.b32.xlu0 %v7430, 120
        %v7512 = vpop.permute.xlu0 %7511
        %7513 = vrot.lane.b32.xlu0 %v7431, 120
        %v7514 = vpop.permute.xlu0 %7513
        %7515 = vrot.lane.b32.xlu0 %v7432, 120
        %v7516 = vpop.permute.xlu0 %7515
        %7517 = vrot.lane.b32.xlu0 %v7433, 120
        %v7518 = vpop.permute.xlu0 %7517
        %7519 = vrot.lane.b32.xlu0 %v7434, 120
        %v7520 = vpop.permute.xlu0 %7519
        %7521 = vrot.lane.b32.xlu0 %v7435, 120
        %v7522 = vpop.permute.xlu0 %7521
        %7523 = vrot.lane.b32.xlu0 %v7436, 120
        %v7524 = vpop.permute.xlu0 %7523
        %7525 = vrot.lane.b32.xlu0 %v7437, 120
        %v7526 = vpop.permute.xlu0 %7525
        %7527 = vrot.lane.b32.xlu0 %v7438, 120
        %v7528 = vpop.permute.xlu0 %7527
        %7529 = vrot.lane.b32.xlu0 %v7439, 120
        %v7530 = vpop.permute.xlu0 %7529
        %7531 = vrot.lane.b32.xlu0 %v7440, 120
        %v7532 = vpop.permute.xlu0 %7531
        %7533 = vrot.lane.b32.xlu0 %v7441, 120
        %v7534 = vpop.permute.xlu0 %7533
        %7535 = vrot.lane.b32.xlu0 %v7442, 120
        %v7536 = vpop.permute.xlu0 %7535
        %7537 = vrot.lane.b32.xlu0 %v7443, 120
        %v7538 = vpop.permute.xlu0 %7537
        %7539 = vrot.lane.b32.xlu0 %v7444, 120
        %v7540 = vpop.permute.xlu0 %7539
        %v7573 = vadd.f32 %v7221, %v7478
        %v7574 = vadd.f32 %v7222, %v7480
        %v7575 = vadd.f32 %v7223, %v7482
        %v7576 = vadd.f32 %v7224, %v7484
        %v7577 = vadd.f32 %v7225, %v7486
        %v7578 = vadd.f32 %v7226, %v7488
        %v7579 = vadd.f32 %v7227, %v7490
        %v7580 = vadd.f32 %v7228, %v7492
        %v7581 = vadd.f32 %v7229, %v7494
        %v7582 = vadd.f32 %v7230, %v7496
        %v7583 = vadd.f32 %v7231, %v7498
        %v7584 = vadd.f32 %v7232, %v7500
        %v7585 = vadd.f32 %v7233, %v7502
        %v7586 = vadd.f32 %v7234, %v7504
        %v7587 = vadd.f32 %v7235, %v7506
        %v7588 = vadd.f32 %v7236, %v7508
        %v7589 = vadd.f32 %v7237, %v7510
        %v7590 = vadd.f32 %v7238, %v7512
        %v7591 = vadd.f32 %v7239, %v7514
        %v7592 = vadd.f32 %v7240, %v7516
        %v7593 = vadd.f32 %v7241, %v7518
        %v7594 = vadd.f32 %v7242, %v7520
        %v7595 = vadd.f32 %v7243, %v7522
        %v7596 = vadd.f32 %v7244, %v7524
        %v7597 = vadd.f32 %v7245, %v7526
        %v7598 = vadd.f32 %v7246, %v7528
        %v7599 = vadd.f32 %v7247, %v7530
        %v7600 = vadd.f32 %v7248, %v7532
        %v7601 = vadd.f32 %v7249, %v7534
        %v7602 = vadd.f32 %v7250, %v7536
        %v7603 = vadd.f32 %v7251, %v7538
        %v7604 = vadd.f32 %v7252, %v7540
        %v7605 = vmul.f32 %v6935, %v7381
        %v7606 = vmul.f32 %v6938, %v7382
        %v7607 = vmul.f32 %v6943, %v7383
        %v7608 = vmul.f32 %v6946, %v7384
        %v7609 = vmul.f32 %v6951, %v7385
        %v7610 = vmul.f32 %v6954, %v7386
        %v7611 = vmul.f32 %v6959, %v7387
        %v7612 = vmul.f32 %v6962, %v7388
        %v7613 = vmul.f32 %v6967, %v7389
        %v7614 = vmul.f32 %v6970, %v7390
        %v7615 = vmul.f32 %v6975, %v7391
        %v7616 = vmul.f32 %v6978, %v7392
        %v7617 = vmul.f32 %v6983, %v7393
        %v7618 = vmul.f32 %v6986, %v7394
        %v7619 = vmul.f32 %v6991, %v7395
        %v7620 = vmul.f32 %v6994, %v7396
        %v7621 = vmul.f32 %v6999, %v7397
        %v7622 = vmul.f32 %v7002, %v7398
        %v7623 = vmul.f32 %v7007, %v7399
        %v7624 = vmul.f32 %v7010, %v7400
        %v7625 = vmul.f32 %v7015, %v7401
        %v7626 = vmul.f32 %v7018, %v7402
        %v7627 = vmul.f32 %v7023, %v7403
        %v7628 = vmul.f32 %v7026, %v7404
        %v7629 = vmul.f32 %v7031, %v7405
        %v7630 = vmul.f32 %v7034, %v7406
        %v7631 = vmul.f32 %v7039, %v7407
        %v7632 = vmul.f32 %v7042, %v7408
        %v7633 = vmul.f32 %v7047, %v7409
        %v7634 = vmul.f32 %v7050, %v7410
        %v7635 = vmul.f32 %v7055, %v7411
        %v7636 = vmul.f32 %v7058, %v7412
        %7669 = vrot.lane.b32.xlu0 %v7573, 8
        %v7670 = vpop.permute.xlu0 %7669
        %7671 = vrot.lane.b32.xlu0 %v7574, 8
        %v7672 = vpop.permute.xlu0 %7671
        %7673 = vrot.lane.b32.xlu0 %v7575, 8
        %v7674 = vpop.permute.xlu0 %7673
        %7675 = vrot.lane.b32.xlu0 %v7576, 8
        %v7676 = vpop.permute.xlu0 %7675
        %7677 = vrot.lane.b32.xlu0 %v7577, 8
        %v7678 = vpop.permute.xlu0 %7677
        %7679 = vrot.lane.b32.xlu0 %v7578, 8
        %v7680 = vpop.permute.xlu0 %7679
        %7681 = vrot.lane.b32.xlu0 %v7579, 8
        %v7682 = vpop.permute.xlu0 %7681
        %7683 = vrot.lane.b32.xlu0 %v7580, 8
        %v7684 = vpop.permute.xlu0 %7683
        %7685 = vrot.lane.b32.xlu0 %v7581, 8
        %v7686 = vpop.permute.xlu0 %7685
        %7687 = vrot.lane.b32.xlu0 %v7582, 8
        %v7688 = vpop.permute.xlu0 %7687
        %7689 = vrot.lane.b32.xlu0 %v7583, 8
        %v7690 = vpop.permute.xlu0 %7689
        %7691 = vrot.lane.b32.xlu0 %v7584, 8
        %v7692 = vpop.permute.xlu0 %7691
        %7693 = vrot.lane.b32.xlu0 %v7585, 8
        %v7694 = vpop.permute.xlu0 %7693
        %7695 = vrot.lane.b32.xlu0 %v7586, 8
        %v7696 = vpop.permute.xlu0 %7695
        %7697 = vrot.lane.b32.xlu0 %v7587, 8
        %v7698 = vpop.permute.xlu0 %7697
        %7699 = vrot.lane.b32.xlu0 %v7588, 8
        %v7700 = vpop.permute.xlu0 %7699
        %7701 = vrot.lane.b32.xlu0 %v7589, 8
        %v7702 = vpop.permute.xlu0 %7701
        %7703 = vrot.lane.b32.xlu0 %v7590, 8
        %v7704 = vpop.permute.xlu0 %7703
        %7705 = vrot.lane.b32.xlu0 %v7591, 8
        %v7706 = vpop.permute.xlu0 %7705
        %7707 = vrot.lane.b32.xlu0 %v7592, 8
        %v7708 = vpop.permute.xlu0 %7707
        %7709 = vrot.lane.b32.xlu0 %v7593, 8
        %v7710 = vpop.permute.xlu0 %7709
        %7711 = vrot.lane.b32.xlu0 %v7594, 8
        %v7712 = vpop.permute.xlu0 %7711
        %7713 = vrot.lane.b32.xlu0 %v7595, 8
        %v7714 = vpop.permute.xlu0 %7713
        %7715 = vrot.lane.b32.xlu0 %v7596, 8
        %v7716 = vpop.permute.xlu0 %7715
        %7717 = vrot.lane.b32.xlu0 %v7597, 8
        %v7718 = vpop.permute.xlu0 %7717
        %7719 = vrot.lane.b32.xlu0 %v7598, 8
        %v7720 = vpop.permute.xlu0 %7719
        %7721 = vrot.lane.b32.xlu0 %v7599, 8
        %v7722 = vpop.permute.xlu0 %7721
        %7723 = vrot.lane.b32.xlu0 %v7600, 8
        %v7724 = vpop.permute.xlu0 %7723
        %7725 = vrot.lane.b32.xlu0 %v7601, 8
        %v7726 = vpop.permute.xlu0 %7725
        %7727 = vrot.lane.b32.xlu0 %v7602, 8
        %v7728 = vpop.permute.xlu0 %7727
        %7729 = vrot.lane.b32.xlu0 %v7603, 8
        %v7730 = vpop.permute.xlu0 %7729
        %7731 = vrot.lane.b32.xlu0 %v7604, 8
        %v7732 = vpop.permute.xlu0 %7731
        %v7765 = vadd.f32 %v7605, %v7670
        %v7766 = vadd.f32 %v7606, %v7672
        %v7767 = vadd.f32 %v7607, %v7674
        %v7768 = vadd.f32 %v7608, %v7676
        %v7769 = vadd.f32 %v7609, %v7678
        %v7770 = vadd.f32 %v7610, %v7680
        %v7771 = vadd.f32 %v7611, %v7682
        %v7772 = vadd.f32 %v7612, %v7684
        %v7773 = vadd.f32 %v7613, %v7686
        %v7774 = vadd.f32 %v7614, %v7688
        %v7775 = vadd.f32 %v7615, %v7690
        %v7776 = vadd.f32 %v7616, %v7692
        %v7777 = vadd.f32 %v7617, %v7694
        %v7778 = vadd.f32 %v7618, %v7696
        %v7779 = vadd.f32 %v7619, %v7698
        %v7780 = vadd.f32 %v7620, %v7700
        %v7781 = vadd.f32 %v7621, %v7702
        %v7782 = vadd.f32 %v7622, %v7704
        %v7783 = vadd.f32 %v7623, %v7706
        %v7784 = vadd.f32 %v7624, %v7708
        %v7785 = vadd.f32 %v7625, %v7710
        %v7786 = vadd.f32 %v7626, %v7712
        %v7787 = vadd.f32 %v7627, %v7714
        %v7788 = vadd.f32 %v7628, %v7716
        %v7789 = vadd.f32 %v7629, %v7718
        %v7790 = vadd.f32 %v7630, %v7720
        %v7791 = vadd.f32 %v7631, %v7722
        %v7792 = vadd.f32 %v7632, %v7724
        %v7793 = vadd.f32 %v7633, %v7726
        %v7794 = vadd.f32 %v7634, %v7728
        %v7795 = vadd.f32 %v7635, %v7730
        %v7796 = vadd.f32 %v7636, %v7732
        %v7797 = vmul.f32 %v6935, 1.442695
        %v7798 = vpow.pop %v7797
        %v7799 = vmul.f32 %v6938, 1.442695
        %v7800 = vpow.pop %v7799
        %v7801 = vmul.f32 %v6943, 1.442695
        %v7802 = vpow.pop %v7801
        %v7803 = vmul.f32 %v6946, 1.442695
        %v7804 = vpow.pop %v7803
        %v7805 = vmul.f32 %v6951, 1.442695
        %v7806 = vpow.pop %v7805
        %v7807 = vmul.f32 %v6954, 1.442695
        %v7808 = vpow.pop %v7807
        %v7809 = vmul.f32 %v6959, 1.442695
        %v7810 = vpow.pop %v7809
        %v7811 = vmul.f32 %v6962, 1.442695
        %v7812 = vpow.pop %v7811
        %v7813 = vmul.f32 %v6967, 1.442695
        %v7814 = vpow.pop %v7813
        %v7815 = vmul.f32 %v6970, 1.442695
        %v7816 = vpow.pop %v7815
        %v7817 = vmul.f32 %v6975, 1.442695
        %v7818 = vpow.pop %v7817
        %v7819 = vmul.f32 %v6978, 1.442695
        %v7820 = vpow.pop %v7819
        %v7821 = vmul.f32 %v6983, 1.442695
        %v7822 = vpow.pop %v7821
        %v7823 = vmul.f32 %v6986, 1.442695
        %v7824 = vpow.pop %v7823
        %v7825 = vmul.f32 %v6991, 1.442695
        %v7826 = vpow.pop %v7825
        %v7827 = vmul.f32 %v6994, 1.442695
        %v7828 = vpow.pop %v7827
        %v7829 = vmul.f32 %v6999, 1.442695
        %v7830 = vpow.pop %v7829
        %v7831 = vmul.f32 %v7002, 1.442695
        %v7832 = vpow.pop %v7831
        %v7833 = vmul.f32 %v7007, 1.442695
        %v7834 = vpow.pop %v7833
        %v7835 = vmul.f32 %v7010, 1.442695
        %v7836 = vpow.pop %v7835
        %v7837 = vmul.f32 %v7015, 1.442695
        %v7838 = vpow.pop %v7837
        %v7839 = vmul.f32 %v7018, 1.442695
        %v7840 = vpow.pop %v7839
        %v7841 = vmul.f32 %v7023, 1.442695
        %v7842 = vpow.pop %v7841
        %v7843 = vmul.f32 %v7026, 1.442695
        %v7844 = vpow.pop %v7843
        %v7845 = vmul.f32 %v7031, 1.442695
        %v7846 = vpow.pop %v7845
        %v7847 = vmul.f32 %v7034, 1.442695
        %v7848 = vpow.pop %v7847
        %v7849 = vmul.f32 %v7039, 1.442695
        %v7850 = vpow.pop %v7849
        %v7851 = vmul.f32 %v7042, 1.442695
        %v7852 = vpow.pop %v7851
        %v7853 = vmul.f32 %v7047, 1.442695
        %v7854 = vpow.pop %v7853
        %v7855 = vmul.f32 %v7050, 1.442695
        %v7856 = vpow.pop %v7855
        %v7857 = vmul.f32 %v7055, 1.442695
        %v7858 = vpow.pop %v7857
        %v7859 = vmul.f32 %v7058, 1.442695
        %v7860 = vpow.pop %v7859
        %7893 = vrot.lane.b32.xlu0 %v7381, 8
        %v7894 = vpop.permute.xlu0 %7893
        %7895 = vrot.lane.b32.xlu0 %v7382, 8
        %v7896 = vpop.permute.xlu0 %7895
        %7897 = vrot.lane.b32.xlu0 %v7383, 8
        %v7898 = vpop.permute.xlu0 %7897
        %7899 = vrot.lane.b32.xlu0 %v7384, 8
        %v7900 = vpop.permute.xlu0 %7899
        %7901 = vrot.lane.b32.xlu0 %v7385, 8
        %v7902 = vpop.permute.xlu0 %7901
        %7903 = vrot.lane.b32.xlu0 %v7386, 8
        %v7904 = vpop.permute.xlu0 %7903
        %7905 = vrot.lane.b32.xlu0 %v7387, 8
        %v7906 = vpop.permute.xlu0 %7905
        %7907 = vrot.lane.b32.xlu0 %v7388, 8
        %v7908 = vpop.permute.xlu0 %7907
        %7909 = vrot.lane.b32.xlu0 %v7389, 8
        %v7910 = vpop.permute.xlu0 %7909
        %7911 = vrot.lane.b32.xlu0 %v7390, 8
        %v7912 = vpop.permute.xlu0 %7911
        %7913 = vrot.lane.b32.xlu0 %v7391, 8
        %v7914 = vpop.permute.xlu0 %7913
        %7915 = vrot.lane.b32.xlu0 %v7392, 8
        %v7916 = vpop.permute.xlu0 %7915
        %7917 = vrot.lane.b32.xlu0 %v7393, 8
        %v7918 = vpop.permute.xlu0 %7917
        %7919 = vrot.lane.b32.xlu0 %v7394, 8
        %v7920 = vpop.permute.xlu0 %7919
        %7921 = vrot.lane.b32.xlu0 %v7395, 8
        %v7922 = vpop.permute.xlu0 %7921
        %7923 = vrot.lane.b32.xlu0 %v7396, 8
        %v7924 = vpop.permute.xlu0 %7923
        %7925 = vrot.lane.b32.xlu0 %v7397, 8
        %v7926 = vpop.permute.xlu0 %7925
        %7927 = vrot.lane.b32.xlu0 %v7398, 8
        %v7928 = vpop.permute.xlu0 %7927
        %7929 = vrot.lane.b32.xlu0 %v7399, 8
        %v7930 = vpop.permute.xlu0 %7929
        %7931 = vrot.lane.b32.xlu0 %v7400, 8
        %v7932 = vpop.permute.xlu0 %7931
        %7933 = vrot.lane.b32.xlu0 %v7401, 8
        %v7934 = vpop.permute.xlu0 %7933
        %7935 = vrot.lane.b32.xlu0 %v7402, 8
        %v7936 = vpop.permute.xlu0 %7935
        %7937 = vrot.lane.b32.xlu0 %v7403, 8
        %v7938 = vpop.permute.xlu0 %7937
        %7939 = vrot.lane.b32.xlu0 %v7404, 8
        %v7940 = vpop.permute.xlu0 %7939
        %7941 = vrot.lane.b32.xlu0 %v7405, 8
        %v7942 = vpop.permute.xlu0 %7941
        %7943 = vrot.lane.b32.xlu0 %v7406, 8
        %v7944 = vpop.permute.xlu0 %7943
        %7945 = vrot.lane.b32.xlu0 %v7407, 8
        %v7946 = vpop.permute.xlu0 %7945
        %7947 = vrot.lane.b32.xlu0 %v7408, 8
        %v7948 = vpop.permute.xlu0 %7947
        %7949 = vrot.lane.b32.xlu0 %v7409, 8
        %v7950 = vpop.permute.xlu0 %7949
        %7951 = vrot.lane.b32.xlu0 %v7410, 8
        %v7952 = vpop.permute.xlu0 %7951
        %7953 = vrot.lane.b32.xlu0 %v7411, 8
        %v7954 = vpop.permute.xlu0 %7953
        %7955 = vrot.lane.b32.xlu0 %v7412, 8
        %v7956 = vpop.permute.xlu0 %7955
        %v7989 = vmul.f32 %v7798, %v7894
        %v7990 = vmul.f32 %v7800, %v7896
        %v7991 = vmul.f32 %v7802, %v7898
        %v7992 = vmul.f32 %v7804, %v7900
        %v7993 = vmul.f32 %v7806, %v7902
        %v7994 = vmul.f32 %v7808, %v7904
        %v7995 = vmul.f32 %v7810, %v7906
        %v7996 = vmul.f32 %v7812, %v7908
        %v7997 = vmul.f32 %v7814, %v7910
        %v7998 = vmul.f32 %v7816, %v7912
        %v7999 = vmul.f32 %v7818, %v7914
        %v8000 = vmul.f32 %v7820, %v7916
        %v8001 = vmul.f32 %v7822, %v7918
        %v8002 = vmul.f32 %v7824, %v7920
        %v8003 = vmul.f32 %v7826, %v7922
        %v8004 = vmul.f32 %v7828, %v7924
        %v8005 = vmul.f32 %v7830, %v7926
        %v8006 = vmul.f32 %v7832, %v7928
        %v8007 = vmul.f32 %v7834, %v7930
        %v8008 = vmul.f32 %v7836, %v7932
        %v8009 = vmul.f32 %v7838, %v7934
        %v8010 = vmul.f32 %v7840, %v7936
        %v8011 = vmul.f32 %v7842, %v7938
        %v8012 = vmul.f32 %v7844, %v7940
        %v8013 = vmul.f32 %v7846, %v7942
        %v8014 = vmul.f32 %v7848, %v7944
        %v8015 = vmul.f32 %v7850, %v7946
        %v8016 = vmul.f32 %v7852, %v7948
        %v8017 = vmul.f32 %v7854, %v7950
        %v8018 = vmul.f32 %v7856, %v7952
        %v8019 = vmul.f32 %v7858, %v7954
        %v8020 = vmul.f32 %v7860, %v7956
        %v8021 = vmul.f32 %v7989, 0.5
        %v8022 = vmul.f32 %v7990, 0.5
        %v8023 = vmul.f32 %v7991, 0.5
        %v8024 = vmul.f32 %v7992, 0.5
        %v8025 = vmul.f32 %v7993, 0.5
        %v8026 = vmul.f32 %v7994, 0.5
        %v8027 = vmul.f32 %v7995, 0.5
        %v8028 = vmul.f32 %v7996, 0.5
        %v8029 = vmul.f32 %v7997, 0.5
        %v8030 = vmul.f32 %v7998, 0.5
        %v8031 = vmul.f32 %v7999, 0.5
        %v8032 = vmul.f32 %v8000, 0.5
        %v8033 = vmul.f32 %v8001, 0.5
        %v8034 = vmul.f32 %v8002, 0.5
        %v8035 = vmul.f32 %v8003, 0.5
        %v8036 = vmul.f32 %v8004, 0.5
        %v8037 = vmul.f32 %v8005, 0.5
        %v8038 = vmul.f32 %v8006, 0.5
        %v8039 = vmul.f32 %v8007, 0.5
        %v8040 = vmul.f32 %v8008, 0.5
        %v8041 = vmul.f32 %v8009, 0.5
        %v8042 = vmul.f32 %v8010, 0.5
        %v8043 = vmul.f32 %v8011, 0.5
        %v8044 = vmul.f32 %v8012, 0.5
        %v8045 = vmul.f32 %v8013, 0.5
        %v8046 = vmul.f32 %v8014, 0.5
        %v8047 = vmul.f32 %v8015, 0.5
        %v8048 = vmul.f32 %v8016, 0.5
        %v8049 = vmul.f32 %v8017, 0.5
        %v8050 = vmul.f32 %v8018, 0.5
        %v8051 = vmul.f32 %v8019, 0.5
        %v8052 = vmul.f32 %v8020, 0.5
        %8085 = vrot.lane.b32.xlu0 %v8021, 120
        %v8086 = vpop.permute.xlu0 %8085
        %8087 = vrot.lane.b32.xlu0 %v8022, 120
        %v8088 = vpop.permute.xlu0 %8087
        %8089 = vrot.lane.b32.xlu0 %v8023, 120
        %v8090 = vpop.permute.xlu0 %8089
        %8091 = vrot.lane.b32.xlu0 %v8024, 120
        %v8092 = vpop.permute.xlu0 %8091
        %8093 = vrot.lane.b32.xlu0 %v8025, 120
        %v8094 = vpop.permute.xlu0 %8093
        %8095 = vrot.lane.b32.xlu0 %v8026, 120
        %v8096 = vpop.permute.xlu0 %8095
        %8097 = vrot.lane.b32.xlu0 %v8027, 120
        %v8098 = vpop.permute.xlu0 %8097
        %8099 = vrot.lane.b32.xlu0 %v8028, 120
        %v8100 = vpop.permute.xlu0 %8099
        %8101 = vrot.lane.b32.xlu0 %v8029, 120
        %v8102 = vpop.permute.xlu0 %8101
        %8103 = vrot.lane.b32.xlu0 %v8030, 120
        %v8104 = vpop.permute.xlu0 %8103
        %8105 = vrot.lane.b32.xlu0 %v8031, 120
        %v8106 = vpop.permute.xlu0 %8105
        %8107 = vrot.lane.b32.xlu0 %v8032, 120
        %v8108 = vpop.permute.xlu0 %8107
        %8109 = vrot.lane.b32.xlu0 %v8033, 120
        %v8110 = vpop.permute.xlu0 %8109
        %8111 = vrot.lane.b32.xlu0 %v8034, 120
        %v8112 = vpop.permute.xlu0 %8111
        %8113 = vrot.lane.b32.xlu0 %v8035, 120
        %v8114 = vpop.permute.xlu0 %8113
        %8115 = vrot.lane.b32.xlu0 %v8036, 120
        %v8116 = vpop.permute.xlu0 %8115
        %8117 = vrot.lane.b32.xlu0 %v8037, 120
        %v8118 = vpop.permute.xlu0 %8117
        %8119 = vrot.lane.b32.xlu0 %v8038, 120
        %v8120 = vpop.permute.xlu0 %8119
        %8121 = vrot.lane.b32.xlu0 %v8039, 120
        %v8122 = vpop.permute.xlu0 %8121
        %8123 = vrot.lane.b32.xlu0 %v8040, 120
        %v8124 = vpop.permute.xlu0 %8123
        %8125 = vrot.lane.b32.xlu0 %v8041, 120
        %v8126 = vpop.permute.xlu0 %8125
        %8127 = vrot.lane.b32.xlu0 %v8042, 120
        %v8128 = vpop.permute.xlu0 %8127
        %8129 = vrot.lane.b32.xlu0 %v8043, 120
        %v8130 = vpop.permute.xlu0 %8129
        %8131 = vrot.lane.b32.xlu0 %v8044, 120
        %v8132 = vpop.permute.xlu0 %8131
        %8133 = vrot.lane.b32.xlu0 %v8045, 120
        %v8134 = vpop.permute.xlu0 %8133
        %8135 = vrot.lane.b32.xlu0 %v8046, 120
        %v8136 = vpop.permute.xlu0 %8135
        %8137 = vrot.lane.b32.xlu0 %v8047, 120
        %v8138 = vpop.permute.xlu0 %8137
        %8139 = vrot.lane.b32.xlu0 %v8048, 120
        %v8140 = vpop.permute.xlu0 %8139
        %8141 = vrot.lane.b32.xlu0 %v8049, 120
        %v8142 = vpop.permute.xlu0 %8141
        %8143 = vrot.lane.b32.xlu0 %v8050, 120
        %v8144 = vpop.permute.xlu0 %8143
        %8145 = vrot.lane.b32.xlu0 %v8051, 120
        %v8146 = vpop.permute.xlu0 %8145
        %8147 = vrot.lane.b32.xlu0 %v8052, 120
        %v8148 = vpop.permute.xlu0 %8147
        %v8181 = vsub.f32 %v7765, %v8086
        %v8182 = vsub.f32 %v7766, %v8088
        %v8183 = vsub.f32 %v7767, %v8090
        %v8184 = vsub.f32 %v7768, %v8092
        %v8185 = vsub.f32 %v7769, %v8094
        %v8186 = vsub.f32 %v7770, %v8096
        %v8187 = vsub.f32 %v7771, %v8098
        %v8188 = vsub.f32 %v7772, %v8100
        %v8189 = vsub.f32 %v7773, %v8102
        %v8190 = vsub.f32 %v7774, %v8104
        %v8191 = vsub.f32 %v7775, %v8106
        %v8192 = vsub.f32 %v7776, %v8108
        %v8193 = vsub.f32 %v7777, %v8110
        %v8194 = vsub.f32 %v7778, %v8112
        %v8195 = vsub.f32 %v7779, %v8114
        %v8196 = vsub.f32 %v7780, %v8116
        %v8197 = vsub.f32 %v7781, %v8118
        %v8198 = vsub.f32 %v7782, %v8120
        %v8199 = vsub.f32 %v7783, %v8122
        %v8200 = vsub.f32 %v7784, %v8124
        %v8201 = vsub.f32 %v7785, %v8126
        %v8202 = vsub.f32 %v7786, %v8128
        %v8203 = vsub.f32 %v7787, %v8130
        %v8204 = vsub.f32 %v7788, %v8132
        %v8205 = vsub.f32 %v7789, %v8134
        %v8206 = vsub.f32 %v7790, %v8136
        %v8207 = vsub.f32 %v7791, %v8138
        %v8208 = vsub.f32 %v7792, %v8140
        %v8209 = vsub.f32 %v7793, %v8142
        %v8210 = vsub.f32 %v7794, %v8144
        %v8211 = vsub.f32 %v7795, %v8146
        %v8212 = vsub.f32 %v7796, %v8148
        %v8213 = vadd.f32 %v7765, %v8086
        %v8214 = vadd.f32 %v7766, %v8088
        %v8215 = vadd.f32 %v7767, %v8090
        %v8216 = vadd.f32 %v7768, %v8092
        %v8217 = vadd.f32 %v7769, %v8094
        %v8218 = vadd.f32 %v7770, %v8096
        %v8219 = vadd.f32 %v7771, %v8098
        %v8220 = vadd.f32 %v7772, %v8100
        %v8221 = vadd.f32 %v7773, %v8102
        %v8222 = vadd.f32 %v7774, %v8104
        %v8223 = vadd.f32 %v7775, %v8106
        %v8224 = vadd.f32 %v7776, %v8108
        %v8225 = vadd.f32 %v7777, %v8110
        %v8226 = vadd.f32 %v7778, %v8112
        %v8227 = vadd.f32 %v7779, %v8114
        %v8228 = vadd.f32 %v7780, %v8116
        %v8229 = vadd.f32 %v7781, %v8118
        %v8230 = vadd.f32 %v7782, %v8120
        %v8231 = vadd.f32 %v7783, %v8122
        %v8232 = vadd.f32 %v7784, %v8124
        %v8233 = vadd.f32 %v7785, %v8126
        %v8234 = vadd.f32 %v7786, %v8128
        %v8235 = vadd.f32 %v7787, %v8130
        %v8236 = vadd.f32 %v7788, %v8132
        %v8237 = vadd.f32 %v7789, %v8134
        %v8238 = vadd.f32 %v7790, %v8136
        %v8239 = vadd.f32 %v7791, %v8138
        %v8240 = vadd.f32 %v7792, %v8140
        %v8241 = vadd.f32 %v7793, %v8142
        %v8242 = vadd.f32 %v7794, %v8144
        %v8243 = vadd.f32 %v7795, %v8146
        %v8244 = vadd.f32 %v7796, %v8148
        %8277 = vrot.lane.b32.xlu0 %v8181, 120
        %v8278 = vpop.permute.xlu0 %8277
        %8279 = vrot.lane.b32.xlu0 %v8182, 120
        %v8280 = vpop.permute.xlu0 %8279
        %8281 = vrot.lane.b32.xlu0 %v8183, 120
        %v8282 = vpop.permute.xlu0 %8281
        %8283 = vrot.lane.b32.xlu0 %v8184, 120
        %v8284 = vpop.permute.xlu0 %8283
        %8285 = vrot.lane.b32.xlu0 %v8185, 120
        %v8286 = vpop.permute.xlu0 %8285
        %8287 = vrot.lane.b32.xlu0 %v8186, 120
        %v8288 = vpop.permute.xlu0 %8287
        %8289 = vrot.lane.b32.xlu0 %v8187, 120
        %v8290 = vpop.permute.xlu0 %8289
        %8291 = vrot.lane.b32.xlu0 %v8188, 120
        %v8292 = vpop.permute.xlu0 %8291
        %8293 = vrot.lane.b32.xlu0 %v8189, 120
        %v8294 = vpop.permute.xlu0 %8293
        %8295 = vrot.lane.b32.xlu0 %v8190, 120
        %v8296 = vpop.permute.xlu0 %8295
        %8297 = vrot.lane.b32.xlu0 %v8191, 120
        %v8298 = vpop.permute.xlu0 %8297
        %8299 = vrot.lane.b32.xlu0 %v8192, 120
        %v8300 = vpop.permute.xlu0 %8299
        %8301 = vrot.lane.b32.xlu0 %v8193, 120
        %v8302 = vpop.permute.xlu0 %8301
        %8303 = vrot.lane.b32.xlu0 %v8194, 120
        %v8304 = vpop.permute.xlu0 %8303
        %8305 = vrot.lane.b32.xlu0 %v8195, 120
        %v8306 = vpop.permute.xlu0 %8305
        %8307 = vrot.lane.b32.xlu0 %v8196, 120
        %v8308 = vpop.permute.xlu0 %8307
        %8309 = vrot.lane.b32.xlu0 %v8197, 120
        %v8310 = vpop.permute.xlu0 %8309
        %8311 = vrot.lane.b32.xlu0 %v8198, 120
        %v8312 = vpop.permute.xlu0 %8311
        %8313 = vrot.lane.b32.xlu0 %v8199, 120
        %v8314 = vpop.permute.xlu0 %8313
        %8315 = vrot.lane.b32.xlu0 %v8200, 120
        %v8316 = vpop.permute.xlu0 %8315
        %8317 = vrot.lane.b32.xlu0 %v8201, 120
        %v8318 = vpop.permute.xlu0 %8317
        %8319 = vrot.lane.b32.xlu0 %v8202, 120
        %v8320 = vpop.permute.xlu0 %8319
        %8321 = vrot.lane.b32.xlu0 %v8203, 120
        %v8322 = vpop.permute.xlu0 %8321
        %8323 = vrot.lane.b32.xlu0 %v8204, 120
        %v8324 = vpop.permute.xlu0 %8323
        %8325 = vrot.lane.b32.xlu0 %v8205, 120
        %v8326 = vpop.permute.xlu0 %8325
        %8327 = vrot.lane.b32.xlu0 %v8206, 120
        %v8328 = vpop.permute.xlu0 %8327
        %8329 = vrot.lane.b32.xlu0 %v8207, 120
        %v8330 = vpop.permute.xlu0 %8329
        %8331 = vrot.lane.b32.xlu0 %v8208, 120
        %v8332 = vpop.permute.xlu0 %8331
        %8333 = vrot.lane.b32.xlu0 %v8209, 120
        %v8334 = vpop.permute.xlu0 %8333
        %8335 = vrot.lane.b32.xlu0 %v8210, 120
        %v8336 = vpop.permute.xlu0 %8335
        %8337 = vrot.lane.b32.xlu0 %v8211, 120
        %v8338 = vpop.permute.xlu0 %8337
        %8339 = vrot.lane.b32.xlu0 %v8212, 120
        %v8340 = vpop.permute.xlu0 %8339
        %v8373 = vsel %vm4014, %v8278, %v8213
        %v8374 = vsel %vm4014, %v8280, %v8214
        %v8375 = vsel %vm4014, %v8282, %v8215
        %v8376 = vsel %vm4014, %v8284, %v8216
        %v8377 = vsel %vm4014, %v8286, %v8217
        %v8378 = vsel %vm4014, %v8288, %v8218
        %v8379 = vsel %vm4014, %v8290, %v8219
        %v8380 = vsel %vm4014, %v8292, %v8220
        %v8381 = vsel %vm4014, %v8294, %v8221
        %v8382 = vsel %vm4014, %v8296, %v8222
        %v8383 = vsel %vm4014, %v8298, %v8223
        %v8384 = vsel %vm4014, %v8300, %v8224
        %v8385 = vsel %vm4014, %v8302, %v8225
        %v8386 = vsel %vm4014, %v8304, %v8226
        %v8387 = vsel %vm4014, %v8306, %v8227
        %v8388 = vsel %vm4014, %v8308, %v8228
        %v8389 = vsel %vm4014, %v8310, %v8229
        %v8390 = vsel %vm4014, %v8312, %v8230
        %v8391 = vsel %vm4014, %v8314, %v8231
        %v8392 = vsel %vm4014, %v8316, %v8232
        %v8393 = vsel %vm4014, %v8318, %v8233
        %v8394 = vsel %vm4014, %v8320, %v8234
        %v8395 = vsel %vm4014, %v8322, %v8235
        %v8396 = vsel %vm4014, %v8324, %v8236
        %v8397 = vsel %vm4014, %v8326, %v8237
        %v8398 = vsel %vm4014, %v8328, %v8238
        %v8399 = vsel %vm4014, %v8330, %v8239
        %v8400 = vsel %vm4014, %v8332, %v8240
        %v8401 = vsel %vm4014, %v8334, %v8241
        %v8402 = vsel %vm4014, %v8336, %v8242
        %v8403 = vsel %vm4014, %v8338, %v8243
        %v8404 = vsel %vm4014, %v8340, %v8244
        %vm8405 = vcmask 97280
        %v8406 = vsel %vm8405, %v8373, %v8213
        %v8407 = vsel %vm8405, %v8374, %v8214
        %v8408 = vsel %vm8405, %v8375, %v8215
        %v8409 = vsel %vm8405, %v8376, %v8216
        %v8410 = vsel %vm8405, %v8377, %v8217
        %v8411 = vsel %vm8405, %v8378, %v8218
        %v8412 = vsel %vm8405, %v8379, %v8219
        %v8413 = vsel %vm8405, %v8380, %v8220
        %v8414 = vsel %vm8405, %v8381, %v8221
        %v8415 = vsel %vm8405, %v8382, %v8222
        %v8416 = vsel %vm8405, %v8383, %v8223
        %v8417 = vsel %vm8405, %v8384, %v8224
        %v8418 = vsel %vm8405, %v8385, %v8225
        %v8419 = vsel %vm8405, %v8386, %v8226
        %v8420 = vsel %vm8405, %v8387, %v8227
        %v8421 = vsel %vm8405, %v8388, %v8228
        %v8422 = vsel %vm8405, %v8389, %v8229
        %v8423 = vsel %vm8405, %v8390, %v8230
        %v8424 = vsel %vm8405, %v8391, %v8231
        %v8425 = vsel %vm8405, %v8392, %v8232
        %v8426 = vsel %vm8405, %v8393, %v8233
        %v8427 = vsel %vm8405, %v8394, %v8234
        %v8428 = vsel %vm8405, %v8395, %v8235
        %v8429 = vsel %vm8405, %v8396, %v8236
        %v8430 = vsel %vm8405, %v8397, %v8237
        %v8431 = vsel %vm8405, %v8398, %v8238
        %v8432 = vsel %vm8405, %v8399, %v8239
        %v8433 = vsel %vm8405, %v8400, %v8240
        %v8434 = vsel %vm8405, %v8401, %v8241
        %v8435 = vsel %vm8405, %v8402, %v8242
        %v8436 = vsel %vm8405, %v8403, %v8243
        %v8437 = vsel %vm8405, %v8404, %v8244
        %8470 = vrot.lane.b32.xlu0 %v8406, 24
        %v8471 = vpop.permute.xlu0 %8470
        %8472 = vrot.lane.b32.xlu0 %v8407, 24
        %v8473 = vpop.permute.xlu0 %8472
        %8474 = vrot.lane.b32.xlu0 %v8408, 24
        %v8475 = vpop.permute.xlu0 %8474
        %8476 = vrot.lane.b32.xlu0 %v8409, 24
        %v8477 = vpop.permute.xlu0 %8476
        %8478 = vrot.lane.b32.xlu0 %v8410, 24
        %v8479 = vpop.permute.xlu0 %8478
        %8480 = vrot.lane.b32.xlu0 %v8411, 24
        %v8481 = vpop.permute.xlu0 %8480
        %8482 = vrot.lane.b32.xlu0 %v8412, 24
        %v8483 = vpop.permute.xlu0 %8482
        %8484 = vrot.lane.b32.xlu0 %v8413, 24
        %v8485 = vpop.permute.xlu0 %8484
        %8486 = vrot.lane.b32.xlu0 %v8414, 24
        %v8487 = vpop.permute.xlu0 %8486
        %8488 = vrot.lane.b32.xlu0 %v8415, 24
        %v8489 = vpop.permute.xlu0 %8488
        %8490 = vrot.lane.b32.xlu0 %v8416, 24
        %v8491 = vpop.permute.xlu0 %8490
        %8492 = vrot.lane.b32.xlu0 %v8417, 24
        %v8493 = vpop.permute.xlu0 %8492
        %8494 = vrot.lane.b32.xlu0 %v8418, 24
        %v8495 = vpop.permute.xlu0 %8494
        %8496 = vrot.lane.b32.xlu0 %v8419, 24
        %v8497 = vpop.permute.xlu0 %8496
        %8498 = vrot.lane.b32.xlu0 %v8420, 24
        %v8499 = vpop.permute.xlu0 %8498
        %8500 = vrot.lane.b32.xlu0 %v8421, 24
        %v8501 = vpop.permute.xlu0 %8500
        %8502 = vrot.lane.b32.xlu0 %v8422, 24
        %v8503 = vpop.permute.xlu0 %8502
        %8504 = vrot.lane.b32.xlu0 %v8423, 24
        %v8505 = vpop.permute.xlu0 %8504
        %8506 = vrot.lane.b32.xlu0 %v8424, 24
        %v8507 = vpop.permute.xlu0 %8506
        %8508 = vrot.lane.b32.xlu0 %v8425, 24
        %v8509 = vpop.permute.xlu0 %8508
        %8510 = vrot.lane.b32.xlu0 %v8426, 24
        %v8511 = vpop.permute.xlu0 %8510
        %8512 = vrot.lane.b32.xlu0 %v8427, 24
        %v8513 = vpop.permute.xlu0 %8512
        %8514 = vrot.lane.b32.xlu0 %v8428, 24
        %v8515 = vpop.permute.xlu0 %8514
        %8516 = vrot.lane.b32.xlu0 %v8429, 24
        %v8517 = vpop.permute.xlu0 %8516
        %8518 = vrot.lane.b32.xlu0 %v8430, 24
        %v8519 = vpop.permute.xlu0 %8518
        %8520 = vrot.lane.b32.xlu0 %v8431, 24
        %v8521 = vpop.permute.xlu0 %8520
        %8522 = vrot.lane.b32.xlu0 %v8432, 24
        %v8523 = vpop.permute.xlu0 %8522
        %8524 = vrot.lane.b32.xlu0 %v8433, 24
        %v8525 = vpop.permute.xlu0 %8524
        %8526 = vrot.lane.b32.xlu0 %v8434, 24
        %v8527 = vpop.permute.xlu0 %8526
        %8528 = vrot.lane.b32.xlu0 %v8435, 24
        %v8529 = vpop.permute.xlu0 %8528
        %8530 = vrot.lane.b32.xlu0 %v8436, 24
        %v8531 = vpop.permute.xlu0 %8530
        %8532 = vrot.lane.b32.xlu0 %v8437, 24
        %v8533 = vpop.permute.xlu0 %8532
        %v8566 = vsel %vm4014, %v7189, %v6935
        %v8567 = vsel %vm4014, %v7190, %v6938
        %v8568 = vsel %vm4014, %v7191, %v6943
        %v8569 = vsel %vm4014, %v7192, %v6946
        %v8570 = vsel %vm4014, %v7193, %v6951
        %v8571 = vsel %vm4014, %v7194, %v6954
        %v8572 = vsel %vm4014, %v7195, %v6959
        %v8573 = vsel %vm4014, %v7196, %v6962
        %v8574 = vsel %vm4014, %v7197, %v6967
        %v8575 = vsel %vm4014, %v7198, %v6970
        %v8576 = vsel %vm4014, %v7199, %v6975
        %v8577 = vsel %vm4014, %v7200, %v6978
        %v8578 = vsel %vm4014, %v7201, %v6983
        %v8579 = vsel %vm4014, %v7202, %v6986
        %v8580 = vsel %vm4014, %v7203, %v6991
        %v8581 = vsel %vm4014, %v7204, %v6994
        %v8582 = vsel %vm4014, %v7205, %v6999
        %v8583 = vsel %vm4014, %v7206, %v7002
        %v8584 = vsel %vm4014, %v7207, %v7007
        %v8585 = vsel %vm4014, %v7208, %v7010
        %v8586 = vsel %vm4014, %v7209, %v7015
        %v8587 = vsel %vm4014, %v7210, %v7018
        %v8588 = vsel %vm4014, %v7211, %v7023
        %v8589 = vsel %vm4014, %v7212, %v7026
        %v8590 = vsel %vm4014, %v7213, %v7031
        %v8591 = vsel %vm4014, %v7214, %v7034
        %v8592 = vsel %vm4014, %v7215, %v7039
        %v8593 = vsel %vm4014, %v7216, %v7042
        %v8594 = vsel %vm4014, %v7217, %v7047
        %v8595 = vsel %vm4014, %v7218, %v7050
        %v8596 = vsel %vm4014, %v7219, %v7055
        %v8597 = vsel %vm4014, %v7220, %v7058
        %vm8598 = vcmask 195584
        %v8599 = vsel %vm8598, %v8566, %v8471
        %v8600 = vsel %vm8598, %v8567, %v8473
        %v8601 = vsel %vm8598, %v8568, %v8475
        %v8602 = vsel %vm8598, %v8569, %v8477
        %v8603 = vsel %vm8598, %v8570, %v8479
        %v8604 = vsel %vm8598, %v8571, %v8481
        %v8605 = vsel %vm8598, %v8572, %v8483
        %v8606 = vsel %vm8598, %v8573, %v8485
        %v8607 = vsel %vm8598, %v8574, %v8487
        %v8608 = vsel %vm8598, %v8575, %v8489
        %v8609 = vsel %vm8598, %v8576, %v8491
        %v8610 = vsel %vm8598, %v8577, %v8493
        %v8611 = vsel %vm8598, %v8578, %v8495
        %v8612 = vsel %vm8598, %v8579, %v8497
        %v8613 = vsel %vm8598, %v8580, %v8499
        %v8614 = vsel %vm8598, %v8581, %v8501
        %v8615 = vsel %vm8598, %v8582, %v8503
        %v8616 = vsel %vm8598, %v8583, %v8505
        %v8617 = vsel %vm8598, %v8584, %v8507
        %v8618 = vsel %vm8598, %v8585, %v8509
        %v8619 = vsel %vm8598, %v8586, %v8511
        %v8620 = vsel %vm8598, %v8587, %v8513
        %v8621 = vsel %vm8598, %v8588, %v8515
        %v8622 = vsel %vm8598, %v8589, %v8517
        %v8623 = vsel %vm8598, %v8590, %v8519
        %v8624 = vsel %vm8598, %v8591, %v8521
        %v8625 = vsel %vm8598, %v8592, %v8523
        %v8626 = vsel %vm8598, %v8593, %v8525
        %v8627 = vsel %vm8598, %v8594, %v8527
        %v8628 = vsel %vm8598, %v8595, %v8529
        %v8629 = vsel %vm8598, %v8596, %v8531
        %v8630 = vsel %vm8598, %v8597, %v8533
        %vm8631 = vcmask 326656
        %v8632 = vsel %vm8631, %v8599, 0.0
        %v8633 = vsel %vm8631, %v8600, 0.0
        %v8634 = vsel %vm8631, %v8601, 0.0
        %v8635 = vsel %vm8631, %v8602, 0.0
        %v8636 = vsel %vm8631, %v8603, 0.0
        %v8637 = vsel %vm8631, %v8604, 0.0
        %v8638 = vsel %vm8631, %v8605, 0.0
        %v8639 = vsel %vm8631, %v8606, 0.0
        %v8640 = vsel %vm8631, %v8607, 0.0
        %v8641 = vsel %vm8631, %v8608, 0.0
        %v8642 = vsel %vm8631, %v8609, 0.0
        %v8643 = vsel %vm8631, %v8610, 0.0
        %v8644 = vsel %vm8631, %v8611, 0.0
        %v8645 = vsel %vm8631, %v8612, 0.0
        %v8646 = vsel %vm8631, %v8613, 0.0
        %v8647 = vsel %vm8631, %v8614, 0.0
        %v8648 = vsel %vm8631, %v8615, 0.0
        %v8649 = vsel %vm8631, %v8616, 0.0
        %v8650 = vsel %vm8631, %v8617, 0.0
        %v8651 = vsel %vm8631, %v8618, 0.0
        %v8652 = vsel %vm8631, %v8619, 0.0
        %v8653 = vsel %vm8631, %v8620, 0.0
        %v8654 = vsel %vm8631, %v8621, 0.0
        %v8655 = vsel %vm8631, %v8622, 0.0
        %v8656 = vsel %vm8631, %v8623, 0.0
        %v8657 = vsel %vm8631, %v8624, 0.0
        %v8658 = vsel %vm8631, %v8625, 0.0
        %v8659 = vsel %vm8631, %v8626, 0.0
        %v8660 = vsel %vm8631, %v8627, 0.0
        %v8661 = vsel %vm8631, %v8628, 0.0
        %v8662 = vsel %vm8631, %v8629, 0.0
        %v8663 = vsel %vm8631, %v8630, 0.0
        %8664 = vst [vmem:[%s298] sm:$0xff] %v8632
        %8665 = vst [vmem:[%s298 + $0x8] sm:$0xff] %v8633
        %8666 = vst [vmem:[%s298 + $0x10] sm:$0xff] %v8634
        %8667 = vst [vmem:[%s298 + $0x18] sm:$0xff] %v8635
        %8668 = vst [vmem:[%s298 + $0x20] sm:$0xff] %v8636
        %8669 = vst [vmem:[%s298 + $0x28] sm:$0xff] %v8637
        %8670 = vst [vmem:[%s298 + $0x30] sm:$0xff] %v8638
        %8671 = vst [vmem:[%s298 + $0x38] sm:$0xff] %v8639
        %8672 = vst [vmem:[%s298 + $0x40] sm:$0xff] %v8640
        %8673 = vst [vmem:[%s298 + $0x48] sm:$0xff] %v8641
        %8674 = vst [vmem:[%s298 + $0x50] sm:$0xff] %v8642
        %8675 = vst [vmem:[%s298 + $0x58] sm:$0xff] %v8643
        %8676 = vst [vmem:[%s298 + $0x60] sm:$0xff] %v8644
        %8677 = vst [vmem:[%s298 + $0x68] sm:$0xff] %v8645
        %8678 = vst [vmem:[%s298 + $0x70] sm:$0xff] %v8646
        %8679 = vst [vmem:[%s298 + $0x78] sm:$0xff] %v8647
        %8680 = vst [vmem:[%s298 + $0x80] sm:$0xff] %v8648
        %8681 = vst [vmem:[%s298 + $0x88] sm:$0xff] %v8649
        %8682 = vst [vmem:[%s298 + $0x90] sm:$0xff] %v8650
        %8683 = vst [vmem:[%s298 + $0x98] sm:$0xff] %v8651
        %8684 = vst [vmem:[%s298 + $0xa0] sm:$0xff] %v8652
        %8685 = vst [vmem:[%s298 + $0xa8] sm:$0xff] %v8653
        %8686 = vst [vmem:[%s298 + $0xb0] sm:$0xff] %v8654
        %8687 = vst [vmem:[%s298 + $0xb8] sm:$0xff] %v8655
        %8688 = vst [vmem:[%s298 + $0xc0] sm:$0xff] %v8656
        %8689 = vst [vmem:[%s298 + $0xc8] sm:$0xff] %v8657
        %8690 = vst [vmem:[%s298 + $0xd0] sm:$0xff] %v8658
        %8691 = vst [vmem:[%s298 + $0xd8] sm:$0xff] %v8659
        %8692 = vst [vmem:[%s298 + $0xe0] sm:$0xff] %v8660
        %8693 = vst [vmem:[%s298 + $0xe8] sm:$0xff] %v8661
        %8694 = vst [vmem:[%s298 + $0xf0] sm:$0xff] %v8662
        %8695 = vst [vmem:[%s298 + $0xf8] sm:$0xff] %v8663
        %s8696 = sand.u32 %s203, 1
        %s8697 = scalar_lea.sflag [#allocation5], %s8696
        %s8698 = sand.u32 %s203, 1
        %s8699 = smul.addr %s8698, 256
        %s8700 = scalar_lea.vmem [#allocation4], %s8699
        // Predicated region
        $region53: #{tpu_custom_call.1} parent=51 // pred_check
          %p8701 = pneg %p213
        $region54: #{tpu_custom_call.1} parent=51 // pred_check_branch
          %8703 = sbr.rel (%p8701) target = $region56
        $region55: #{tpu_custom_call.1} parent=51 // pred_region
          %s8705 = ssub.s32 4096, 4096
          %8706 = vsyncadd %s8697, %s8705
          %s8707 = smul.addr %s22, 32
          %s8708 = smul.addr %s8707, 128
          %s8709 = scalar_lea.hbm %s8, %s8708
          %s8710 = sshll.u32 %s8700, 4
          %s8711 = int_to_ptr.vmem [resolvable:$true] %s8710
          %8716 = dma.vmem_to_hbm [thread:$0]  %s8711, 4096, %s8709, %s8697, 128, 128, 8
        $region56: #{tpu_custom_call.1} parent=51 // pred_fallthru
          _
      $region52: #{tpu_custom_call.1} parent=5 // pred_fallthru
        _
      %p8717 = scmp.le.s32.totalorder 2, %s17
      // Predicated region
      $region57: #{tpu_custom_call.1} parent=5 // pred_check
        %p8718 = pneg %p8717
      $region58: #{tpu_custom_call.1} parent=5 // pred_check_branch
        %8720 = sbr.rel (%p8718) target = $region60
      $region59: #{tpu_custom_call.1} parent=5 // pred_region
        %s8721 = ssub.s32 %s17, 2
        // Predicated region
        $region61: #{tpu_custom_call.1} parent=59 // pred_check
          %p8722 = pneg %p219
        $region62: #{tpu_custom_call.1} parent=59 // pred_check_branch
          %8724 = sbr.rel (%p8722) target = $region64
        $region63: #{tpu_custom_call.1} parent=59 // pred_region
          %s8725 = sand.u32 %s204, 1
          %s8726 = scalar_lea.sflag [#allocation5], %s8725
          %s8727 = sand.u32 %s204, 1
          %s8728 = smul.addr %s8727, 256
          %s8729 = scalar_lea.vmem [#allocation4], %s8728
          %8730 = dma.done %s8726, 4096
        $region64: #{tpu_custom_call.1} parent=59 // pred_fallthru
          _
      $region60: #{tpu_custom_call.1} parent=5 // pred_fallthru
        _
    $region6: #{tpu_custom_call.1} parent=1 // loop_footer
      %s21 = sadd.s32 1, %s17
    $region7: #{tpu_custom_call.1} parent=1 // loop_footer_branch
      %16 = sbr.rel target = $region3
    $region8: #{tpu_custom_call.1} parent=1 // loop_exit
      _
    %8731 = vsyncpa [#allocation5], 1
    %s8732 = scalar_lea.sflag [#allocation5], 1
    %8733 = vsyncpa %s8732, 1

</llo_original>
